<compile_context>
chip_gen: v6e
topology: v6e:2x2x1
jax: 0.10.0
libtpu: 0.0.40
codegen_flags: <defaults>
</compile_context>

<pallas_src>
import numpy as np

import jax
import jax.numpy as jnp
from jax.experimental import pallas as pl
from jax.experimental.pallas import tpu as pltpu


# ---------------------------------------------------------------------------
# Banded-weight construction (wrapper-side, pure JAX)
# ---------------------------------------------------------------------------
def _band_expand(w, W):
    """(K, K, Cin, Cout) HWIO conv weight -> (K, W*Cin, W*Cout) banded weight.

    B[kh, win*Cin + ci, wout*Cout + co] = w[kh, kw, ci, co]  where
    win = wout + kw - K//2 (zero outside [0, W)), so one matmul per row tap
    performs the whole width dimension of the conv including 'same' padding.
    """
    K, _, cin, cout = w.shape
    p = K // 2
    sel = np.zeros((K, W, W), np.float32)          # sel[kw, wout, win]
    for kw in range(K):
        for wo in range(W):
            wi = wo + kw - p
            if 0 <= wi < W:
                sel[kw, wo, wi] = 1.0
    b = jnp.einsum("kwv,hkio->hviwo", jnp.asarray(sel), w)  # (K,Win,Cin,Wout,Cout)
    return b.reshape(K, W * cin, W * cout)


def _const_index_map(ndim):
    return lambda n: (0,) * ndim


def _single_tensorcore_chip():
    """True for single-TensorCore chips (v5e / v6e) -> fold the batch."""
    try:
        kind = jax.devices()[0].device_kind.lower()
    except Exception:
        return False
    return any(t in kind for t in ("v5 lite", "v5e", "v6 lite", "v6e"))


# ---------------------------------------------------------------------------
# Fused whole-network kernel
# ---------------------------------------------------------------------------
def _build_kernel(ops, meta, H, scr_lanes, nb):
    """ops: static wiring program; meta[i] = (K, W*Cin, W*Cout, relu)."""
    n_layers = len(meta)

    def kernel(*refs):
        x_ref = refs[0]
        wb = refs[1:1 + 2 * n_layers]          # interleaved (weight, bias) refs
        o_ref = refs[1 + 2 * n_layers]
        scr = refs[2 + 2 * n_layers]           # (H+2, scr_lanes) bf16 scratch

        # 'same' zero padding along H: rows 0 and H+1 are zeroed here and are
        # NEVER written again (every conv only touches rows 1..H).  Invariant:
        # any future layer writing outside scr[1:1+H] corrupts padding.
        scr[0:1, :] = jnp.zeros((1, scr_lanes), jnp.bfloat16)
        scr[H + 1:H + 2, :] = jnp.zeros((1, scr_lanes), jnp.bfloat16)

        def conv(idx, act, residual=None):
            k, li, lo, relu = meta[idx]
            w_ref = wb[2 * idx]
            b_ref = wb[2 * idx + 1]
            if k == 1:
                # 1x1 conv: single block-diagonal matmul, no padding needed.
                acc = jnp.dot(act.astype(jnp.bfloat16), w_ref[0],
                              preferred_element_type=jnp.float32)
            else:
                # KxK conv: cast to bf16 ONCE when staging into the padded
                # scratch, then one banded matmul per row tap, f32 accumulate.
                scr[1:1 + H, 0:li] = act.astype(jnp.bfloat16)
                acc = None
                for kh in range(k):
                    d = jnp.dot(scr[kh:kh + H, 0:li], w_ref[kh],
                                preferred_element_type=jnp.float32)
                    acc = d if acc is None else acc + d
            acc = acc + b_ref[...]             # folded-BN bias, (1, W*Cout) f32
            if residual is not None:
                acc = acc + residual           # residual add before the ReLU
            if relu:
                acc = jnp.maximum(acc, 0.0)
            return acc

        for b in range(nb):                    # static loop (nb = 1 or N)
            act = x_ref[b]                     # (H, W*Cin) f32, lane-dense
            identity = None
            skip = None
            for op, idx in ops:
                if op == "conv":
                    act = conv(idx, act)
                elif op == "save":
                    identity = act
                elif op == "skip_conv":
                    skip = conv(idx, identity)  # 1x1 conv + BN (no ReLU)
                elif op == "skip_id":
                    skip = identity
                else:                           # "conv_res": conv4+bn4+skip+relu
                    act = conv(idx, act, residual=skip)
            o_ref[b, :, :] = act

    return kernel


def cnn_forward(x_nchw, params):
    """Whole CNN forward pass (eval mode) in one fused Pallas kernel."""
    N, c_in, H, W = x_nchw.shape
    # NCHW -> lane-dense (N, H, W*Cin): lane index = w*Cin + ci.
    x = jnp.transpose(x_nchw, (0, 2, 3, 1)).reshape(N, H, W * c_in)
    x = x.astype(jnp.float32)

    layers_meta = []   # (K, W*Cin, W*Cout, relu) per conv layer (static)
    tensors = []       # interleaved [banded_w_bf16, bias_row_f32, ...]
    ops = []           # static wiring program, interpreted at trace time

    def add_layer(w, b, relu):
        k = w.shape[0]
        cin, cout = w.shape[2], w.shape[3]
        tensors.append(_band_expand(w, W).astype(jnp.bfloat16))
        tensors.append(jnp.tile(b.astype(jnp.float32), W).reshape(1, W * cout))
        layers_meta.append((k, W * cin, W * cout, bool(relu)))
        return len(layers_meta) - 1

    w, b = params["initial"]
    ops.append(("conv", add_layer(w, b, True)))
    for blk in params["blocks"]:
        ops.append(("save", None))
        for name in ("c1", "c2", "c3"):
            w, b = blk[name]
            ops.append(("conv", add_layer(w, b, True)))
        if blk["skip"] is not None:
            ws, bs = blk["skip"]
            ops.append(("skip_conv", add_layer(ws, bs, False)))
        else:
            ops.append(("skip_id", None))
        w, b = blk["c4"]
        ops.append(("conv_res", add_layer(w, b, True)))
    # TODO(synk): nn.Dropout2d is stochastic; eval-mode (identity) semantics used.
    w, b = params["final1"]
    ops.append(("conv", add_layer(w, b, True)))

    # Final 1x1 conv: zero-pad Cout so the output slab is a multiple of 128
    # lanes (unmasked stores, lane-dense output DMA); sliced off below.
    w, b = params["final2"]
    c_out = w.shape[3]
    if (W * c_out) % 128 != 0 and 128 % W == 0:
        c_per = 128 // W
        c_out_pad = ((c_out + c_per - 1) // c_per) * c_per
    else:
        c_out_pad = c_out
    w = jnp.pad(w, ((0, 0), (0, 0), (0, 0), (0, c_out_pad - c_out)))
    b = jnp.pad(b, (0, c_out_pad - c_out))
    ops.append(("conv", add_layer(w, b, False)))

    out_lanes = W * c_out_pad
    wide = [li for (k, li, _, _) in layers_meta if k > 1]
    scr_lanes = max(wide) if wide else W * c_in

    # Batch folding: single-TC chips (v5e/v6e) do the whole batch in one grid
    # step; 2-TC v7x keeps a "parallel" batch axis (one element per core).
    nb = N if _single_tensorcore_chip() else 1
    if N % nb != 0:
        nb = 1
    grid = (N // nb,)

    kernel = _build_kernel(tuple(ops), tuple(layers_meta), H, scr_lanes, nb)

    in_specs = [pl.BlockSpec((nb, H, W * c_in), lambda n: (n, 0, 0))]
    for t in tensors:
        in_specs.append(pl.BlockSpec(t.shape, _const_index_map(t.ndim)))

    out = pl.pallas_call(
        kernel,
        out_shape=jax.ShapeDtypeStruct((N, H, out_lanes), jnp.float32),
        grid=grid,
        in_specs=in_specs,
        out_specs=pl.BlockSpec((nb, H, out_lanes), lambda n: (n, 0, 0)),
        scratch_shapes=[pltpu.VMEM((H + 2, scr_lanes), jnp.bfloat16)],
        compiler_params=pltpu.CompilerParams(
            dimension_semantics=("parallel",),
            vmem_limit_bytes=32 * 1024 * 1024),
    )(x, *tensors)

    out = out.reshape(N, H, W, c_out_pad)[..., :c_out]
    return jnp.transpose(out, (0, 3, 1, 2))     # NHWC -> NCHW


# ---------------------------------------------------------------------------
# Parameter construction (deterministic, in-script) + BN folding
# ---------------------------------------------------------------------------
_BN_EPS = 1e-5


def _fold_bn(w, b, gamma, beta, mean, var):
    scale = gamma / jnp.sqrt(var + _BN_EPS)
    w_eff = w * scale[None, None, None, :]
    b_eff = scale * (b - mean) + beta
    return w_eff, b_eff


def _conv_bn_params(key, cin, cout, k):
    k1, k2, k3, k4, k5, k6 = jax.random.split(key, 6)
    w = jax.random.normal(k1, (k, k, cin, cout), jnp.float32) / jnp.sqrt(k * k * cin)
    b = 0.01 * jax.random.normal(k2, (cout,), jnp.float32)
    gamma = 1.0 + 0.1 * jax.random.normal(k3, (cout,), jnp.float32)
    beta = 0.1 * jax.random.normal(k4, (cout,), jnp.float32)
    mean = 0.1 * jax.random.normal(k5, (cout,), jnp.float32)
    var = 1.0 + 0.1 * jnp.abs(jax.random.normal(k6, (cout,), jnp.float32))
    return _fold_bn(w, b, gamma, beta, mean, var)


def _conv_params(key, cin, cout, k):
    k1, k2 = jax.random.split(key)
    w = jax.random.normal(k1, (k, k, cin, cout), jnp.float32) / jnp.sqrt(k * k * cin)
    b = 0.01 * jax.random.normal(k2, (cout,), jnp.float32)
    return w, b


def init_cnn_params(key, n_in, n_out, kernel_size=3, init_dim=8, depth=2):
    keys = iter(jax.random.split(key, 64))
    params = {}
    params["initial"] = _conv_bn_params(next(keys), n_in, init_dim, kernel_size)

    blocks = []
    current = init_dim
    for i in range(depth):
        out_dim = current * 2 if i < depth - 1 else current
        blk = {
            "c1": _conv_bn_params(next(keys), current, out_dim, kernel_size),
            "c2": _conv_bn_params(next(keys), out_dim, out_dim, kernel_size),
            "c3": _conv_bn_params(next(keys), out_dim, out_dim, kernel_size),
            "c4": _conv_bn_params(next(keys), out_dim, out_dim, kernel_size),
            "skip": (_conv_bn_params(next(keys), current, out_dim, 1)
                     if current != out_dim else None),
        }
        blocks.append(blk)
        if i < depth - 1:
            current *= 2
    params["blocks"] = blocks

    params["final1"] = _conv_bn_params(next(keys), current, current // 2, kernel_size)
    params["final2"] = _conv_params(next(keys), current // 2, n_out, 1)
    return params


# ---------------------------------------------------------------------------
# Pure-JAX (f32) reference for a sanity check
# ---------------------------------------------------------------------------
def _conv_ref(x, w, b, relu, residual=None):
    y = jax.lax.conv_general_dilated(
        x, w, window_strides=(1, 1), padding="SAME",
        dimension_numbers=("NHWC", "HWIO", "NHWC"))
    y = y + b[None, None, None, :]
    if residual is not None:
        y = y + residual
    if relu:
        y = jnp.maximum(y, 0.0)
    return y


def _ref_forward(x_nchw, params):
    x = jnp.transpose(x_nchw, (0, 2, 3, 1))
    w, b = params["initial"]; x = _conv_ref(x, w, b, True)
    for blk in params["blocks"]:
        identity = x
        w, b = blk["c1"]; h = _conv_ref(x, w, b, True)
        w, b = blk["c2"]; h = _conv_ref(h, w, b, True)
        w, b = blk["c3"]; h = _conv_ref(h, w, b, True)
        if blk["skip"] is not None:
            ws, bs = blk["skip"]; skip = _conv_ref(identity, ws, bs, False)
        else:
            skip = identity
        w, b = blk["c4"]; x = _conv_ref(h, w, b, True, residual=skip)
    w, b = params["final1"]; x = _conv_ref(x, w, b, True)
    w, b = params["final2"]; x = _conv_ref(x, w, b, False)
    return jnp.transpose(x, (0, 3, 1, 2))


if __name__ == "__main__":
    # CNN(n_input_channels=4, n_output_channels=4, kernel_size=3, init_dim=8, depth=2)
    N, C_IN, HW = 2, 4, 16
    C_OUT, INIT_DIM, DEPTH, KSIZE = 4, 8, 2, 3

    root = jax.random.PRNGKey(0)
    k_x, k_p = jax.random.split(root)
    x = jax.random.normal(k_x, (N, C_IN, HW, HW), jnp.float32)  # NCHW like PyTorch
    params = init_cnn_params(k_p, C_IN, C_OUT, KSIZE, INIT_DIM, DEPTH)

    fwd = jax.jit(lambda xx: cnn_forward(xx, params))
    out = fwd(x)
    jax.block_until_ready(out)

    assert out.shape == (N, C_OUT, HW, HW), out.shape
    assert jnp.all(jnp.isfinite(out))

    # Sanity check against a pure-JAX f32 reference (bf16 matmuls -> loose tol).
    ref = _ref_forward(x, params)
    err = float(jnp.max(jnp.abs(out - ref)) / (jnp.max(jnp.abs(ref)) + 1e-6))
    assert err < 0.1, f"relative-to-peak error too large: {err}"

    print("KERNEL_OK")
</pallas_src>

<mosaic_0001>
module attributes {stable_mosaic.version = 11 : i64} {
  func.func @kernel(%arg0: i32, %arg1: memref<1x16x64xf32, #tpu.memory_space<vmem>>, %arg2: memref<3x64x128xbf16, #tpu.memory_space<vmem>>, %arg3: memref<1x128xf32, #tpu.memory_space<vmem>>, %arg4: memref<3x128x256xbf16, #tpu.memory_space<vmem>>, %arg5: memref<1x256xf32, #tpu.memory_space<vmem>>, %arg6: memref<3x256x256xbf16, #tpu.memory_space<vmem>>, %arg7: memref<1x256xf32, #tpu.memory_space<vmem>>, %arg8: memref<3x256x256xbf16, #tpu.memory_space<vmem>>, %arg9: memref<1x256xf32, #tpu.memory_space<vmem>>, %arg10: memref<1x128x256xbf16, #tpu.memory_space<vmem>>, %arg11: memref<1x256xf32, #tpu.memory_space<vmem>>, %arg12: memref<3x256x256xbf16, #tpu.memory_space<vmem>>, %arg13: memref<1x256xf32, #tpu.memory_space<vmem>>, %arg14: memref<3x256x256xbf16, #tpu.memory_space<vmem>>, %arg15: memref<1x256xf32, #tpu.memory_space<vmem>>, %arg16: memref<3x256x256xbf16, #tpu.memory_space<vmem>>, %arg17: memref<1x256xf32, #tpu.memory_space<vmem>>, %arg18: memref<3x256x256xbf16, #tpu.memory_space<vmem>>, %arg19: memref<1x256xf32, #tpu.memory_space<vmem>>, %arg20: memref<3x256x256xbf16, #tpu.memory_space<vmem>>, %arg21: memref<1x256xf32, #tpu.memory_space<vmem>>, %arg22: memref<3x256x128xbf16, #tpu.memory_space<vmem>>, %arg23: memref<1x128xf32, #tpu.memory_space<vmem>>, %arg24: memref<1x128x128xbf16, #tpu.memory_space<vmem>>, %arg25: memref<1x128xf32, #tpu.memory_space<vmem>>, %arg26: memref<1x16x128xf32, #tpu.memory_space<vmem>>, %arg27: memref<18x256xbf16, #tpu.memory_space<vmem>>) attributes {dimension_semantics = [#tpu.dimension_semantics<parallel>], iteration_bounds = array<i64: 2>, scalar_prefetch = 0 : i64, scratch_operands = 1 : i64, tpu.core_type = #tpu.core_type<tc>, window_params = [{transform_indices = @transform_0, window_bounds = array<i64: 1, 16, 64>}, {pipeline_mode = #tpu.pipeline_mode<synchronous>, transform_indices = @transform_1, window_bounds = array<i64: 3, 64, 128>}, {pipeline_mode = #tpu.pipeline_mode<synchronous>, transform_indices = @transform_2, window_bounds = array<i64: 1, 128>}, {pipeline_mode = #tpu.pipeline_mode<synchronous>, transform_indices = @transform_3, window_bounds = array<i64: 3, 128, 256>}, {pipeline_mode = #tpu.pipeline_mode<synchronous>, transform_indices = @transform_4, window_bounds = array<i64: 1, 256>}, {pipeline_mode = #tpu.pipeline_mode<synchronous>, transform_indices = @transform_5, window_bounds = array<i64: 3, 256, 256>}, {pipeline_mode = #tpu.pipeline_mode<synchronous>, transform_indices = @transform_6, window_bounds = array<i64: 1, 256>}, {pipeline_mode = #tpu.pipeline_mode<synchronous>, transform_indices = @transform_7, window_bounds = array<i64: 3, 256, 256>}, {pipeline_mode = #tpu.pipeline_mode<synchronous>, transform_indices = @transform_8, window_bounds = array<i64: 1, 256>}, {pipeline_mode = #tpu.pipeline_mode<synchronous>, transform_indices = @transform_9, window_bounds = array<i64: 1, 128, 256>}, {pipeline_mode = #tpu.pipeline_mode<synchronous>, transform_indices = @transform_10, window_bounds = array<i64: 1, 256>}, {pipeline_mode = #tpu.pipeline_mode<synchronous>, transform_indices = @transform_11, window_bounds = array<i64: 3, 256, 256>}, {pipeline_mode = #tpu.pipeline_mode<synchronous>, transform_indices = @transform_12, window_bounds = array<i64: 1, 256>}, {pipeline_mode = #tpu.pipeline_mode<synchronous>, transform_indices = @transform_13, window_bounds = array<i64: 3, 256, 256>}, {pipeline_mode = #tpu.pipeline_mode<synchronous>, transform_indices = @transform_14, window_bounds = array<i64: 1, 256>}, {pipeline_mode = #tpu.pipeline_mode<synchronous>, transform_indices = @transform_15, window_bounds = array<i64: 3, 256, 256>}, {pipeline_mode = #tpu.pipeline_mode<synchronous>, transform_indices = @transform_16, window_bounds = array<i64: 1, 256>}, {pipeline_mode = #tpu.pipeline_mode<synchronous>, transform_indices = @transform_17, window_bounds = array<i64: 3, 256, 256>}, {pipeline_mode = #tpu.pipeline_mode<synchronous>, transform_indices = @transform_18, window_bounds = array<i64: 1, 256>}, {pipeline_mode = #tpu.pipeline_mode<synchronous>, transform_indices = @transform_19, window_bounds = array<i64: 3, 256, 256>}, {pipeline_mode = #tpu.pipeline_mode<synchronous>, transform_indices = @transform_20, window_bounds = array<i64: 1, 256>}, {pipeline_mode = #tpu.pipeline_mode<synchronous>, transform_indices = @transform_21, window_bounds = array<i64: 3, 256, 128>}, {pipeline_mode = #tpu.pipeline_mode<synchronous>, transform_indices = @transform_22, window_bounds = array<i64: 1, 128>}, {pipeline_mode = #tpu.pipeline_mode<synchronous>, transform_indices = @transform_23, window_bounds = array<i64: 1, 128, 128>}, {pipeline_mode = #tpu.pipeline_mode<synchronous>, transform_indices = @transform_24, window_bounds = array<i64: 1, 128>}, {transform_indices = @transform_25, window_bounds = array<i64: 1, 16, 128>}]} {
    %cst = arith.constant 0.000000e+00 : bf16
    %0 = vector.broadcast %cst : bf16 to vector<1x256xbf16>
    %c0 = arith.constant 0 : index
    %c0_0 = arith.constant 0 : index
    %1 = vector.load %arg27[%c0, %c0_0] : memref<18x256xbf16, #tpu.memory_space<vmem>>, vector<1x256xbf16>
    tpu.vector_store %arg27[%c0, %c0_0], %0 {strides = array<i32>} : memref<18x256xbf16, #tpu.memory_space<vmem>>, vector<1x256xbf16>,
    %cst_1 = arith.constant 0.000000e+00 : bf16
    %2 = vector.broadcast %cst_1 : bf16 to vector<1x256xbf16>
    %c17 = arith.constant 17 : index
    %c0_2 = arith.constant 0 : index
    %3 = vector.load %arg27[%c17, %c0_2] : memref<18x256xbf16, #tpu.memory_space<vmem>>, vector<1x256xbf16>
    tpu.vector_store %arg27[%c17, %c0_2], %2 {strides = array<i32>} : memref<18x256xbf16, #tpu.memory_space<vmem>>, vector<1x256xbf16>,
    %c0_3 = arith.constant 0 : index
    %c0_4 = arith.constant 0 : index
    %c0_5 = arith.constant 0 : index
    %4 = vector.load %arg1[%c0_3, %c0_4, %c0_5] : memref<1x16x64xf32, #tpu.memory_space<vmem>>, vector<1x16x64xf32>
    %5 = vector.shape_cast %4 : vector<1x16x64xf32> to vector<16x64xf32>
    %6 = arith.truncf %5 : vector<16x64xf32> to vector<16x64xbf16>
    %c1 = arith.constant 1 : index
    %c0_6 = arith.constant 0 : index
    %7 = vector.load %arg27[%c1, %c0_6] : memref<18x256xbf16, #tpu.memory_space<vmem>>, vector<16x64xbf16>
    tpu.vector_store %arg27[%c1, %c0_6], %6 {strides = array<i32>} : memref<18x256xbf16, #tpu.memory_space<vmem>>, vector<16x64xbf16>,
    %c0_7 = arith.constant 0 : index
    %c0_8 = arith.constant 0 : index
    %8 = vector.load %arg27[%c0_7, %c0_8] : memref<18x256xbf16, #tpu.memory_space<vmem>>, vector<16x64xbf16>
    %c0_9 = arith.constant 0 : index
    %c0_10 = arith.constant 0 : index
    %c0_11 = arith.constant 0 : index
    %9 = vector.load %arg2[%c0_9, %c0_10, %c0_11] : memref<3x64x128xbf16, #tpu.memory_space<vmem>>, vector<1x64x128xbf16>
    %10 = vector.shape_cast %9 : vector<1x64x128xbf16> to vector<64x128xbf16>
    %cst_12 = arith.constant dense<0.000000e+00> : vector<16x128xf32>
    %11 = tpu.matmul %8, %10, %cst_12 {dimension_numbers = #tpu.dot_dimension_numbers<[1], [0], [0], [1], [0, 0, 1, 1], [], []>} : vector<16x64xbf16>, vector<64x128xbf16>, vector<16x128xf32> -> vector<16x128xf32>
    %c1_13 = arith.constant 1 : index
    %c0_14 = arith.constant 0 : index
    %12 = vector.load %arg27[%c1_13, %c0_14] : memref<18x256xbf16, #tpu.memory_space<vmem>>, vector<16x64xbf16>
    %c1_15 = arith.constant 1 : index
    %c0_16 = arith.constant 0 : index
    %c0_17 = arith.constant 0 : index
    %13 = vector.load %arg2[%c1_15, %c0_16, %c0_17] : memref<3x64x128xbf16, #tpu.memory_space<vmem>>, vector<1x64x128xbf16>
    %14 = vector.shape_cast %13 : vector<1x64x128xbf16> to vector<64x128xbf16>
    %cst_18 = arith.constant dense<0.000000e+00> : vector<16x128xf32>
    %15 = tpu.matmul %12, %14, %cst_18 {dimension_numbers = #tpu.dot_dimension_numbers<[1], [0], [0], [1], [0, 0, 1, 1], [], []>} : vector<16x64xbf16>, vector<64x128xbf16>, vector<16x128xf32> -> vector<16x128xf32>
    %16 = arith.addf %11, %15 : vector<16x128xf32>
    %c2 = arith.constant 2 : index
    %c0_19 = arith.constant 0 : index
    %17 = vector.load %arg27[%c2, %c0_19] : memref<18x256xbf16, #tpu.memory_space<vmem>>, vector<16x64xbf16>
    %c2_20 = arith.constant 2 : index
    %c0_21 = arith.constant 0 : index
    %c0_22 = arith.constant 0 : index
    %18 = vector.load %arg2[%c2_20, %c0_21, %c0_22] : memref<3x64x128xbf16, #tpu.memory_space<vmem>>, vector<1x64x128xbf16>
    %19 = vector.shape_cast %18 : vector<1x64x128xbf16> to vector<64x128xbf16>
    %cst_23 = arith.constant dense<0.000000e+00> : vector<16x128xf32>
    %20 = tpu.matmul %17, %19, %cst_23 {dimension_numbers = #tpu.dot_dimension_numbers<[1], [0], [0], [1], [0, 0, 1, 1], [], []>} : vector<16x64xbf16>, vector<64x128xbf16>, vector<16x128xf32> -> vector<16x128xf32>
    %21 = arith.addf %16, %20 : vector<16x128xf32>
    %c0_24 = arith.constant 0 : index
    %c0_25 = arith.constant 0 : index
    %22 = vector.load %arg3[%c0_24, %c0_25] : memref<1x128xf32, #tpu.memory_space<vmem>>, vector<1x128xf32>
    %23 = vector.broadcast %22 : vector<1x128xf32> to vector<16x128xf32>
    %24 = arith.addf %21, %23 : vector<16x128xf32>
    %cst_26 = arith.constant 0.000000e+00 : f32
    %25 = vector.broadcast %cst_26 : f32 to vector<16x128xf32>
    %26 = arith.maximumf %24, %25 : vector<16x128xf32>
    %27 = arith.truncf %26 : vector<16x128xf32> to vector<16x128xbf16>
    %c1_27 = arith.constant 1 : index
    %c0_28 = arith.constant 0 : index
    %28 = vector.load %arg27[%c1_27, %c0_28] : memref<18x256xbf16, #tpu.memory_space<vmem>>, vector<16x128xbf16>
    tpu.vector_store %arg27[%c1_27, %c0_28], %27 {strides = array<i32>} : memref<18x256xbf16, #tpu.memory_space<vmem>>, vector<16x128xbf16>,
    %c0_29 = arith.constant 0 : index
    %c0_30 = arith.constant 0 : index
    %29 = vector.load %arg27[%c0_29, %c0_30] : memref<18x256xbf16, #tpu.memory_space<vmem>>, vector<16x128xbf16>
    %c0_31 = arith.constant 0 : index
    %c0_32 = arith.constant 0 : index
    %c0_33 = arith.constant 0 : index
    %30 = vector.load %arg4[%c0_31, %c0_32, %c0_33] : memref<3x128x256xbf16, #tpu.memory_space<vmem>>, vector<1x128x256xbf16>
    %31 = vector.shape_cast %30 : vector<1x128x256xbf16> to vector<128x256xbf16>
    %cst_34 = arith.constant dense<0.000000e+00> : vector<16x256xf32>
    %32 = tpu.matmul %29, %31, %cst_34 {dimension_numbers = #tpu.dot_dimension_numbers<[1], [0], [0], [1], [0, 0, 1, 1], [], []>} : vector<16x128xbf16>, vector<128x256xbf16>, vector<16x256xf32> -> vector<16x256xf32>
    %c1_35 = arith.constant 1 : index
    %c0_36 = arith.constant 0 : index
    %33 = vector.load %arg27[%c1_35, %c0_36] : memref<18x256xbf16, #tpu.memory_space<vmem>>, vector<16x128xbf16>
    %c1_37 = arith.constant 1 : index
    %c0_38 = arith.constant 0 : index
    %c0_39 = arith.constant 0 : index
    %34 = vector.load %arg4[%c1_37, %c0_38, %c0_39] : memref<3x128x256xbf16, #tpu.memory_space<vmem>>, vector<1x128x256xbf16>
    %35 = vector.shape_cast %34 : vector<1x128x256xbf16> to vector<128x256xbf16>
    %cst_40 = arith.constant dense<0.000000e+00> : vector<16x256xf32>
    %36 = tpu.matmul %33, %35, %cst_40 {dimension_numbers = #tpu.dot_dimension_numbers<[1], [0], [0], [1], [0, 0, 1, 1], [], []>} : vector<16x128xbf16>, vector<128x256xbf16>, vector<16x256xf32> -> vector<16x256xf32>
    %37 = arith.addf %32, %36 : vector<16x256xf32>
    %c2_41 = arith.constant 2 : index
    %c0_42 = arith.constant 0 : index
    %38 = vector.load %arg27[%c2_41, %c0_42] : memref<18x256xbf16, #tpu.memory_space<vmem>>, vector<16x128xbf16>
    %c2_43 = arith.constant 2 : index
    %c0_44 = arith.constant 0 : index
    %c0_45 = arith.constant 0 : index
    %39 = vector.load %arg4[%c2_43, %c0_44, %c0_45] : memref<3x128x256xbf16, #tpu.memory_space<vmem>>, vector<1x128x256xbf16>
    %40 = vector.shape_cast %39 : vector<1x128x256xbf16> to vector<128x256xbf16>
    %cst_46 = arith.constant dense<0.000000e+00> : vector<16x256xf32>
    %41 = tpu.matmul %38, %40, %cst_46 {dimension_numbers = #tpu.dot_dimension_numbers<[1], [0], [0], [1], [0, 0, 1, 1], [], []>} : vector<16x128xbf16>, vector<128x256xbf16>, vector<16x256xf32> -> vector<16x256xf32>
    %42 = arith.addf %37, %41 : vector<16x256xf32>
    %c0_47 = arith.constant 0 : index
    %c0_48 = arith.constant 0 : index
    %43 = vector.load %arg5[%c0_47, %c0_48] : memref<1x256xf32, #tpu.memory_space<vmem>>, vector<1x256xf32>
    %44 = vector.broadcast %43 : vector<1x256xf32> to vector<16x256xf32>
    %45 = arith.addf %42, %44 : vector<16x256xf32>
    %cst_49 = arith.constant 0.000000e+00 : f32
    %46 = vector.broadcast %cst_49 : f32 to vector<16x256xf32>
    %47 = arith.maximumf %45, %46 : vector<16x256xf32>
    %48 = arith.truncf %47 : vector<16x256xf32> to vector<16x256xbf16>
    %c1_50 = arith.constant 1 : index
    %c0_51 = arith.constant 0 : index
    %49 = vector.load %arg27[%c1_50, %c0_51] : memref<18x256xbf16, #tpu.memory_space<vmem>>, vector<16x256xbf16>
    tpu.vector_store %arg27[%c1_50, %c0_51], %48 {strides = array<i32>} : memref<18x256xbf16, #tpu.memory_space<vmem>>, vector<16x256xbf16>,
    %c0_52 = arith.constant 0 : index
    %c0_53 = arith.constant 0 : index
    %50 = vector.load %arg27[%c0_52, %c0_53] : memref<18x256xbf16, #tpu.memory_space<vmem>>, vector<16x256xbf16>
    %c0_54 = arith.constant 0 : index
    %c0_55 = arith.constant 0 : index
    %c0_56 = arith.constant 0 : index
    %51 = vector.load %arg6[%c0_54, %c0_55, %c0_56] : memref<3x256x256xbf16, #tpu.memory_space<vmem>>, vector<1x256x256xbf16>
    %52 = vector.shape_cast %51 : vector<1x256x256xbf16> to vector<256x256xbf16>
    %cst_57 = arith.constant dense<0.000000e+00> : vector<16x256xf32>
    %53 = tpu.matmul %50, %52, %cst_57 {dimension_numbers = #tpu.dot_dimension_numbers<[1], [0], [0], [1], [0, 0, 1, 1], [], []>} : vector<16x256xbf16>, vector<256x256xbf16>, vector<16x256xf32> -> vector<16x256xf32>
    %c1_58 = arith.constant 1 : index
    %c0_59 = arith.constant 0 : index
    %54 = vector.load %arg27[%c1_58, %c0_59] : memref<18x256xbf16, #tpu.memory_space<vmem>>, vector<16x256xbf16>
    %c1_60 = arith.constant 1 : index
    %c0_61 = arith.constant 0 : index
    %c0_62 = arith.constant 0 : index
    %55 = vector.load %arg6[%c1_60, %c0_61, %c0_62] : memref<3x256x256xbf16, #tpu.memory_space<vmem>>, vector<1x256x256xbf16>
    %56 = vector.shape_cast %55 : vector<1x256x256xbf16> to vector<256x256xbf16>
    %cst_63 = arith.constant dense<0.000000e+00> : vector<16x256xf32>
    %57 = tpu.matmul %54, %56, %cst_63 {dimension_numbers = #tpu.dot_dimension_numbers<[1], [0], [0], [1], [0, 0, 1, 1], [], []>} : vector<16x256xbf16>, vector<256x256xbf16>, vector<16x256xf32> -> vector<16x256xf32>
    %58 = arith.addf %53, %57 : vector<16x256xf32>
    %c2_64 = arith.constant 2 : index
    %c0_65 = arith.constant 0 : index
    %59 = vector.load %arg27[%c2_64, %c0_65] : memref<18x256xbf16, #tpu.memory_space<vmem>>, vector<16x256xbf16>
    %c2_66 = arith.constant 2 : index
    %c0_67 = arith.constant 0 : index
    %c0_68 = arith.constant 0 : index
    %60 = vector.load %arg6[%c2_66, %c0_67, %c0_68] : memref<3x256x256xbf16, #tpu.memory_space<vmem>>, vector<1x256x256xbf16>
    %61 = vector.shape_cast %60 : vector<1x256x256xbf16> to vector<256x256xbf16>
    %cst_69 = arith.constant dense<0.000000e+00> : vector<16x256xf32>
    %62 = tpu.matmul %59, %61, %cst_69 {dimension_numbers = #tpu.dot_dimension_numbers<[1], [0], [0], [1], [0, 0, 1, 1], [], []>} : vector<16x256xbf16>, vector<256x256xbf16>, vector<16x256xf32> -> vector<16x256xf32>
    %63 = arith.addf %58, %62 : vector<16x256xf32>
    %c0_70 = arith.constant 0 : index
    %c0_71 = arith.constant 0 : index
    %64 = vector.load %arg7[%c0_70, %c0_71] : memref<1x256xf32, #tpu.memory_space<vmem>>, vector<1x256xf32>
    %65 = vector.broadcast %64 : vector<1x256xf32> to vector<16x256xf32>
    %66 = arith.addf %63, %65 : vector<16x256xf32>
    %cst_72 = arith.constant 0.000000e+00 : f32
    %67 = vector.broadcast %cst_72 : f32 to vector<16x256xf32>
    %68 = arith.maximumf %66, %67 : vector<16x256xf32>
    %69 = arith.truncf %68 : vector<16x256xf32> to vector<16x256xbf16>
    %c1_73 = arith.constant 1 : index
    %c0_74 = arith.constant 0 : index
    %70 = vector.load %arg27[%c1_73, %c0_74] : memref<18x256xbf16, #tpu.memory_space<vmem>>, vector<16x256xbf16>
    tpu.vector_store %arg27[%c1_73, %c0_74], %69 {strides = array<i32>} : memref<18x256xbf16, #tpu.memory_space<vmem>>, vector<16x256xbf16>,
    %c0_75 = arith.constant 0 : index
    %c0_76 = arith.constant 0 : index
    %71 = vector.load %arg27[%c0_75, %c0_76] : memref<18x256xbf16, #tpu.memory_space<vmem>>, vector<16x256xbf16>
    %c0_77 = arith.constant 0 : index
    %c0_78 = arith.constant 0 : index
    %c0_79 = arith.constant 0 : index
    %72 = vector.load %arg8[%c0_77, %c0_78, %c0_79] : memref<3x256x256xbf16, #tpu.memory_space<vmem>>, vector<1x256x256xbf16>
    %73 = vector.shape_cast %72 : vector<1x256x256xbf16> to vector<256x256xbf16>
    %cst_80 = arith.constant dense<0.000000e+00> : vector<16x256xf32>
    %74 = tpu.matmul %71, %73, %cst_80 {dimension_numbers = #tpu.dot_dimension_numbers<[1], [0], [0], [1], [0, 0, 1, 1], [], []>} : vector<16x256xbf16>, vector<256x256xbf16>, vector<16x256xf32> -> vector<16x256xf32>
    %c1_81 = arith.constant 1 : index
    %c0_82 = arith.constant 0 : index
    %75 = vector.load %arg27[%c1_81, %c0_82] : memref<18x256xbf16, #tpu.memory_space<vmem>>, vector<16x256xbf16>
    %c1_83 = arith.constant 1 : index
    %c0_84 = arith.constant 0 : index
    %c0_85 = arith.constant 0 : index
    %76 = vector.load %arg8[%c1_83, %c0_84, %c0_85] : memref<3x256x256xbf16, #tpu.memory_space<vmem>>, vector<1x256x256xbf16>
    %77 = vector.shape_cast %76 : vector<1x256x256xbf16> to vector<256x256xbf16>
    %cst_86 = arith.constant dense<0.000000e+00> : vector<16x256xf32>
    %78 = tpu.matmul %75, %77, %cst_86 {dimension_numbers = #tpu.dot_dimension_numbers<[1], [0], [0], [1], [0, 0, 1, 1], [], []>} : vector<16x256xbf16>, vector<256x256xbf16>, vector<16x256xf32> -> vector<16x256xf32>
    %79 = arith.addf %74, %78 : vector<16x256xf32>
    %c2_87 = arith.constant 2 : index
    %c0_88 = arith.constant 0 : index
    %80 = vector.load %arg27[%c2_87, %c0_88] : memref<18x256xbf16, #tpu.memory_space<vmem>>, vector<16x256xbf16>
    %c2_89 = arith.constant 2 : index
    %c0_90 = arith.constant 0 : index
    %c0_91 = arith.constant 0 : index
    %81 = vector.load %arg8[%c2_89, %c0_90, %c0_91] : memref<3x256x256xbf16, #tpu.memory_space<vmem>>, vector<1x256x256xbf16>
    %82 = vector.shape_cast %81 : vector<1x256x256xbf16> to vector<256x256xbf16>
    %cst_92 = arith.constant dense<0.000000e+00> : vector<16x256xf32>
    %83 = tpu.matmul %80, %82, %cst_92 {dimension_numbers = #tpu.dot_dimension_numbers<[1], [0], [0], [1], [0, 0, 1, 1], [], []>} : vector<16x256xbf16>, vector<256x256xbf16>, vector<16x256xf32> -> vector<16x256xf32>
    %84 = arith.addf %79, %83 : vector<16x256xf32>
    %c0_93 = arith.constant 0 : index
    %c0_94 = arith.constant 0 : index
    %85 = vector.load %arg9[%c0_93, %c0_94] : memref<1x256xf32, #tpu.memory_space<vmem>>, vector<1x256xf32>
    %86 = vector.broadcast %85 : vector<1x256xf32> to vector<16x256xf32>
    %87 = arith.addf %84, %86 : vector<16x256xf32>
    %cst_95 = arith.constant 0.000000e+00 : f32
    %88 = vector.broadcast %cst_95 : f32 to vector<16x256xf32>
    %89 = arith.maximumf %87, %88 : vector<16x256xf32>
    %90 = arith.truncf %26 : vector<16x128xf32> to vector<16x128xbf16>
    %c0_96 = arith.constant 0 : index
    %c0_97 = arith.constant 0 : index
    %c0_98 = arith.constant 0 : index
    %91 = vector.load %arg10[%c0_96, %c0_97, %c0_98] : memref<1x128x256xbf16, #tpu.memory_space<vmem>>, vector<1x128x256xbf16>
    %92 = vector.shape_cast %91 : vector<1x128x256xbf16> to vector<128x256xbf16>
    %cst_99 = arith.constant dense<0.000000e+00> : vector<16x256xf32>
    %93 = tpu.matmul %90, %92, %cst_99 {dimension_numbers = #tpu.dot_dimension_numbers<[1], [0], [0], [1], [0, 0, 1, 1], [], []>} : vector<16x128xbf16>, vector<128x256xbf16>, vector<16x256xf32> -> vector<16x256xf32>
    %c0_100 = arith.constant 0 : index
    %c0_101 = arith.constant 0 : index
    %94 = vector.load %arg11[%c0_100, %c0_101] : memref<1x256xf32, #tpu.memory_space<vmem>>, vector<1x256xf32>
    %95 = vector.broadcast %94 : vector<1x256xf32> to vector<16x256xf32>
    %96 = arith.addf %93, %95 : vector<16x256xf32>
    %97 = arith.truncf %89 : vector<16x256xf32> to vector<16x256xbf16>
    %c1_102 = arith.constant 1 : index
    %c0_103 = arith.constant 0 : index
    %98 = vector.load %arg27[%c1_102, %c0_103] : memref<18x256xbf16, #tpu.memory_space<vmem>>, vector<16x256xbf16>
    tpu.vector_store %arg27[%c1_102, %c0_103], %97 {strides = array<i32>} : memref<18x256xbf16, #tpu.memory_space<vmem>>, vector<16x256xbf16>,
    %c0_104 = arith.constant 0 : index
    %c0_105 = arith.constant 0 : index
    %99 = vector.load %arg27[%c0_104, %c0_105] : memref<18x256xbf16, #tpu.memory_space<vmem>>, vector<16x256xbf16>
    %c0_106 = arith.constant 0 : index
    %c0_107 = arith.constant 0 : index
    %c0_108 = arith.constant 0 : index
    %100 = vector.load %arg12[%c0_106, %c0_107, %c0_108] : memref<3x256x256xbf16, #tpu.memory_space<vmem>>, vector<1x256x256xbf16>
    %101 = vector.shape_cast %100 : vector<1x256x256xbf16> to vector<256x256xbf16>
    %cst_109 = arith.constant dense<0.000000e+00> : vector<16x256xf32>
    %102 = tpu.matmul %99, %101, %cst_109 {dimension_numbers = #tpu.dot_dimension_numbers<[1], [0], [0], [1], [0, 0, 1, 1], [], []>} : vector<16x256xbf16>, vector<256x256xbf16>, vector<16x256xf32> -> vector<16x256xf32>
    %c1_110 = arith.constant 1 : index
    %c0_111 = arith.constant 0 : index
    %103 = vector.load %arg27[%c1_110, %c0_111] : memref<18x256xbf16, #tpu.memory_space<vmem>>, vector<16x256xbf16>
    %c1_112 = arith.constant 1 : index
    %c0_113 = arith.constant 0 : index
    %c0_114 = arith.constant 0 : index
    %104 = vector.load %arg12[%c1_112, %c0_113, %c0_114] : memref<3x256x256xbf16, #tpu.memory_space<vmem>>, vector<1x256x256xbf16>
    %105 = vector.shape_cast %104 : vector<1x256x256xbf16> to vector<256x256xbf16>
    %cst_115 = arith.constant dense<0.000000e+00> : vector<16x256xf32>
    %106 = tpu.matmul %103, %105, %cst_115 {dimension_numbers = #tpu.dot_dimension_numbers<[1], [0], [0], [1], [0, 0, 1, 1], [], []>} : vector<16x256xbf16>, vector<256x256xbf16>, vector<16x256xf32> -> vector<16x256xf32>
    %107 = arith.addf %102, %106 : vector<16x256xf32>
    %c2_116 = arith.constant 2 : index
    %c0_117 = arith.constant 0 : index
    %108 = vector.load %arg27[%c2_116, %c0_117] : memref<18x256xbf16, #tpu.memory_space<vmem>>, vector<16x256xbf16>
    %c2_118 = arith.constant 2 : index
    %c0_119 = arith.constant 0 : index
    %c0_120 = arith.constant 0 : index
    %109 = vector.load %arg12[%c2_118, %c0_119, %c0_120] : memref<3x256x256xbf16, #tpu.memory_space<vmem>>, vector<1x256x256xbf16>
    %110 = vector.shape_cast %109 : vector<1x256x256xbf16> to vector<256x256xbf16>
    %cst_121 = arith.constant dense<0.000000e+00> : vector<16x256xf32>
    %111 = tpu.matmul %108, %110, %cst_121 {dimension_numbers = #tpu.dot_dimension_numbers<[1], [0], [0], [1], [0, 0, 1, 1], [], []>} : vector<16x256xbf16>, vector<256x256xbf16>, vector<16x256xf32> -> vector<16x256xf32>
    %112 = arith.addf %107, %111 : vector<16x256xf32>
    %c0_122 = arith.constant 0 : index
    %c0_123 = arith.constant 0 : index
    %113 = vector.load %arg13[%c0_122, %c0_123] : memref<1x256xf32, #tpu.memory_space<vmem>>, vector<1x256xf32>
    %114 = vector.broadcast %113 : vector<1x256xf32> to vector<16x256xf32>
    %115 = arith.addf %112, %114 : vector<16x256xf32>
    %116 = arith.addf %115, %96 : vector<16x256xf32>
    %cst_124 = arith.constant 0.000000e+00 : f32
    %117 = vector.broadcast %cst_124 : f32 to vector<16x256xf32>
    %118 = arith.maximumf %116, %117 : vector<16x256xf32>
    %119 = arith.truncf %118 : vector<16x256xf32> to vector<16x256xbf16>
    %c1_125 = arith.constant 1 : index
    %c0_126 = arith.constant 0 : index
    %120 = vector.load %arg27[%c1_125, %c0_126] : memref<18x256xbf16, #tpu.memory_space<vmem>>, vector<16x256xbf16>
    tpu.vector_store %arg27[%c1_125, %c0_126], %119 {strides = array<i32>} : memref<18x256xbf16, #tpu.memory_space<vmem>>, vector<16x256xbf16>,
    %c0_127 = arith.constant 0 : index
    %c0_128 = arith.constant 0 : index
    %121 = vector.load %arg27[%c0_127, %c0_128] : memref<18x256xbf16, #tpu.memory_space<vmem>>, vector<16x256xbf16>
    %c0_129 = arith.constant 0 : index
    %c0_130 = arith.constant 0 : index
    %c0_131 = arith.constant 0 : index
    %122 = vector.load %arg14[%c0_129, %c0_130, %c0_131] : memref<3x256x256xbf16, #tpu.memory_space<vmem>>, vector<1x256x256xbf16>
    %123 = vector.shape_cast %122 : vector<1x256x256xbf16> to vector<256x256xbf16>
    %cst_132 = arith.constant dense<0.000000e+00> : vector<16x256xf32>
    %124 = tpu.matmul %121, %123, %cst_132 {dimension_numbers = #tpu.dot_dimension_numbers<[1], [0], [0], [1], [0, 0, 1, 1], [], []>} : vector<16x256xbf16>, vector<256x256xbf16>, vector<16x256xf32> -> vector<16x256xf32>
    %c1_133 = arith.constant 1 : index
    %c0_134 = arith.constant 0 : index
    %125 = vector.load %arg27[%c1_133, %c0_134] : memref<18x256xbf16, #tpu.memory_space<vmem>>, vector<16x256xbf16>
    %c1_135 = arith.constant 1 : index
    %c0_136 = arith.constant 0 : index
    %c0_137 = arith.constant 0 : index
    %126 = vector.load %arg14[%c1_135, %c0_136, %c0_137] : memref<3x256x256xbf16, #tpu.memory_space<vmem>>, vector<1x256x256xbf16>
    %127 = vector.shape_cast %126 : vector<1x256x256xbf16> to vector<256x256xbf16>
    %cst_138 = arith.constant dense<0.000000e+00> : vector<16x256xf32>
    %128 = tpu.matmul %125, %127, %cst_138 {dimension_numbers = #tpu.dot_dimension_numbers<[1], [0], [0], [1], [0, 0, 1, 1], [], []>} : vector<16x256xbf16>, vector<256x256xbf16>, vector<16x256xf32> -> vector<16x256xf32>
    %129 = arith.addf %124, %128 : vector<16x256xf32>
    %c2_139 = arith.constant 2 : index
    %c0_140 = arith.constant 0 : index
    %130 = vector.load %arg27[%c2_139, %c0_140] : memref<18x256xbf16, #tpu.memory_space<vmem>>, vector<16x256xbf16>
    %c2_141 = arith.constant 2 : index
    %c0_142 = arith.constant 0 : index
    %c0_143 = arith.constant 0 : index
    %131 = vector.load %arg14[%c2_141, %c0_142, %c0_143] : memref<3x256x256xbf16, #tpu.memory_space<vmem>>, vector<1x256x256xbf16>
    %132 = vector.shape_cast %131 : vector<1x256x256xbf16> to vector<256x256xbf16>
    %cst_144 = arith.constant dense<0.000000e+00> : vector<16x256xf32>
    %133 = tpu.matmul %130, %132, %cst_144 {dimension_numbers = #tpu.dot_dimension_numbers<[1], [0], [0], [1], [0, 0, 1, 1], [], []>} : vector<16x256xbf16>, vector<256x256xbf16>, vector<16x256xf32> -> vector<16x256xf32>
    %134 = arith.addf %129, %133 : vector<16x256xf32>
    %c0_145 = arith.constant 0 : index
    %c0_146 = arith.constant 0 : index
    %135 = vector.load %arg15[%c0_145, %c0_146] : memref<1x256xf32, #tpu.memory_space<vmem>>, vector<1x256xf32>
    %136 = vector.broadcast %135 : vector<1x256xf32> to vector<16x256xf32>
    %137 = arith.addf %134, %136 : vector<16x256xf32>
    %cst_147 = arith.constant 0.000000e+00 : f32
    %138 = vector.broadcast %cst_147 : f32 to vector<16x256xf32>
    %139 = arith.maximumf %137, %138 : vector<16x256xf32>
    %140 = arith.truncf %139 : vector<16x256xf32> to vector<16x256xbf16>
    %c1_148 = arith.constant 1 : index
    %c0_149 = arith.constant 0 : index
    %141 = vector.load %arg27[%c1_148, %c0_149] : memref<18x256xbf16, #tpu.memory_space<vmem>>, vector<16x256xbf16>
    tpu.vector_store %arg27[%c1_148, %c0_149], %140 {strides = array<i32>} : memref<18x256xbf16, #tpu.memory_space<vmem>>, vector<16x256xbf16>,
    %c0_150 = arith.constant 0 : index
    %c0_151 = arith.constant 0 : index
    %142 = vector.load %arg27[%c0_150, %c0_151] : memref<18x256xbf16, #tpu.memory_space<vmem>>, vector<16x256xbf16>
    %c0_152 = arith.constant 0 : index
    %c0_153 = arith.constant 0 : index
    %c0_154 = arith.constant 0 : index
    %143 = vector.load %arg16[%c0_152, %c0_153, %c0_154] : memref<3x256x256xbf16, #tpu.memory_space<vmem>>, vector<1x256x256xbf16>
    %144 = vector.shape_cast %143 : vector<1x256x256xbf16> to vector<256x256xbf16>
    %cst_155 = arith.constant dense<0.000000e+00> : vector<16x256xf32>
    %145 = tpu.matmul %142, %144, %cst_155 {dimension_numbers = #tpu.dot_dimension_numbers<[1], [0], [0], [1], [0, 0, 1, 1], [], []>} : vector<16x256xbf16>, vector<256x256xbf16>, vector<16x256xf32> -> vector<16x256xf32>
    %c1_156 = arith.constant 1 : index
    %c0_157 = arith.constant 0 : index
    %146 = vector.load %arg27[%c1_156, %c0_157] : memref<18x256xbf16, #tpu.memory_space<vmem>>, vector<16x256xbf16>
    %c1_158 = arith.constant 1 : index
    %c0_159 = arith.constant 0 : index
    %c0_160 = arith.constant 0 : index
    %147 = vector.load %arg16[%c1_158, %c0_159, %c0_160] : memref<3x256x256xbf16, #tpu.memory_space<vmem>>, vector<1x256x256xbf16>
    %148 = vector.shape_cast %147 : vector<1x256x256xbf16> to vector<256x256xbf16>
    %cst_161 = arith.constant dense<0.000000e+00> : vector<16x256xf32>
    %149 = tpu.matmul %146, %148, %cst_161 {dimension_numbers = #tpu.dot_dimension_numbers<[1], [0], [0], [1], [0, 0, 1, 1], [], []>} : vector<16x256xbf16>, vector<256x256xbf16>, vector<16x256xf32> -> vector<16x256xf32>
    %150 = arith.addf %145, %149 : vector<16x256xf32>
    %c2_162 = arith.constant 2 : index
    %c0_163 = arith.constant 0 : index
    %151 = vector.load %arg27[%c2_162, %c0_163] : memref<18x256xbf16, #tpu.memory_space<vmem>>, vector<16x256xbf16>
    %c2_164 = arith.constant 2 : index
    %c0_165 = arith.constant 0 : index
    %c0_166 = arith.constant 0 : index
    %152 = vector.load %arg16[%c2_164, %c0_165, %c0_166] : memref<3x256x256xbf16, #tpu.memory_space<vmem>>, vector<1x256x256xbf16>
    %153 = vector.shape_cast %152 : vector<1x256x256xbf16> to vector<256x256xbf16>
    %cst_167 = arith.constant dense<0.000000e+00> : vector<16x256xf32>
    %154 = tpu.matmul %151, %153, %cst_167 {dimension_numbers = #tpu.dot_dimension_numbers<[1], [0], [0], [1], [0, 0, 1, 1], [], []>} : vector<16x256xbf16>, vector<256x256xbf16>, vector<16x256xf32> -> vector<16x256xf32>
    %155 = arith.addf %150, %154 : vector<16x256xf32>
    %c0_168 = arith.constant 0 : index
    %c0_169 = arith.constant 0 : index
    %156 = vector.load %arg17[%c0_168, %c0_169] : memref<1x256xf32, #tpu.memory_space<vmem>>, vector<1x256xf32>
    %157 = vector.broadcast %156 : vector<1x256xf32> to vector<16x256xf32>
    %158 = arith.addf %155, %157 : vector<16x256xf32>
    %cst_170 = arith.constant 0.000000e+00 : f32
    %159 = vector.broadcast %cst_170 : f32 to vector<16x256xf32>
    %160 = arith.maximumf %158, %159 : vector<16x256xf32>
    %161 = arith.truncf %160 : vector<16x256xf32> to vector<16x256xbf16>
    %c1_171 = arith.constant 1 : index
    %c0_172 = arith.constant 0 : index
    %162 = vector.load %arg27[%c1_171, %c0_172] : memref<18x256xbf16, #tpu.memory_space<vmem>>, vector<16x256xbf16>
    tpu.vector_store %arg27[%c1_171, %c0_172], %161 {strides = array<i32>} : memref<18x256xbf16, #tpu.memory_space<vmem>>, vector<16x256xbf16>,
    %c0_173 = arith.constant 0 : index
    %c0_174 = arith.constant 0 : index
    %163 = vector.load %arg27[%c0_173, %c0_174] : memref<18x256xbf16, #tpu.memory_space<vmem>>, vector<16x256xbf16>
    %c0_175 = arith.constant 0 : index
    %c0_176 = arith.constant 0 : index
    %c0_177 = arith.constant 0 : index
    %164 = vector.load %arg18[%c0_175, %c0_176, %c0_177] : memref<3x256x256xbf16, #tpu.memory_space<vmem>>, vector<1x256x256xbf16>
    %165 = vector.shape_cast %164 : vector<1x256x256xbf16> to vector<256x256xbf16>
    %cst_178 = arith.constant dense<0.000000e+00> : vector<16x256xf32>
    %166 = tpu.matmul %163, %165, %cst_178 {dimension_numbers = #tpu.dot_dimension_numbers<[1], [0], [0], [1], [0, 0, 1, 1], [], []>} : vector<16x256xbf16>, vector<256x256xbf16>, vector<16x256xf32> -> vector<16x256xf32>
    %c1_179 = arith.constant 1 : index
    %c0_180 = arith.constant 0 : index
    %167 = vector.load %arg27[%c1_179, %c0_180] : memref<18x256xbf16, #tpu.memory_space<vmem>>, vector<16x256xbf16>
    %c1_181 = arith.constant 1 : index
    %c0_182 = arith.constant 0 : index
    %c0_183 = arith.constant 0 : index
    %168 = vector.load %arg18[%c1_181, %c0_182, %c0_183] : memref<3x256x256xbf16, #tpu.memory_space<vmem>>, vector<1x256x256xbf16>
    %169 = vector.shape_cast %168 : vector<1x256x256xbf16> to vector<256x256xbf16>
    %cst_184 = arith.constant dense<0.000000e+00> : vector<16x256xf32>
    %170 = tpu.matmul %167, %169, %cst_184 {dimension_numbers = #tpu.dot_dimension_numbers<[1], [0], [0], [1], [0, 0, 1, 1], [], []>} : vector<16x256xbf16>, vector<256x256xbf16>, vector<16x256xf32> -> vector<16x256xf32>
    %171 = arith.addf %166, %170 : vector<16x256xf32>
    %c2_185 = arith.constant 2 : index
    %c0_186 = arith.constant 0 : index
    %172 = vector.load %arg27[%c2_185, %c0_186] : memref<18x256xbf16, #tpu.memory_space<vmem>>, vector<16x256xbf16>
    %c2_187 = arith.constant 2 : index
    %c0_188 = arith.constant 0 : index
    %c0_189 = arith.constant 0 : index
    %173 = vector.load %arg18[%c2_187, %c0_188, %c0_189] : memref<3x256x256xbf16, #tpu.memory_space<vmem>>, vector<1x256x256xbf16>
    %174 = vector.shape_cast %173 : vector<1x256x256xbf16> to vector<256x256xbf16>
    %cst_190 = arith.constant dense<0.000000e+00> : vector<16x256xf32>
    %175 = tpu.matmul %172, %174, %cst_190 {dimension_numbers = #tpu.dot_dimension_numbers<[1], [0], [0], [1], [0, 0, 1, 1], [], []>} : vector<16x256xbf16>, vector<256x256xbf16>, vector<16x256xf32> -> vector<16x256xf32>
    %176 = arith.addf %171, %175 : vector<16x256xf32>
    %c0_191 = arith.constant 0 : index
    %c0_192 = arith.constant 0 : index
    %177 = vector.load %arg19[%c0_191, %c0_192] : memref<1x256xf32, #tpu.memory_space<vmem>>, vector<1x256xf32>
    %178 = vector.broadcast %177 : vector<1x256xf32> to vector<16x256xf32>
    %179 = arith.addf %176, %178 : vector<16x256xf32>
    %cst_193 = arith.constant 0.000000e+00 : f32
    %180 = vector.broadcast %cst_193 : f32 to vector<16x256xf32>
    %181 = arith.maximumf %179, %180 : vector<16x256xf32>
    %182 = arith.truncf %181 : vector<16x256xf32> to vector<16x256xbf16>
    %c1_194 = arith.constant 1 : index
    %c0_195 = arith.constant 0 : index
    %183 = vector.load %arg27[%c1_194, %c0_195] : memref<18x256xbf16, #tpu.memory_space<vmem>>, vector<16x256xbf16>
    tpu.vector_store %arg27[%c1_194, %c0_195], %182 {strides = array<i32>} : memref<18x256xbf16, #tpu.memory_space<vmem>>, vector<16x256xbf16>,
    %c0_196 = arith.constant 0 : index
    %c0_197 = arith.constant 0 : index
    %184 = vector.load %arg27[%c0_196, %c0_197] : memref<18x256xbf16, #tpu.memory_space<vmem>>, vector<16x256xbf16>
    %c0_198 = arith.constant 0 : index
    %c0_199 = arith.constant 0 : index
    %c0_200 = arith.constant 0 : index
    %185 = vector.load %arg20[%c0_198, %c0_199, %c0_200] : memref<3x256x256xbf16, #tpu.memory_space<vmem>>, vector<1x256x256xbf16>
    %186 = vector.shape_cast %185 : vector<1x256x256xbf16> to vector<256x256xbf16>
    %cst_201 = arith.constant dense<0.000000e+00> : vector<16x256xf32>
    %187 = tpu.matmul %184, %186, %cst_201 {dimension_numbers = #tpu.dot_dimension_numbers<[1], [0], [0], [1], [0, 0, 1, 1], [], []>} : vector<16x256xbf16>, vector<256x256xbf16>, vector<16x256xf32> -> vector<16x256xf32>
    %c1_202 = arith.constant 1 : index
    %c0_203 = arith.constant 0 : index
    %188 = vector.load %arg27[%c1_202, %c0_203] : memref<18x256xbf16, #tpu.memory_space<vmem>>, vector<16x256xbf16>
    %c1_204 = arith.constant 1 : index
    %c0_205 = arith.constant 0 : index
    %c0_206 = arith.constant 0 : index
    %189 = vector.load %arg20[%c1_204, %c0_205, %c0_206] : memref<3x256x256xbf16, #tpu.memory_space<vmem>>, vector<1x256x256xbf16>
    %190 = vector.shape_cast %189 : vector<1x256x256xbf16> to vector<256x256xbf16>
    %cst_207 = arith.constant dense<0.000000e+00> : vector<16x256xf32>
    %191 = tpu.matmul %188, %190, %cst_207 {dimension_numbers = #tpu.dot_dimension_numbers<[1], [0], [0], [1], [0, 0, 1, 1], [], []>} : vector<16x256xbf16>, vector<256x256xbf16>, vector<16x256xf32> -> vector<16x256xf32>
    %192 = arith.addf %187, %191 : vector<16x256xf32>
    %c2_208 = arith.constant 2 : index
    %c0_209 = arith.constant 0 : index
    %193 = vector.load %arg27[%c2_208, %c0_209] : memref<18x256xbf16, #tpu.memory_space<vmem>>, vector<16x256xbf16>
    %c2_210 = arith.constant 2 : index
    %c0_211 = arith.constant 0 : index
    %c0_212 = arith.constant 0 : index
    %194 = vector.load %arg20[%c2_210, %c0_211, %c0_212] : memref<3x256x256xbf16, #tpu.memory_space<vmem>>, vector<1x256x256xbf16>
    %195 = vector.shape_cast %194 : vector<1x256x256xbf16> to vector<256x256xbf16>
    %cst_213 = arith.constant dense<0.000000e+00> : vector<16x256xf32>
    %196 = tpu.matmul %193, %195, %cst_213 {dimension_numbers = #tpu.dot_dimension_numbers<[1], [0], [0], [1], [0, 0, 1, 1], [], []>} : vector<16x256xbf16>, vector<256x256xbf16>, vector<16x256xf32> -> vector<16x256xf32>
    %197 = arith.addf %192, %196 : vector<16x256xf32>
    %c0_214 = arith.constant 0 : index
    %c0_215 = arith.constant 0 : index
    %198 = vector.load %arg21[%c0_214, %c0_215] : memref<1x256xf32, #tpu.memory_space<vmem>>, vector<1x256xf32>
    %199 = vector.broadcast %198 : vector<1x256xf32> to vector<16x256xf32>
    %200 = arith.addf %197, %199 : vector<16x256xf32>
    %201 = arith.addf %200, %118 : vector<16x256xf32>
    %cst_216 = arith.constant 0.000000e+00 : f32
    %202 = vector.broadcast %cst_216 : f32 to vector<16x256xf32>
    %203 = arith.maximumf %201, %202 : vector<16x256xf32>
    %204 = arith.truncf %203 : vector<16x256xf32> to vector<16x256xbf16>
    %c1_217 = arith.constant 1 : index
    %c0_218 = arith.constant 0 : index
    %205 = vector.load %arg27[%c1_217, %c0_218] : memref<18x256xbf16, #tpu.memory_space<vmem>>, vector<16x256xbf16>
    tpu.vector_store %arg27[%c1_217, %c0_218], %204 {strides = array<i32>} : memref<18x256xbf16, #tpu.memory_space<vmem>>, vector<16x256xbf16>,
    %c0_219 = arith.constant 0 : index
    %c0_220 = arith.constant 0 : index
    %206 = vector.load %arg27[%c0_219, %c0_220] : memref<18x256xbf16, #tpu.memory_space<vmem>>, vector<16x256xbf16>
    %c0_221 = arith.constant 0 : index
    %c0_222 = arith.constant 0 : index
    %c0_223 = arith.constant 0 : index
    %207 = vector.load %arg22[%c0_221, %c0_222, %c0_223] : memref<3x256x128xbf16, #tpu.memory_space<vmem>>, vector<1x256x128xbf16>
    %208 = vector.shape_cast %207 : vector<1x256x128xbf16> to vector<256x128xbf16>
    %cst_224 = arith.constant dense<0.000000e+00> : vector<16x128xf32>
    %209 = tpu.matmul %206, %208, %cst_224 {dimension_numbers = #tpu.dot_dimension_numbers<[1], [0], [0], [1], [0, 0, 1, 1], [], []>} : vector<16x256xbf16>, vector<256x128xbf16>, vector<16x128xf32> -> vector<16x128xf32>
    %c1_225 = arith.constant 1 : index
    %c0_226 = arith.constant 0 : index
    %210 = vector.load %arg27[%c1_225, %c0_226] : memref<18x256xbf16, #tpu.memory_space<vmem>>, vector<16x256xbf16>
    %c1_227 = arith.constant 1 : index
    %c0_228 = arith.constant 0 : index
    %c0_229 = arith.constant 0 : index
    %211 = vector.load %arg22[%c1_227, %c0_228, %c0_229] : memref<3x256x128xbf16, #tpu.memory_space<vmem>>, vector<1x256x128xbf16>
    %212 = vector.shape_cast %211 : vector<1x256x128xbf16> to vector<256x128xbf16>
    %cst_230 = arith.constant dense<0.000000e+00> : vector<16x128xf32>
    %213 = tpu.matmul %210, %212, %cst_230 {dimension_numbers = #tpu.dot_dimension_numbers<[1], [0], [0], [1], [0, 0, 1, 1], [], []>} : vector<16x256xbf16>, vector<256x128xbf16>, vector<16x128xf32> -> vector<16x128xf32>
    %214 = arith.addf %209, %213 : vector<16x128xf32>
    %c2_231 = arith.constant 2 : index
    %c0_232 = arith.constant 0 : index
    %215 = vector.load %arg27[%c2_231, %c0_232] : memref<18x256xbf16, #tpu.memory_space<vmem>>, vector<16x256xbf16>
    %c2_233 = arith.constant 2 : index
    %c0_234 = arith.constant 0 : index
    %c0_235 = arith.constant 0 : index
    %216 = vector.load %arg22[%c2_233, %c0_234, %c0_235] : memref<3x256x128xbf16, #tpu.memory_space<vmem>>, vector<1x256x128xbf16>
    %217 = vector.shape_cast %216 : vector<1x256x128xbf16> to vector<256x128xbf16>
    %cst_236 = arith.constant dense<0.000000e+00> : vector<16x128xf32>
    %218 = tpu.matmul %215, %217, %cst_236 {dimension_numbers = #tpu.dot_dimension_numbers<[1], [0], [0], [1], [0, 0, 1, 1], [], []>} : vector<16x256xbf16>, vector<256x128xbf16>, vector<16x128xf32> -> vector<16x128xf32>
    %219 = arith.addf %214, %218 : vector<16x128xf32>
    %c0_237 = arith.constant 0 : index
    %c0_238 = arith.constant 0 : index
    %220 = vector.load %arg23[%c0_237, %c0_238] : memref<1x128xf32, #tpu.memory_space<vmem>>, vector<1x128xf32>
    %221 = vector.broadcast %220 : vector<1x128xf32> to vector<16x128xf32>
    %222 = arith.addf %219, %221 : vector<16x128xf32>
    %cst_239 = arith.constant 0.000000e+00 : f32
    %223 = vector.broadcast %cst_239 : f32 to vector<16x128xf32>
    %224 = arith.maximumf %222, %223 : vector<16x128xf32>
    %225 = arith.truncf %224 : vector<16x128xf32> to vector<16x128xbf16>
    %c0_240 = arith.constant 0 : index
    %c0_241 = arith.constant 0 : index
    %c0_242 = arith.constant 0 : index
    %226 = vector.load %arg24[%c0_240, %c0_241, %c0_242] : memref<1x128x128xbf16, #tpu.memory_space<vmem>>, vector<1x128x128xbf16>
    %227 = vector.shape_cast %226 : vector<1x128x128xbf16> to vector<128x128xbf16>
    %cst_243 = arith.constant dense<0.000000e+00> : vector<16x128xf32>
    %228 = tpu.matmul %225, %227, %cst_243 {dimension_numbers = #tpu.dot_dimension_numbers<[1], [0], [0], [1], [0, 0, 1, 1], [], []>} : vector<16x128xbf16>, vector<128x128xbf16>, vector<16x128xf32> -> vector<16x128xf32>
    %c0_244 = arith.constant 0 : index
    %c0_245 = arith.constant 0 : index
    %229 = vector.load %arg25[%c0_244, %c0_245] : memref<1x128xf32, #tpu.memory_space<vmem>>, vector<1x128xf32>
    %230 = vector.broadcast %229 : vector<1x128xf32> to vector<16x128xf32>
    %231 = arith.addf %228, %230 : vector<16x128xf32>
    %c0_246 = arith.constant 0 : index
    %c0_247 = arith.constant 0 : index
    %c0_248 = arith.constant 0 : index
    %232 = vector.load %arg26[%c0_246, %c0_247, %c0_248] : memref<1x16x128xf32, #tpu.memory_space<vmem>>, vector<1x16x128xf32>
    %233 = vector.shape_cast %232 : vector<1x16x128xf32> to vector<16x128xf32>
    %234 = vector.shape_cast %231 : vector<16x128xf32> to vector<1x16x128xf32>
    tpu.vector_store %arg26[%c0_246, %c0_247, %c0_248], %234 {strides = array<i32>} : memref<1x16x128xf32, #tpu.memory_space<vmem>>, vector<1x16x128xf32>,
    return
  }
  func.func @transform_0(%arg0: i32) -> (i32, i32, i32) {
    %c0_i32 = arith.constant 0 : i32
    %c0_i32_0 = arith.constant 0 : i32
    %c0_i32_1 = arith.constant 0 : i32
    return %arg0, %c0_i32, %c0_i32_0 : i32, i32, i32
  }
  func.func @transform_1(%arg0: i32) -> (i32, i32, i32) {
    %c0_i32 = arith.constant 0 : i32
    %c0_i32_0 = arith.constant 0 : i32
    %c0_i32_1 = arith.constant 0 : i32
    %c0_i32_2 = arith.constant 0 : i32
    return %c0_i32, %c0_i32_0, %c0_i32_1 : i32, i32, i32
  }
  func.func @transform_2(%arg0: i32) -> (i32, i32) {
    %c0_i32 = arith.constant 0 : i32
    %c0_i32_0 = arith.constant 0 : i32
    %c0_i32_1 = arith.constant 0 : i32
    return %c0_i32, %c0_i32_0 : i32, i32
  }
  func.func @transform_3(%arg0: i32) -> (i32, i32, i32) {
    %c0_i32 = arith.constant 0 : i32
    %c0_i32_0 = arith.constant 0 : i32
    %c0_i32_1 = arith.constant 0 : i32
    %c0_i32_2 = arith.constant 0 : i32
    return %c0_i32, %c0_i32_0, %c0_i32_1 : i32, i32, i32
  }
  func.func @transform_4(%arg0: i32) -> (i32, i32) {
    %c0_i32 = arith.constant 0 : i32
    %c0_i32_0 = arith.constant 0 : i32
    %c0_i32_1 = arith.constant 0 : i32
    return %c0_i32, %c0_i32_0 : i32, i32
  }
  func.func @transform_5(%arg0: i32) -> (i32, i32, i32) {
    %c0_i32 = arith.constant 0 : i32
    %c0_i32_0 = arith.constant 0 : i32
    %c0_i32_1 = arith.constant 0 : i32
    %c0_i32_2 = arith.constant 0 : i32
    return %c0_i32, %c0_i32_0, %c0_i32_1 : i32, i32, i32
  }
  func.func @transform_6(%arg0: i32) -> (i32, i32) {
    %c0_i32 = arith.constant 0 : i32
    %c0_i32_0 = arith.constant 0 : i32
    %c0_i32_1 = arith.constant 0 : i32
    return %c0_i32, %c0_i32_0 : i32, i32
  }
  func.func @transform_7(%arg0: i32) -> (i32, i32, i32) {
    %c0_i32 = arith.constant 0 : i32
    %c0_i32_0 = arith.constant 0 : i32
    %c0_i32_1 = arith.constant 0 : i32
    %c0_i32_2 = arith.constant 0 : i32
    return %c0_i32, %c0_i32_0, %c0_i32_1 : i32, i32, i32
  }
  func.func @transform_8(%arg0: i32) -> (i32, i32) {
    %c0_i32 = arith.constant 0 : i32
    %c0_i32_0 = arith.constant 0 : i32
    %c0_i32_1 = arith.constant 0 : i32
    return %c0_i32, %c0_i32_0 : i32, i32
  }
  func.func @transform_9(%arg0: i32) -> (i32, i32, i32) {
    %c0_i32 = arith.constant 0 : i32
    %c0_i32_0 = arith.constant 0 : i32
    %c0_i32_1 = arith.constant 0 : i32
    %c0_i32_2 = arith.constant 0 : i32
    return %c0_i32, %c0_i32_0, %c0_i32_1 : i32, i32, i32
  }
  func.func @transform_10(%arg0: i32) -> (i32, i32) {
    %c0_i32 = arith.constant 0 : i32
    %c0_i32_0 = arith.constant 0 : i32
    %c0_i32_1 = arith.constant 0 : i32
    return %c0_i32, %c0_i32_0 : i32, i32
  }
  func.func @transform_11(%arg0: i32) -> (i32, i32, i32) {
    %c0_i32 = arith.constant 0 : i32
    %c0_i32_0 = arith.constant 0 : i32
    %c0_i32_1 = arith.constant 0 : i32
    %c0_i32_2 = arith.constant 0 : i32
    return %c0_i32, %c0_i32_0, %c0_i32_1 : i32, i32, i32
  }
  func.func @transform_12(%arg0: i32) -> (i32, i32) {
    %c0_i32 = arith.constant 0 : i32
    %c0_i32_0 = arith.constant 0 : i32
    %c0_i32_1 = arith.constant 0 : i32
    return %c0_i32, %c0_i32_0 : i32, i32
  }
  func.func @transform_13(%arg0: i32) -> (i32, i32, i32) {
    %c0_i32 = arith.constant 0 : i32
    %c0_i32_0 = arith.constant 0 : i32
    %c0_i32_1 = arith.constant 0 : i32
    %c0_i32_2 = arith.constant 0 : i32
    return %c0_i32, %c0_i32_0, %c0_i32_1 : i32, i32, i32
  }
  func.func @transform_14(%arg0: i32) -> (i32, i32) {
    %c0_i32 = arith.constant 0 : i32
    %c0_i32_0 = arith.constant 0 : i32
    %c0_i32_1 = arith.constant 0 : i32
    return %c0_i32, %c0_i32_0 : i32, i32
  }
  func.func @transform_15(%arg0: i32) -> (i32, i32, i32) {
    %c0_i32 = arith.constant 0 : i32
    %c0_i32_0 = arith.constant 0 : i32
    %c0_i32_1 = arith.constant 0 : i32
    %c0_i32_2 = arith.constant 0 : i32
    return %c0_i32, %c0_i32_0, %c0_i32_1 : i32, i32, i32
  }
  func.func @transform_16(%arg0: i32) -> (i32, i32) {
    %c0_i32 = arith.constant 0 : i32
    %c0_i32_0 = arith.constant 0 : i32
    %c0_i32_1 = arith.constant 0 : i32
    return %c0_i32, %c0_i32_0 : i32, i32
  }
  func.func @transform_17(%arg0: i32) -> (i32, i32, i32) {
    %c0_i32 = arith.constant 0 : i32
    %c0_i32_0 = arith.constant 0 : i32
    %c0_i32_1 = arith.constant 0 : i32
    %c0_i32_2 = arith.constant 0 : i32
    return %c0_i32, %c0_i32_0, %c0_i32_1 : i32, i32, i32
  }
  func.func @transform_18(%arg0: i32) -> (i32, i32) {
    %c0_i32 = arith.constant 0 : i32
    %c0_i32_0 = arith.constant 0 : i32
    %c0_i32_1 = arith.constant 0 : i32
    return %c0_i32, %c0_i32_0 : i32, i32
  }
  func.func @transform_19(%arg0: i32) -> (i32, i32, i32) {
    %c0_i32 = arith.constant 0 : i32
    %c0_i32_0 = arith.constant 0 : i32
    %c0_i32_1 = arith.constant 0 : i32
    %c0_i32_2 = arith.constant 0 : i32
    return %c0_i32, %c0_i32_0, %c0_i32_1 : i32, i32, i32
  }
  func.func @transform_20(%arg0: i32) -> (i32, i32) {
    %c0_i32 = arith.constant 0 : i32
    %c0_i32_0 = arith.constant 0 : i32
    %c0_i32_1 = arith.constant 0 : i32
    return %c0_i32, %c0_i32_0 : i32, i32
  }
  func.func @transform_21(%arg0: i32) -> (i32, i32, i32) {
    %c0_i32 = arith.constant 0 : i32
    %c0_i32_0 = arith.constant 0 : i32
    %c0_i32_1 = arith.constant 0 : i32
    %c0_i32_2 = arith.constant 0 : i32
    return %c0_i32, %c0_i32_0, %c0_i32_1 : i32, i32, i32
  }
  func.func @transform_22(%arg0: i32) -> (i32, i32) {
    %c0_i32 = arith.constant 0 : i32
    %c0_i32_0 = arith.constant 0 : i32
    %c0_i32_1 = arith.constant 0 : i32
    return %c0_i32, %c0_i32_0 : i32, i32
  }
  func.func @transform_23(%arg0: i32) -> (i32, i32, i32) {
    %c0_i32 = arith.constant 0 : i32
    %c0_i32_0 = arith.constant 0 : i32
    %c0_i32_1 = arith.constant 0 : i32
    %c0_i32_2 = arith.constant 0 : i32
    return %c0_i32, %c0_i32_0, %c0_i32_1 : i32, i32, i32
  }
  func.func @transform_24(%arg0: i32) -> (i32, i32) {
    %c0_i32 = arith.constant 0 : i32
    %c0_i32_0 = arith.constant 0 : i32
    %c0_i32_1 = arith.constant 0 : i32
    return %c0_i32, %c0_i32_0 : i32, i32
  }
  func.func @transform_25(%arg0: i32) -> (i32, i32, i32) {
    %c0_i32 = arith.constant 0 : i32
    %c0_i32_0 = arith.constant 0 : i32
    %c0_i32_1 = arith.constant 0 : i32
    return %arg0, %c0_i32, %c0_i32_0 : i32, i32, i32
  }
}

</mosaic_0001>

<llo_original>
// kernel: tile.51
$region0: #{tile.51}
  #allocation0 [shape = 's32[1]{0}', space=sflag, size = 0x4, scoped, tag = 'scoped memory for tile.51']
  %s0 = inlined_call_operand.vmem [shape: f32[8], index: 0, kind: input, shape index: {}]
  %s1 = inlined_call_operand.vmem [shape: f32[16,8], index: 1, kind: output, shape index: {}]
  // Predicated region
  $region2: #{tile.51} parent=0 // pred_check
    _
  $region3: #{tile.51} parent=0 // pred_check_branch
    %3 = sbr.rel (0) target = $region5
  $region4: #{tile.51} parent=0 // pred_region
    _
  $region5: #{tile.51} parent=0 // pred_fallthru
    _
  %v4 = vld [vmem:[%s0] ss:$0 sm:$0xff]
  %5 = vst [vmem:[%s1] sm:$0xff] %v4
  %s6 = scalar_lea.vmem %s1, 8
  %7 = vst [vmem:[%s6] sm:$0xff] %v4

// kernel: tile.55
$region0: #{tile.55}
  #allocation0 [shape = 's32[1]{0}', space=sflag, size = 0x4, scoped, tag = 'scoped memory for tile.55']
  %s0 = inlined_call_operand.vmem [shape: f32[16], index: 0, kind: input, shape index: {}]
  %s1 = inlined_call_operand.vmem [shape: f32[16,16], index: 1, kind: output, shape index: {}]
  // Predicated region
  $region2: #{tile.55} parent=0 // pred_check
    _
  $region3: #{tile.55} parent=0 // pred_check_branch
    %3 = sbr.rel (0) target = $region5
  $region4: #{tile.55} parent=0 // pred_region
    _
  $region5: #{tile.55} parent=0 // pred_fallthru
    _
  %v4 = vld [vmem:[%s0] ss:$0 sm:$0xff]
  %5 = vst [vmem:[%s1] sm:$0xff] %v4
  %s6 = scalar_lea.vmem %s1, 8
  %7 = vst [vmem:[%s6] sm:$0xff] %v4

// kernel: tile.52
$region0: #{tile.52}
  %s0 = inlined_call_operand.vmem [shape: f32[16,8], index: 0, kind: input, shape index: {}]
  %s1 = inlined_call_operand.vmem [shape: f32[1,128], index: 1, kind: output, shape index: {}]
  $region1: #{tile.52} parent=0
    #allocation0 [shape = 'u8[4096]{0}', space=vmem, size = 0x1000, scoped, tag = 'scoped mem for output reshape']
    %v2 = vld [vmem:[%s0] sm:$0x1]
    %vm3 = vcmask 64512
    %4 = vst.msk [vmem:[#allocation0] sm:$0x1] %vm3, %v2
    %s5 = scalar_lea.vmem %s0, 15
    %v6 = vld [vmem:[%s5] sm:$0x1]
    %7 = vrot.lane.b32.xlu0 %v6, 120
    %v8 = vpop.permute.xlu0 %7
    %vm9 = vcmask 1048512
    %10 = vst.msk [vmem:[#allocation0] sm:$0x1] %vm9, %v8
    %s11 = scalar_lea.vmem %s0, 14
    %v12 = vld [vmem:[%s11] sm:$0x1]
    %13 = vrot.lane.b32.xlu0 %v12, 112
    %v14 = vpop.permute.xlu0 %13
    %vm15 = vcmask 982912
    %16 = vst.msk [vmem:[#allocation0] sm:$0x1] %vm15, %v14
    %s17 = scalar_lea.vmem %s0, 13
    %v18 = vld [vmem:[%s17] sm:$0x1]
    %19 = vrot.lane.b32.xlu0 %v18, 104
    %v20 = vpop.permute.xlu0 %19
    %vm21 = vcmask 917312
    %22 = vst.msk [vmem:[#allocation0] sm:$0x1] %vm21, %v20
    %s23 = scalar_lea.vmem %s0, 12
    %v24 = vld [vmem:[%s23] sm:$0x1]
    %25 = vrot.lane.b32.xlu0 %v24, 96
    %v26 = vpop.permute.xlu0 %25
    %vm27 = vcmask 851712
    %28 = vst.msk [vmem:[#allocation0] sm:$0x1] %vm27, %v26
    %s29 = scalar_lea.vmem %s0, 11
    %v30 = vld [vmem:[%s29] sm:$0x1]
    %31 = vrot.lane.b32.xlu0 %v30, 88
    %v32 = vpop.permute.xlu0 %31
    %vm33 = vcmask 786112
    %34 = vst.msk [vmem:[#allocation0] sm:$0x1] %vm33, %v32
    %s35 = scalar_lea.vmem %s0, 10
    %v36 = vld [vmem:[%s35] sm:$0x1]
    %37 = vrot.lane.b32.xlu0 %v36, 80
    %v38 = vpop.permute.xlu0 %37
    %vm39 = vcmask 720512
    %40 = vst.msk [vmem:[#allocation0] sm:$0x1] %vm39, %v38
    %s41 = scalar_lea.vmem %s0, 9
    %v42 = vld [vmem:[%s41] sm:$0x1]
    %43 = vrot.lane.b32.xlu0 %v42, 72
    %v44 = vpop.permute.xlu0 %43
    %vm45 = vcmask 654912
    %46 = vst.msk [vmem:[#allocation0] sm:$0x1] %vm45, %v44
    %s47 = scalar_lea.vmem %s0, 8
    %v48 = vld [vmem:[%s47] sm:$0x1]
    %49 = vrot.lane.b32.xlu0 %v48, 64
    %v50 = vpop.permute.xlu0 %49
    %vm51 = vcmask 589312
    %52 = vst.msk [vmem:[#allocation0] sm:$0x1] %vm51, %v50
    %s53 = scalar_lea.vmem %s0, 7
    %v54 = vld [vmem:[%s53] sm:$0x1]
    %55 = vrot.lane.b32.xlu0 %v54, 56
    %v56 = vpop.permute.xlu0 %55
    %vm57 = vcmask 523712
    %58 = vst.msk [vmem:[#allocation0] sm:$0x1] %vm57, %v56
    %s59 = scalar_lea.vmem %s0, 6
    %v60 = vld [vmem:[%s59] sm:$0x1]
    %61 = vrot.lane.b32.xlu0 %v60, 48
    %v62 = vpop.permute.xlu0 %61
    %vm63 = vcmask 458112
    %64 = vst.msk [vmem:[#allocation0] sm:$0x1] %vm63, %v62
    %s65 = scalar_lea.vmem %s0, 5
    %v66 = vld [vmem:[%s65] sm:$0x1]
    %67 = vrot.lane.b32.xlu0 %v66, 40
    %v68 = vpop.permute.xlu0 %67
    %vm69 = vcmask 392512
    %70 = vst.msk [vmem:[#allocation0] sm:$0x1] %vm69, %v68
    %s71 = scalar_lea.vmem %s0, 4
    %v72 = vld [vmem:[%s71] sm:$0x1]
    %73 = vrot.lane.b32.xlu0 %v72, 32
    %v74 = vpop.permute.xlu0 %73
    %vm75 = vcmask 326912
    %76 = vst.msk [vmem:[#allocation0] sm:$0x1] %vm75, %v74
    %s77 = scalar_lea.vmem %s0, 3
    %v78 = vld [vmem:[%s77] sm:$0x1]
    %79 = vrot.lane.b32.xlu0 %v78, 24
    %v80 = vpop.permute.xlu0 %79
    %vm81 = vcmask 261312
    %82 = vst.msk [vmem:[#allocation0] sm:$0x1] %vm81, %v80
    %s83 = scalar_lea.vmem %s0, 2
    %v84 = vld [vmem:[%s83] sm:$0x1]
    %85 = vrot.lane.b32.xlu0 %v84, 16
    %v86 = vpop.permute.xlu0 %85
    %vm87 = vcmask 195712
    %88 = vst.msk [vmem:[#allocation0] sm:$0x1] %vm87, %v86
    %s89 = scalar_lea.vmem %s0, 1
    %v90 = vld [vmem:[%s89] sm:$0x1]
    %91 = vrot.lane.b32.xlu0 %v90, 8
    %v92 = vpop.permute.xlu0 %91
    %vm93 = vcmask 130112
    %94 = vst.msk [vmem:[#allocation0] sm:$0x1] %vm93, %v92
    %s96 = sshll.u32 1, 1
    %s97 = ssub.s32 %s96, 1
    %v99 = vld [vmem:[#allocation0] sm:%s97]
    %s100 = sshll.u32 1, 1
    %s101 = ssub.s32 %s100, 1
    %102 = vst [vmem:[%s1] sm:%s101] %v99

// kernel: tile.56
$region0: #{tile.56}
  %s0 = inlined_call_operand.vmem [shape: f32[16,16], index: 0, kind: input, shape index: {}]
  %s1 = inlined_call_operand.vmem [shape: f32[1,256], index: 1, kind: output, shape index: {}]
  $region1: #{tile.56} parent=0
    #allocation0 [shape = 'u8[8192]{0}', space=vmem, size = 0x2000, scoped, tag = 'scoped mem for output reshape']
    %s2 = smov 3
    %v3 = vld [vmem:[%s0] ss:$8 sm:%s2]
    %vm4 = vcmask 130048
    %5 = vst.msk [vmem:[#allocation0] ss:$8 sm:$0x3] %vm4, %v3
    %s6 = scalar_lea.vmem %s0, 7
    %s7 = smov 3
    %v8 = vld [vmem:[%s6] ss:$8 sm:%s7]
    %9 = vrot.lane.b32.xlu0 %v8, 112
    %v10 = vpop.permute.xlu0 %9
    %vm11 = vcmask 1048448
    %12 = vst.msk [vmem:[#allocation0] ss:$8 sm:$0x3] %vm11, %v10
    %s13 = scalar_lea.vmem %s0, 6
    %s14 = smov 3
    %v15 = vld [vmem:[%s13] ss:$8 sm:%s14]
    %16 = vrot.lane.b32.xlu0 %v15, 96
    %v17 = vpop.permute.xlu0 %16
    %vm18 = vcmask 917248
    %19 = vst.msk [vmem:[#allocation0] ss:$8 sm:$0x3] %vm18, %v17
    %s20 = scalar_lea.vmem %s0, 5
    %s21 = smov 3
    %v22 = vld [vmem:[%s20] ss:$8 sm:%s21]
    %23 = vrot.lane.b32.xlu0 %v22, 80
    %v24 = vpop.permute.xlu0 %23
    %vm25 = vcmask 786048
    %26 = vst.msk [vmem:[#allocation0] ss:$8 sm:$0x3] %vm25, %v24
    %s27 = scalar_lea.vmem %s0, 4
    %s28 = smov 3
    %v29 = vld [vmem:[%s27] ss:$8 sm:%s28]
    %30 = vrot.lane.b32.xlu0 %v29, 64
    %v31 = vpop.permute.xlu0 %30
    %vm32 = vcmask 654848
    %33 = vst.msk [vmem:[#allocation0] ss:$8 sm:$0x3] %vm32, %v31
    %s34 = scalar_lea.vmem %s0, 3
    %s35 = smov 3
    %v36 = vld [vmem:[%s34] ss:$8 sm:%s35]
    %37 = vrot.lane.b32.xlu0 %v36, 48
    %v38 = vpop.permute.xlu0 %37
    %vm39 = vcmask 523648
    %40 = vst.msk [vmem:[#allocation0] ss:$8 sm:$0x3] %vm39, %v38
    %s41 = scalar_lea.vmem %s0, 2
    %s42 = smov 3
    %v43 = vld [vmem:[%s41] ss:$8 sm:%s42]
    %44 = vrot.lane.b32.xlu0 %v43, 32
    %v45 = vpop.permute.xlu0 %44
    %vm46 = vcmask 392448
    %47 = vst.msk [vmem:[#allocation0] ss:$8 sm:$0x3] %vm46, %v45
    %s48 = scalar_lea.vmem %s0, 1
    %s49 = smov 3
    %v50 = vld [vmem:[%s48] ss:$8 sm:%s49]
    %51 = vrot.lane.b32.xlu0 %v50, 16
    %v52 = vpop.permute.xlu0 %51
    %vm53 = vcmask 261248
    %54 = vst.msk [vmem:[#allocation0] ss:$8 sm:$0x3] %vm53, %v52
    %s56 = sshll.u32 1, 1
    %s57 = ssub.s32 %s56, 1
    %v59 = vld [vmem:[#allocation0] sm:%s57]
    %s60 = sshll.u32 1, 1
    %s61 = ssub.s32 %s60, 1
    %62 = vst [vmem:[%s1] sm:%s61] %v59
    %s63 = scalar_lea.vmem [#allocation0], 8
    %v64 = vld [vmem:[%s63] sm:%s57]
    %s65 = sshll.u32 1, 1
    %s66 = ssub.s32 %s65, 1
    %s67 = scalar_lea.vmem %s1, 1
    %68 = vst [vmem:[%s67] sm:%s66] %v64

// kernel: _lambda_.1
$region0: #{_lambda_.1}
  #allocation0 [shape = 'u32[]', space=smem, size = 0x4, offset = 0x4, fixed_abs, tag = 'smem constant byte address 0x4 - core index']
  #allocation1 [shape = 'u32[144,128]{1,0:T(1,128)}', space=vmem, size = 0x12000, scoped, tag = 'internal scratch']
  #allocation2 [shape = 'bf16[18,256]{1,0:T(8,128)(2,1)}', space=vmem, size = 0x3000, scoped, tag = 'scratch operand']
  %s0 = inlined_call_operand.vmem [shape: f32[2,16,64], index: 0, kind: input, shape index: {}]
  %s1 = inlined_call_operand.hbm [shape: bf16[3,64,128], index: 1, kind: input, shape index: {}]
  %s2 = inlined_call_operand.vmem [shape: f32[1,128], index: 2, kind: input, shape index: {}]
  %s3 = inlined_call_operand.hbm [shape: bf16[3,128,256], index: 3, kind: input, shape index: {}]
  %s4 = inlined_call_operand.vmem [shape: f32[1,256], index: 4, kind: input, shape index: {}]
  %s5 = inlined_call_operand.hbm [shape: bf16[3,256,256], index: 5, kind: input, shape index: {}]
  %s6 = inlined_call_operand.vmem [shape: f32[1,256], index: 6, kind: input, shape index: {}]
  %s7 = inlined_call_operand.hbm [shape: bf16[3,256,256], index: 7, kind: input, shape index: {}]
  %s8 = inlined_call_operand.vmem [shape: f32[1,256], index: 8, kind: input, shape index: {}]
  %s9 = inlined_call_operand.hbm [shape: bf16[1,128,256], index: 9, kind: input, shape index: {}]
  %s10 = inlined_call_operand.vmem [shape: f32[1,256], index: 10, kind: input, shape index: {}]
  %s11 = inlined_call_operand.hbm [shape: bf16[3,256,256], index: 11, kind: input, shape index: {}]
  %s12 = inlined_call_operand.vmem [shape: f32[1,256], index: 12, kind: input, shape index: {}]
  %s13 = inlined_call_operand.hbm [shape: bf16[3,256,256], index: 13, kind: input, shape index: {}]
  %s14 = inlined_call_operand.vmem [shape: f32[1,256], index: 14, kind: input, shape index: {}]
  %s15 = inlined_call_operand.hbm [shape: bf16[3,256,256], index: 15, kind: input, shape index: {}]
  %s16 = inlined_call_operand.vmem [shape: f32[1,256], index: 16, kind: input, shape index: {}]
  %s17 = inlined_call_operand.hbm [shape: bf16[3,256,256], index: 17, kind: input, shape index: {}]
  %s18 = inlined_call_operand.vmem [shape: f32[1,256], index: 18, kind: input, shape index: {}]
  %s19 = inlined_call_operand.vmem [shape: bf16[3,256,256], index: 19, kind: input, shape index: {}]
  %s20 = inlined_call_operand.vmem [shape: f32[1,256], index: 20, kind: input, shape index: {}]
  %s21 = inlined_call_operand.hbm [shape: bf16[3,256,128], index: 21, kind: input, shape index: {}]
  %s22 = inlined_call_operand.vmem [shape: f32[1,128], index: 22, kind: input, shape index: {}]
  %s23 = inlined_call_operand.vmem [shape: bf16[1,128,128], index: 23, kind: input, shape index: {}]
  %s24 = inlined_call_operand.vmem [shape: f32[1,128], index: 24, kind: input, shape index: {}]
  %s25 = inlined_call_operand.vmem [shape: f32[2,16,128], index: 25, kind: output, shape index: {}]
  %s26 = sld [smem:[#allocation0]]
  $region173: #{_lambda_.1} parent=0
    _
  %s28 = ssub.s32 1, %s26
  %s29 = scalar_select 0, %s28, %s26
  $region1: #{_lambda_.1} parent=0
    #allocation3 [shape = 'u8[49152]{0}', space=vmem, size = 0xc000, scoped, tag = 'input window, operand 1, single buffered']
    #allocation4 [shape = 's32[2]{0}', space=sflag, size = 0x8, scoped, tag = 'scoped memory for _lambda_.1']
    #allocation5 [shape = 'u8[196608]{0}', space=vmem, size = 0x30000, scoped, tag = 'input window, operand 3, single buffered']
    #allocation6 [shape = 's32[1]{0}', space=sflag, size = 0x4, scoped, tag = 'scoped memory for _lambda_.1']
    #allocation7 [shape = 'u8[393216]{0}', space=vmem, size = 0x60000, scoped, tag = 'input window, operand 5, single buffered']
    #allocation8 [shape = 'u8[393216]{0}', space=vmem, size = 0x60000, scoped, tag = 'input window, operand 7, single buffered']
    #allocation9 [shape = 's32[1]{0}', space=sflag, size = 0x4, scoped, tag = 'scoped memory for _lambda_.1']
    #allocation10 [shape = 'u8[65536]{0}', space=vmem, size = 0x10000, scoped, tag = 'input window, operand 9, single buffered']
    #allocation11 [shape = 'u8[393216]{0}', space=vmem, size = 0x60000, scoped, tag = 'input window, operand 11, single buffered']
    #allocation12 [shape = 's32[1]{0}', space=sflag, size = 0x4, scoped, tag = 'scoped memory for _lambda_.1']
    #allocation13 [shape = 'u8[393216]{0}', space=vmem, size = 0x60000, scoped, tag = 'input window, operand 13, single buffered']
    #allocation14 [shape = 'u8[393216]{0}', space=vmem, size = 0x60000, scoped, tag = 'input window, operand 15, single buffered']
    #allocation15 [shape = 's32[1]{0}', space=sflag, size = 0x4, scoped, tag = 'scoped memory for _lambda_.1']
    #allocation16 [shape = 'u8[393216]{0}', space=vmem, size = 0x60000, scoped, tag = 'input window, operand 17, single buffered']
    #allocation17 [shape = 'u8[196608]{0}', space=vmem, size = 0x30000, scoped, tag = 'input window, operand 21, single buffered']
    #allocation18 [shape = 's32[1]{0}', space=sflag, size = 0x4, scoped, tag = 'scoped memory for _lambda_.1']
    %30 = vsyncpa [#allocation4], 0
    %31 = vsyncpa [#allocation6], 0
    %32 = vsyncpa [#allocation9], 0
    %33 = vsyncpa [#allocation12], 0
    %34 = vsyncpa [#allocation15], 0
    %35 = vsyncpa [#allocation18], 0
    loop: start=0, step=1, limit=4
    $region2: #{_lambda_.1} parent=1 // loop_pre_header
      _
    $region3: #{_lambda_.1} parent=1 // loop_header
      %s37 = sphi 0, %s41
      %p38 = scmp.ge.s32.totalorder %s37, 4
      %s47 = sphi 0, %s49
      %s50 = sphi 0, %s47
      %s51 = sphi 0, %s50
      %s67 = sphi 0, %s51
      %s71 = sphi 0, %s71
      %s73 = sphi 0, %s71
      %s74 = sphi 0, %s73
      %s88 = sphi 0, %s74
      %s92 = sphi 0, %s92
      %s94 = sphi 0, %s92
      %s95 = sphi 0, %s94
      %s109 = sphi 0, %s95
      %s113 = sphi 0, %s113
      %s115 = sphi 0, %s113
      %s116 = sphi 0, %s115
      %s130 = sphi 0, %s116
      %s134 = sphi 0, %s134
      %s136 = sphi 0, %s134
      %s137 = sphi 0, %s136
      %s151 = sphi 0, %s137
      %s155 = sphi 0, %s155
      %s157 = sphi 0, %s155
      %s158 = sphi 0, %s157
      %s172 = sphi 0, %s158
      %s176 = sphi 0, %s176
      %s178 = sphi 0, %s176
      %s179 = sphi 0, %s178
      %s193 = sphi 0, %s179
      %s197 = sphi 0, %s197
      %s199 = sphi 0, %s197
      %s200 = sphi 0, %s199
      %s214 = sphi 0, %s200
      %s218 = sphi 0, %s218
      %s220 = sphi 0, %s218
      %s221 = sphi 0, %s220
      %s235 = sphi 0, %s221
      %s239 = sphi 0, %s239
      %s241 = sphi 0, %s239
      %s242 = sphi 0, %s241
      %s256 = sphi 0, %s242
      %s260 = sphi 0, %s260
      %s262 = sphi 0, %s260
      %s263 = sphi 0, %s262
      %s277 = sphi 0, %s263
      %s281 = sphi 0, %s281
      %s283 = sphi 0, %s281
      %s284 = sphi 0, %s283
      %s298 = sphi 0, %s284
      %s302 = sphi 0, %s302
      %s304 = sphi 0, %s302
      %s305 = sphi 0, %s304
      %s319 = sphi 0, %s305
      %s323 = sphi 0, %s323
      %s325 = sphi 0, %s323
      %s326 = sphi 0, %s325
      %s340 = sphi 0, %s326
      %s344 = sphi 0, %s344
      %s346 = sphi 0, %s344
      %s347 = sphi 0, %s346
      %s361 = sphi 0, %s347
      %s365 = sphi 0, %s365
      %s367 = sphi 0, %s365
      %s368 = sphi 0, %s367
      %s382 = sphi 0, %s368
      %s386 = sphi 0, %s386
      %s388 = sphi 0, %s386
      %s389 = sphi 0, %s388
      %s403 = sphi 0, %s389
      %s407 = sphi 0, %s407
      %s409 = sphi 0, %s407
      %s410 = sphi 0, %s409
      %s424 = sphi 0, %s410
      %s428 = sphi 0, %s428
      %s430 = sphi 0, %s428
      %s431 = sphi 0, %s430
      %s445 = sphi 0, %s431
      %s449 = sphi 0, %s449
      %s451 = sphi 0, %s449
      %s452 = sphi 0, %s451
      %s466 = sphi 0, %s452
      %s470 = sphi 0, %s470
      %s472 = sphi 0, %s470
      %s473 = sphi 0, %s472
      %s487 = sphi 0, %s473
      %s491 = sphi 0, %s491
      %s493 = sphi 0, %s491
      %s494 = sphi 0, %s493
      %s508 = sphi 0, %s494
      %s512 = sphi 0, %s512
      %s514 = sphi 0, %s512
      %s515 = sphi 0, %s514
      %s529 = sphi 0, %s515
      %s533 = sphi 0, %s533
      %s535 = sphi 0, %s533
      %s536 = sphi 0, %s535
      %s550 = sphi 0, %s536
      %s554 = sphi 0, %s554
      %s556 = sphi 0, %s554
      %s557 = sphi 0, %s556
      %s571 = sphi 0, %s557
      %s577 = sphi 0, %s579
      %s580 = sphi 0, %s577
      %s581 = sphi 0, %s580
      %s597 = sphi 0, %s581
    $region4: #{_lambda_.1} parent=1 // loop_header_branch
      %40 = sbr.rel (%p38) target = $region8
    $region5: #{_lambda_.1} parent=1 // loop_body
      %s42 = ssub.s32 %s37, 1
      %s43 = ssub.s32 %s37, 2
      %s44 = sadd.s32 %s37, 1
      %s45 = ssub.s32 %s37, %s44
      %p46 = scmp.eq.s32.totalorder %s45, 0
      %s48 = sadd.s32 %s47, 1
      %s49 = scalar_select %p46, %s47, %s48
      %p52 = pneg %p46
      %p53 = scmp.eq.s32.totalorder %s37, 1
      %p54 = por %p52, %p53
      %p55 = scmp.ne.s32.totalorder %s47, %s50
      %p56 = scmp.eq.s32.totalorder %s37, 0
      %p57 = por %p55, %p56
      %p58 = scmp.ne.s32.totalorder %s47, %s50
      %p59 = scmp.eq.s32.totalorder %s42, 1
      %p60 = por %p58, %p59
      %p61 = scmp.ne.s32.totalorder %s50, %s51
      %p62 = scmp.eq.s32.totalorder %s42, 0
      %p63 = por %p61, %p62
      %p64 = scmp.ne.s32.totalorder %s50, %s51
      %p65 = scmp.eq.s32.totalorder %s43, 1
      %p66 = por %p64, %p65
      %p68 = scmp.ne.s32.totalorder %s51, %s67
      %p69 = scmp.eq.s32.totalorder %s43, 0
      %p70 = por %p68, %p69
      %s72 = sadd.s32 %s71, 1
      %p75 = scmp.eq.s32.totalorder %s37, 1
      %p76 = scmp.ne.s32.totalorder %s71, %s73
      %p77 = scmp.eq.s32.totalorder %s37, 0
      %p78 = por %p76, %p77
      %p79 = scmp.ne.s32.totalorder %s71, %s73
      %p80 = scmp.eq.s32.totalorder %s42, 1
      %p81 = por %p79, %p80
      %p82 = scmp.ne.s32.totalorder %s73, %s74
      %p83 = scmp.eq.s32.totalorder %s42, 0
      %p84 = por %p82, %p83
      %p85 = scmp.ne.s32.totalorder %s73, %s74
      %p86 = scmp.eq.s32.totalorder %s43, 1
      %p87 = por %p85, %p86
      %p89 = scmp.ne.s32.totalorder %s74, %s88
      %p90 = scmp.eq.s32.totalorder %s43, 0
      %p91 = por %p89, %p90
      %s93 = sadd.s32 %s92, 1
      %p96 = scmp.eq.s32.totalorder %s37, 1
      %p97 = scmp.ne.s32.totalorder %s92, %s94
      %p98 = scmp.eq.s32.totalorder %s37, 0
      %p99 = por %p97, %p98
      %p100 = scmp.ne.s32.totalorder %s92, %s94
      %p101 = scmp.eq.s32.totalorder %s42, 1
      %p102 = por %p100, %p101
      %p103 = scmp.ne.s32.totalorder %s94, %s95
      %p104 = scmp.eq.s32.totalorder %s42, 0
      %p105 = por %p103, %p104
      %p106 = scmp.ne.s32.totalorder %s94, %s95
      %p107 = scmp.eq.s32.totalorder %s43, 1
      %p108 = por %p106, %p107
      %p110 = scmp.ne.s32.totalorder %s95, %s109
      %p111 = scmp.eq.s32.totalorder %s43, 0
      %p112 = por %p110, %p111
      %s114 = sadd.s32 %s113, 1
      %p117 = scmp.eq.s32.totalorder %s37, 1
      %p118 = scmp.ne.s32.totalorder %s113, %s115
      %p119 = scmp.eq.s32.totalorder %s37, 0
      %p120 = por %p118, %p119
      %p121 = scmp.ne.s32.totalorder %s113, %s115
      %p122 = scmp.eq.s32.totalorder %s42, 1
      %p123 = por %p121, %p122
      %p124 = scmp.ne.s32.totalorder %s115, %s116
      %p125 = scmp.eq.s32.totalorder %s42, 0
      %p126 = por %p124, %p125
      %p127 = scmp.ne.s32.totalorder %s115, %s116
      %p128 = scmp.eq.s32.totalorder %s43, 1
      %p129 = por %p127, %p128
      %p131 = scmp.ne.s32.totalorder %s116, %s130
      %p132 = scmp.eq.s32.totalorder %s43, 0
      %p133 = por %p131, %p132
      %s135 = sadd.s32 %s134, 1
      %p138 = scmp.eq.s32.totalorder %s37, 1
      %p139 = scmp.ne.s32.totalorder %s134, %s136
      %p140 = scmp.eq.s32.totalorder %s37, 0
      %p141 = por %p139, %p140
      %p142 = scmp.ne.s32.totalorder %s134, %s136
      %p143 = scmp.eq.s32.totalorder %s42, 1
      %p144 = por %p142, %p143
      %p145 = scmp.ne.s32.totalorder %s136, %s137
      %p146 = scmp.eq.s32.totalorder %s42, 0
      %p147 = por %p145, %p146
      %p148 = scmp.ne.s32.totalorder %s136, %s137
      %p149 = scmp.eq.s32.totalorder %s43, 1
      %p150 = por %p148, %p149
      %p152 = scmp.ne.s32.totalorder %s137, %s151
      %p153 = scmp.eq.s32.totalorder %s43, 0
      %p154 = por %p152, %p153
      %s156 = sadd.s32 %s155, 1
      %p159 = scmp.eq.s32.totalorder %s37, 1
      %p160 = scmp.ne.s32.totalorder %s155, %s157
      %p161 = scmp.eq.s32.totalorder %s37, 0
      %p162 = por %p160, %p161
      %p163 = scmp.ne.s32.totalorder %s155, %s157
      %p164 = scmp.eq.s32.totalorder %s42, 1
      %p165 = por %p163, %p164
      %p166 = scmp.ne.s32.totalorder %s157, %s158
      %p167 = scmp.eq.s32.totalorder %s42, 0
      %p168 = por %p166, %p167
      %p169 = scmp.ne.s32.totalorder %s157, %s158
      %p170 = scmp.eq.s32.totalorder %s43, 1
      %p171 = por %p169, %p170
      %p173 = scmp.ne.s32.totalorder %s158, %s172
      %p174 = scmp.eq.s32.totalorder %s43, 0
      %p175 = por %p173, %p174
      %s177 = sadd.s32 %s176, 1
      %p180 = scmp.eq.s32.totalorder %s37, 1
      %p181 = scmp.ne.s32.totalorder %s176, %s178
      %p182 = scmp.eq.s32.totalorder %s37, 0
      %p183 = por %p181, %p182
      %p184 = scmp.ne.s32.totalorder %s176, %s178
      %p185 = scmp.eq.s32.totalorder %s42, 1
      %p186 = por %p184, %p185
      %p187 = scmp.ne.s32.totalorder %s178, %s179
      %p188 = scmp.eq.s32.totalorder %s42, 0
      %p189 = por %p187, %p188
      %p190 = scmp.ne.s32.totalorder %s178, %s179
      %p191 = scmp.eq.s32.totalorder %s43, 1
      %p192 = por %p190, %p191
      %p194 = scmp.ne.s32.totalorder %s179, %s193
      %p195 = scmp.eq.s32.totalorder %s43, 0
      %p196 = por %p194, %p195
      %s198 = sadd.s32 %s197, 1
      %p201 = scmp.eq.s32.totalorder %s37, 1
      %p202 = scmp.ne.s32.totalorder %s197, %s199
      %p203 = scmp.eq.s32.totalorder %s37, 0
      %p204 = por %p202, %p203
      %p205 = scmp.ne.s32.totalorder %s197, %s199
      %p206 = scmp.eq.s32.totalorder %s42, 1
      %p207 = por %p205, %p206
      %p208 = scmp.ne.s32.totalorder %s199, %s200
      %p209 = scmp.eq.s32.totalorder %s42, 0
      %p210 = por %p208, %p209
      %p211 = scmp.ne.s32.totalorder %s199, %s200
      %p212 = scmp.eq.s32.totalorder %s43, 1
      %p213 = por %p211, %p212
      %p215 = scmp.ne.s32.totalorder %s200, %s214
      %p216 = scmp.eq.s32.totalorder %s43, 0
      %p217 = por %p215, %p216
      %s219 = sadd.s32 %s218, 1
      %p222 = scmp.eq.s32.totalorder %s37, 1
      %p223 = scmp.ne.s32.totalorder %s218, %s220
      %p224 = scmp.eq.s32.totalorder %s37, 0
      %p225 = por %p223, %p224
      %p226 = scmp.ne.s32.totalorder %s218, %s220
      %p227 = scmp.eq.s32.totalorder %s42, 1
      %p228 = por %p226, %p227
      %p229 = scmp.ne.s32.totalorder %s220, %s221
      %p230 = scmp.eq.s32.totalorder %s42, 0
      %p231 = por %p229, %p230
      %p232 = scmp.ne.s32.totalorder %s220, %s221
      %p233 = scmp.eq.s32.totalorder %s43, 1
      %p234 = por %p232, %p233
      %p236 = scmp.ne.s32.totalorder %s221, %s235
      %p237 = scmp.eq.s32.totalorder %s43, 0
      %p238 = por %p236, %p237
      %s240 = sadd.s32 %s239, 1
      %p243 = scmp.eq.s32.totalorder %s37, 1
      %p244 = scmp.ne.s32.totalorder %s239, %s241
      %p245 = scmp.eq.s32.totalorder %s37, 0
      %p246 = por %p244, %p245
      %p247 = scmp.ne.s32.totalorder %s239, %s241
      %p248 = scmp.eq.s32.totalorder %s42, 1
      %p249 = por %p247, %p248
      %p250 = scmp.ne.s32.totalorder %s241, %s242
      %p251 = scmp.eq.s32.totalorder %s42, 0
      %p252 = por %p250, %p251
      %p253 = scmp.ne.s32.totalorder %s241, %s242
      %p254 = scmp.eq.s32.totalorder %s43, 1
      %p255 = por %p253, %p254
      %p257 = scmp.ne.s32.totalorder %s242, %s256
      %p258 = scmp.eq.s32.totalorder %s43, 0
      %p259 = por %p257, %p258
      %s261 = sadd.s32 %s260, 1
      %p264 = scmp.eq.s32.totalorder %s37, 1
      %p265 = scmp.ne.s32.totalorder %s260, %s262
      %p266 = scmp.eq.s32.totalorder %s37, 0
      %p267 = por %p265, %p266
      %p268 = scmp.ne.s32.totalorder %s260, %s262
      %p269 = scmp.eq.s32.totalorder %s42, 1
      %p270 = por %p268, %p269
      %p271 = scmp.ne.s32.totalorder %s262, %s263
      %p272 = scmp.eq.s32.totalorder %s42, 0
      %p273 = por %p271, %p272
      %p274 = scmp.ne.s32.totalorder %s262, %s263
      %p275 = scmp.eq.s32.totalorder %s43, 1
      %p276 = por %p274, %p275
      %p278 = scmp.ne.s32.totalorder %s263, %s277
      %p279 = scmp.eq.s32.totalorder %s43, 0
      %p280 = por %p278, %p279
      %s282 = sadd.s32 %s281, 1
      %p285 = scmp.eq.s32.totalorder %s37, 1
      %p286 = scmp.ne.s32.totalorder %s281, %s283
      %p287 = scmp.eq.s32.totalorder %s37, 0
      %p288 = por %p286, %p287
      %p289 = scmp.ne.s32.totalorder %s281, %s283
      %p290 = scmp.eq.s32.totalorder %s42, 1
      %p291 = por %p289, %p290
      %p292 = scmp.ne.s32.totalorder %s283, %s284
      %p293 = scmp.eq.s32.totalorder %s42, 0
      %p294 = por %p292, %p293
      %p295 = scmp.ne.s32.totalorder %s283, %s284
      %p296 = scmp.eq.s32.totalorder %s43, 1
      %p297 = por %p295, %p296
      %p299 = scmp.ne.s32.totalorder %s284, %s298
      %p300 = scmp.eq.s32.totalorder %s43, 0
      %p301 = por %p299, %p300
      %s303 = sadd.s32 %s302, 1
      %p306 = scmp.eq.s32.totalorder %s37, 1
      %p307 = scmp.ne.s32.totalorder %s302, %s304
      %p308 = scmp.eq.s32.totalorder %s37, 0
      %p309 = por %p307, %p308
      %p310 = scmp.ne.s32.totalorder %s302, %s304
      %p311 = scmp.eq.s32.totalorder %s42, 1
      %p312 = por %p310, %p311
      %p313 = scmp.ne.s32.totalorder %s304, %s305
      %p314 = scmp.eq.s32.totalorder %s42, 0
      %p315 = por %p313, %p314
      %p316 = scmp.ne.s32.totalorder %s304, %s305
      %p317 = scmp.eq.s32.totalorder %s43, 1
      %p318 = por %p316, %p317
      %p320 = scmp.ne.s32.totalorder %s305, %s319
      %p321 = scmp.eq.s32.totalorder %s43, 0
      %p322 = por %p320, %p321
      %s324 = sadd.s32 %s323, 1
      %p327 = scmp.eq.s32.totalorder %s37, 1
      %p328 = scmp.ne.s32.totalorder %s323, %s325
      %p329 = scmp.eq.s32.totalorder %s37, 0
      %p330 = por %p328, %p329
      %p331 = scmp.ne.s32.totalorder %s323, %s325
      %p332 = scmp.eq.s32.totalorder %s42, 1
      %p333 = por %p331, %p332
      %p334 = scmp.ne.s32.totalorder %s325, %s326
      %p335 = scmp.eq.s32.totalorder %s42, 0
      %p336 = por %p334, %p335
      %p337 = scmp.ne.s32.totalorder %s325, %s326
      %p338 = scmp.eq.s32.totalorder %s43, 1
      %p339 = por %p337, %p338
      %p341 = scmp.ne.s32.totalorder %s326, %s340
      %p342 = scmp.eq.s32.totalorder %s43, 0
      %p343 = por %p341, %p342
      %s345 = sadd.s32 %s344, 1
      %p348 = scmp.eq.s32.totalorder %s37, 1
      %p349 = scmp.ne.s32.totalorder %s344, %s346
      %p350 = scmp.eq.s32.totalorder %s37, 0
      %p351 = por %p349, %p350
      %p352 = scmp.ne.s32.totalorder %s344, %s346
      %p353 = scmp.eq.s32.totalorder %s42, 1
      %p354 = por %p352, %p353
      %p355 = scmp.ne.s32.totalorder %s346, %s347
      %p356 = scmp.eq.s32.totalorder %s42, 0
      %p357 = por %p355, %p356
      %p358 = scmp.ne.s32.totalorder %s346, %s347
      %p359 = scmp.eq.s32.totalorder %s43, 1
      %p360 = por %p358, %p359
      %p362 = scmp.ne.s32.totalorder %s347, %s361
      %p363 = scmp.eq.s32.totalorder %s43, 0
      %p364 = por %p362, %p363
      %s366 = sadd.s32 %s365, 1
      %p369 = scmp.eq.s32.totalorder %s37, 1
      %p370 = scmp.ne.s32.totalorder %s365, %s367
      %p371 = scmp.eq.s32.totalorder %s37, 0
      %p372 = por %p370, %p371
      %p373 = scmp.ne.s32.totalorder %s365, %s367
      %p374 = scmp.eq.s32.totalorder %s42, 1
      %p375 = por %p373, %p374
      %p376 = scmp.ne.s32.totalorder %s367, %s368
      %p377 = scmp.eq.s32.totalorder %s42, 0
      %p378 = por %p376, %p377
      %p379 = scmp.ne.s32.totalorder %s367, %s368
      %p380 = scmp.eq.s32.totalorder %s43, 1
      %p381 = por %p379, %p380
      %p383 = scmp.ne.s32.totalorder %s368, %s382
      %p384 = scmp.eq.s32.totalorder %s43, 0
      %p385 = por %p383, %p384
      %s387 = sadd.s32 %s386, 1
      %p390 = scmp.eq.s32.totalorder %s37, 1
      %p391 = scmp.ne.s32.totalorder %s386, %s388
      %p392 = scmp.eq.s32.totalorder %s37, 0
      %p393 = por %p391, %p392
      %p394 = scmp.ne.s32.totalorder %s386, %s388
      %p395 = scmp.eq.s32.totalorder %s42, 1
      %p396 = por %p394, %p395
      %p397 = scmp.ne.s32.totalorder %s388, %s389
      %p398 = scmp.eq.s32.totalorder %s42, 0
      %p399 = por %p397, %p398
      %p400 = scmp.ne.s32.totalorder %s388, %s389
      %p401 = scmp.eq.s32.totalorder %s43, 1
      %p402 = por %p400, %p401
      %p404 = scmp.ne.s32.totalorder %s389, %s403
      %p405 = scmp.eq.s32.totalorder %s43, 0
      %p406 = por %p404, %p405
      %s408 = sadd.s32 %s407, 1
      %p411 = scmp.eq.s32.totalorder %s37, 1
      %p412 = scmp.ne.s32.totalorder %s407, %s409
      %p413 = scmp.eq.s32.totalorder %s37, 0
      %p414 = por %p412, %p413
      %p415 = scmp.ne.s32.totalorder %s407, %s409
      %p416 = scmp.eq.s32.totalorder %s42, 1
      %p417 = por %p415, %p416
      %p418 = scmp.ne.s32.totalorder %s409, %s410
      %p419 = scmp.eq.s32.totalorder %s42, 0
      %p420 = por %p418, %p419
      %p421 = scmp.ne.s32.totalorder %s409, %s410
      %p422 = scmp.eq.s32.totalorder %s43, 1
      %p423 = por %p421, %p422
      %p425 = scmp.ne.s32.totalorder %s410, %s424
      %p426 = scmp.eq.s32.totalorder %s43, 0
      %p427 = por %p425, %p426
      %s429 = sadd.s32 %s428, 1
      %p432 = scmp.eq.s32.totalorder %s37, 1
      %p433 = scmp.ne.s32.totalorder %s428, %s430
      %p434 = scmp.eq.s32.totalorder %s37, 0
      %p435 = por %p433, %p434
      %p436 = scmp.ne.s32.totalorder %s428, %s430
      %p437 = scmp.eq.s32.totalorder %s42, 1
      %p438 = por %p436, %p437
      %p439 = scmp.ne.s32.totalorder %s430, %s431
      %p440 = scmp.eq.s32.totalorder %s42, 0
      %p441 = por %p439, %p440
      %p442 = scmp.ne.s32.totalorder %s430, %s431
      %p443 = scmp.eq.s32.totalorder %s43, 1
      %p444 = por %p442, %p443
      %p446 = scmp.ne.s32.totalorder %s431, %s445
      %p447 = scmp.eq.s32.totalorder %s43, 0
      %p448 = por %p446, %p447
      %s450 = sadd.s32 %s449, 1
      %p453 = scmp.eq.s32.totalorder %s37, 1
      %p454 = scmp.ne.s32.totalorder %s449, %s451
      %p455 = scmp.eq.s32.totalorder %s37, 0
      %p456 = por %p454, %p455
      %p457 = scmp.ne.s32.totalorder %s449, %s451
      %p458 = scmp.eq.s32.totalorder %s42, 1
      %p459 = por %p457, %p458
      %p460 = scmp.ne.s32.totalorder %s451, %s452
      %p461 = scmp.eq.s32.totalorder %s42, 0
      %p462 = por %p460, %p461
      %p463 = scmp.ne.s32.totalorder %s451, %s452
      %p464 = scmp.eq.s32.totalorder %s43, 1
      %p465 = por %p463, %p464
      %p467 = scmp.ne.s32.totalorder %s452, %s466
      %p468 = scmp.eq.s32.totalorder %s43, 0
      %p469 = por %p467, %p468
      %s471 = sadd.s32 %s470, 1
      %p474 = scmp.eq.s32.totalorder %s37, 1
      %p475 = scmp.ne.s32.totalorder %s470, %s472
      %p476 = scmp.eq.s32.totalorder %s37, 0
      %p477 = por %p475, %p476
      %p478 = scmp.ne.s32.totalorder %s470, %s472
      %p479 = scmp.eq.s32.totalorder %s42, 1
      %p480 = por %p478, %p479
      %p481 = scmp.ne.s32.totalorder %s472, %s473
      %p482 = scmp.eq.s32.totalorder %s42, 0
      %p483 = por %p481, %p482
      %p484 = scmp.ne.s32.totalorder %s472, %s473
      %p485 = scmp.eq.s32.totalorder %s43, 1
      %p486 = por %p484, %p485
      %p488 = scmp.ne.s32.totalorder %s473, %s487
      %p489 = scmp.eq.s32.totalorder %s43, 0
      %p490 = por %p488, %p489
      %s492 = sadd.s32 %s491, 1
      %p495 = scmp.eq.s32.totalorder %s37, 1
      %p496 = scmp.ne.s32.totalorder %s491, %s493
      %p497 = scmp.eq.s32.totalorder %s37, 0
      %p498 = por %p496, %p497
      %p499 = scmp.ne.s32.totalorder %s491, %s493
      %p500 = scmp.eq.s32.totalorder %s42, 1
      %p501 = por %p499, %p500
      %p502 = scmp.ne.s32.totalorder %s493, %s494
      %p503 = scmp.eq.s32.totalorder %s42, 0
      %p504 = por %p502, %p503
      %p505 = scmp.ne.s32.totalorder %s493, %s494
      %p506 = scmp.eq.s32.totalorder %s43, 1
      %p507 = por %p505, %p506
      %p509 = scmp.ne.s32.totalorder %s494, %s508
      %p510 = scmp.eq.s32.totalorder %s43, 0
      %p511 = por %p509, %p510
      %s513 = sadd.s32 %s512, 1
      %p516 = scmp.eq.s32.totalorder %s37, 1
      %p517 = scmp.ne.s32.totalorder %s512, %s514
      %p518 = scmp.eq.s32.totalorder %s37, 0
      %p519 = por %p517, %p518
      %p520 = scmp.ne.s32.totalorder %s512, %s514
      %p521 = scmp.eq.s32.totalorder %s42, 1
      %p522 = por %p520, %p521
      %p523 = scmp.ne.s32.totalorder %s514, %s515
      %p524 = scmp.eq.s32.totalorder %s42, 0
      %p525 = por %p523, %p524
      %p526 = scmp.ne.s32.totalorder %s514, %s515
      %p527 = scmp.eq.s32.totalorder %s43, 1
      %p528 = por %p526, %p527
      %p530 = scmp.ne.s32.totalorder %s515, %s529
      %p531 = scmp.eq.s32.totalorder %s43, 0
      %p532 = por %p530, %p531
      %s534 = sadd.s32 %s533, 1
      %p537 = scmp.eq.s32.totalorder %s37, 1
      %p538 = scmp.ne.s32.totalorder %s533, %s535
      %p539 = scmp.eq.s32.totalorder %s37, 0
      %p540 = por %p538, %p539
      %p541 = scmp.ne.s32.totalorder %s533, %s535
      %p542 = scmp.eq.s32.totalorder %s42, 1
      %p543 = por %p541, %p542
      %p544 = scmp.ne.s32.totalorder %s535, %s536
      %p545 = scmp.eq.s32.totalorder %s42, 0
      %p546 = por %p544, %p545
      %p547 = scmp.ne.s32.totalorder %s535, %s536
      %p548 = scmp.eq.s32.totalorder %s43, 1
      %p549 = por %p547, %p548
      %p551 = scmp.ne.s32.totalorder %s536, %s550
      %p552 = scmp.eq.s32.totalorder %s43, 0
      %p553 = por %p551, %p552
      %s555 = sadd.s32 %s554, 1
      %p558 = scmp.eq.s32.totalorder %s37, 1
      %p559 = scmp.ne.s32.totalorder %s554, %s556
      %p560 = scmp.eq.s32.totalorder %s37, 0
      %p561 = por %p559, %p560
      %p562 = scmp.ne.s32.totalorder %s554, %s556
      %p563 = scmp.eq.s32.totalorder %s42, 1
      %p564 = por %p562, %p563
      %p565 = scmp.ne.s32.totalorder %s556, %s557
      %p566 = scmp.eq.s32.totalorder %s42, 0
      %p567 = por %p565, %p566
      %p568 = scmp.ne.s32.totalorder %s556, %s557
      %p569 = scmp.eq.s32.totalorder %s43, 1
      %p570 = por %p568, %p569
      %p572 = scmp.ne.s32.totalorder %s557, %s571
      %p573 = scmp.eq.s32.totalorder %s43, 0
      %p574 = por %p572, %p573
      %s575 = ssub.s32 %s37, %s44
      %p576 = scmp.eq.s32.totalorder %s575, 0
      %s578 = sadd.s32 %s577, 1
      %s579 = scalar_select %p576, %s577, %s578
      %p582 = pneg %p576
      %p583 = scmp.eq.s32.totalorder %s37, 1
      %p584 = por %p582, %p583
      %p585 = scmp.ne.s32.totalorder %s577, %s580
      %p586 = scmp.eq.s32.totalorder %s37, 0
      %p587 = por %p585, %p586
      %p588 = scmp.ne.s32.totalorder %s577, %s580
      %p589 = scmp.eq.s32.totalorder %s42, 1
      %p590 = por %p588, %p589
      %p591 = scmp.ne.s32.totalorder %s580, %s581
      %p592 = scmp.eq.s32.totalorder %s42, 0
      %p593 = por %p591, %p592
      %p594 = scmp.ne.s32.totalorder %s580, %s581
      %p595 = scmp.eq.s32.totalorder %s43, 1
      %p596 = por %p594, %p595
      %p598 = scmp.ne.s32.totalorder %s581, %s597
      %p599 = scmp.eq.s32.totalorder %s43, 0
      %p600 = por %p598, %p599
      %p601 = scmp.le.s32.totalorder 1, %s37
      %p602 = scmp.lt.s32.totalorder %s37, 3
      %p603 = pnand %p601, %p602
      %p604 = pneg %p603
      // Predicated region
      $region9: #{_lambda_.1} parent=5 // pred_check
        _
      $region10: #{_lambda_.1} parent=5 // pred_check_branch
        %606 = sbr.rel (%p603) target = $region12
      $region11: #{_lambda_.1} parent=5 // pred_region
        %s607 = ssub.s32 %s37, 1
        // Predicated region
        $region13: #{_lambda_.1} parent=11 // pred_check
          %p608 = pneg %p84
        $region14: #{_lambda_.1} parent=11 // pred_check_branch
          %610 = sbr.rel (%p608) target = $region16
        $region15: #{_lambda_.1} parent=11 // pred_region
          %s612 = ssub.s32 1536, 1536
          %613 = vsyncadd [#allocation4], %s612
          %s614 = sshll.u32 [#allocation3], 4
          %s615 = int_to_ptr.vmem [resolvable:$true] %s614
          %620 = dma.hbm_to_vmem [thread:$0]  %s1, 1536, %s615, [#allocation4], 64, 64, 4
        $region16: #{_lambda_.1} parent=11 // pred_fallthru
          _
        // Predicated region
        $region17: #{_lambda_.1} parent=11 // pred_check
          %p621 = pneg %p105
        $region18: #{_lambda_.1} parent=11 // pred_check_branch
          %623 = sbr.rel (%p621) target = $region20
        $region19: #{_lambda_.1} parent=11 // pred_region
          _
        $region20: #{_lambda_.1} parent=11 // pred_fallthru
          _
        // Predicated region
        $region21: #{_lambda_.1} parent=11 // pred_check
          %p624 = pneg %p126
        $region22: #{_lambda_.1} parent=11 // pred_check_branch
          %626 = sbr.rel (%p624) target = $region24
        $region23: #{_lambda_.1} parent=11 // pred_region
          %s628 = ssub.s32 6144, 6144
          %629 = vsyncadd [#allocation6], %s628
          %s630 = sshll.u32 [#allocation5], 4
          %s631 = int_to_ptr.vmem [resolvable:$true] %s630
          %636 = dma.hbm_to_vmem [thread:$0]  %s3, 6144, %s631, [#allocation6], 128, 128, 8
        $region24: #{_lambda_.1} parent=11 // pred_fallthru
          _
        // Predicated region
        $region25: #{_lambda_.1} parent=11 // pred_check
          %p637 = pneg %p147
        $region26: #{_lambda_.1} parent=11 // pred_check_branch
          %639 = sbr.rel (%p637) target = $region28
        $region27: #{_lambda_.1} parent=11 // pred_region
          _
        $region28: #{_lambda_.1} parent=11 // pred_fallthru
          _
        // Predicated region
        $region29: #{_lambda_.1} parent=11 // pred_check
          %p640 = pneg %p168
        $region30: #{_lambda_.1} parent=11 // pred_check_branch
          %642 = sbr.rel (%p640) target = $region32
        $region31: #{_lambda_.1} parent=11 // pred_region
          %s644 = ssub.s32 12288, 12288
          %645 = vsyncadd [#allocation6], %s644
          %s646 = sshll.u32 [#allocation7], 4
          %s647 = int_to_ptr.vmem [resolvable:$true] %s646
          %652 = dma.hbm_to_vmem [thread:$0]  %s5, 12288, %s647, [#allocation6], 128, 128, 8
        $region32: #{_lambda_.1} parent=11 // pred_fallthru
          _
        // Predicated region
        $region33: #{_lambda_.1} parent=11 // pred_check
          %p653 = pneg %p189
        $region34: #{_lambda_.1} parent=11 // pred_check_branch
          %655 = sbr.rel (%p653) target = $region36
        $region35: #{_lambda_.1} parent=11 // pred_region
          _
        $region36: #{_lambda_.1} parent=11 // pred_fallthru
          _
        // Predicated region
        $region37: #{_lambda_.1} parent=11 // pred_check
          %p656 = pneg %p210
        $region38: #{_lambda_.1} parent=11 // pred_check_branch
          %658 = sbr.rel (%p656) target = $region40
        $region39: #{_lambda_.1} parent=11 // pred_region
          %s660 = ssub.s32 12288, 12288
          %661 = vsyncadd [#allocation9], %s660
          %s662 = sshll.u32 [#allocation8], 4
          %s663 = int_to_ptr.vmem [resolvable:$true] %s662
          %668 = dma.hbm_to_vmem [thread:$0]  %s7, 12288, %s663, [#allocation9], 128, 128, 8
        $region40: #{_lambda_.1} parent=11 // pred_fallthru
          _
        // Predicated region
        $region41: #{_lambda_.1} parent=11 // pred_check
          %p669 = pneg %p231
        $region42: #{_lambda_.1} parent=11 // pred_check_branch
          %671 = sbr.rel (%p669) target = $region44
        $region43: #{_lambda_.1} parent=11 // pred_region
          _
        $region44: #{_lambda_.1} parent=11 // pred_fallthru
          _
        // Predicated region
        $region45: #{_lambda_.1} parent=11 // pred_check
          %p672 = pneg %p252
        $region46: #{_lambda_.1} parent=11 // pred_check_branch
          %674 = sbr.rel (%p672) target = $region48
        $region47: #{_lambda_.1} parent=11 // pred_region
          %s676 = ssub.s32 2048, 2048
          %677 = vsyncadd [#allocation9], %s676
          %s678 = sshll.u32 [#allocation10], 4
          %s679 = int_to_ptr.vmem [resolvable:$true] %s678
          %684 = dma.hbm_to_vmem [thread:$0]  %s9, 2048, %s679, [#allocation9], 128, 128, 8
        $region48: #{_lambda_.1} parent=11 // pred_fallthru
          _
        // Predicated region
        $region49: #{_lambda_.1} parent=11 // pred_check
          %p685 = pneg %p273
        $region50: #{_lambda_.1} parent=11 // pred_check_branch
          %687 = sbr.rel (%p685) target = $region52
        $region51: #{_lambda_.1} parent=11 // pred_region
          _
        $region52: #{_lambda_.1} parent=11 // pred_fallthru
          _
        // Predicated region
        $region53: #{_lambda_.1} parent=11 // pred_check
          %p688 = pneg %p294
        $region54: #{_lambda_.1} parent=11 // pred_check_branch
          %690 = sbr.rel (%p688) target = $region56
        $region55: #{_lambda_.1} parent=11 // pred_region
          %s692 = ssub.s32 12288, 12288
          %693 = vsyncadd [#allocation12], %s692
          %s694 = sshll.u32 [#allocation11], 4
          %s695 = int_to_ptr.vmem [resolvable:$true] %s694
          %700 = dma.hbm_to_vmem [thread:$0]  %s11, 12288, %s695, [#allocation12], 128, 128, 8
        $region56: #{_lambda_.1} parent=11 // pred_fallthru
          _
        // Predicated region
        $region57: #{_lambda_.1} parent=11 // pred_check
          %p701 = pneg %p315
        $region58: #{_lambda_.1} parent=11 // pred_check_branch
          %703 = sbr.rel (%p701) target = $region60
        $region59: #{_lambda_.1} parent=11 // pred_region
          _
        $region60: #{_lambda_.1} parent=11 // pred_fallthru
          _
        // Predicated region
        $region61: #{_lambda_.1} parent=11 // pred_check
          %p704 = pneg %p336
        $region62: #{_lambda_.1} parent=11 // pred_check_branch
          %706 = sbr.rel (%p704) target = $region64
        $region63: #{_lambda_.1} parent=11 // pred_region
          %s708 = ssub.s32 12288, 12288
          %709 = vsyncadd [#allocation12], %s708
          %s710 = sshll.u32 [#allocation13], 4
          %s711 = int_to_ptr.vmem [resolvable:$true] %s710
          %716 = dma.hbm_to_vmem [thread:$0]  %s13, 12288, %s711, [#allocation12], 128, 128, 8
        $region64: #{_lambda_.1} parent=11 // pred_fallthru
          _
        // Predicated region
        $region65: #{_lambda_.1} parent=11 // pred_check
          %p717 = pneg %p357
        $region66: #{_lambda_.1} parent=11 // pred_check_branch
          %719 = sbr.rel (%p717) target = $region68
        $region67: #{_lambda_.1} parent=11 // pred_region
          _
        $region68: #{_lambda_.1} parent=11 // pred_fallthru
          _
        // Predicated region
        $region69: #{_lambda_.1} parent=11 // pred_check
          %p720 = pneg %p378
        $region70: #{_lambda_.1} parent=11 // pred_check_branch
          %722 = sbr.rel (%p720) target = $region72
        $region71: #{_lambda_.1} parent=11 // pred_region
          %s724 = ssub.s32 12288, 12288
          %725 = vsyncadd [#allocation15], %s724
          %s726 = sshll.u32 [#allocation14], 4
          %s727 = int_to_ptr.vmem [resolvable:$true] %s726
          %732 = dma.hbm_to_vmem [thread:$0]  %s15, 12288, %s727, [#allocation15], 128, 128, 8
        $region72: #{_lambda_.1} parent=11 // pred_fallthru
          _
        // Predicated region
        $region73: #{_lambda_.1} parent=11 // pred_check
          %p733 = pneg %p399
        $region74: #{_lambda_.1} parent=11 // pred_check_branch
          %735 = sbr.rel (%p733) target = $region76
        $region75: #{_lambda_.1} parent=11 // pred_region
          _
        $region76: #{_lambda_.1} parent=11 // pred_fallthru
          _
        // Predicated region
        $region77: #{_lambda_.1} parent=11 // pred_check
          %p736 = pneg %p420
        $region78: #{_lambda_.1} parent=11 // pred_check_branch
          %738 = sbr.rel (%p736) target = $region80
        $region79: #{_lambda_.1} parent=11 // pred_region
          %s740 = ssub.s32 12288, 12288
          %741 = vsyncadd [#allocation15], %s740
          %s742 = sshll.u32 [#allocation16], 4
          %s743 = int_to_ptr.vmem [resolvable:$true] %s742
          %748 = dma.hbm_to_vmem [thread:$0]  %s17, 12288, %s743, [#allocation15], 128, 128, 8
        $region80: #{_lambda_.1} parent=11 // pred_fallthru
          _
        // Predicated region
        $region81: #{_lambda_.1} parent=11 // pred_check
          %p749 = pneg %p441
        $region82: #{_lambda_.1} parent=11 // pred_check_branch
          %751 = sbr.rel (%p749) target = $region84
        $region83: #{_lambda_.1} parent=11 // pred_region
          _
        $region84: #{_lambda_.1} parent=11 // pred_fallthru
          _
        // Predicated region
        $region85: #{_lambda_.1} parent=11 // pred_check
          %p752 = pneg %p462
        $region86: #{_lambda_.1} parent=11 // pred_check_branch
          %754 = sbr.rel (%p752) target = $region88
        $region87: #{_lambda_.1} parent=11 // pred_region
          _
        $region88: #{_lambda_.1} parent=11 // pred_fallthru
          _
        // Predicated region
        $region89: #{_lambda_.1} parent=11 // pred_check
          %p755 = pneg %p483
        $region90: #{_lambda_.1} parent=11 // pred_check_branch
          %757 = sbr.rel (%p755) target = $region92
        $region91: #{_lambda_.1} parent=11 // pred_region
          _
        $region92: #{_lambda_.1} parent=11 // pred_fallthru
          _
        // Predicated region
        $region93: #{_lambda_.1} parent=11 // pred_check
          %p758 = pneg %p504
        $region94: #{_lambda_.1} parent=11 // pred_check_branch
          %760 = sbr.rel (%p758) target = $region96
        $region95: #{_lambda_.1} parent=11 // pred_region
          %s762 = ssub.s32 6144, 6144
          %763 = vsyncadd [#allocation18], %s762
          %s764 = sshll.u32 [#allocation17], 4
          %s765 = int_to_ptr.vmem [resolvable:$true] %s764
          %770 = dma.hbm_to_vmem [thread:$0]  %s21, 6144, %s765, [#allocation18], 64, 64, 4
        $region96: #{_lambda_.1} parent=11 // pred_fallthru
          _
        // Predicated region
        $region97: #{_lambda_.1} parent=11 // pred_check
          %p771 = pneg %p525
        $region98: #{_lambda_.1} parent=11 // pred_check_branch
          %773 = sbr.rel (%p771) target = $region100
        $region99: #{_lambda_.1} parent=11 // pred_region
          _
        $region100: #{_lambda_.1} parent=11 // pred_fallthru
          _
        // Predicated region
        $region101: #{_lambda_.1} parent=11 // pred_check
          %p774 = pneg %p546
        $region102: #{_lambda_.1} parent=11 // pred_check_branch
          %776 = sbr.rel (%p774) target = $region104
        $region103: #{_lambda_.1} parent=11 // pred_region
          _
        $region104: #{_lambda_.1} parent=11 // pred_fallthru
          _
        // Predicated region
        $region105: #{_lambda_.1} parent=11 // pred_check
          %p777 = pneg %p567
        $region106: #{_lambda_.1} parent=11 // pred_check_branch
          %779 = sbr.rel (%p777) target = $region108
        $region107: #{_lambda_.1} parent=11 // pred_region
          _
        $region108: #{_lambda_.1} parent=11 // pred_fallthru
          _
      $region12: #{_lambda_.1} parent=5 // pred_fallthru
        _
      %p780 = scmp.lt.s32.totalorder %s37, 2
      // Predicated region
      $region109: #{_lambda_.1} parent=5 // pred_check
        %p781 = pneg %p780
      $region110: #{_lambda_.1} parent=5 // pred_check_branch
        %783 = sbr.rel (%p781) target = $region112
      $region111: #{_lambda_.1} parent=5 // pred_region
        // Predicated region
        $region113: #{_lambda_.1} parent=111 // pred_check
          %p784 = pneg %p57
        $region114: #{_lambda_.1} parent=111 // pred_check_branch
          %786 = sbr.rel (%p784) target = $region116
        $region115: #{_lambda_.1} parent=111 // pred_region
          %p787 = scmp.lt.s32.totalorder %s37, 1
          %s788 = scalar_select %p787, %s37, 1
          %s789 = smul.addr %s788, 2
          %s790 = smul.addr %s789, 8
          %s791 = scalar_lea.vmem %s0, %s790
        $region116: #{_lambda_.1} parent=111 // pred_fallthru
          _
      $region112: #{_lambda_.1} parent=5 // pred_fallthru
        _
      %p792 = scmp.le.s32.totalorder 1, %s37
      %p793 = scmp.lt.s32.totalorder %s37, 3
      %p794 = pnand %p792, %p793
      %p795 = pneg %p794
      // Predicated region
      $region117: #{_lambda_.1} parent=5 // pred_check
        _
      $region118: #{_lambda_.1} parent=5 // pred_check_branch
        %797 = sbr.rel (%p794) target = $region120
      $region119: #{_lambda_.1} parent=5 // pred_region
        %s798 = ssub.s32 %s37, 1
        // Predicated region
        $region121: #{_lambda_.1} parent=119 // pred_check
          %p799 = pneg %p84
        $region122: #{_lambda_.1} parent=119 // pred_check_branch
          %801 = sbr.rel (%p799) target = $region124
        $region123: #{_lambda_.1} parent=119 // pred_region
          %802 = dma.done [#allocation4], 1536
        $region124: #{_lambda_.1} parent=119 // pred_fallthru
          _
        // Predicated region
        $region125: #{_lambda_.1} parent=119 // pred_check
          %p803 = pneg %p126
        $region126: #{_lambda_.1} parent=119 // pred_check_branch
          %805 = sbr.rel (%p803) target = $region128
        $region127: #{_lambda_.1} parent=119 // pred_region
          %806 = dma.done [#allocation6], 6144
        $region128: #{_lambda_.1} parent=119 // pred_fallthru
          _
        // Predicated region
        $region129: #{_lambda_.1} parent=119 // pred_check
          %p807 = pneg %p168
        $region130: #{_lambda_.1} parent=119 // pred_check_branch
          %809 = sbr.rel (%p807) target = $region132
        $region131: #{_lambda_.1} parent=119 // pred_region
          %810 = dma.done [#allocation6], 12288
        $region132: #{_lambda_.1} parent=119 // pred_fallthru
          _
        // Predicated region
        $region133: #{_lambda_.1} parent=119 // pred_check
          %p811 = pneg %p210
        $region134: #{_lambda_.1} parent=119 // pred_check_branch
          %813 = sbr.rel (%p811) target = $region136
        $region135: #{_lambda_.1} parent=119 // pred_region
          %814 = dma.done [#allocation9], 12288
        $region136: #{_lambda_.1} parent=119 // pred_fallthru
          _
        // Predicated region
        $region137: #{_lambda_.1} parent=119 // pred_check
          %p815 = pneg %p252
        $region138: #{_lambda_.1} parent=119 // pred_check_branch
          %817 = sbr.rel (%p815) target = $region140
        $region139: #{_lambda_.1} parent=119 // pred_region
          %818 = dma.done [#allocation9], 2048
        $region140: #{_lambda_.1} parent=119 // pred_fallthru
          _
        // Predicated region
        $region141: #{_lambda_.1} parent=119 // pred_check
          %p819 = pneg %p294
        $region142: #{_lambda_.1} parent=119 // pred_check_branch
          %821 = sbr.rel (%p819) target = $region144
        $region143: #{_lambda_.1} parent=119 // pred_region
          %822 = dma.done [#allocation12], 12288
        $region144: #{_lambda_.1} parent=119 // pred_fallthru
          _
        // Predicated region
        $region145: #{_lambda_.1} parent=119 // pred_check
          %p823 = pneg %p336
        $region146: #{_lambda_.1} parent=119 // pred_check_branch
          %825 = sbr.rel (%p823) target = $region148
        $region147: #{_lambda_.1} parent=119 // pred_region
          %826 = dma.done [#allocation12], 12288
        $region148: #{_lambda_.1} parent=119 // pred_fallthru
          _
        // Predicated region
        $region149: #{_lambda_.1} parent=119 // pred_check
          %p827 = pneg %p378
        $region150: #{_lambda_.1} parent=119 // pred_check_branch
          %829 = sbr.rel (%p827) target = $region152
        $region151: #{_lambda_.1} parent=119 // pred_region
          %830 = dma.done [#allocation15], 12288
        $region152: #{_lambda_.1} parent=119 // pred_fallthru
          _
        // Predicated region
        $region153: #{_lambda_.1} parent=119 // pred_check
          %p831 = pneg %p420
        $region154: #{_lambda_.1} parent=119 // pred_check_branch
          %833 = sbr.rel (%p831) target = $region156
        $region155: #{_lambda_.1} parent=119 // pred_region
          %834 = dma.done [#allocation15], 12288
        $region156: #{_lambda_.1} parent=119 // pred_fallthru
          _
        // Predicated region
        $region157: #{_lambda_.1} parent=119 // pred_check
          %p835 = pneg %p504
        $region158: #{_lambda_.1} parent=119 // pred_check_branch
          %837 = sbr.rel (%p835) target = $region160
        $region159: #{_lambda_.1} parent=119 // pred_region
          %838 = dma.done [#allocation18], 6144
        $region160: #{_lambda_.1} parent=119 // pred_fallthru
          _
        %p839 = scmp.lt.s32.totalorder %s42, 1
        %s840 = scalar_select %p839, %s42, 1
        %s841 = smul.addr %s840, 2
        %s842 = smul.addr %s841, 8
        %s843 = scalar_lea.vmem %s0, %s842
        %p844 = pneg %p63
        %p845 = pneg %p60
        %p846 = pneg %p84
        %p847 = pneg %p81
        %p848 = pneg %p105
        %p849 = pneg %p102
        %p850 = pneg %p126
        %p851 = pneg %p123
        %p852 = pneg %p147
        %p853 = pneg %p144
        %p854 = pneg %p168
        %p855 = pneg %p165
        %p856 = pneg %p189
        %p857 = pneg %p186
        %p858 = pneg %p210
        %p859 = pneg %p207
        %p860 = pneg %p231
        %p861 = pneg %p228
        %p862 = pneg %p252
        %p863 = pneg %p249
        %p864 = pneg %p273
        %p865 = pneg %p270
        %p866 = pneg %p294
        %p867 = pneg %p291
        %p868 = pneg %p315
        %p869 = pneg %p312
        %p870 = pneg %p336
        %p871 = pneg %p333
        %p872 = pneg %p357
        %p873 = pneg %p354
        %p874 = pneg %p378
        %p875 = pneg %p375
        %p876 = pneg %p399
        %p877 = pneg %p396
        %p878 = pneg %p420
        %p879 = pneg %p417
        %p880 = pneg %p441
        %p881 = pneg %p438
        %p882 = pneg %p462
        %p883 = pneg %p459
        %p884 = pneg %p483
        %p885 = pneg %p480
        %p886 = pneg %p504
        %p887 = pneg %p501
        %p888 = pneg %p525
        %p889 = pneg %p522
        %p890 = pneg %p546
        %p891 = pneg %p543
        %p892 = pneg %p567
        %p893 = pneg %p564
        %p894 = pneg %p593
        %p895 = pneg %p590
        %p896 = scmp.lt.s32.totalorder %s42, 1
        %s897 = scalar_select %p896, %s42, 1
        %s898 = smul.addr %s897, 2
        %s899 = smul.addr %s898, 8
        %s900 = scalar_lea.vmem %s25, %s899
        %p901 = scmp.lt.s32.totalorder %s42, 1
        %s902 = scalar_select %p901, %s42, 1
        %s903 = smul.addr %s902, 2
        %s904 = smul.addr %s903, 8
        %s905 = scalar_lea.vmem %s0, %s904
        %p906 = scmp.lt.s32.totalorder %s42, 1
        %s907 = scalar_select %p906, %s42, 1
        %s908 = smul.addr %s907, 2
        %s909 = smul.addr %s908, 8
        %s910 = scalar_lea.vmem %s25, %s909
        %vm912 = vcmask 1040384
        %vm913 = vsmask.f32 256
        %vm914 = vmand %vm912, %vm913
        %vm915 = vcmask 1044484
        %vm916 = vsmask.f32 4352
        %vm917 = vmand %vm915, %vm916
        %vm918 = vmor %vm917, %vm914
        %v919 = vld [vmem:[#allocation2] sm:$0x11]
        %v920 = vsel %vm918, 0, %v919
        %921 = vst [vmem:[#allocation2] sm:$0x11] %v920
        %vm922 = vsmask.f32 7938
        %vm923 = vmand %vm912, %vm922
        %vm924 = vsmask.f32 7954
        %vm925 = vmand %vm915, %vm924
        %vm926 = vmor %vm925, %vm923
        %v927 = vld [vmem:[#allocation2 + $0x10] sm:$0x11]
        %v928 = vsel %vm926, 0, %v927
        %929 = vst [vmem:[#allocation2 + $0x10] sm:$0x11] %v928
        %v930 = vld [vmem:[%s905] sm:$0xff]
        %v931 = vld [vmem:[%s905 + $0x8] sm:$0xff]
        %v932 = vpack.c.bf16 %v931, %v930
        %v934 = vunpack.c.l.b16 %v932
        %v935 = vunpack.c.h.b16 %v932
        %v936 = vpack.c.b16 %v934, %v934
        %v937 = vpack.c.b16 %v935, %v935
        %vm938 = vsmask.f32 4368
        %vm939 = vmor %vm913, %vm938
        %v941 = vshrl.u32 %v936, 16
        %v943 = vrot.slane %v941, 7
        %v944 = vshll.u32 %v936, 16
        %v946 = vor.u32 %v943, %v944
        %v947 = vrot.slane %v943, 4
        %v949 = vshrl.u32 %v937, 16
        %v951 = vrot.slane %v949, 7
        %v952 = vshll.u32 %v937, 16
        %v954 = vor.u32 %v951, %v952
        %v955 = vsel %vm939, %v947, %v954
        %v956 = vrot.slane %v951, 4
        %vm960 = vcmask 519168
        %vm961 = vmand %vm960, %vm922
        %v962 = vld [vmem:[#allocation2] sm:$0xf]
        %v963 = vsel %vm961, %v946, %v962
        %964 = vst [vmem:[#allocation2] sm:$0xf] %v963
        %vm965 = vcmask 519168
        %966 = vst.msk [vmem:[#allocation2 + $0x8] sm:$0xf] %vm965, %v955
        %vm967 = vcmask 516096
        %vm968 = vmand %vm967, %vm913
        %v969 = vld [vmem:[#allocation2 + $0x10] sm:$0x1]
        %v970 = vsel %vm968, %v956, %v969
        %971 = vst [vmem:[#allocation2 + $0x10] sm:$0x1] %v970
        %v972 = vld [vmem:[#allocation2] sm:$0xf]
        %v973 = vld [vmem:[#allocation2 + $0x8] sm:$0xf]
        %v974 = vld [vmem:[#allocation3] sm:$0xf]
        %v975 = vld [vmem:[#allocation3 + $0x4] sm:$0xf]
        %v976 = vld [vmem:[#allocation3 + $0x8] sm:$0xf]
        %v977 = vld [vmem:[#allocation3 + $0xc] sm:$0xf]
        %v978 = vld [vmem:[#allocation3 + $0x10] sm:$0xf]
        %v979 = vld [vmem:[#allocation3 + $0x14] sm:$0xf]
        %v980 = vld [vmem:[#allocation3 + $0x18] sm:$0xf]
        %v981 = vld [vmem:[#allocation3 + $0x1c] sm:$0xf]
        %v982 = vld [vmem:[#allocation2 + $0x10] sm:$0x1]
        %s983 = scalar_lea.vmem [#allocation3], 32
        %v984 = vld [vmem:[%s983] sm:$0xf]
        %v985 = vld [vmem:[%s983 + $0x4] sm:$0xf]
        %v986 = vld [vmem:[%s983 + $0x8] sm:$0xf]
        %v987 = vld [vmem:[%s983 + $0xc] sm:$0xf]
        %v988 = vld [vmem:[%s983 + $0x10] sm:$0xf]
        %v989 = vld [vmem:[%s983 + $0x14] sm:$0xf]
        %v990 = vld [vmem:[%s983 + $0x18] sm:$0xf]
        %v991 = vld [vmem:[%s983 + $0x1c] sm:$0xf]
        %v995 = vunpack.c.l.b16 %v972
        %v996 = vunpack.c.l.b16 %v973
        %v997 = vunpack.c.l.b16 %v982
        %v998 = vpack.c.b16 %v996, %v995
        %v999 = vpack.c.b16 %v997, %v997
        %vm1000 = vsmask.f32 7424
        %v1002 = vshrl.u32 %v998, 16
        %v1004 = vshll.u32 %v998, 16
        %v1006 = vrot.slane %v1004, 1
        %v1007 = vor.u32 %v1002, %v1006
        %v1009 = vshll.u32 %v999, 16
        %v1011 = vrot.slane %v1009, 1
        %v1012 = vsel %vm1000, %v1007, %v1011
        %v1021 = vunpack.c.l.b16 %v984
        %v1022 = vunpack.c.l.b16 %v985
        %v1023 = vunpack.c.l.b16 %v986
        %v1024 = vunpack.c.l.b16 %v987
        %v1025 = vunpack.c.l.b16 %v988
        %v1026 = vunpack.c.l.b16 %v989
        %v1027 = vunpack.c.l.b16 %v990
        %v1028 = vunpack.c.l.b16 %v991
        %v1029 = vpack.c.b16 %v1022, %v1021
        %v1030 = vpack.c.b16 %v1024, %v1023
        %v1031 = vpack.c.b16 %v1026, %v1025
        %v1032 = vpack.c.b16 %v1028, %v1027
        %vm1037 = vcmask 523264
        %v1039 = vsel %vm1037, %v1012, 0
        %1041 = vmatprep.subr.bf16.mxu0 0
        %1042 = vmatpush1.bf16.msra.mxu0 0
        %1043 = vmatprep.subr.bf16.mxu0 0
        %1044 = vmatpush1.bf16.msra.mxu0 0
        %1045 = vmatprep.subr.bf16.mxu0 0
        %1046 = vmatpush1.bf16.msra.mxu0 0
        %1047 = vmatprep.subr.bf16.mxu0 0
        %1048 = vmatpush1.bf16.msra.mxu0 0
        %1049 = vmatprep.subr.bf16.mxu0 0
        %1050 = vmatpush1.bf16.msra.mxu0 %v1032
        %1051 = vmatprep.subr.bf16.mxu0 0
        %1052 = vmatpush1.bf16.msra.mxu0 %v1031
        %1053 = vmatprep.subr.bf16.mxu0 0
        %1054 = vmatpush1.bf16.msra.mxu0 %v1030
        %1055 = vmatprep.subr.bf16.mxu0 0
        %1056 = vmatpush1.bf16.msra.mxu0 %v1029
        %1057 = vmatprep.subr.bf16.mxu0 0
        %1058 = vmatpush2.bf16.msra.mxu0 0
        %1059 = vmatprep.subr.bf16.mxu0 0
        %1060 = vmatpush2.bf16.msra.mxu0 0
        %1061 = vmatprep.subr.bf16.mxu0 0
        %1062 = vmatpush2.bf16.msra.mxu0 0
        %1063 = vmatprep.subr.bf16.mxu0 0
        %1064 = vmatpush2.bf16.msra.mxu0 0
        %1065 = vmatprep.subr.bf16.mxu0 0
        %1066 = vmatpush2.bf16.msra.mxu0 0
        %1067 = vmatprep.subr.bf16.mxu0 0
        %1068 = vmatpush2.bf16.msra.mxu0 0
        %1069 = vmatprep.subr.bf16.mxu0 0
        %1070 = vmatpush2.bf16.msra.mxu0 0
        %1071 = vmatprep.subr.bf16.mxu0 0
        %1072 = vmatpush2.bf16.msra.mxu0 0
        %1073 = vmatprep.mubr.bf16.mxu0 0
        %1074 = vmatmul.mubr.bf16.gmra.mxu0 %v1039
        %v1075 = vpop.f32.mrf.mxu0
        %v1076 = vadd.f32 0.0, %v1075
        %v1077 = vpop.f32.mrf.mxu0
        %v1078 = vpop.f32.mrf.mxu0
        %v1079 = vadd.f32 0.0, %v1078
        %v1080 = vpop.f32.mrf.mxu0
        %1081 = vdwg.mxu0
        %v1090 = vunpack.c.l.b16 %v974
        %v1091 = vunpack.c.l.b16 %v975
        %v1092 = vunpack.c.l.b16 %v976
        %v1093 = vunpack.c.l.b16 %v977
        %v1094 = vunpack.c.l.b16 %v978
        %v1095 = vunpack.c.l.b16 %v979
        %v1096 = vunpack.c.l.b16 %v980
        %v1097 = vunpack.c.l.b16 %v981
        %v1098 = vpack.c.b16 %v1091, %v1090
        %v1099 = vpack.c.b16 %v1093, %v1092
        %v1100 = vpack.c.b16 %v1095, %v1094
        %v1101 = vpack.c.b16 %v1097, %v1096
        %v1106 = vsel %vm1037, %v998, 0
        %1108 = vmatprep.subr.bf16.mxu0 0
        %1109 = vmatpush1.bf16.msra.mxu0 0
        %1110 = vmatprep.subr.bf16.mxu0 0
        %1111 = vmatpush1.bf16.msra.mxu0 0
        %1112 = vmatprep.subr.bf16.mxu0 0
        %1113 = vmatpush1.bf16.msra.mxu0 0
        %1114 = vmatprep.subr.bf16.mxu0 0
        %1115 = vmatpush1.bf16.msra.mxu0 0
        %1116 = vmatprep.subr.bf16.mxu0 0
        %1117 = vmatpush1.bf16.msra.mxu0 %v1101
        %1118 = vmatprep.subr.bf16.mxu0 0
        %1119 = vmatpush1.bf16.msra.mxu0 %v1100
        %1120 = vmatprep.subr.bf16.mxu0 0
        %1121 = vmatpush1.bf16.msra.mxu0 %v1099
        %1122 = vmatprep.subr.bf16.mxu0 0
        %1123 = vmatpush1.bf16.msra.mxu0 %v1098
        %1124 = vmatprep.subr.bf16.mxu0 0
        %1125 = vmatpush2.bf16.msra.mxu0 0
        %1126 = vmatprep.subr.bf16.mxu0 0
        %1127 = vmatpush2.bf16.msra.mxu0 0
        %1128 = vmatprep.subr.bf16.mxu0 0
        %1129 = vmatpush2.bf16.msra.mxu0 0
        %1130 = vmatprep.subr.bf16.mxu0 0
        %1131 = vmatpush2.bf16.msra.mxu0 0
        %1132 = vmatprep.subr.bf16.mxu0 0
        %1133 = vmatpush2.bf16.msra.mxu0 0
        %1134 = vmatprep.subr.bf16.mxu0 0
        %1135 = vmatpush2.bf16.msra.mxu0 0
        %1136 = vmatprep.subr.bf16.mxu0 0
        %1137 = vmatpush2.bf16.msra.mxu0 0
        %1138 = vmatprep.subr.bf16.mxu0 0
        %1139 = vmatpush2.bf16.msra.mxu0 0
        %1140 = vmatprep.mubr.bf16.mxu0 0
        %1141 = vmatmul.mubr.bf16.gmra.mxu0 %v1106
        %v1142 = vpop.f32.mrf.mxu0
        %v1143 = vadd.f32 %v1076, %v1142
        %v1144 = vpop.f32.mrf.mxu0
        %v1145 = vpop.f32.mrf.mxu0
        %v1146 = vadd.f32 %v1079, %v1145
        %v1147 = vpop.f32.mrf.mxu0
        %1148 = vdwg.mxu0
        %v1149 = vld [vmem:[#allocation2] sm:$0xe]
        %s1150 = scalar_lea.vmem [#allocation3], 64
        %v1151 = vld [vmem:[%s1150] sm:$0xf]
        %v1152 = vld [vmem:[%s1150 + $0x4] sm:$0xf]
        %v1153 = vld [vmem:[%s1150 + $0x8] sm:$0xf]
        %v1154 = vld [vmem:[%s1150 + $0xc] sm:$0xf]
        %v1155 = vld [vmem:[%s1150 + $0x10] sm:$0xf]
        %v1156 = vld [vmem:[%s1150 + $0x14] sm:$0xf]
        %v1157 = vld [vmem:[%s1150 + $0x18] sm:$0xf]
        %v1158 = vld [vmem:[%s1150 + $0x1c] sm:$0xf]
        %v1160 = vunpack.c.l.b16 %v1149
        %v1161 = vpack.c.b16 %v996, %v1160
        %vm1162 = vcmask 1046528
        %v1163 = vrot.slane %v1161, 1
        %v1164 = vrot.slane %v999, 1
        %v1165 = vsel %vm1162, %v1163, %v1164
        %v1174 = vunpack.c.l.b16 %v1151
        %v1175 = vunpack.c.l.b16 %v1152
        %v1176 = vunpack.c.l.b16 %v1153
        %v1177 = vunpack.c.l.b16 %v1154
        %v1178 = vunpack.c.l.b16 %v1155
        %v1179 = vunpack.c.l.b16 %v1156
        %v1180 = vunpack.c.l.b16 %v1157
        %v1181 = vunpack.c.l.b16 %v1158
        %v1182 = vpack.c.b16 %v1175, %v1174
        %v1183 = vpack.c.b16 %v1177, %v1176
        %v1184 = vpack.c.b16 %v1179, %v1178
        %v1185 = vpack.c.b16 %v1181, %v1180
        %v1191 = vsel %vm1037, %v1165, 0
        %1193 = vmatprep.subr.bf16.mxu0 0
        %1194 = vmatpush1.bf16.msra.mxu0 0
        %1195 = vmatprep.subr.bf16.mxu0 0
        %1196 = vmatpush1.bf16.msra.mxu0 0
        %1197 = vmatprep.subr.bf16.mxu0 0
        %1198 = vmatpush1.bf16.msra.mxu0 0
        %1199 = vmatprep.subr.bf16.mxu0 0
        %1200 = vmatpush1.bf16.msra.mxu0 0
        %1201 = vmatprep.subr.bf16.mxu0 0
        %1202 = vmatpush1.bf16.msra.mxu0 %v1185
        %1203 = vmatprep.subr.bf16.mxu0 0
        %1204 = vmatpush1.bf16.msra.mxu0 %v1184
        %1205 = vmatprep.subr.bf16.mxu0 0
        %1206 = vmatpush1.bf16.msra.mxu0 %v1183
        %1207 = vmatprep.subr.bf16.mxu0 0
        %1208 = vmatpush1.bf16.msra.mxu0 %v1182
        %1209 = vmatprep.subr.bf16.mxu0 0
        %1210 = vmatpush2.bf16.msra.mxu0 0
        %1211 = vmatprep.subr.bf16.mxu0 0
        %1212 = vmatpush2.bf16.msra.mxu0 0
        %1213 = vmatprep.subr.bf16.mxu0 0
        %1214 = vmatpush2.bf16.msra.mxu0 0
        %1215 = vmatprep.subr.bf16.mxu0 0
        %1216 = vmatpush2.bf16.msra.mxu0 0
        %1217 = vmatprep.subr.bf16.mxu0 0
        %1218 = vmatpush2.bf16.msra.mxu0 0
        %1219 = vmatprep.subr.bf16.mxu0 0
        %1220 = vmatpush2.bf16.msra.mxu0 0
        %1221 = vmatprep.subr.bf16.mxu0 0
        %1222 = vmatpush2.bf16.msra.mxu0 0
        %1223 = vmatprep.subr.bf16.mxu0 0
        %1224 = vmatpush2.bf16.msra.mxu0 0
        %1225 = vmatprep.mubr.bf16.mxu0 0
        %1226 = vmatmul.mubr.bf16.gmra.mxu0 %v1191
        %v1227 = vpop.f32.mrf.mxu0
        %v1228 = vadd.f32 0.0, %v1227
        %v1229 = vpop.f32.mrf.mxu0
        %v1230 = vpop.f32.mrf.mxu0
        %v1231 = vadd.f32 0.0, %v1230
        %v1232 = vpop.f32.mrf.mxu0
        %1233 = vdwg.mxu0
        %v1234 = vadd.f32 %v1143, %v1228
        %v1235 = vadd.f32 %v1146, %v1231
        %v1236 = vld [vmem:[%s2] sm:$0x1]
        %v1238 = vlaneseq
        %v1239 = vshrl.u32 %v1238, 7
        %v1240 = vsub.s32 0, %v1239
        %v1241 = vrot.slane %v1236, %v1240
        %v1243 = vadd.f32 %v1234, %v1241
        %v1244 = vadd.f32 %v1235, %v1241
        %v1245 = vmax.f32 %v1243, 0.0
        %v1246 = vmax.f32 %v1244, 0.0
        %v1247 = vpack.c.bf16 %v1246, %v1245
        %v1249 = vunpack.c.l.b16 %v1247
        %v1250 = vunpack.c.h.b16 %v1247
        %v1251 = vpack.c.b16 %v1249, %v1249
        %v1252 = vpack.c.b16 %v1250, %v1250
        %v1254 = vshrl.u32 %v1251, 16
        %v1256 = vrot.slane %v1254, 7
        %v1257 = vshll.u32 %v1251, 16
        %v1259 = vor.u32 %v1256, %v1257
        %v1260 = vrot.slane %v1256, 4
        %v1262 = vshrl.u32 %v1252, 16
        %v1264 = vrot.slane %v1262, 7
        %v1265 = vshll.u32 %v1252, 16
        %v1267 = vor.u32 %v1264, %v1265
        %v1268 = vsel %vm939, %v1260, %v1267
        %v1269 = vrot.slane %v1264, 4
        %vm1273 = vcmask 1043456
        %vm1274 = vmand %vm1273, %vm922
        %v1275 = vsel %vm1274, %v1259, %v972
        %1276 = vst [vmem:[#allocation2] sm:$0xf] %v1275
        %1277 = vst [vmem:[#allocation2 + $0x8] sm:$0xf] %v1268
        %v1278 = vld [vmem:[#allocation2 + $0x10] sm:$0x1]
        %v1279 = vsel %vm914, %v1269, %v1278
        %1280 = vst [vmem:[#allocation2 + $0x10] sm:$0x1] %v1279
        %v1281 = vld [vmem:[#allocation2] sm:$0xf]
        %v1282 = vld [vmem:[#allocation2 + $0x8] sm:$0xf]
        %v1283 = vld [vmem:[#allocation5] sm:$0xff]
        %v1284 = vld [vmem:[#allocation5 + $0x8] sm:$0xff]
        %v1285 = vld [vmem:[#allocation5 + $0x10] sm:$0xff]
        %v1286 = vld [vmem:[#allocation5 + $0x18] sm:$0xff]
        %v1287 = vld [vmem:[#allocation5 + $0x20] sm:$0xff]
        %v1288 = vld [vmem:[#allocation5 + $0x28] sm:$0xff]
        %v1289 = vld [vmem:[#allocation5 + $0x30] sm:$0xff]
        %v1290 = vld [vmem:[#allocation5 + $0x38] sm:$0xff]
        %v1291 = vld [vmem:[#allocation5 + $0x40] sm:$0xff]
        %v1292 = vld [vmem:[#allocation5 + $0x48] sm:$0xff]
        %v1293 = vld [vmem:[#allocation5 + $0x50] sm:$0xff]
        %v1294 = vld [vmem:[#allocation5 + $0x58] sm:$0xff]
        %v1295 = vld [vmem:[#allocation5 + $0x60] sm:$0xff]
        %v1296 = vld [vmem:[#allocation5 + $0x68] sm:$0xff]
        %v1297 = vld [vmem:[#allocation5 + $0x70] sm:$0xff]
        %v1298 = vld [vmem:[#allocation5 + $0x78] sm:$0xff]
        %v1299 = vld [vmem:[#allocation2 + $0x10] sm:$0x1]
        %s1300 = scalar_lea.vmem [#allocation5], 128
        %v1301 = vld [vmem:[%s1300] sm:$0xff]
        %v1302 = vld [vmem:[%s1300 + $0x8] sm:$0xff]
        %v1303 = vld [vmem:[%s1300 + $0x10] sm:$0xff]
        %v1304 = vld [vmem:[%s1300 + $0x18] sm:$0xff]
        %v1305 = vld [vmem:[%s1300 + $0x20] sm:$0xff]
        %v1306 = vld [vmem:[%s1300 + $0x28] sm:$0xff]
        %v1307 = vld [vmem:[%s1300 + $0x30] sm:$0xff]
        %v1308 = vld [vmem:[%s1300 + $0x38] sm:$0xff]
        %v1309 = vld [vmem:[%s1300 + $0x40] sm:$0xff]
        %v1310 = vld [vmem:[%s1300 + $0x48] sm:$0xff]
        %v1311 = vld [vmem:[%s1300 + $0x50] sm:$0xff]
        %v1312 = vld [vmem:[%s1300 + $0x58] sm:$0xff]
        %v1313 = vld [vmem:[%s1300 + $0x60] sm:$0xff]
        %v1314 = vld [vmem:[%s1300 + $0x68] sm:$0xff]
        %v1315 = vld [vmem:[%s1300 + $0x70] sm:$0xff]
        %v1316 = vld [vmem:[%s1300 + $0x78] sm:$0xff]
        %v1320 = vunpack.c.l.b16 %v1281
        %v1321 = vunpack.c.l.b16 %v1282
        %v1322 = vunpack.c.l.b16 %v1299
        %v1323 = vpack.c.b16 %v1321, %v1320
        %v1324 = vpack.c.b16 %v1322, %v1322
        %v1326 = vshrl.u32 %v1323, 16
        %v1328 = vshll.u32 %v1323, 16
        %v1330 = vrot.slane %v1328, 1
        %v1331 = vor.u32 %v1326, %v1330
        %v1333 = vshll.u32 %v1324, 16
        %v1335 = vrot.slane %v1333, 1
        %v1336 = vsel %vm1000, %v1331, %v1335
        %v1354 = vunpack.c.l.b16 %v1301
        %v1355 = vunpack.c.h.b16 %v1301
        %v1356 = vunpack.c.l.b16 %v1302
        %v1357 = vunpack.c.h.b16 %v1302
        %v1358 = vunpack.c.l.b16 %v1303
        %v1359 = vunpack.c.h.b16 %v1303
        %v1360 = vunpack.c.l.b16 %v1304
        %v1361 = vunpack.c.h.b16 %v1304
        %v1362 = vunpack.c.l.b16 %v1305
        %v1363 = vunpack.c.h.b16 %v1305
        %v1364 = vunpack.c.l.b16 %v1306
        %v1365 = vunpack.c.h.b16 %v1306
        %v1366 = vunpack.c.l.b16 %v1307
        %v1367 = vunpack.c.h.b16 %v1307
        %v1368 = vunpack.c.l.b16 %v1308
        %v1369 = vunpack.c.h.b16 %v1308
        %v1370 = vunpack.c.l.b16 %v1309
        %v1371 = vunpack.c.h.b16 %v1309
        %v1372 = vunpack.c.l.b16 %v1310
        %v1373 = vunpack.c.h.b16 %v1310
        %v1374 = vunpack.c.l.b16 %v1311
        %v1375 = vunpack.c.h.b16 %v1311
        %v1376 = vunpack.c.l.b16 %v1312
        %v1377 = vunpack.c.h.b16 %v1312
        %v1378 = vunpack.c.l.b16 %v1313
        %v1379 = vunpack.c.h.b16 %v1313
        %v1380 = vunpack.c.l.b16 %v1314
        %v1381 = vunpack.c.h.b16 %v1314
        %v1382 = vunpack.c.l.b16 %v1315
        %v1383 = vunpack.c.h.b16 %v1315
        %v1384 = vunpack.c.l.b16 %v1316
        %v1385 = vunpack.c.h.b16 %v1316
        %v1386 = vpack.c.b16 %v1356, %v1354
        %v1387 = vpack.c.b16 %v1357, %v1355
        %v1388 = vpack.c.b16 %v1360, %v1358
        %v1389 = vpack.c.b16 %v1361, %v1359
        %v1390 = vpack.c.b16 %v1364, %v1362
        %v1391 = vpack.c.b16 %v1365, %v1363
        %v1392 = vpack.c.b16 %v1368, %v1366
        %v1393 = vpack.c.b16 %v1369, %v1367
        %v1394 = vpack.c.b16 %v1372, %v1370
        %v1395 = vpack.c.b16 %v1373, %v1371
        %v1396 = vpack.c.b16 %v1376, %v1374
        %v1397 = vpack.c.b16 %v1377, %v1375
        %v1398 = vpack.c.b16 %v1380, %v1378
        %v1399 = vpack.c.b16 %v1381, %v1379
        %v1400 = vpack.c.b16 %v1384, %v1382
        %v1401 = vpack.c.b16 %v1385, %v1383
        %1418 = vmatprep.subr.bf16.mxu0 %v1401
        %1419 = vmatpush1.bf16.msra.mxu0 %v1400
        %1420 = vmatprep.subr.bf16.mxu0 %v1399
        %1421 = vmatpush1.bf16.msra.mxu0 %v1398
        %1422 = vmatprep.subr.bf16.mxu0 %v1397
        %1423 = vmatpush1.bf16.msra.mxu0 %v1396
        %1424 = vmatprep.subr.bf16.mxu0 %v1395
        %1425 = vmatpush1.bf16.msra.mxu0 %v1394
        %1426 = vmatprep.subr.bf16.mxu0 %v1393
        %1427 = vmatpush1.bf16.msra.mxu0 %v1392
        %1428 = vmatprep.subr.bf16.mxu0 %v1391
        %1429 = vmatpush1.bf16.msra.mxu0 %v1390
        %1430 = vmatprep.subr.bf16.mxu0 %v1389
        %1431 = vmatpush1.bf16.msra.mxu0 %v1388
        %1432 = vmatprep.subr.bf16.mxu0 %v1387
        %1433 = vmatpush1.bf16.msra.mxu0 %v1386
        %1434 = vmatprep.subr.bf16.mxu0 0
        %1435 = vmatpush2.bf16.msra.mxu0 0
        %1436 = vmatprep.subr.bf16.mxu0 0
        %1437 = vmatpush2.bf16.msra.mxu0 0
        %1438 = vmatprep.subr.bf16.mxu0 0
        %1439 = vmatpush2.bf16.msra.mxu0 0
        %1440 = vmatprep.subr.bf16.mxu0 0
        %1441 = vmatpush2.bf16.msra.mxu0 0
        %1442 = vmatprep.subr.bf16.mxu0 0
        %1443 = vmatpush2.bf16.msra.mxu0 0
        %1444 = vmatprep.subr.bf16.mxu0 0
        %1445 = vmatpush2.bf16.msra.mxu0 0
        %1446 = vmatprep.subr.bf16.mxu0 0
        %1447 = vmatpush2.bf16.msra.mxu0 0
        %1448 = vmatprep.subr.bf16.mxu0 0
        %1449 = vmatpush2.bf16.msra.mxu0 0
        %1450 = vmatprep.mubr.bf16.mxu0 0
        %1451 = vmatmul.mubr.bf16.gmra.mxu0 %v1336
        %v1452 = vpop.f32.mrf.mxu0
        %v1453 = vadd.f32 0.0, %v1452
        %v1454 = vpop.f32.mrf.mxu0
        %v1455 = vadd.f32 0.0, %v1454
        %v1456 = vpop.f32.mrf.mxu0
        %v1457 = vadd.f32 0.0, %v1456
        %v1458 = vpop.f32.mrf.mxu0
        %v1459 = vadd.f32 0.0, %v1458
        %1460 = vdwg.mxu0
        %v1478 = vunpack.c.l.b16 %v1283
        %v1479 = vunpack.c.h.b16 %v1283
        %v1480 = vunpack.c.l.b16 %v1284
        %v1481 = vunpack.c.h.b16 %v1284
        %v1482 = vunpack.c.l.b16 %v1285
        %v1483 = vunpack.c.h.b16 %v1285
        %v1484 = vunpack.c.l.b16 %v1286
        %v1485 = vunpack.c.h.b16 %v1286
        %v1486 = vunpack.c.l.b16 %v1287
        %v1487 = vunpack.c.h.b16 %v1287
        %v1488 = vunpack.c.l.b16 %v1288
        %v1489 = vunpack.c.h.b16 %v1288
        %v1490 = vunpack.c.l.b16 %v1289
        %v1491 = vunpack.c.h.b16 %v1289
        %v1492 = vunpack.c.l.b16 %v1290
        %v1493 = vunpack.c.h.b16 %v1290
        %v1494 = vunpack.c.l.b16 %v1291
        %v1495 = vunpack.c.h.b16 %v1291
        %v1496 = vunpack.c.l.b16 %v1292
        %v1497 = vunpack.c.h.b16 %v1292
        %v1498 = vunpack.c.l.b16 %v1293
        %v1499 = vunpack.c.h.b16 %v1293
        %v1500 = vunpack.c.l.b16 %v1294
        %v1501 = vunpack.c.h.b16 %v1294
        %v1502 = vunpack.c.l.b16 %v1295
        %v1503 = vunpack.c.h.b16 %v1295
        %v1504 = vunpack.c.l.b16 %v1296
        %v1505 = vunpack.c.h.b16 %v1296
        %v1506 = vunpack.c.l.b16 %v1297
        %v1507 = vunpack.c.h.b16 %v1297
        %v1508 = vunpack.c.l.b16 %v1298
        %v1509 = vunpack.c.h.b16 %v1298
        %v1510 = vpack.c.b16 %v1480, %v1478
        %v1511 = vpack.c.b16 %v1481, %v1479
        %v1512 = vpack.c.b16 %v1484, %v1482
        %v1513 = vpack.c.b16 %v1485, %v1483
        %v1514 = vpack.c.b16 %v1488, %v1486
        %v1515 = vpack.c.b16 %v1489, %v1487
        %v1516 = vpack.c.b16 %v1492, %v1490
        %v1517 = vpack.c.b16 %v1493, %v1491
        %v1518 = vpack.c.b16 %v1496, %v1494
        %v1519 = vpack.c.b16 %v1497, %v1495
        %v1520 = vpack.c.b16 %v1500, %v1498
        %v1521 = vpack.c.b16 %v1501, %v1499
        %v1522 = vpack.c.b16 %v1504, %v1502
        %v1523 = vpack.c.b16 %v1505, %v1503
        %v1524 = vpack.c.b16 %v1508, %v1506
        %v1525 = vpack.c.b16 %v1509, %v1507
        %1542 = vmatprep.subr.bf16.mxu0 %v1525
        %1543 = vmatpush1.bf16.msra.mxu0 %v1524
        %1544 = vmatprep.subr.bf16.mxu0 %v1523
        %1545 = vmatpush1.bf16.msra.mxu0 %v1522
        %1546 = vmatprep.subr.bf16.mxu0 %v1521
        %1547 = vmatpush1.bf16.msra.mxu0 %v1520
        %1548 = vmatprep.subr.bf16.mxu0 %v1519
        %1549 = vmatpush1.bf16.msra.mxu0 %v1518
        %1550 = vmatprep.subr.bf16.mxu0 %v1517
        %1551 = vmatpush1.bf16.msra.mxu0 %v1516
        %1552 = vmatprep.subr.bf16.mxu0 %v1515
        %1553 = vmatpush1.bf16.msra.mxu0 %v1514
        %1554 = vmatprep.subr.bf16.mxu0 %v1513
        %1555 = vmatpush1.bf16.msra.mxu0 %v1512
        %1556 = vmatprep.subr.bf16.mxu0 %v1511
        %1557 = vmatpush1.bf16.msra.mxu0 %v1510
        %1558 = vmatprep.subr.bf16.mxu0 0
        %1559 = vmatpush2.bf16.msra.mxu0 0
        %1560 = vmatprep.subr.bf16.mxu0 0
        %1561 = vmatpush2.bf16.msra.mxu0 0
        %1562 = vmatprep.subr.bf16.mxu0 0
        %1563 = vmatpush2.bf16.msra.mxu0 0
        %1564 = vmatprep.subr.bf16.mxu0 0
        %1565 = vmatpush2.bf16.msra.mxu0 0
        %1566 = vmatprep.subr.bf16.mxu0 0
        %1567 = vmatpush2.bf16.msra.mxu0 0
        %1568 = vmatprep.subr.bf16.mxu0 0
        %1569 = vmatpush2.bf16.msra.mxu0 0
        %1570 = vmatprep.subr.bf16.mxu0 0
        %1571 = vmatpush2.bf16.msra.mxu0 0
        %1572 = vmatprep.subr.bf16.mxu0 0
        %1573 = vmatpush2.bf16.msra.mxu0 0
        %1574 = vmatprep.mubr.bf16.mxu0 0
        %1575 = vmatmul.mubr.bf16.gmra.mxu0 %v1323
        %v1576 = vpop.f32.mrf.mxu0
        %v1577 = vadd.f32 %v1453, %v1576
        %v1578 = vpop.f32.mrf.mxu0
        %v1579 = vadd.f32 %v1455, %v1578
        %v1580 = vpop.f32.mrf.mxu0
        %v1581 = vadd.f32 %v1457, %v1580
        %v1582 = vpop.f32.mrf.mxu0
        %v1583 = vadd.f32 %v1459, %v1582
        %1584 = vdwg.mxu0
        %v1585 = vld [vmem:[#allocation2] sm:$0xe]
        %s1586 = scalar_lea.vmem [#allocation5], 256
        %v1587 = vld [vmem:[%s1586] sm:$0xff]
        %v1588 = vld [vmem:[%s1586 + $0x8] sm:$0xff]
        %v1589 = vld [vmem:[%s1586 + $0x10] sm:$0xff]
        %v1590 = vld [vmem:[%s1586 + $0x18] sm:$0xff]
        %v1591 = vld [vmem:[%s1586 + $0x20] sm:$0xff]
        %v1592 = vld [vmem:[%s1586 + $0x28] sm:$0xff]
        %v1593 = vld [vmem:[%s1586 + $0x30] sm:$0xff]
        %v1594 = vld [vmem:[%s1586 + $0x38] sm:$0xff]
        %v1595 = vld [vmem:[%s1586 + $0x40] sm:$0xff]
        %v1596 = vld [vmem:[%s1586 + $0x48] sm:$0xff]
        %v1597 = vld [vmem:[%s1586 + $0x50] sm:$0xff]
        %v1598 = vld [vmem:[%s1586 + $0x58] sm:$0xff]
        %v1599 = vld [vmem:[%s1586 + $0x60] sm:$0xff]
        %v1600 = vld [vmem:[%s1586 + $0x68] sm:$0xff]
        %v1601 = vld [vmem:[%s1586 + $0x70] sm:$0xff]
        %v1602 = vld [vmem:[%s1586 + $0x78] sm:$0xff]
        %v1604 = vunpack.c.l.b16 %v1585
        %v1605 = vpack.c.b16 %v1321, %v1604
        %v1606 = vrot.slane %v1605, 1
        %v1607 = vrot.slane %v1324, 1
        %v1608 = vsel %vm1162, %v1606, %v1607
        %v1626 = vunpack.c.l.b16 %v1587
        %v1627 = vunpack.c.h.b16 %v1587
        %v1628 = vunpack.c.l.b16 %v1588
        %v1629 = vunpack.c.h.b16 %v1588
        %v1630 = vunpack.c.l.b16 %v1589
        %v1631 = vunpack.c.h.b16 %v1589
        %v1632 = vunpack.c.l.b16 %v1590
        %v1633 = vunpack.c.h.b16 %v1590
        %v1634 = vunpack.c.l.b16 %v1591
        %v1635 = vunpack.c.h.b16 %v1591
        %v1636 = vunpack.c.l.b16 %v1592
        %v1637 = vunpack.c.h.b16 %v1592
        %v1638 = vunpack.c.l.b16 %v1593
        %v1639 = vunpack.c.h.b16 %v1593
        %v1640 = vunpack.c.l.b16 %v1594
        %v1641 = vunpack.c.h.b16 %v1594
        %v1642 = vunpack.c.l.b16 %v1595
        %v1643 = vunpack.c.h.b16 %v1595
        %v1644 = vunpack.c.l.b16 %v1596
        %v1645 = vunpack.c.h.b16 %v1596
        %v1646 = vunpack.c.l.b16 %v1597
        %v1647 = vunpack.c.h.b16 %v1597
        %v1648 = vunpack.c.l.b16 %v1598
        %v1649 = vunpack.c.h.b16 %v1598
        %v1650 = vunpack.c.l.b16 %v1599
        %v1651 = vunpack.c.h.b16 %v1599
        %v1652 = vunpack.c.l.b16 %v1600
        %v1653 = vunpack.c.h.b16 %v1600
        %v1654 = vunpack.c.l.b16 %v1601
        %v1655 = vunpack.c.h.b16 %v1601
        %v1656 = vunpack.c.l.b16 %v1602
        %v1657 = vunpack.c.h.b16 %v1602
        %v1658 = vpack.c.b16 %v1628, %v1626
        %v1659 = vpack.c.b16 %v1629, %v1627
        %v1660 = vpack.c.b16 %v1632, %v1630
        %v1661 = vpack.c.b16 %v1633, %v1631
        %v1662 = vpack.c.b16 %v1636, %v1634
        %v1663 = vpack.c.b16 %v1637, %v1635
        %v1664 = vpack.c.b16 %v1640, %v1638
        %v1665 = vpack.c.b16 %v1641, %v1639
        %v1666 = vpack.c.b16 %v1644, %v1642
        %v1667 = vpack.c.b16 %v1645, %v1643
        %v1668 = vpack.c.b16 %v1648, %v1646
        %v1669 = vpack.c.b16 %v1649, %v1647
        %v1670 = vpack.c.b16 %v1652, %v1650
        %v1671 = vpack.c.b16 %v1653, %v1651
        %v1672 = vpack.c.b16 %v1656, %v1654
        %v1673 = vpack.c.b16 %v1657, %v1655
        %1690 = vmatprep.subr.bf16.mxu0 %v1673
        %1691 = vmatpush1.bf16.msra.mxu0 %v1672
        %1692 = vmatprep.subr.bf16.mxu0 %v1671
        %1693 = vmatpush1.bf16.msra.mxu0 %v1670
        %1694 = vmatprep.subr.bf16.mxu0 %v1669
        %1695 = vmatpush1.bf16.msra.mxu0 %v1668
        %1696 = vmatprep.subr.bf16.mxu0 %v1667
        %1697 = vmatpush1.bf16.msra.mxu0 %v1666
        %1698 = vmatprep.subr.bf16.mxu0 %v1665
        %1699 = vmatpush1.bf16.msra.mxu0 %v1664
        %1700 = vmatprep.subr.bf16.mxu0 %v1663
        %1701 = vmatpush1.bf16.msra.mxu0 %v1662
        %1702 = vmatprep.subr.bf16.mxu0 %v1661
        %1703 = vmatpush1.bf16.msra.mxu0 %v1660
        %1704 = vmatprep.subr.bf16.mxu0 %v1659
        %1705 = vmatpush1.bf16.msra.mxu0 %v1658
        %1706 = vmatprep.subr.bf16.mxu0 0
        %1707 = vmatpush2.bf16.msra.mxu0 0
        %1708 = vmatprep.subr.bf16.mxu0 0
        %1709 = vmatpush2.bf16.msra.mxu0 0
        %1710 = vmatprep.subr.bf16.mxu0 0
        %1711 = vmatpush2.bf16.msra.mxu0 0
        %1712 = vmatprep.subr.bf16.mxu0 0
        %1713 = vmatpush2.bf16.msra.mxu0 0
        %1714 = vmatprep.subr.bf16.mxu0 0
        %1715 = vmatpush2.bf16.msra.mxu0 0
        %1716 = vmatprep.subr.bf16.mxu0 0
        %1717 = vmatpush2.bf16.msra.mxu0 0
        %1718 = vmatprep.subr.bf16.mxu0 0
        %1719 = vmatpush2.bf16.msra.mxu0 0
        %1720 = vmatprep.subr.bf16.mxu0 0
        %1721 = vmatpush2.bf16.msra.mxu0 0
        %1722 = vmatprep.mubr.bf16.mxu0 0
        %1723 = vmatmul.mubr.bf16.gmra.mxu0 %v1608
        %v1724 = vpop.f32.mrf.mxu0
        %v1725 = vadd.f32 0.0, %v1724
        %v1726 = vpop.f32.mrf.mxu0
        %v1727 = vadd.f32 0.0, %v1726
        %v1728 = vpop.f32.mrf.mxu0
        %v1729 = vadd.f32 0.0, %v1728
        %v1730 = vpop.f32.mrf.mxu0
        %v1731 = vadd.f32 0.0, %v1730
        %1732 = vdwg.mxu0
        %v1733 = vadd.f32 %v1577, %v1725
        %v1734 = vadd.f32 %v1579, %v1727
        %v1735 = vadd.f32 %v1581, %v1729
        %v1736 = vadd.f32 %v1583, %v1731
        %v1737 = vld [vmem:[%s4] sm:$0x3]
        %v1739 = vlaneseq
        %v1740 = vshrl.u32 %v1739, 7
        %v1741 = vsub.s32 0, %v1740
        %v1742 = vrot.slane %v1737, %v1741
        %v1743 = vlaneseq
        %v1744 = vshrl.u32 %v1743, 7
        %v1745 = vsub.s32 1, %v1744
        %v1746 = vrot.slane %v1737, %v1745
        %v1749 = vadd.f32 %v1733, %v1742
        %v1750 = vadd.f32 %v1734, %v1746
        %v1751 = vadd.f32 %v1735, %v1742
        %v1752 = vadd.f32 %v1736, %v1746
        %v1753 = vmax.f32 %v1749, 0.0
        %v1754 = vmax.f32 %v1750, 0.0
        %v1755 = vmax.f32 %v1751, 0.0
        %v1756 = vmax.f32 %v1752, 0.0
        %v1757 = vpack.c.bf16 %v1755, %v1753
        %v1758 = vpack.c.bf16 %v1756, %v1754
        %v1761 = vunpack.c.l.b16 %v1757
        %v1762 = vunpack.c.l.b16 %v1758
        %v1763 = vunpack.c.h.b16 %v1757
        %v1764 = vunpack.c.h.b16 %v1758
        %v1765 = vpack.c.b16 %v1762, %v1761
        %v1766 = vpack.c.b16 %v1764, %v1763
        %v1768 = vshrl.u32 %v1765, 16
        %v1770 = vrot.slane %v1768, 7
        %v1771 = vshll.u32 %v1765, 16
        %v1773 = vor.u32 %v1770, %v1771
        %v1774 = vrot.slane %v1770, 4
        %v1776 = vshrl.u32 %v1766, 16
        %v1778 = vrot.slane %v1776, 7
        %v1779 = vshll.u32 %v1766, 16
        %v1781 = vor.u32 %v1778, %v1779
        %v1782 = vsel %vm939, %v1774, %v1781
        %v1783 = vrot.slane %v1778, 4
        %vm1787 = vcmask 1047556
        %vm1788 = vmand %vm1787, %vm924
        %vm1789 = vmor %vm1788, %vm1274
        %v1790 = vld [vmem:[#allocation2] sm:$0xff]
        %v1791 = vsel %vm1789, %v1773, %v1790
        %1792 = vst [vmem:[#allocation2] sm:$0xff] %v1791
        %1793 = vst [vmem:[#allocation2 + $0x8] sm:$0xff] %v1782
        %v1794 = vld [vmem:[#allocation2 + $0x10] sm:$0x11]
        %v1795 = vsel %vm918, %v1783, %v1794
        %1796 = vst [vmem:[#allocation2 + $0x10] sm:$0x11] %v1795
        %v1797 = vld [vmem:[#allocation2] sm:$0xff]
        %v1798 = vld [vmem:[#allocation2 + $0x8] sm:$0xff]
        %v1799 = vld [vmem:[#allocation7] sm:$0xff]
        %v1800 = vld [vmem:[#allocation7 + $0x8] sm:$0xff]
        %v1801 = vld [vmem:[#allocation7 + $0x10] sm:$0xff]
        %v1802 = vld [vmem:[#allocation7 + $0x18] sm:$0xff]
        %v1803 = vld [vmem:[#allocation7 + $0x20] sm:$0xff]
        %v1804 = vld [vmem:[#allocation7 + $0x28] sm:$0xff]
        %v1805 = vld [vmem:[#allocation7 + $0x30] sm:$0xff]
        %v1806 = vld [vmem:[#allocation7 + $0x38] sm:$0xff]
        %v1807 = vld [vmem:[#allocation7 + $0x40] sm:$0xff]
        %v1808 = vld [vmem:[#allocation7 + $0x48] sm:$0xff]
        %v1809 = vld [vmem:[#allocation7 + $0x50] sm:$0xff]
        %v1810 = vld [vmem:[#allocation7 + $0x58] sm:$0xff]
        %v1811 = vld [vmem:[#allocation7 + $0x60] sm:$0xff]
        %v1812 = vld [vmem:[#allocation7 + $0x68] sm:$0xff]
        %v1813 = vld [vmem:[#allocation7 + $0x70] sm:$0xff]
        %v1814 = vld [vmem:[#allocation7 + $0x78] sm:$0xff]
        %v1815 = vld [vmem:[#allocation7 + $0x80] sm:$0xff]
        %v1816 = vld [vmem:[#allocation7 + $0x88] sm:$0xff]
        %v1817 = vld [vmem:[#allocation7 + $0x90] sm:$0xff]
        %v1818 = vld [vmem:[#allocation7 + $0x98] sm:$0xff]
        %v1819 = vld [vmem:[#allocation7 + $0xa0] sm:$0xff]
        %v1820 = vld [vmem:[#allocation7 + $0xa8] sm:$0xff]
        %v1821 = vld [vmem:[#allocation7 + $0xb0] sm:$0xff]
        %v1822 = vld [vmem:[#allocation7 + $0xb8] sm:$0xff]
        %v1823 = vld [vmem:[#allocation7 + $0xc0] sm:$0xff]
        %v1824 = vld [vmem:[#allocation7 + $0xc8] sm:$0xff]
        %v1825 = vld [vmem:[#allocation7 + $0xd0] sm:$0xff]
        %v1826 = vld [vmem:[#allocation7 + $0xd8] sm:$0xff]
        %v1827 = vld [vmem:[#allocation7 + $0xe0] sm:$0xff]
        %v1828 = vld [vmem:[#allocation7 + $0xe8] sm:$0xff]
        %v1829 = vld [vmem:[#allocation7 + $0xf0] sm:$0xff]
        %v1830 = vld [vmem:[#allocation7 + $0xf8] sm:$0xff]
        %v1831 = vld [vmem:[#allocation2 + $0x10] sm:$0x11]
        %s1832 = scalar_lea.vmem [#allocation7], 256
        %v1833 = vld [vmem:[%s1832] sm:$0xff]
        %v1834 = vld [vmem:[%s1832 + $0x8] sm:$0xff]
        %v1835 = vld [vmem:[%s1832 + $0x10] sm:$0xff]
        %v1836 = vld [vmem:[%s1832 + $0x18] sm:$0xff]
        %v1837 = vld [vmem:[%s1832 + $0x20] sm:$0xff]
        %v1838 = vld [vmem:[%s1832 + $0x28] sm:$0xff]
        %v1839 = vld [vmem:[%s1832 + $0x30] sm:$0xff]
        %v1840 = vld [vmem:[%s1832 + $0x38] sm:$0xff]
        %v1841 = vld [vmem:[%s1832 + $0x40] sm:$0xff]
        %v1842 = vld [vmem:[%s1832 + $0x48] sm:$0xff]
        %v1843 = vld [vmem:[%s1832 + $0x50] sm:$0xff]
        %v1844 = vld [vmem:[%s1832 + $0x58] sm:$0xff]
        %v1845 = vld [vmem:[%s1832 + $0x60] sm:$0xff]
        %v1846 = vld [vmem:[%s1832 + $0x68] sm:$0xff]
        %v1847 = vld [vmem:[%s1832 + $0x70] sm:$0xff]
        %v1848 = vld [vmem:[%s1832 + $0x78] sm:$0xff]
        %v1849 = vld [vmem:[%s1832 + $0x80] sm:$0xff]
        %v1850 = vld [vmem:[%s1832 + $0x88] sm:$0xff]
        %v1851 = vld [vmem:[%s1832 + $0x90] sm:$0xff]
        %v1852 = vld [vmem:[%s1832 + $0x98] sm:$0xff]
        %v1853 = vld [vmem:[%s1832 + $0xa0] sm:$0xff]
        %v1854 = vld [vmem:[%s1832 + $0xa8] sm:$0xff]
        %v1855 = vld [vmem:[%s1832 + $0xb0] sm:$0xff]
        %v1856 = vld [vmem:[%s1832 + $0xb8] sm:$0xff]
        %v1857 = vld [vmem:[%s1832 + $0xc0] sm:$0xff]
        %v1858 = vld [vmem:[%s1832 + $0xc8] sm:$0xff]
        %v1859 = vld [vmem:[%s1832 + $0xd0] sm:$0xff]
        %v1860 = vld [vmem:[%s1832 + $0xd8] sm:$0xff]
        %v1861 = vld [vmem:[%s1832 + $0xe0] sm:$0xff]
        %v1862 = vld [vmem:[%s1832 + $0xe8] sm:$0xff]
        %v1863 = vld [vmem:[%s1832 + $0xf0] sm:$0xff]
        %v1864 = vld [vmem:[%s1832 + $0xf8] sm:$0xff]
        %v1868 = vunpack.c.l.b16 %v1797
        %v1869 = vunpack.c.h.b16 %v1797
        %v1870 = vunpack.c.l.b16 %v1798
        %v1871 = vunpack.c.h.b16 %v1798
        %v1872 = vunpack.c.l.b16 %v1831
        %v1873 = vunpack.c.h.b16 %v1831
        %v1874 = vpack.c.b16 %v1870, %v1868
        %v1875 = vpack.c.b16 %v1871, %v1869
        %v1876 = vpack.c.b16 %v1872, %v1872
        %v1877 = vpack.c.b16 %v1873, %v1873
        %v1879 = vshrl.u32 %v1874, 16
        %v1881 = vshll.u32 %v1874, 16
        %v1883 = vrot.slane %v1881, 1
        %v1884 = vor.u32 %v1879, %v1883
        %v1886 = vshll.u32 %v1876, 16
        %v1888 = vrot.slane %v1886, 1
        %v1889 = vsel %vm1000, %v1884, %v1888
        %v1891 = vshrl.u32 %v1875, 16
        %v1893 = vshll.u32 %v1875, 16
        %v1895 = vrot.slane %v1893, 1
        %v1896 = vor.u32 %v1891, %v1895
        %v1898 = vshll.u32 %v1877, 16
        %v1900 = vrot.slane %v1898, 1
        %v1901 = vsel %vm1000, %v1896, %v1900
        %v1936 = vunpack.c.l.b16 %v1833
        %v1937 = vunpack.c.h.b16 %v1833
        %v1938 = vunpack.c.l.b16 %v1834
        %v1939 = vunpack.c.h.b16 %v1834
        %v1940 = vunpack.c.l.b16 %v1835
        %v1941 = vunpack.c.h.b16 %v1835
        %v1942 = vunpack.c.l.b16 %v1836
        %v1943 = vunpack.c.h.b16 %v1836
        %v1944 = vunpack.c.l.b16 %v1837
        %v1945 = vunpack.c.h.b16 %v1837
        %v1946 = vunpack.c.l.b16 %v1838
        %v1947 = vunpack.c.h.b16 %v1838
        %v1948 = vunpack.c.l.b16 %v1839
        %v1949 = vunpack.c.h.b16 %v1839
        %v1950 = vunpack.c.l.b16 %v1840
        %v1951 = vunpack.c.h.b16 %v1840
        %v1952 = vunpack.c.l.b16 %v1841
        %v1953 = vunpack.c.h.b16 %v1841
        %v1954 = vunpack.c.l.b16 %v1842
        %v1955 = vunpack.c.h.b16 %v1842
        %v1956 = vunpack.c.l.b16 %v1843
        %v1957 = vunpack.c.h.b16 %v1843
        %v1958 = vunpack.c.l.b16 %v1844
        %v1959 = vunpack.c.h.b16 %v1844
        %v1960 = vunpack.c.l.b16 %v1845
        %v1961 = vunpack.c.h.b16 %v1845
        %v1962 = vunpack.c.l.b16 %v1846
        %v1963 = vunpack.c.h.b16 %v1846
        %v1964 = vunpack.c.l.b16 %v1847
        %v1965 = vunpack.c.h.b16 %v1847
        %v1966 = vunpack.c.l.b16 %v1848
        %v1967 = vunpack.c.h.b16 %v1848
        %v1968 = vunpack.c.l.b16 %v1849
        %v1969 = vunpack.c.h.b16 %v1849
        %v1970 = vunpack.c.l.b16 %v1850
        %v1971 = vunpack.c.h.b16 %v1850
        %v1972 = vunpack.c.l.b16 %v1851
        %v1973 = vunpack.c.h.b16 %v1851
        %v1974 = vunpack.c.l.b16 %v1852
        %v1975 = vunpack.c.h.b16 %v1852
        %v1976 = vunpack.c.l.b16 %v1853
        %v1977 = vunpack.c.h.b16 %v1853
        %v1978 = vunpack.c.l.b16 %v1854
        %v1979 = vunpack.c.h.b16 %v1854
        %v1980 = vunpack.c.l.b16 %v1855
        %v1981 = vunpack.c.h.b16 %v1855
        %v1982 = vunpack.c.l.b16 %v1856
        %v1983 = vunpack.c.h.b16 %v1856
        %v1984 = vunpack.c.l.b16 %v1857
        %v1985 = vunpack.c.h.b16 %v1857
        %v1986 = vunpack.c.l.b16 %v1858
        %v1987 = vunpack.c.h.b16 %v1858
        %v1988 = vunpack.c.l.b16 %v1859
        %v1989 = vunpack.c.h.b16 %v1859
        %v1990 = vunpack.c.l.b16 %v1860
        %v1991 = vunpack.c.h.b16 %v1860
        %v1992 = vunpack.c.l.b16 %v1861
        %v1993 = vunpack.c.h.b16 %v1861
        %v1994 = vunpack.c.l.b16 %v1862
        %v1995 = vunpack.c.h.b16 %v1862
        %v1996 = vunpack.c.l.b16 %v1863
        %v1997 = vunpack.c.h.b16 %v1863
        %v1998 = vunpack.c.l.b16 %v1864
        %v1999 = vunpack.c.h.b16 %v1864
        %v2000 = vpack.c.b16 %v1938, %v1936
        %v2001 = vpack.c.b16 %v1939, %v1937
        %v2002 = vpack.c.b16 %v1942, %v1940
        %v2003 = vpack.c.b16 %v1943, %v1941
        %v2004 = vpack.c.b16 %v1946, %v1944
        %v2005 = vpack.c.b16 %v1947, %v1945
        %v2006 = vpack.c.b16 %v1950, %v1948
        %v2007 = vpack.c.b16 %v1951, %v1949
        %v2008 = vpack.c.b16 %v1954, %v1952
        %v2009 = vpack.c.b16 %v1955, %v1953
        %v2010 = vpack.c.b16 %v1958, %v1956
        %v2011 = vpack.c.b16 %v1959, %v1957
        %v2012 = vpack.c.b16 %v1962, %v1960
        %v2013 = vpack.c.b16 %v1963, %v1961
        %v2014 = vpack.c.b16 %v1966, %v1964
        %v2015 = vpack.c.b16 %v1967, %v1965
        %v2016 = vpack.c.b16 %v1970, %v1968
        %v2017 = vpack.c.b16 %v1971, %v1969
        %v2018 = vpack.c.b16 %v1974, %v1972
        %v2019 = vpack.c.b16 %v1975, %v1973
        %v2020 = vpack.c.b16 %v1978, %v1976
        %v2021 = vpack.c.b16 %v1979, %v1977
        %v2022 = vpack.c.b16 %v1982, %v1980
        %v2023 = vpack.c.b16 %v1983, %v1981
        %v2024 = vpack.c.b16 %v1986, %v1984
        %v2025 = vpack.c.b16 %v1987, %v1985
        %v2026 = vpack.c.b16 %v1990, %v1988
        %v2027 = vpack.c.b16 %v1991, %v1989
        %v2028 = vpack.c.b16 %v1994, %v1992
        %v2029 = vpack.c.b16 %v1995, %v1993
        %v2030 = vpack.c.b16 %v1998, %v1996
        %v2031 = vpack.c.b16 %v1999, %v1997
        %2064 = vmatprep.subr.bf16.mxu0 %v2015
        %2065 = vmatpush1.bf16.msra.mxu0 %v2014
        %2066 = vmatprep.subr.bf16.mxu0 %v2013
        %2067 = vmatpush1.bf16.msra.mxu0 %v2012
        %2068 = vmatprep.subr.bf16.mxu0 %v2011
        %2069 = vmatpush1.bf16.msra.mxu0 %v2010
        %2070 = vmatprep.subr.bf16.mxu0 %v2009
        %2071 = vmatpush1.bf16.msra.mxu0 %v2008
        %2072 = vmatprep.subr.bf16.mxu0 %v2007
        %2073 = vmatpush1.bf16.msra.mxu0 %v2006
        %2074 = vmatprep.subr.bf16.mxu0 %v2005
        %2075 = vmatpush1.bf16.msra.mxu0 %v2004
        %2076 = vmatprep.subr.bf16.mxu0 %v2003
        %2077 = vmatpush1.bf16.msra.mxu0 %v2002
        %2078 = vmatprep.subr.bf16.mxu0 %v2001
        %2079 = vmatpush1.bf16.msra.mxu0 %v2000
        %2080 = vmatprep.subr.bf16.mxu0 %v2031
        %2081 = vmatpush2.bf16.msra.mxu0 %v2030
        %2082 = vmatprep.subr.bf16.mxu0 %v2029
        %2083 = vmatpush2.bf16.msra.mxu0 %v2028
        %2084 = vmatprep.subr.bf16.mxu0 %v2027
        %2085 = vmatpush2.bf16.msra.mxu0 %v2026
        %2086 = vmatprep.subr.bf16.mxu0 %v2025
        %2087 = vmatpush2.bf16.msra.mxu0 %v2024
        %2088 = vmatprep.subr.bf16.mxu0 %v2023
        %2089 = vmatpush2.bf16.msra.mxu0 %v2022
        %2090 = vmatprep.subr.bf16.mxu0 %v2021
        %2091 = vmatpush2.bf16.msra.mxu0 %v2020
        %2092 = vmatprep.subr.bf16.mxu0 %v2019
        %2093 = vmatpush2.bf16.msra.mxu0 %v2018
        %2094 = vmatprep.subr.bf16.mxu0 %v2017
        %2095 = vmatpush2.bf16.msra.mxu0 %v2016
        %2096 = vmatprep.mubr.bf16.mxu0 %v1901
        %2097 = vmatmul.mubr.bf16.gmra.mxu0 %v1889
        %v2098 = vpop.f32.mrf.mxu0
        %v2099 = vadd.f32 0.0, %v2098
        %v2100 = vpop.f32.mrf.mxu0
        %v2101 = vadd.f32 0.0, %v2100
        %v2102 = vpop.f32.mrf.mxu0
        %v2103 = vadd.f32 0.0, %v2102
        %v2104 = vpop.f32.mrf.mxu0
        %v2105 = vadd.f32 0.0, %v2104
        %2106 = vdwg.mxu0
        %v2141 = vunpack.c.l.b16 %v1799
        %v2142 = vunpack.c.h.b16 %v1799
        %v2143 = vunpack.c.l.b16 %v1800
        %v2144 = vunpack.c.h.b16 %v1800
        %v2145 = vunpack.c.l.b16 %v1801
        %v2146 = vunpack.c.h.b16 %v1801
        %v2147 = vunpack.c.l.b16 %v1802
        %v2148 = vunpack.c.h.b16 %v1802
        %v2149 = vunpack.c.l.b16 %v1803
        %v2150 = vunpack.c.h.b16 %v1803
        %v2151 = vunpack.c.l.b16 %v1804
        %v2152 = vunpack.c.h.b16 %v1804
        %v2153 = vunpack.c.l.b16 %v1805
        %v2154 = vunpack.c.h.b16 %v1805
        %v2155 = vunpack.c.l.b16 %v1806
        %v2156 = vunpack.c.h.b16 %v1806
        %v2157 = vunpack.c.l.b16 %v1807
        %v2158 = vunpack.c.h.b16 %v1807
        %v2159 = vunpack.c.l.b16 %v1808
        %v2160 = vunpack.c.h.b16 %v1808
        %v2161 = vunpack.c.l.b16 %v1809
        %v2162 = vunpack.c.h.b16 %v1809
        %v2163 = vunpack.c.l.b16 %v1810
        %v2164 = vunpack.c.h.b16 %v1810
        %v2165 = vunpack.c.l.b16 %v1811
        %v2166 = vunpack.c.h.b16 %v1811
        %v2167 = vunpack.c.l.b16 %v1812
        %v2168 = vunpack.c.h.b16 %v1812
        %v2169 = vunpack.c.l.b16 %v1813
        %v2170 = vunpack.c.h.b16 %v1813
        %v2171 = vunpack.c.l.b16 %v1814
        %v2172 = vunpack.c.h.b16 %v1814
        %v2173 = vunpack.c.l.b16 %v1815
        %v2174 = vunpack.c.h.b16 %v1815
        %v2175 = vunpack.c.l.b16 %v1816
        %v2176 = vunpack.c.h.b16 %v1816
        %v2177 = vunpack.c.l.b16 %v1817
        %v2178 = vunpack.c.h.b16 %v1817
        %v2179 = vunpack.c.l.b16 %v1818
        %v2180 = vunpack.c.h.b16 %v1818
        %v2181 = vunpack.c.l.b16 %v1819
        %v2182 = vunpack.c.h.b16 %v1819
        %v2183 = vunpack.c.l.b16 %v1820
        %v2184 = vunpack.c.h.b16 %v1820
        %v2185 = vunpack.c.l.b16 %v1821
        %v2186 = vunpack.c.h.b16 %v1821
        %v2187 = vunpack.c.l.b16 %v1822
        %v2188 = vunpack.c.h.b16 %v1822
        %v2189 = vunpack.c.l.b16 %v1823
        %v2190 = vunpack.c.h.b16 %v1823
        %v2191 = vunpack.c.l.b16 %v1824
        %v2192 = vunpack.c.h.b16 %v1824
        %v2193 = vunpack.c.l.b16 %v1825
        %v2194 = vunpack.c.h.b16 %v1825
        %v2195 = vunpack.c.l.b16 %v1826
        %v2196 = vunpack.c.h.b16 %v1826
        %v2197 = vunpack.c.l.b16 %v1827
        %v2198 = vunpack.c.h.b16 %v1827
        %v2199 = vunpack.c.l.b16 %v1828
        %v2200 = vunpack.c.h.b16 %v1828
        %v2201 = vunpack.c.l.b16 %v1829
        %v2202 = vunpack.c.h.b16 %v1829
        %v2203 = vunpack.c.l.b16 %v1830
        %v2204 = vunpack.c.h.b16 %v1830
        %v2205 = vpack.c.b16 %v2143, %v2141
        %v2206 = vpack.c.b16 %v2144, %v2142
        %v2207 = vpack.c.b16 %v2147, %v2145
        %v2208 = vpack.c.b16 %v2148, %v2146
        %v2209 = vpack.c.b16 %v2151, %v2149
        %v2210 = vpack.c.b16 %v2152, %v2150
        %v2211 = vpack.c.b16 %v2155, %v2153
        %v2212 = vpack.c.b16 %v2156, %v2154
        %v2213 = vpack.c.b16 %v2159, %v2157
        %v2214 = vpack.c.b16 %v2160, %v2158
        %v2215 = vpack.c.b16 %v2163, %v2161
        %v2216 = vpack.c.b16 %v2164, %v2162
        %v2217 = vpack.c.b16 %v2167, %v2165
        %v2218 = vpack.c.b16 %v2168, %v2166
        %v2219 = vpack.c.b16 %v2171, %v2169
        %v2220 = vpack.c.b16 %v2172, %v2170
        %v2221 = vpack.c.b16 %v2175, %v2173
        %v2222 = vpack.c.b16 %v2176, %v2174
        %v2223 = vpack.c.b16 %v2179, %v2177
        %v2224 = vpack.c.b16 %v2180, %v2178
        %v2225 = vpack.c.b16 %v2183, %v2181
        %v2226 = vpack.c.b16 %v2184, %v2182
        %v2227 = vpack.c.b16 %v2187, %v2185
        %v2228 = vpack.c.b16 %v2188, %v2186
        %v2229 = vpack.c.b16 %v2191, %v2189
        %v2230 = vpack.c.b16 %v2192, %v2190
        %v2231 = vpack.c.b16 %v2195, %v2193
        %v2232 = vpack.c.b16 %v2196, %v2194
        %v2233 = vpack.c.b16 %v2199, %v2197
        %v2234 = vpack.c.b16 %v2200, %v2198
        %v2235 = vpack.c.b16 %v2203, %v2201
        %v2236 = vpack.c.b16 %v2204, %v2202
        %2269 = vmatprep.subr.bf16.mxu0 %v2220
        %2270 = vmatpush1.bf16.msra.mxu0 %v2219
        %2271 = vmatprep.subr.bf16.mxu0 %v2218
        %2272 = vmatpush1.bf16.msra.mxu0 %v2217
        %2273 = vmatprep.subr.bf16.mxu0 %v2216
        %2274 = vmatpush1.bf16.msra.mxu0 %v2215
        %2275 = vmatprep.subr.bf16.mxu0 %v2214
        %2276 = vmatpush1.bf16.msra.mxu0 %v2213
        %2277 = vmatprep.subr.bf16.mxu0 %v2212
        %2278 = vmatpush1.bf16.msra.mxu0 %v2211
        %2279 = vmatprep.subr.bf16.mxu0 %v2210
        %2280 = vmatpush1.bf16.msra.mxu0 %v2209
        %2281 = vmatprep.subr.bf16.mxu0 %v2208
        %2282 = vmatpush1.bf16.msra.mxu0 %v2207
        %2283 = vmatprep.subr.bf16.mxu0 %v2206
        %2284 = vmatpush1.bf16.msra.mxu0 %v2205
        %2285 = vmatprep.subr.bf16.mxu0 %v2236
        %2286 = vmatpush2.bf16.msra.mxu0 %v2235
        %2287 = vmatprep.subr.bf16.mxu0 %v2234
        %2288 = vmatpush2.bf16.msra.mxu0 %v2233
        %2289 = vmatprep.subr.bf16.mxu0 %v2232
        %2290 = vmatpush2.bf16.msra.mxu0 %v2231
        %2291 = vmatprep.subr.bf16.mxu0 %v2230
        %2292 = vmatpush2.bf16.msra.mxu0 %v2229
        %2293 = vmatprep.subr.bf16.mxu0 %v2228
        %2294 = vmatpush2.bf16.msra.mxu0 %v2227
        %2295 = vmatprep.subr.bf16.mxu0 %v2226
        %2296 = vmatpush2.bf16.msra.mxu0 %v2225
        %2297 = vmatprep.subr.bf16.mxu0 %v2224
        %2298 = vmatpush2.bf16.msra.mxu0 %v2223
        %2299 = vmatprep.subr.bf16.mxu0 %v2222
        %2300 = vmatpush2.bf16.msra.mxu0 %v2221
        %2301 = vmatprep.mubr.bf16.mxu0 %v1875
        %2302 = vmatmul.mubr.bf16.gmra.mxu0 %v1874
        %v2303 = vpop.f32.mrf.mxu0
        %v2304 = vadd.f32 %v2099, %v2303
        %v2305 = vpop.f32.mrf.mxu0
        %v2306 = vadd.f32 %v2101, %v2305
        %v2307 = vpop.f32.mrf.mxu0
        %v2308 = vadd.f32 %v2103, %v2307
        %v2309 = vpop.f32.mrf.mxu0
        %v2310 = vadd.f32 %v2105, %v2309
        %2311 = vdwg.mxu0
        %v2312 = vld [vmem:[#allocation2] sm:$0xee]
        %s2313 = scalar_lea.vmem [#allocation7], 512
        %v2314 = vld [vmem:[%s2313] sm:$0xff]
        %v2315 = vld [vmem:[%s2313 + $0x8] sm:$0xff]
        %v2316 = vld [vmem:[%s2313 + $0x10] sm:$0xff]
        %v2317 = vld [vmem:[%s2313 + $0x18] sm:$0xff]
        %v2318 = vld [vmem:[%s2313 + $0x20] sm:$0xff]
        %v2319 = vld [vmem:[%s2313 + $0x28] sm:$0xff]
        %v2320 = vld [vmem:[%s2313 + $0x30] sm:$0xff]
        %v2321 = vld [vmem:[%s2313 + $0x38] sm:$0xff]
        %v2322 = vld [vmem:[%s2313 + $0x40] sm:$0xff]
        %v2323 = vld [vmem:[%s2313 + $0x48] sm:$0xff]
        %v2324 = vld [vmem:[%s2313 + $0x50] sm:$0xff]
        %v2325 = vld [vmem:[%s2313 + $0x58] sm:$0xff]
        %v2326 = vld [vmem:[%s2313 + $0x60] sm:$0xff]
        %v2327 = vld [vmem:[%s2313 + $0x68] sm:$0xff]
        %v2328 = vld [vmem:[%s2313 + $0x70] sm:$0xff]
        %v2329 = vld [vmem:[%s2313 + $0x78] sm:$0xff]
        %v2330 = vld [vmem:[%s2313 + $0x80] sm:$0xff]
        %v2331 = vld [vmem:[%s2313 + $0x88] sm:$0xff]
        %v2332 = vld [vmem:[%s2313 + $0x90] sm:$0xff]
        %v2333 = vld [vmem:[%s2313 + $0x98] sm:$0xff]
        %v2334 = vld [vmem:[%s2313 + $0xa0] sm:$0xff]
        %v2335 = vld [vmem:[%s2313 + $0xa8] sm:$0xff]
        %v2336 = vld [vmem:[%s2313 + $0xb0] sm:$0xff]
        %v2337 = vld [vmem:[%s2313 + $0xb8] sm:$0xff]
        %v2338 = vld [vmem:[%s2313 + $0xc0] sm:$0xff]
        %v2339 = vld [vmem:[%s2313 + $0xc8] sm:$0xff]
        %v2340 = vld [vmem:[%s2313 + $0xd0] sm:$0xff]
        %v2341 = vld [vmem:[%s2313 + $0xd8] sm:$0xff]
        %v2342 = vld [vmem:[%s2313 + $0xe0] sm:$0xff]
        %v2343 = vld [vmem:[%s2313 + $0xe8] sm:$0xff]
        %v2344 = vld [vmem:[%s2313 + $0xf0] sm:$0xff]
        %v2345 = vld [vmem:[%s2313 + $0xf8] sm:$0xff]
        %v2347 = vunpack.c.l.b16 %v2312
        %v2348 = vunpack.c.h.b16 %v2312
        %v2349 = vpack.c.b16 %v1870, %v2347
        %v2350 = vpack.c.b16 %v1871, %v2348
        %v2351 = vrot.slane %v2349, 1
        %v2352 = vrot.slane %v1876, 1
        %v2353 = vsel %vm1162, %v2351, %v2352
        %v2354 = vrot.slane %v2350, 1
        %v2355 = vrot.slane %v1877, 1
        %v2356 = vsel %vm1162, %v2354, %v2355
        %v2391 = vunpack.c.l.b16 %v2314
        %v2392 = vunpack.c.h.b16 %v2314
        %v2393 = vunpack.c.l.b16 %v2315
        %v2394 = vunpack.c.h.b16 %v2315
        %v2395 = vunpack.c.l.b16 %v2316
        %v2396 = vunpack.c.h.b16 %v2316
        %v2397 = vunpack.c.l.b16 %v2317
        %v2398 = vunpack.c.h.b16 %v2317
        %v2399 = vunpack.c.l.b16 %v2318
        %v2400 = vunpack.c.h.b16 %v2318
        %v2401 = vunpack.c.l.b16 %v2319
        %v2402 = vunpack.c.h.b16 %v2319
        %v2403 = vunpack.c.l.b16 %v2320
        %v2404 = vunpack.c.h.b16 %v2320
        %v2405 = vunpack.c.l.b16 %v2321
        %v2406 = vunpack.c.h.b16 %v2321
        %v2407 = vunpack.c.l.b16 %v2322
        %v2408 = vunpack.c.h.b16 %v2322
        %v2409 = vunpack.c.l.b16 %v2323
        %v2410 = vunpack.c.h.b16 %v2323
        %v2411 = vunpack.c.l.b16 %v2324
        %v2412 = vunpack.c.h.b16 %v2324
        %v2413 = vunpack.c.l.b16 %v2325
        %v2414 = vunpack.c.h.b16 %v2325
        %v2415 = vunpack.c.l.b16 %v2326
        %v2416 = vunpack.c.h.b16 %v2326
        %v2417 = vunpack.c.l.b16 %v2327
        %v2418 = vunpack.c.h.b16 %v2327
        %v2419 = vunpack.c.l.b16 %v2328
        %v2420 = vunpack.c.h.b16 %v2328
        %v2421 = vunpack.c.l.b16 %v2329
        %v2422 = vunpack.c.h.b16 %v2329
        %v2423 = vunpack.c.l.b16 %v2330
        %v2424 = vunpack.c.h.b16 %v2330
        %v2425 = vunpack.c.l.b16 %v2331
        %v2426 = vunpack.c.h.b16 %v2331
        %v2427 = vunpack.c.l.b16 %v2332
        %v2428 = vunpack.c.h.b16 %v2332
        %v2429 = vunpack.c.l.b16 %v2333
        %v2430 = vunpack.c.h.b16 %v2333
        %v2431 = vunpack.c.l.b16 %v2334
        %v2432 = vunpack.c.h.b16 %v2334
        %v2433 = vunpack.c.l.b16 %v2335
        %v2434 = vunpack.c.h.b16 %v2335
        %v2435 = vunpack.c.l.b16 %v2336
        %v2436 = vunpack.c.h.b16 %v2336
        %v2437 = vunpack.c.l.b16 %v2337
        %v2438 = vunpack.c.h.b16 %v2337
        %v2439 = vunpack.c.l.b16 %v2338
        %v2440 = vunpack.c.h.b16 %v2338
        %v2441 = vunpack.c.l.b16 %v2339
        %v2442 = vunpack.c.h.b16 %v2339
        %v2443 = vunpack.c.l.b16 %v2340
        %v2444 = vunpack.c.h.b16 %v2340
        %v2445 = vunpack.c.l.b16 %v2341
        %v2446 = vunpack.c.h.b16 %v2341
        %v2447 = vunpack.c.l.b16 %v2342
        %v2448 = vunpack.c.h.b16 %v2342
        %v2449 = vunpack.c.l.b16 %v2343
        %v2450 = vunpack.c.h.b16 %v2343
        %v2451 = vunpack.c.l.b16 %v2344
        %v2452 = vunpack.c.h.b16 %v2344
        %v2453 = vunpack.c.l.b16 %v2345
        %v2454 = vunpack.c.h.b16 %v2345
        %v2455 = vpack.c.b16 %v2393, %v2391
        %v2456 = vpack.c.b16 %v2394, %v2392
        %v2457 = vpack.c.b16 %v2397, %v2395
        %v2458 = vpack.c.b16 %v2398, %v2396
        %v2459 = vpack.c.b16 %v2401, %v2399
        %v2460 = vpack.c.b16 %v2402, %v2400
        %v2461 = vpack.c.b16 %v2405, %v2403
        %v2462 = vpack.c.b16 %v2406, %v2404
        %v2463 = vpack.c.b16 %v2409, %v2407
        %v2464 = vpack.c.b16 %v2410, %v2408
        %v2465 = vpack.c.b16 %v2413, %v2411
        %v2466 = vpack.c.b16 %v2414, %v2412
        %v2467 = vpack.c.b16 %v2417, %v2415
        %v2468 = vpack.c.b16 %v2418, %v2416
        %v2469 = vpack.c.b16 %v2421, %v2419
        %v2470 = vpack.c.b16 %v2422, %v2420
        %v2471 = vpack.c.b16 %v2425, %v2423
        %v2472 = vpack.c.b16 %v2426, %v2424
        %v2473 = vpack.c.b16 %v2429, %v2427
        %v2474 = vpack.c.b16 %v2430, %v2428
        %v2475 = vpack.c.b16 %v2433, %v2431
        %v2476 = vpack.c.b16 %v2434, %v2432
        %v2477 = vpack.c.b16 %v2437, %v2435
        %v2478 = vpack.c.b16 %v2438, %v2436
        %v2479 = vpack.c.b16 %v2441, %v2439
        %v2480 = vpack.c.b16 %v2442, %v2440
        %v2481 = vpack.c.b16 %v2445, %v2443
        %v2482 = vpack.c.b16 %v2446, %v2444
        %v2483 = vpack.c.b16 %v2449, %v2447
        %v2484 = vpack.c.b16 %v2450, %v2448
        %v2485 = vpack.c.b16 %v2453, %v2451
        %v2486 = vpack.c.b16 %v2454, %v2452
        %2519 = vmatprep.subr.bf16.mxu0 %v2470
        %2520 = vmatpush1.bf16.msra.mxu0 %v2469
        %2521 = vmatprep.subr.bf16.mxu0 %v2468
        %2522 = vmatpush1.bf16.msra.mxu0 %v2467
        %2523 = vmatprep.subr.bf16.mxu0 %v2466
        %2524 = vmatpush1.bf16.msra.mxu0 %v2465
        %2525 = vmatprep.subr.bf16.mxu0 %v2464
        %2526 = vmatpush1.bf16.msra.mxu0 %v2463
        %2527 = vmatprep.subr.bf16.mxu0 %v2462
        %2528 = vmatpush1.bf16.msra.mxu0 %v2461
        %2529 = vmatprep.subr.bf16.mxu0 %v2460
        %2530 = vmatpush1.bf16.msra.mxu0 %v2459
        %2531 = vmatprep.subr.bf16.mxu0 %v2458
        %2532 = vmatpush1.bf16.msra.mxu0 %v2457
        %2533 = vmatprep.subr.bf16.mxu0 %v2456
        %2534 = vmatpush1.bf16.msra.mxu0 %v2455
        %2535 = vmatprep.subr.bf16.mxu0 %v2486
        %2536 = vmatpush2.bf16.msra.mxu0 %v2485
        %2537 = vmatprep.subr.bf16.mxu0 %v2484
        %2538 = vmatpush2.bf16.msra.mxu0 %v2483
        %2539 = vmatprep.subr.bf16.mxu0 %v2482
        %2540 = vmatpush2.bf16.msra.mxu0 %v2481
        %2541 = vmatprep.subr.bf16.mxu0 %v2480
        %2542 = vmatpush2.bf16.msra.mxu0 %v2479
        %2543 = vmatprep.subr.bf16.mxu0 %v2478
        %2544 = vmatpush2.bf16.msra.mxu0 %v2477
        %2545 = vmatprep.subr.bf16.mxu0 %v2476
        %2546 = vmatpush2.bf16.msra.mxu0 %v2475
        %2547 = vmatprep.subr.bf16.mxu0 %v2474
        %2548 = vmatpush2.bf16.msra.mxu0 %v2473
        %2549 = vmatprep.subr.bf16.mxu0 %v2472
        %2550 = vmatpush2.bf16.msra.mxu0 %v2471
        %2551 = vmatprep.mubr.bf16.mxu0 %v2356
        %2552 = vmatmul.mubr.bf16.gmra.mxu0 %v2353
        %v2553 = vpop.f32.mrf.mxu0
        %v2554 = vadd.f32 0.0, %v2553
        %v2555 = vpop.f32.mrf.mxu0
        %v2556 = vadd.f32 0.0, %v2555
        %v2557 = vpop.f32.mrf.mxu0
        %v2558 = vadd.f32 0.0, %v2557
        %v2559 = vpop.f32.mrf.mxu0
        %v2560 = vadd.f32 0.0, %v2559
        %2561 = vdwg.mxu0
        %v2562 = vadd.f32 %v2304, %v2554
        %v2563 = vadd.f32 %v2306, %v2556
        %v2564 = vadd.f32 %v2308, %v2558
        %v2565 = vadd.f32 %v2310, %v2560
        %v2566 = vld [vmem:[%s6] sm:$0x3]
        %v2568 = vlaneseq
        %v2569 = vshrl.u32 %v2568, 7
        %v2570 = vsub.s32 0, %v2569
        %v2571 = vrot.slane %v2566, %v2570
        %v2572 = vlaneseq
        %v2573 = vshrl.u32 %v2572, 7
        %v2574 = vsub.s32 1, %v2573
        %v2575 = vrot.slane %v2566, %v2574
        %v2578 = vadd.f32 %v2562, %v2571
        %v2579 = vadd.f32 %v2563, %v2575
        %v2580 = vadd.f32 %v2564, %v2571
        %v2581 = vadd.f32 %v2565, %v2575
        %v2582 = vmax.f32 %v2578, 0.0
        %v2583 = vmax.f32 %v2579, 0.0
        %v2584 = vmax.f32 %v2580, 0.0
        %v2585 = vmax.f32 %v2581, 0.0
        %v2586 = vpack.c.bf16 %v2584, %v2582
        %v2587 = vpack.c.bf16 %v2585, %v2583
        %v2590 = vunpack.c.l.b16 %v2586
        %v2591 = vunpack.c.l.b16 %v2587
        %v2592 = vunpack.c.h.b16 %v2586
        %v2593 = vunpack.c.h.b16 %v2587
        %v2594 = vpack.c.b16 %v2591, %v2590
        %v2595 = vpack.c.b16 %v2593, %v2592
        %v2597 = vshrl.u32 %v2594, 16
        %v2599 = vrot.slane %v2597, 7
        %v2600 = vshll.u32 %v2594, 16
        %v2602 = vor.u32 %v2599, %v2600
        %v2603 = vrot.slane %v2599, 4
        %v2605 = vshrl.u32 %v2595, 16
        %v2607 = vrot.slane %v2605, 7
        %v2608 = vshll.u32 %v2595, 16
        %v2610 = vor.u32 %v2607, %v2608
        %v2611 = vsel %vm939, %v2603, %v2610
        %v2612 = vrot.slane %v2607, 4
        %v2616 = vsel %vm1789, %v2602, %v1797
        %2617 = vst [vmem:[#allocation2] sm:$0xff] %v2616
        %2618 = vst [vmem:[#allocation2 + $0x8] sm:$0xff] %v2611
        %v2619 = vld [vmem:[#allocation2 + $0x10] sm:$0x11]
        %v2620 = vsel %vm918, %v2612, %v2619
        %2621 = vst [vmem:[#allocation2 + $0x10] sm:$0x11] %v2620
        %v2622 = vld [vmem:[#allocation2] sm:$0xff]
        %v2623 = vld [vmem:[#allocation2 + $0x8] sm:$0xff]
        %v2624 = vld [vmem:[#allocation8] sm:$0xff]
        %v2625 = vld [vmem:[#allocation8 + $0x8] sm:$0xff]
        %v2626 = vld [vmem:[#allocation8 + $0x10] sm:$0xff]
        %v2627 = vld [vmem:[#allocation8 + $0x18] sm:$0xff]
        %v2628 = vld [vmem:[#allocation8 + $0x20] sm:$0xff]
        %v2629 = vld [vmem:[#allocation8 + $0x28] sm:$0xff]
        %v2630 = vld [vmem:[#allocation8 + $0x30] sm:$0xff]
        %v2631 = vld [vmem:[#allocation8 + $0x38] sm:$0xff]
        %v2632 = vld [vmem:[#allocation8 + $0x40] sm:$0xff]
        %v2633 = vld [vmem:[#allocation8 + $0x48] sm:$0xff]
        %v2634 = vld [vmem:[#allocation8 + $0x50] sm:$0xff]
        %v2635 = vld [vmem:[#allocation8 + $0x58] sm:$0xff]
        %v2636 = vld [vmem:[#allocation8 + $0x60] sm:$0xff]
        %v2637 = vld [vmem:[#allocation8 + $0x68] sm:$0xff]
        %v2638 = vld [vmem:[#allocation8 + $0x70] sm:$0xff]
        %v2639 = vld [vmem:[#allocation8 + $0x78] sm:$0xff]
        %v2640 = vld [vmem:[#allocation8 + $0x80] sm:$0xff]
        %v2641 = vld [vmem:[#allocation8 + $0x88] sm:$0xff]
        %v2642 = vld [vmem:[#allocation8 + $0x90] sm:$0xff]
        %v2643 = vld [vmem:[#allocation8 + $0x98] sm:$0xff]
        %v2644 = vld [vmem:[#allocation8 + $0xa0] sm:$0xff]
        %v2645 = vld [vmem:[#allocation8 + $0xa8] sm:$0xff]
        %v2646 = vld [vmem:[#allocation8 + $0xb0] sm:$0xff]
        %v2647 = vld [vmem:[#allocation8 + $0xb8] sm:$0xff]
        %v2648 = vld [vmem:[#allocation8 + $0xc0] sm:$0xff]
        %v2649 = vld [vmem:[#allocation8 + $0xc8] sm:$0xff]
        %v2650 = vld [vmem:[#allocation8 + $0xd0] sm:$0xff]
        %v2651 = vld [vmem:[#allocation8 + $0xd8] sm:$0xff]
        %v2652 = vld [vmem:[#allocation8 + $0xe0] sm:$0xff]
        %v2653 = vld [vmem:[#allocation8 + $0xe8] sm:$0xff]
        %v2654 = vld [vmem:[#allocation8 + $0xf0] sm:$0xff]
        %v2655 = vld [vmem:[#allocation8 + $0xf8] sm:$0xff]
        %v2656 = vld [vmem:[#allocation2 + $0x10] sm:$0x11]
        %s2657 = scalar_lea.vmem [#allocation8], 256
        %v2658 = vld [vmem:[%s2657] sm:$0xff]
        %v2659 = vld [vmem:[%s2657 + $0x8] sm:$0xff]
        %v2660 = vld [vmem:[%s2657 + $0x10] sm:$0xff]
        %v2661 = vld [vmem:[%s2657 + $0x18] sm:$0xff]
        %v2662 = vld [vmem:[%s2657 + $0x20] sm:$0xff]
        %v2663 = vld [vmem:[%s2657 + $0x28] sm:$0xff]
        %v2664 = vld [vmem:[%s2657 + $0x30] sm:$0xff]
        %v2665 = vld [vmem:[%s2657 + $0x38] sm:$0xff]
        %v2666 = vld [vmem:[%s2657 + $0x40] sm:$0xff]
        %v2667 = vld [vmem:[%s2657 + $0x48] sm:$0xff]
        %v2668 = vld [vmem:[%s2657 + $0x50] sm:$0xff]
        %v2669 = vld [vmem:[%s2657 + $0x58] sm:$0xff]
        %v2670 = vld [vmem:[%s2657 + $0x60] sm:$0xff]
        %v2671 = vld [vmem:[%s2657 + $0x68] sm:$0xff]
        %v2672 = vld [vmem:[%s2657 + $0x70] sm:$0xff]
        %v2673 = vld [vmem:[%s2657 + $0x78] sm:$0xff]
        %v2674 = vld [vmem:[%s2657 + $0x80] sm:$0xff]
        %v2675 = vld [vmem:[%s2657 + $0x88] sm:$0xff]
        %v2676 = vld [vmem:[%s2657 + $0x90] sm:$0xff]
        %v2677 = vld [vmem:[%s2657 + $0x98] sm:$0xff]
        %v2678 = vld [vmem:[%s2657 + $0xa0] sm:$0xff]
        %v2679 = vld [vmem:[%s2657 + $0xa8] sm:$0xff]
        %v2680 = vld [vmem:[%s2657 + $0xb0] sm:$0xff]
        %v2681 = vld [vmem:[%s2657 + $0xb8] sm:$0xff]
        %v2682 = vld [vmem:[%s2657 + $0xc0] sm:$0xff]
        %v2683 = vld [vmem:[%s2657 + $0xc8] sm:$0xff]
        %v2684 = vld [vmem:[%s2657 + $0xd0] sm:$0xff]
        %v2685 = vld [vmem:[%s2657 + $0xd8] sm:$0xff]
        %v2686 = vld [vmem:[%s2657 + $0xe0] sm:$0xff]
        %v2687 = vld [vmem:[%s2657 + $0xe8] sm:$0xff]
        %v2688 = vld [vmem:[%s2657 + $0xf0] sm:$0xff]
        %v2689 = vld [vmem:[%s2657 + $0xf8] sm:$0xff]
        %v2693 = vunpack.c.l.b16 %v2622
        %v2694 = vunpack.c.h.b16 %v2622
        %v2695 = vunpack.c.l.b16 %v2623
        %v2696 = vunpack.c.h.b16 %v2623
        %v2697 = vunpack.c.l.b16 %v2656
        %v2698 = vunpack.c.h.b16 %v2656
        %v2699 = vpack.c.b16 %v2695, %v2693
        %v2700 = vpack.c.b16 %v2696, %v2694
        %v2701 = vpack.c.b16 %v2697, %v2697
        %v2702 = vpack.c.b16 %v2698, %v2698
        %v2704 = vshrl.u32 %v2699, 16
        %v2706 = vshll.u32 %v2699, 16
        %v2708 = vrot.slane %v2706, 1
        %v2709 = vor.u32 %v2704, %v2708
        %v2711 = vshll.u32 %v2701, 16
        %v2713 = vrot.slane %v2711, 1
        %v2714 = vsel %vm1000, %v2709, %v2713
        %v2716 = vshrl.u32 %v2700, 16
        %v2718 = vshll.u32 %v2700, 16
        %v2720 = vrot.slane %v2718, 1
        %v2721 = vor.u32 %v2716, %v2720
        %v2723 = vshll.u32 %v2702, 16
        %v2725 = vrot.slane %v2723, 1
        %v2726 = vsel %vm1000, %v2721, %v2725
        %v2761 = vunpack.c.l.b16 %v2658
        %v2762 = vunpack.c.h.b16 %v2658
        %v2763 = vunpack.c.l.b16 %v2659
        %v2764 = vunpack.c.h.b16 %v2659
        %v2765 = vunpack.c.l.b16 %v2660
        %v2766 = vunpack.c.h.b16 %v2660
        %v2767 = vunpack.c.l.b16 %v2661
        %v2768 = vunpack.c.h.b16 %v2661
        %v2769 = vunpack.c.l.b16 %v2662
        %v2770 = vunpack.c.h.b16 %v2662
        %v2771 = vunpack.c.l.b16 %v2663
        %v2772 = vunpack.c.h.b16 %v2663
        %v2773 = vunpack.c.l.b16 %v2664
        %v2774 = vunpack.c.h.b16 %v2664
        %v2775 = vunpack.c.l.b16 %v2665
        %v2776 = vunpack.c.h.b16 %v2665
        %v2777 = vunpack.c.l.b16 %v2666
        %v2778 = vunpack.c.h.b16 %v2666
        %v2779 = vunpack.c.l.b16 %v2667
        %v2780 = vunpack.c.h.b16 %v2667
        %v2781 = vunpack.c.l.b16 %v2668
        %v2782 = vunpack.c.h.b16 %v2668
        %v2783 = vunpack.c.l.b16 %v2669
        %v2784 = vunpack.c.h.b16 %v2669
        %v2785 = vunpack.c.l.b16 %v2670
        %v2786 = vunpack.c.h.b16 %v2670
        %v2787 = vunpack.c.l.b16 %v2671
        %v2788 = vunpack.c.h.b16 %v2671
        %v2789 = vunpack.c.l.b16 %v2672
        %v2790 = vunpack.c.h.b16 %v2672
        %v2791 = vunpack.c.l.b16 %v2673
        %v2792 = vunpack.c.h.b16 %v2673
        %v2793 = vunpack.c.l.b16 %v2674
        %v2794 = vunpack.c.h.b16 %v2674
        %v2795 = vunpack.c.l.b16 %v2675
        %v2796 = vunpack.c.h.b16 %v2675
        %v2797 = vunpack.c.l.b16 %v2676
        %v2798 = vunpack.c.h.b16 %v2676
        %v2799 = vunpack.c.l.b16 %v2677
        %v2800 = vunpack.c.h.b16 %v2677
        %v2801 = vunpack.c.l.b16 %v2678
        %v2802 = vunpack.c.h.b16 %v2678
        %v2803 = vunpack.c.l.b16 %v2679
        %v2804 = vunpack.c.h.b16 %v2679
        %v2805 = vunpack.c.l.b16 %v2680
        %v2806 = vunpack.c.h.b16 %v2680
        %v2807 = vunpack.c.l.b16 %v2681
        %v2808 = vunpack.c.h.b16 %v2681
        %v2809 = vunpack.c.l.b16 %v2682
        %v2810 = vunpack.c.h.b16 %v2682
        %v2811 = vunpack.c.l.b16 %v2683
        %v2812 = vunpack.c.h.b16 %v2683
        %v2813 = vunpack.c.l.b16 %v2684
        %v2814 = vunpack.c.h.b16 %v2684
        %v2815 = vunpack.c.l.b16 %v2685
        %v2816 = vunpack.c.h.b16 %v2685
        %v2817 = vunpack.c.l.b16 %v2686
        %v2818 = vunpack.c.h.b16 %v2686
        %v2819 = vunpack.c.l.b16 %v2687
        %v2820 = vunpack.c.h.b16 %v2687
        %v2821 = vunpack.c.l.b16 %v2688
        %v2822 = vunpack.c.h.b16 %v2688
        %v2823 = vunpack.c.l.b16 %v2689
        %v2824 = vunpack.c.h.b16 %v2689
        %v2825 = vpack.c.b16 %v2763, %v2761
        %v2826 = vpack.c.b16 %v2764, %v2762
        %v2827 = vpack.c.b16 %v2767, %v2765
        %v2828 = vpack.c.b16 %v2768, %v2766
        %v2829 = vpack.c.b16 %v2771, %v2769
        %v2830 = vpack.c.b16 %v2772, %v2770
        %v2831 = vpack.c.b16 %v2775, %v2773
        %v2832 = vpack.c.b16 %v2776, %v2774
        %v2833 = vpack.c.b16 %v2779, %v2777
        %v2834 = vpack.c.b16 %v2780, %v2778
        %v2835 = vpack.c.b16 %v2783, %v2781
        %v2836 = vpack.c.b16 %v2784, %v2782
        %v2837 = vpack.c.b16 %v2787, %v2785
        %v2838 = vpack.c.b16 %v2788, %v2786
        %v2839 = vpack.c.b16 %v2791, %v2789
        %v2840 = vpack.c.b16 %v2792, %v2790
        %v2841 = vpack.c.b16 %v2795, %v2793
        %v2842 = vpack.c.b16 %v2796, %v2794
        %v2843 = vpack.c.b16 %v2799, %v2797
        %v2844 = vpack.c.b16 %v2800, %v2798
        %v2845 = vpack.c.b16 %v2803, %v2801
        %v2846 = vpack.c.b16 %v2804, %v2802
        %v2847 = vpack.c.b16 %v2807, %v2805
        %v2848 = vpack.c.b16 %v2808, %v2806
        %v2849 = vpack.c.b16 %v2811, %v2809
        %v2850 = vpack.c.b16 %v2812, %v2810
        %v2851 = vpack.c.b16 %v2815, %v2813
        %v2852 = vpack.c.b16 %v2816, %v2814
        %v2853 = vpack.c.b16 %v2819, %v2817
        %v2854 = vpack.c.b16 %v2820, %v2818
        %v2855 = vpack.c.b16 %v2823, %v2821
        %v2856 = vpack.c.b16 %v2824, %v2822
        %2889 = vmatprep.subr.bf16.mxu0 %v2840
        %2890 = vmatpush1.bf16.msra.mxu0 %v2839
        %2891 = vmatprep.subr.bf16.mxu0 %v2838
        %2892 = vmatpush1.bf16.msra.mxu0 %v2837
        %2893 = vmatprep.subr.bf16.mxu0 %v2836
        %2894 = vmatpush1.bf16.msra.mxu0 %v2835
        %2895 = vmatprep.subr.bf16.mxu0 %v2834
        %2896 = vmatpush1.bf16.msra.mxu0 %v2833
        %2897 = vmatprep.subr.bf16.mxu0 %v2832
        %2898 = vmatpush1.bf16.msra.mxu0 %v2831
        %2899 = vmatprep.subr.bf16.mxu0 %v2830
        %2900 = vmatpush1.bf16.msra.mxu0 %v2829
        %2901 = vmatprep.subr.bf16.mxu0 %v2828
        %2902 = vmatpush1.bf16.msra.mxu0 %v2827
        %2903 = vmatprep.subr.bf16.mxu0 %v2826
        %2904 = vmatpush1.bf16.msra.mxu0 %v2825
        %2905 = vmatprep.subr.bf16.mxu0 %v2856
        %2906 = vmatpush2.bf16.msra.mxu0 %v2855
        %2907 = vmatprep.subr.bf16.mxu0 %v2854
        %2908 = vmatpush2.bf16.msra.mxu0 %v2853
        %2909 = vmatprep.subr.bf16.mxu0 %v2852
        %2910 = vmatpush2.bf16.msra.mxu0 %v2851
        %2911 = vmatprep.subr.bf16.mxu0 %v2850
        %2912 = vmatpush2.bf16.msra.mxu0 %v2849
        %2913 = vmatprep.subr.bf16.mxu0 %v2848
        %2914 = vmatpush2.bf16.msra.mxu0 %v2847
        %2915 = vmatprep.subr.bf16.mxu0 %v2846
        %2916 = vmatpush2.bf16.msra.mxu0 %v2845
        %2917 = vmatprep.subr.bf16.mxu0 %v2844
        %2918 = vmatpush2.bf16.msra.mxu0 %v2843
        %2919 = vmatprep.subr.bf16.mxu0 %v2842
        %2920 = vmatpush2.bf16.msra.mxu0 %v2841
        %2921 = vmatprep.mubr.bf16.mxu0 %v2726
        %2922 = vmatmul.mubr.bf16.gmra.mxu0 %v2714
        %v2923 = vpop.f32.mrf.mxu0
        %v2924 = vadd.f32 0.0, %v2923
        %v2925 = vpop.f32.mrf.mxu0
        %v2926 = vadd.f32 0.0, %v2925
        %v2927 = vpop.f32.mrf.mxu0
        %v2928 = vadd.f32 0.0, %v2927
        %v2929 = vpop.f32.mrf.mxu0
        %v2930 = vadd.f32 0.0, %v2929
        %2931 = vdwg.mxu0
        %v2966 = vunpack.c.l.b16 %v2624
        %v2967 = vunpack.c.h.b16 %v2624
        %v2968 = vunpack.c.l.b16 %v2625
        %v2969 = vunpack.c.h.b16 %v2625
        %v2970 = vunpack.c.l.b16 %v2626
        %v2971 = vunpack.c.h.b16 %v2626
        %v2972 = vunpack.c.l.b16 %v2627
        %v2973 = vunpack.c.h.b16 %v2627
        %v2974 = vunpack.c.l.b16 %v2628
        %v2975 = vunpack.c.h.b16 %v2628
        %v2976 = vunpack.c.l.b16 %v2629
        %v2977 = vunpack.c.h.b16 %v2629
        %v2978 = vunpack.c.l.b16 %v2630
        %v2979 = vunpack.c.h.b16 %v2630
        %v2980 = vunpack.c.l.b16 %v2631
        %v2981 = vunpack.c.h.b16 %v2631
        %v2982 = vunpack.c.l.b16 %v2632
        %v2983 = vunpack.c.h.b16 %v2632
        %v2984 = vunpack.c.l.b16 %v2633
        %v2985 = vunpack.c.h.b16 %v2633
        %v2986 = vunpack.c.l.b16 %v2634
        %v2987 = vunpack.c.h.b16 %v2634
        %v2988 = vunpack.c.l.b16 %v2635
        %v2989 = vunpack.c.h.b16 %v2635
        %v2990 = vunpack.c.l.b16 %v2636
        %v2991 = vunpack.c.h.b16 %v2636
        %v2992 = vunpack.c.l.b16 %v2637
        %v2993 = vunpack.c.h.b16 %v2637
        %v2994 = vunpack.c.l.b16 %v2638
        %v2995 = vunpack.c.h.b16 %v2638
        %v2996 = vunpack.c.l.b16 %v2639
        %v2997 = vunpack.c.h.b16 %v2639
        %v2998 = vunpack.c.l.b16 %v2640
        %v2999 = vunpack.c.h.b16 %v2640
        %v3000 = vunpack.c.l.b16 %v2641
        %v3001 = vunpack.c.h.b16 %v2641
        %v3002 = vunpack.c.l.b16 %v2642
        %v3003 = vunpack.c.h.b16 %v2642
        %v3004 = vunpack.c.l.b16 %v2643
        %v3005 = vunpack.c.h.b16 %v2643
        %v3006 = vunpack.c.l.b16 %v2644
        %v3007 = vunpack.c.h.b16 %v2644
        %v3008 = vunpack.c.l.b16 %v2645
        %v3009 = vunpack.c.h.b16 %v2645
        %v3010 = vunpack.c.l.b16 %v2646
        %v3011 = vunpack.c.h.b16 %v2646
        %v3012 = vunpack.c.l.b16 %v2647
        %v3013 = vunpack.c.h.b16 %v2647
        %v3014 = vunpack.c.l.b16 %v2648
        %v3015 = vunpack.c.h.b16 %v2648
        %v3016 = vunpack.c.l.b16 %v2649
        %v3017 = vunpack.c.h.b16 %v2649
        %v3018 = vunpack.c.l.b16 %v2650
        %v3019 = vunpack.c.h.b16 %v2650
        %v3020 = vunpack.c.l.b16 %v2651
        %v3021 = vunpack.c.h.b16 %v2651
        %v3022 = vunpack.c.l.b16 %v2652
        %v3023 = vunpack.c.h.b16 %v2652
        %v3024 = vunpack.c.l.b16 %v2653
        %v3025 = vunpack.c.h.b16 %v2653
        %v3026 = vunpack.c.l.b16 %v2654
        %v3027 = vunpack.c.h.b16 %v2654
        %v3028 = vunpack.c.l.b16 %v2655
        %v3029 = vunpack.c.h.b16 %v2655
        %v3030 = vpack.c.b16 %v2968, %v2966
        %v3031 = vpack.c.b16 %v2969, %v2967
        %v3032 = vpack.c.b16 %v2972, %v2970
        %v3033 = vpack.c.b16 %v2973, %v2971
        %v3034 = vpack.c.b16 %v2976, %v2974
        %v3035 = vpack.c.b16 %v2977, %v2975
        %v3036 = vpack.c.b16 %v2980, %v2978
        %v3037 = vpack.c.b16 %v2981, %v2979
        %v3038 = vpack.c.b16 %v2984, %v2982
        %v3039 = vpack.c.b16 %v2985, %v2983
        %v3040 = vpack.c.b16 %v2988, %v2986
        %v3041 = vpack.c.b16 %v2989, %v2987
        %v3042 = vpack.c.b16 %v2992, %v2990
        %v3043 = vpack.c.b16 %v2993, %v2991
        %v3044 = vpack.c.b16 %v2996, %v2994
        %v3045 = vpack.c.b16 %v2997, %v2995
        %v3046 = vpack.c.b16 %v3000, %v2998
        %v3047 = vpack.c.b16 %v3001, %v2999
        %v3048 = vpack.c.b16 %v3004, %v3002
        %v3049 = vpack.c.b16 %v3005, %v3003
        %v3050 = vpack.c.b16 %v3008, %v3006
        %v3051 = vpack.c.b16 %v3009, %v3007
        %v3052 = vpack.c.b16 %v3012, %v3010
        %v3053 = vpack.c.b16 %v3013, %v3011
        %v3054 = vpack.c.b16 %v3016, %v3014
        %v3055 = vpack.c.b16 %v3017, %v3015
        %v3056 = vpack.c.b16 %v3020, %v3018
        %v3057 = vpack.c.b16 %v3021, %v3019
        %v3058 = vpack.c.b16 %v3024, %v3022
        %v3059 = vpack.c.b16 %v3025, %v3023
        %v3060 = vpack.c.b16 %v3028, %v3026
        %v3061 = vpack.c.b16 %v3029, %v3027
        %3094 = vmatprep.subr.bf16.mxu0 %v3045
        %3095 = vmatpush1.bf16.msra.mxu0 %v3044
        %3096 = vmatprep.subr.bf16.mxu0 %v3043
        %3097 = vmatpush1.bf16.msra.mxu0 %v3042
        %3098 = vmatprep.subr.bf16.mxu0 %v3041
        %3099 = vmatpush1.bf16.msra.mxu0 %v3040
        %3100 = vmatprep.subr.bf16.mxu0 %v3039
        %3101 = vmatpush1.bf16.msra.mxu0 %v3038
        %3102 = vmatprep.subr.bf16.mxu0 %v3037
        %3103 = vmatpush1.bf16.msra.mxu0 %v3036
        %3104 = vmatprep.subr.bf16.mxu0 %v3035
        %3105 = vmatpush1.bf16.msra.mxu0 %v3034
        %3106 = vmatprep.subr.bf16.mxu0 %v3033
        %3107 = vmatpush1.bf16.msra.mxu0 %v3032
        %3108 = vmatprep.subr.bf16.mxu0 %v3031
        %3109 = vmatpush1.bf16.msra.mxu0 %v3030
        %3110 = vmatprep.subr.bf16.mxu0 %v3061
        %3111 = vmatpush2.bf16.msra.mxu0 %v3060
        %3112 = vmatprep.subr.bf16.mxu0 %v3059
        %3113 = vmatpush2.bf16.msra.mxu0 %v3058
        %3114 = vmatprep.subr.bf16.mxu0 %v3057
        %3115 = vmatpush2.bf16.msra.mxu0 %v3056
        %3116 = vmatprep.subr.bf16.mxu0 %v3055
        %3117 = vmatpush2.bf16.msra.mxu0 %v3054
        %3118 = vmatprep.subr.bf16.mxu0 %v3053
        %3119 = vmatpush2.bf16.msra.mxu0 %v3052
        %3120 = vmatprep.subr.bf16.mxu0 %v3051
        %3121 = vmatpush2.bf16.msra.mxu0 %v3050
        %3122 = vmatprep.subr.bf16.mxu0 %v3049
        %3123 = vmatpush2.bf16.msra.mxu0 %v3048
        %3124 = vmatprep.subr.bf16.mxu0 %v3047
        %3125 = vmatpush2.bf16.msra.mxu0 %v3046
        %3126 = vmatprep.mubr.bf16.mxu0 %v2700
        %3127 = vmatmul.mubr.bf16.gmra.mxu0 %v2699
        %v3128 = vpop.f32.mrf.mxu0
        %v3129 = vadd.f32 %v2924, %v3128
        %v3130 = vpop.f32.mrf.mxu0
        %v3131 = vadd.f32 %v2926, %v3130
        %v3132 = vpop.f32.mrf.mxu0
        %v3133 = vadd.f32 %v2928, %v3132
        %v3134 = vpop.f32.mrf.mxu0
        %v3135 = vadd.f32 %v2930, %v3134
        %3136 = vdwg.mxu0
        %v3137 = vld [vmem:[#allocation2] sm:$0xee]
        %s3138 = scalar_lea.vmem [#allocation8], 512
        %v3139 = vld [vmem:[%s3138] sm:$0xff]
        %v3140 = vld [vmem:[%s3138 + $0x8] sm:$0xff]
        %v3141 = vld [vmem:[%s3138 + $0x10] sm:$0xff]
        %v3142 = vld [vmem:[%s3138 + $0x18] sm:$0xff]
        %v3143 = vld [vmem:[%s3138 + $0x20] sm:$0xff]
        %v3144 = vld [vmem:[%s3138 + $0x28] sm:$0xff]
        %v3145 = vld [vmem:[%s3138 + $0x30] sm:$0xff]
        %v3146 = vld [vmem:[%s3138 + $0x38] sm:$0xff]
        %v3147 = vld [vmem:[%s3138 + $0x40] sm:$0xff]
        %v3148 = vld [vmem:[%s3138 + $0x48] sm:$0xff]
        %v3149 = vld [vmem:[%s3138 + $0x50] sm:$0xff]
        %v3150 = vld [vmem:[%s3138 + $0x58] sm:$0xff]
        %v3151 = vld [vmem:[%s3138 + $0x60] sm:$0xff]
        %v3152 = vld [vmem:[%s3138 + $0x68] sm:$0xff]
        %v3153 = vld [vmem:[%s3138 + $0x70] sm:$0xff]
        %v3154 = vld [vmem:[%s3138 + $0x78] sm:$0xff]
        %v3155 = vld [vmem:[%s3138 + $0x80] sm:$0xff]
        %v3156 = vld [vmem:[%s3138 + $0x88] sm:$0xff]
        %v3157 = vld [vmem:[%s3138 + $0x90] sm:$0xff]
        %v3158 = vld [vmem:[%s3138 + $0x98] sm:$0xff]
        %v3159 = vld [vmem:[%s3138 + $0xa0] sm:$0xff]
        %v3160 = vld [vmem:[%s3138 + $0xa8] sm:$0xff]
        %v3161 = vld [vmem:[%s3138 + $0xb0] sm:$0xff]
        %v3162 = vld [vmem:[%s3138 + $0xb8] sm:$0xff]
        %v3163 = vld [vmem:[%s3138 + $0xc0] sm:$0xff]
        %v3164 = vld [vmem:[%s3138 + $0xc8] sm:$0xff]
        %v3165 = vld [vmem:[%s3138 + $0xd0] sm:$0xff]
        %v3166 = vld [vmem:[%s3138 + $0xd8] sm:$0xff]
        %v3167 = vld [vmem:[%s3138 + $0xe0] sm:$0xff]
        %v3168 = vld [vmem:[%s3138 + $0xe8] sm:$0xff]
        %v3169 = vld [vmem:[%s3138 + $0xf0] sm:$0xff]
        %v3170 = vld [vmem:[%s3138 + $0xf8] sm:$0xff]
        %v3172 = vunpack.c.l.b16 %v3137
        %v3173 = vunpack.c.h.b16 %v3137
        %v3174 = vpack.c.b16 %v2695, %v3172
        %v3175 = vpack.c.b16 %v2696, %v3173
        %v3176 = vrot.slane %v3174, 1
        %v3177 = vrot.slane %v2701, 1
        %v3178 = vsel %vm1162, %v3176, %v3177
        %v3179 = vrot.slane %v3175, 1
        %v3180 = vrot.slane %v2702, 1
        %v3181 = vsel %vm1162, %v3179, %v3180
        %v3216 = vunpack.c.l.b16 %v3139
        %v3217 = vunpack.c.h.b16 %v3139
        %v3218 = vunpack.c.l.b16 %v3140
        %v3219 = vunpack.c.h.b16 %v3140
        %v3220 = vunpack.c.l.b16 %v3141
        %v3221 = vunpack.c.h.b16 %v3141
        %v3222 = vunpack.c.l.b16 %v3142
        %v3223 = vunpack.c.h.b16 %v3142
        %v3224 = vunpack.c.l.b16 %v3143
        %v3225 = vunpack.c.h.b16 %v3143
        %v3226 = vunpack.c.l.b16 %v3144
        %v3227 = vunpack.c.h.b16 %v3144
        %v3228 = vunpack.c.l.b16 %v3145
        %v3229 = vunpack.c.h.b16 %v3145
        %v3230 = vunpack.c.l.b16 %v3146
        %v3231 = vunpack.c.h.b16 %v3146
        %v3232 = vunpack.c.l.b16 %v3147
        %v3233 = vunpack.c.h.b16 %v3147
        %v3234 = vunpack.c.l.b16 %v3148
        %v3235 = vunpack.c.h.b16 %v3148
        %v3236 = vunpack.c.l.b16 %v3149
        %v3237 = vunpack.c.h.b16 %v3149
        %v3238 = vunpack.c.l.b16 %v3150
        %v3239 = vunpack.c.h.b16 %v3150
        %v3240 = vunpack.c.l.b16 %v3151
        %v3241 = vunpack.c.h.b16 %v3151
        %v3242 = vunpack.c.l.b16 %v3152
        %v3243 = vunpack.c.h.b16 %v3152
        %v3244 = vunpack.c.l.b16 %v3153
        %v3245 = vunpack.c.h.b16 %v3153
        %v3246 = vunpack.c.l.b16 %v3154
        %v3247 = vunpack.c.h.b16 %v3154
        %v3248 = vunpack.c.l.b16 %v3155
        %v3249 = vunpack.c.h.b16 %v3155
        %v3250 = vunpack.c.l.b16 %v3156
        %v3251 = vunpack.c.h.b16 %v3156
        %v3252 = vunpack.c.l.b16 %v3157
        %v3253 = vunpack.c.h.b16 %v3157
        %v3254 = vunpack.c.l.b16 %v3158
        %v3255 = vunpack.c.h.b16 %v3158
        %v3256 = vunpack.c.l.b16 %v3159
        %v3257 = vunpack.c.h.b16 %v3159
        %v3258 = vunpack.c.l.b16 %v3160
        %v3259 = vunpack.c.h.b16 %v3160
        %v3260 = vunpack.c.l.b16 %v3161
        %v3261 = vunpack.c.h.b16 %v3161
        %v3262 = vunpack.c.l.b16 %v3162
        %v3263 = vunpack.c.h.b16 %v3162
        %v3264 = vunpack.c.l.b16 %v3163
        %v3265 = vunpack.c.h.b16 %v3163
        %v3266 = vunpack.c.l.b16 %v3164
        %v3267 = vunpack.c.h.b16 %v3164
        %v3268 = vunpack.c.l.b16 %v3165
        %v3269 = vunpack.c.h.b16 %v3165
        %v3270 = vunpack.c.l.b16 %v3166
        %v3271 = vunpack.c.h.b16 %v3166
        %v3272 = vunpack.c.l.b16 %v3167
        %v3273 = vunpack.c.h.b16 %v3167
        %v3274 = vunpack.c.l.b16 %v3168
        %v3275 = vunpack.c.h.b16 %v3168
        %v3276 = vunpack.c.l.b16 %v3169
        %v3277 = vunpack.c.h.b16 %v3169
        %v3278 = vunpack.c.l.b16 %v3170
        %v3279 = vunpack.c.h.b16 %v3170
        %v3280 = vpack.c.b16 %v3218, %v3216
        %v3281 = vpack.c.b16 %v3219, %v3217
        %v3282 = vpack.c.b16 %v3222, %v3220
        %v3283 = vpack.c.b16 %v3223, %v3221
        %v3284 = vpack.c.b16 %v3226, %v3224
        %v3285 = vpack.c.b16 %v3227, %v3225
        %v3286 = vpack.c.b16 %v3230, %v3228
        %v3287 = vpack.c.b16 %v3231, %v3229
        %v3288 = vpack.c.b16 %v3234, %v3232
        %v3289 = vpack.c.b16 %v3235, %v3233
        %v3290 = vpack.c.b16 %v3238, %v3236
        %v3291 = vpack.c.b16 %v3239, %v3237
        %v3292 = vpack.c.b16 %v3242, %v3240
        %v3293 = vpack.c.b16 %v3243, %v3241
        %v3294 = vpack.c.b16 %v3246, %v3244
        %v3295 = vpack.c.b16 %v3247, %v3245
        %v3296 = vpack.c.b16 %v3250, %v3248
        %v3297 = vpack.c.b16 %v3251, %v3249
        %v3298 = vpack.c.b16 %v3254, %v3252
        %v3299 = vpack.c.b16 %v3255, %v3253
        %v3300 = vpack.c.b16 %v3258, %v3256
        %v3301 = vpack.c.b16 %v3259, %v3257
        %v3302 = vpack.c.b16 %v3262, %v3260
        %v3303 = vpack.c.b16 %v3263, %v3261
        %v3304 = vpack.c.b16 %v3266, %v3264
        %v3305 = vpack.c.b16 %v3267, %v3265
        %v3306 = vpack.c.b16 %v3270, %v3268
        %v3307 = vpack.c.b16 %v3271, %v3269
        %v3308 = vpack.c.b16 %v3274, %v3272
        %v3309 = vpack.c.b16 %v3275, %v3273
        %v3310 = vpack.c.b16 %v3278, %v3276
        %v3311 = vpack.c.b16 %v3279, %v3277
        %3344 = vmatprep.subr.bf16.mxu0 %v3295
        %3345 = vmatpush1.bf16.msra.mxu0 %v3294
        %3346 = vmatprep.subr.bf16.mxu0 %v3293
        %3347 = vmatpush1.bf16.msra.mxu0 %v3292
        %3348 = vmatprep.subr.bf16.mxu0 %v3291
        %3349 = vmatpush1.bf16.msra.mxu0 %v3290
        %3350 = vmatprep.subr.bf16.mxu0 %v3289
        %3351 = vmatpush1.bf16.msra.mxu0 %v3288
        %3352 = vmatprep.subr.bf16.mxu0 %v3287
        %3353 = vmatpush1.bf16.msra.mxu0 %v3286
        %3354 = vmatprep.subr.bf16.mxu0 %v3285
        %3355 = vmatpush1.bf16.msra.mxu0 %v3284
        %3356 = vmatprep.subr.bf16.mxu0 %v3283
        %3357 = vmatpush1.bf16.msra.mxu0 %v3282
        %3358 = vmatprep.subr.bf16.mxu0 %v3281
        %3359 = vmatpush1.bf16.msra.mxu0 %v3280
        %3360 = vmatprep.subr.bf16.mxu0 %v3311
        %3361 = vmatpush2.bf16.msra.mxu0 %v3310
        %3362 = vmatprep.subr.bf16.mxu0 %v3309
        %3363 = vmatpush2.bf16.msra.mxu0 %v3308
        %3364 = vmatprep.subr.bf16.mxu0 %v3307
        %3365 = vmatpush2.bf16.msra.mxu0 %v3306
        %3366 = vmatprep.subr.bf16.mxu0 %v3305
        %3367 = vmatpush2.bf16.msra.mxu0 %v3304
        %3368 = vmatprep.subr.bf16.mxu0 %v3303
        %3369 = vmatpush2.bf16.msra.mxu0 %v3302
        %3370 = vmatprep.subr.bf16.mxu0 %v3301
        %3371 = vmatpush2.bf16.msra.mxu0 %v3300
        %3372 = vmatprep.subr.bf16.mxu0 %v3299
        %3373 = vmatpush2.bf16.msra.mxu0 %v3298
        %3374 = vmatprep.subr.bf16.mxu0 %v3297
        %3375 = vmatpush2.bf16.msra.mxu0 %v3296
        %3376 = vmatprep.mubr.bf16.mxu0 %v3181
        %3377 = vmatmul.mubr.bf16.gmra.mxu0 %v3178
        %v3378 = vpop.f32.mrf.mxu0
        %v3379 = vadd.f32 0.0, %v3378
        %v3380 = vpop.f32.mrf.mxu0
        %v3381 = vadd.f32 0.0, %v3380
        %v3382 = vpop.f32.mrf.mxu0
        %v3383 = vadd.f32 0.0, %v3382
        %v3384 = vpop.f32.mrf.mxu0
        %v3385 = vadd.f32 0.0, %v3384
        %3386 = vdwg.mxu0
        %v3387 = vadd.f32 %v3129, %v3379
        %v3388 = vadd.f32 %v3131, %v3381
        %v3389 = vadd.f32 %v3133, %v3383
        %v3390 = vadd.f32 %v3135, %v3385
        %v3391 = vld [vmem:[%s8] sm:$0x3]
        %v3393 = vlaneseq
        %v3394 = vshrl.u32 %v3393, 7
        %v3395 = vsub.s32 0, %v3394
        %v3396 = vrot.slane %v3391, %v3395
        %v3397 = vlaneseq
        %v3398 = vshrl.u32 %v3397, 7
        %v3399 = vsub.s32 1, %v3398
        %v3400 = vrot.slane %v3391, %v3399
        %v3403 = vadd.f32 %v3387, %v3396
        %v3404 = vadd.f32 %v3388, %v3400
        %v3405 = vadd.f32 %v3389, %v3396
        %v3406 = vadd.f32 %v3390, %v3400
        %v3407 = vmax.f32 %v3403, 0.0
        %v3408 = vmax.f32 %v3404, 0.0
        %v3409 = vmax.f32 %v3405, 0.0
        %v3410 = vmax.f32 %v3406, 0.0
        %v3411 = vld [vmem:[#allocation10] sm:$0xff]
        %v3412 = vld [vmem:[#allocation10 + $0x8] sm:$0xff]
        %v3413 = vld [vmem:[#allocation10 + $0x10] sm:$0xff]
        %v3414 = vld [vmem:[#allocation10 + $0x18] sm:$0xff]
        %v3415 = vld [vmem:[#allocation10 + $0x20] sm:$0xff]
        %v3416 = vld [vmem:[#allocation10 + $0x28] sm:$0xff]
        %v3417 = vld [vmem:[#allocation10 + $0x30] sm:$0xff]
        %v3418 = vld [vmem:[#allocation10 + $0x38] sm:$0xff]
        %v3419 = vld [vmem:[#allocation10 + $0x40] sm:$0xff]
        %v3420 = vld [vmem:[#allocation10 + $0x48] sm:$0xff]
        %v3421 = vld [vmem:[#allocation10 + $0x50] sm:$0xff]
        %v3422 = vld [vmem:[#allocation10 + $0x58] sm:$0xff]
        %v3423 = vld [vmem:[#allocation10 + $0x60] sm:$0xff]
        %v3424 = vld [vmem:[#allocation10 + $0x68] sm:$0xff]
        %v3425 = vld [vmem:[#allocation10 + $0x70] sm:$0xff]
        %v3426 = vld [vmem:[#allocation10 + $0x78] sm:$0xff]
        %v3427 = vld [vmem:[%s10] sm:$0x3]
        %v3429 = vlaneseq
        %v3430 = vshrl.u32 %v3429, 7
        %v3431 = vsub.s32 0, %v3430
        %v3432 = vrot.slane %v3427, %v3431
        %v3433 = vlaneseq
        %v3434 = vshrl.u32 %v3433, 7
        %v3435 = vsub.s32 1, %v3434
        %v3436 = vrot.slane %v3427, %v3435
        %v3455 = vunpack.c.l.b16 %v3411
        %v3456 = vunpack.c.h.b16 %v3411
        %v3457 = vunpack.c.l.b16 %v3412
        %v3458 = vunpack.c.h.b16 %v3412
        %v3459 = vunpack.c.l.b16 %v3413
        %v3460 = vunpack.c.h.b16 %v3413
        %v3461 = vunpack.c.l.b16 %v3414
        %v3462 = vunpack.c.h.b16 %v3414
        %v3463 = vunpack.c.l.b16 %v3415
        %v3464 = vunpack.c.h.b16 %v3415
        %v3465 = vunpack.c.l.b16 %v3416
        %v3466 = vunpack.c.h.b16 %v3416
        %v3467 = vunpack.c.l.b16 %v3417
        %v3468 = vunpack.c.h.b16 %v3417
        %v3469 = vunpack.c.l.b16 %v3418
        %v3470 = vunpack.c.h.b16 %v3418
        %v3471 = vunpack.c.l.b16 %v3419
        %v3472 = vunpack.c.h.b16 %v3419
        %v3473 = vunpack.c.l.b16 %v3420
        %v3474 = vunpack.c.h.b16 %v3420
        %v3475 = vunpack.c.l.b16 %v3421
        %v3476 = vunpack.c.h.b16 %v3421
        %v3477 = vunpack.c.l.b16 %v3422
        %v3478 = vunpack.c.h.b16 %v3422
        %v3479 = vunpack.c.l.b16 %v3423
        %v3480 = vunpack.c.h.b16 %v3423
        %v3481 = vunpack.c.l.b16 %v3424
        %v3482 = vunpack.c.h.b16 %v3424
        %v3483 = vunpack.c.l.b16 %v3425
        %v3484 = vunpack.c.h.b16 %v3425
        %v3485 = vunpack.c.l.b16 %v3426
        %v3486 = vunpack.c.h.b16 %v3426
        %v3487 = vpack.c.b16 %v3457, %v3455
        %v3488 = vpack.c.b16 %v3458, %v3456
        %v3489 = vpack.c.b16 %v3461, %v3459
        %v3490 = vpack.c.b16 %v3462, %v3460
        %v3491 = vpack.c.b16 %v3465, %v3463
        %v3492 = vpack.c.b16 %v3466, %v3464
        %v3493 = vpack.c.b16 %v3469, %v3467
        %v3494 = vpack.c.b16 %v3470, %v3468
        %v3495 = vpack.c.b16 %v3473, %v3471
        %v3496 = vpack.c.b16 %v3474, %v3472
        %v3497 = vpack.c.b16 %v3477, %v3475
        %v3498 = vpack.c.b16 %v3478, %v3476
        %v3499 = vpack.c.b16 %v3481, %v3479
        %v3500 = vpack.c.b16 %v3482, %v3480
        %v3501 = vpack.c.b16 %v3485, %v3483
        %v3502 = vpack.c.b16 %v3486, %v3484
        %3519 = vmatprep.subr.bf16.mxu0 %v3502
        %3520 = vmatpush1.bf16.msra.mxu0 %v3501
        %3521 = vmatprep.subr.bf16.mxu0 %v3500
        %3522 = vmatpush1.bf16.msra.mxu0 %v3499
        %3523 = vmatprep.subr.bf16.mxu0 %v3498
        %3524 = vmatpush1.bf16.msra.mxu0 %v3497
        %3525 = vmatprep.subr.bf16.mxu0 %v3496
        %3526 = vmatpush1.bf16.msra.mxu0 %v3495
        %3527 = vmatprep.subr.bf16.mxu0 %v3494
        %3528 = vmatpush1.bf16.msra.mxu0 %v3493
        %3529 = vmatprep.subr.bf16.mxu0 %v3492
        %3530 = vmatpush1.bf16.msra.mxu0 %v3491
        %3531 = vmatprep.subr.bf16.mxu0 %v3490
        %3532 = vmatpush1.bf16.msra.mxu0 %v3489
        %3533 = vmatprep.subr.bf16.mxu0 %v3488
        %3534 = vmatpush1.bf16.msra.mxu0 %v3487
        %3535 = vmatprep.subr.bf16.mxu0 0
        %3536 = vmatpush2.bf16.msra.mxu0 0
        %3537 = vmatprep.subr.bf16.mxu0 0
        %3538 = vmatpush2.bf16.msra.mxu0 0
        %3539 = vmatprep.subr.bf16.mxu0 0
        %3540 = vmatpush2.bf16.msra.mxu0 0
        %3541 = vmatprep.subr.bf16.mxu0 0
        %3542 = vmatpush2.bf16.msra.mxu0 0
        %3543 = vmatprep.subr.bf16.mxu0 0
        %3544 = vmatpush2.bf16.msra.mxu0 0
        %3545 = vmatprep.subr.bf16.mxu0 0
        %3546 = vmatpush2.bf16.msra.mxu0 0
        %3547 = vmatprep.subr.bf16.mxu0 0
        %3548 = vmatpush2.bf16.msra.mxu0 0
        %3549 = vmatprep.subr.bf16.mxu0 0
        %3550 = vmatpush2.bf16.msra.mxu0 0
        %3551 = vmatprep.mubr.bf16.mxu0 0
        %3552 = vmatmul.mubr.bf16.gmra.mxu0 %v1247
        %v3553 = vpop.f32.mrf.mxu0
        %v3554 = vadd.f32 %v3432, %v3553
        %v3555 = vpop.f32.mrf.mxu0
        %v3556 = vadd.f32 %v3436, %v3555
        %v3557 = vpop.f32.mrf.mxu0
        %v3558 = vadd.f32 %v3432, %v3557
        %v3559 = vpop.f32.mrf.mxu0
        %v3560 = vadd.f32 %v3436, %v3559
        %3561 = vdwg.mxu0
        %v3562 = vpack.c.bf16 %v3409, %v3407
        %v3563 = vpack.c.bf16 %v3410, %v3408
        %v3566 = vunpack.c.l.b16 %v3562
        %v3567 = vunpack.c.l.b16 %v3563
        %v3568 = vunpack.c.h.b16 %v3562
        %v3569 = vunpack.c.h.b16 %v3563
        %v3570 = vpack.c.b16 %v3567, %v3566
        %v3571 = vpack.c.b16 %v3569, %v3568
        %v3573 = vshrl.u32 %v3570, 16
        %v3575 = vrot.slane %v3573, 7
        %v3576 = vshll.u32 %v3570, 16
        %v3578 = vor.u32 %v3575, %v3576
        %v3579 = vrot.slane %v3575, 4
        %v3581 = vshrl.u32 %v3571, 16
        %v3583 = vrot.slane %v3581, 7
        %v3584 = vshll.u32 %v3571, 16
        %v3586 = vor.u32 %v3583, %v3584
        %v3587 = vsel %vm939, %v3579, %v3586
        %v3588 = vrot.slane %v3583, 4
        %v3592 = vsel %vm1789, %v3578, %v2622
        %3593 = vst [vmem:[#allocation2] sm:$0xff] %v3592
        %3594 = vst [vmem:[#allocation2 + $0x8] sm:$0xff] %v3587
        %v3595 = vld [vmem:[#allocation2 + $0x10] sm:$0x11]
        %v3596 = vsel %vm918, %v3588, %v3595
        %3597 = vst [vmem:[#allocation2 + $0x10] sm:$0x11] %v3596
        %v3598 = vld [vmem:[#allocation2] sm:$0xff]
        %v3599 = vld [vmem:[#allocation2 + $0x8] sm:$0xff]
        %v3600 = vld [vmem:[#allocation11] sm:$0xff]
        %v3601 = vld [vmem:[#allocation11 + $0x8] sm:$0xff]
        %v3602 = vld [vmem:[#allocation11 + $0x10] sm:$0xff]
        %v3603 = vld [vmem:[#allocation11 + $0x18] sm:$0xff]
        %v3604 = vld [vmem:[#allocation11 + $0x20] sm:$0xff]
        %v3605 = vld [vmem:[#allocation11 + $0x28] sm:$0xff]
        %v3606 = vld [vmem:[#allocation11 + $0x30] sm:$0xff]
        %v3607 = vld [vmem:[#allocation11 + $0x38] sm:$0xff]
        %v3608 = vld [vmem:[#allocation11 + $0x40] sm:$0xff]
        %v3609 = vld [vmem:[#allocation11 + $0x48] sm:$0xff]
        %v3610 = vld [vmem:[#allocation11 + $0x50] sm:$0xff]
        %v3611 = vld [vmem:[#allocation11 + $0x58] sm:$0xff]
        %v3612 = vld [vmem:[#allocation11 + $0x60] sm:$0xff]
        %v3613 = vld [vmem:[#allocation11 + $0x68] sm:$0xff]
        %v3614 = vld [vmem:[#allocation11 + $0x70] sm:$0xff]
        %v3615 = vld [vmem:[#allocation11 + $0x78] sm:$0xff]
        %v3616 = vld [vmem:[#allocation11 + $0x80] sm:$0xff]
        %v3617 = vld [vmem:[#allocation11 + $0x88] sm:$0xff]
        %v3618 = vld [vmem:[#allocation11 + $0x90] sm:$0xff]
        %v3619 = vld [vmem:[#allocation11 + $0x98] sm:$0xff]
        %v3620 = vld [vmem:[#allocation11 + $0xa0] sm:$0xff]
        %v3621 = vld [vmem:[#allocation11 + $0xa8] sm:$0xff]
        %v3622 = vld [vmem:[#allocation11 + $0xb0] sm:$0xff]
        %v3623 = vld [vmem:[#allocation11 + $0xb8] sm:$0xff]
        %v3624 = vld [vmem:[#allocation11 + $0xc0] sm:$0xff]
        %v3625 = vld [vmem:[#allocation11 + $0xc8] sm:$0xff]
        %v3626 = vld [vmem:[#allocation11 + $0xd0] sm:$0xff]
        %v3627 = vld [vmem:[#allocation11 + $0xd8] sm:$0xff]
        %v3628 = vld [vmem:[#allocation11 + $0xe0] sm:$0xff]
        %v3629 = vld [vmem:[#allocation11 + $0xe8] sm:$0xff]
        %v3630 = vld [vmem:[#allocation11 + $0xf0] sm:$0xff]
        %v3631 = vld [vmem:[#allocation11 + $0xf8] sm:$0xff]
        %v3632 = vld [vmem:[#allocation2 + $0x10] sm:$0x11]
        %s3633 = scalar_lea.vmem [#allocation11], 256
        %v3634 = vld [vmem:[%s3633] sm:$0xff]
        %v3635 = vld [vmem:[%s3633 + $0x8] sm:$0xff]
        %v3636 = vld [vmem:[%s3633 + $0x10] sm:$0xff]
        %v3637 = vld [vmem:[%s3633 + $0x18] sm:$0xff]
        %v3638 = vld [vmem:[%s3633 + $0x20] sm:$0xff]
        %v3639 = vld [vmem:[%s3633 + $0x28] sm:$0xff]
        %v3640 = vld [vmem:[%s3633 + $0x30] sm:$0xff]
        %v3641 = vld [vmem:[%s3633 + $0x38] sm:$0xff]
        %v3642 = vld [vmem:[%s3633 + $0x40] sm:$0xff]
        %v3643 = vld [vmem:[%s3633 + $0x48] sm:$0xff]
        %v3644 = vld [vmem:[%s3633 + $0x50] sm:$0xff]
        %v3645 = vld [vmem:[%s3633 + $0x58] sm:$0xff]
        %v3646 = vld [vmem:[%s3633 + $0x60] sm:$0xff]
        %v3647 = vld [vmem:[%s3633 + $0x68] sm:$0xff]
        %v3648 = vld [vmem:[%s3633 + $0x70] sm:$0xff]
        %v3649 = vld [vmem:[%s3633 + $0x78] sm:$0xff]
        %v3650 = vld [vmem:[%s3633 + $0x80] sm:$0xff]
        %v3651 = vld [vmem:[%s3633 + $0x88] sm:$0xff]
        %v3652 = vld [vmem:[%s3633 + $0x90] sm:$0xff]
        %v3653 = vld [vmem:[%s3633 + $0x98] sm:$0xff]
        %v3654 = vld [vmem:[%s3633 + $0xa0] sm:$0xff]
        %v3655 = vld [vmem:[%s3633 + $0xa8] sm:$0xff]
        %v3656 = vld [vmem:[%s3633 + $0xb0] sm:$0xff]
        %v3657 = vld [vmem:[%s3633 + $0xb8] sm:$0xff]
        %v3658 = vld [vmem:[%s3633 + $0xc0] sm:$0xff]
        %v3659 = vld [vmem:[%s3633 + $0xc8] sm:$0xff]
        %v3660 = vld [vmem:[%s3633 + $0xd0] sm:$0xff]
        %v3661 = vld [vmem:[%s3633 + $0xd8] sm:$0xff]
        %v3662 = vld [vmem:[%s3633 + $0xe0] sm:$0xff]
        %v3663 = vld [vmem:[%s3633 + $0xe8] sm:$0xff]
        %v3664 = vld [vmem:[%s3633 + $0xf0] sm:$0xff]
        %v3665 = vld [vmem:[%s3633 + $0xf8] sm:$0xff]
        %v3669 = vunpack.c.l.b16 %v3598
        %v3670 = vunpack.c.h.b16 %v3598
        %v3671 = vunpack.c.l.b16 %v3599
        %v3672 = vunpack.c.h.b16 %v3599
        %v3673 = vunpack.c.l.b16 %v3632
        %v3674 = vunpack.c.h.b16 %v3632
        %v3675 = vpack.c.b16 %v3671, %v3669
        %v3676 = vpack.c.b16 %v3672, %v3670
        %v3677 = vpack.c.b16 %v3673, %v3673
        %v3678 = vpack.c.b16 %v3674, %v3674
        %v3680 = vshrl.u32 %v3675, 16
        %v3682 = vshll.u32 %v3675, 16
        %v3684 = vrot.slane %v3682, 1
        %v3685 = vor.u32 %v3680, %v3684
        %v3687 = vshll.u32 %v3677, 16
        %v3689 = vrot.slane %v3687, 1
        %v3690 = vsel %vm1000, %v3685, %v3689
        %v3692 = vshrl.u32 %v3676, 16
        %v3694 = vshll.u32 %v3676, 16
        %v3696 = vrot.slane %v3694, 1
        %v3697 = vor.u32 %v3692, %v3696
        %v3699 = vshll.u32 %v3678, 16
        %v3701 = vrot.slane %v3699, 1
        %v3702 = vsel %vm1000, %v3697, %v3701
        %v3737 = vunpack.c.l.b16 %v3634
        %v3738 = vunpack.c.h.b16 %v3634
        %v3739 = vunpack.c.l.b16 %v3635
        %v3740 = vunpack.c.h.b16 %v3635
        %v3741 = vunpack.c.l.b16 %v3636
        %v3742 = vunpack.c.h.b16 %v3636
        %v3743 = vunpack.c.l.b16 %v3637
        %v3744 = vunpack.c.h.b16 %v3637
        %v3745 = vunpack.c.l.b16 %v3638
        %v3746 = vunpack.c.h.b16 %v3638
        %v3747 = vunpack.c.l.b16 %v3639
        %v3748 = vunpack.c.h.b16 %v3639
        %v3749 = vunpack.c.l.b16 %v3640
        %v3750 = vunpack.c.h.b16 %v3640
        %v3751 = vunpack.c.l.b16 %v3641
        %v3752 = vunpack.c.h.b16 %v3641
        %v3753 = vunpack.c.l.b16 %v3642
        %v3754 = vunpack.c.h.b16 %v3642
        %v3755 = vunpack.c.l.b16 %v3643
        %v3756 = vunpack.c.h.b16 %v3643
        %v3757 = vunpack.c.l.b16 %v3644
        %v3758 = vunpack.c.h.b16 %v3644
        %v3759 = vunpack.c.l.b16 %v3645
        %v3760 = vunpack.c.h.b16 %v3645
        %v3761 = vunpack.c.l.b16 %v3646
        %v3762 = vunpack.c.h.b16 %v3646
        %v3763 = vunpack.c.l.b16 %v3647
        %v3764 = vunpack.c.h.b16 %v3647
        %v3765 = vunpack.c.l.b16 %v3648
        %v3766 = vunpack.c.h.b16 %v3648
        %v3767 = vunpack.c.l.b16 %v3649
        %v3768 = vunpack.c.h.b16 %v3649
        %v3769 = vunpack.c.l.b16 %v3650
        %v3770 = vunpack.c.h.b16 %v3650
        %v3771 = vunpack.c.l.b16 %v3651
        %v3772 = vunpack.c.h.b16 %v3651
        %v3773 = vunpack.c.l.b16 %v3652
        %v3774 = vunpack.c.h.b16 %v3652
        %v3775 = vunpack.c.l.b16 %v3653
        %v3776 = vunpack.c.h.b16 %v3653
        %v3777 = vunpack.c.l.b16 %v3654
        %v3778 = vunpack.c.h.b16 %v3654
        %v3779 = vunpack.c.l.b16 %v3655
        %v3780 = vunpack.c.h.b16 %v3655
        %v3781 = vunpack.c.l.b16 %v3656
        %v3782 = vunpack.c.h.b16 %v3656
        %v3783 = vunpack.c.l.b16 %v3657
        %v3784 = vunpack.c.h.b16 %v3657
        %v3785 = vunpack.c.l.b16 %v3658
        %v3786 = vunpack.c.h.b16 %v3658
        %v3787 = vunpack.c.l.b16 %v3659
        %v3788 = vunpack.c.h.b16 %v3659
        %v3789 = vunpack.c.l.b16 %v3660
        %v3790 = vunpack.c.h.b16 %v3660
        %v3791 = vunpack.c.l.b16 %v3661
        %v3792 = vunpack.c.h.b16 %v3661
        %v3793 = vunpack.c.l.b16 %v3662
        %v3794 = vunpack.c.h.b16 %v3662
        %v3795 = vunpack.c.l.b16 %v3663
        %v3796 = vunpack.c.h.b16 %v3663
        %v3797 = vunpack.c.l.b16 %v3664
        %v3798 = vunpack.c.h.b16 %v3664
        %v3799 = vunpack.c.l.b16 %v3665
        %v3800 = vunpack.c.h.b16 %v3665
        %v3801 = vpack.c.b16 %v3739, %v3737
        %v3802 = vpack.c.b16 %v3740, %v3738
        %v3803 = vpack.c.b16 %v3743, %v3741
        %v3804 = vpack.c.b16 %v3744, %v3742
        %v3805 = vpack.c.b16 %v3747, %v3745
        %v3806 = vpack.c.b16 %v3748, %v3746
        %v3807 = vpack.c.b16 %v3751, %v3749
        %v3808 = vpack.c.b16 %v3752, %v3750
        %v3809 = vpack.c.b16 %v3755, %v3753
        %v3810 = vpack.c.b16 %v3756, %v3754
        %v3811 = vpack.c.b16 %v3759, %v3757
        %v3812 = vpack.c.b16 %v3760, %v3758
        %v3813 = vpack.c.b16 %v3763, %v3761
        %v3814 = vpack.c.b16 %v3764, %v3762
        %v3815 = vpack.c.b16 %v3767, %v3765
        %v3816 = vpack.c.b16 %v3768, %v3766
        %v3817 = vpack.c.b16 %v3771, %v3769
        %v3818 = vpack.c.b16 %v3772, %v3770
        %v3819 = vpack.c.b16 %v3775, %v3773
        %v3820 = vpack.c.b16 %v3776, %v3774
        %v3821 = vpack.c.b16 %v3779, %v3777
        %v3822 = vpack.c.b16 %v3780, %v3778
        %v3823 = vpack.c.b16 %v3783, %v3781
        %v3824 = vpack.c.b16 %v3784, %v3782
        %v3825 = vpack.c.b16 %v3787, %v3785
        %v3826 = vpack.c.b16 %v3788, %v3786
        %v3827 = vpack.c.b16 %v3791, %v3789
        %v3828 = vpack.c.b16 %v3792, %v3790
        %v3829 = vpack.c.b16 %v3795, %v3793
        %v3830 = vpack.c.b16 %v3796, %v3794
        %v3831 = vpack.c.b16 %v3799, %v3797
        %v3832 = vpack.c.b16 %v3800, %v3798
        %3865 = vmatprep.subr.bf16.mxu0 %v3816
        %3866 = vmatpush1.bf16.msra.mxu0 %v3815
        %3867 = vmatprep.subr.bf16.mxu0 %v3814
        %3868 = vmatpush1.bf16.msra.mxu0 %v3813
        %3869 = vmatprep.subr.bf16.mxu0 %v3812
        %3870 = vmatpush1.bf16.msra.mxu0 %v3811
        %3871 = vmatprep.subr.bf16.mxu0 %v3810
        %3872 = vmatpush1.bf16.msra.mxu0 %v3809
        %3873 = vmatprep.subr.bf16.mxu0 %v3808
        %3874 = vmatpush1.bf16.msra.mxu0 %v3807
        %3875 = vmatprep.subr.bf16.mxu0 %v3806
        %3876 = vmatpush1.bf16.msra.mxu0 %v3805
        %3877 = vmatprep.subr.bf16.mxu0 %v3804
        %3878 = vmatpush1.bf16.msra.mxu0 %v3803
        %3879 = vmatprep.subr.bf16.mxu0 %v3802
        %3880 = vmatpush1.bf16.msra.mxu0 %v3801
        %3881 = vmatprep.subr.bf16.mxu0 %v3832
        %3882 = vmatpush2.bf16.msra.mxu0 %v3831
        %3883 = vmatprep.subr.bf16.mxu0 %v3830
        %3884 = vmatpush2.bf16.msra.mxu0 %v3829
        %3885 = vmatprep.subr.bf16.mxu0 %v3828
        %3886 = vmatpush2.bf16.msra.mxu0 %v3827
        %3887 = vmatprep.subr.bf16.mxu0 %v3826
        %3888 = vmatpush2.bf16.msra.mxu0 %v3825
        %3889 = vmatprep.subr.bf16.mxu0 %v3824
        %3890 = vmatpush2.bf16.msra.mxu0 %v3823
        %3891 = vmatprep.subr.bf16.mxu0 %v3822
        %3892 = vmatpush2.bf16.msra.mxu0 %v3821
        %3893 = vmatprep.subr.bf16.mxu0 %v3820
        %3894 = vmatpush2.bf16.msra.mxu0 %v3819
        %3895 = vmatprep.subr.bf16.mxu0 %v3818
        %3896 = vmatpush2.bf16.msra.mxu0 %v3817
        %3897 = vmatprep.mubr.bf16.mxu0 %v3702
        %3898 = vmatmul.mubr.bf16.gmra.mxu0 %v3690
        %v3899 = vpop.f32.mrf.mxu0
        %v3900 = vadd.f32 0.0, %v3899
        %v3901 = vpop.f32.mrf.mxu0
        %v3902 = vadd.f32 0.0, %v3901
        %v3903 = vpop.f32.mrf.mxu0
        %v3904 = vadd.f32 0.0, %v3903
        %v3905 = vpop.f32.mrf.mxu0
        %v3906 = vadd.f32 0.0, %v3905
        %3907 = vdwg.mxu0
        %v3942 = vunpack.c.l.b16 %v3600
        %v3943 = vunpack.c.h.b16 %v3600
        %v3944 = vunpack.c.l.b16 %v3601
        %v3945 = vunpack.c.h.b16 %v3601
        %v3946 = vunpack.c.l.b16 %v3602
        %v3947 = vunpack.c.h.b16 %v3602
        %v3948 = vunpack.c.l.b16 %v3603
        %v3949 = vunpack.c.h.b16 %v3603
        %v3950 = vunpack.c.l.b16 %v3604
        %v3951 = vunpack.c.h.b16 %v3604
        %v3952 = vunpack.c.l.b16 %v3605
        %v3953 = vunpack.c.h.b16 %v3605
        %v3954 = vunpack.c.l.b16 %v3606
        %v3955 = vunpack.c.h.b16 %v3606
        %v3956 = vunpack.c.l.b16 %v3607
        %v3957 = vunpack.c.h.b16 %v3607
        %v3958 = vunpack.c.l.b16 %v3608
        %v3959 = vunpack.c.h.b16 %v3608
        %v3960 = vunpack.c.l.b16 %v3609
        %v3961 = vunpack.c.h.b16 %v3609
        %v3962 = vunpack.c.l.b16 %v3610
        %v3963 = vunpack.c.h.b16 %v3610
        %v3964 = vunpack.c.l.b16 %v3611
        %v3965 = vunpack.c.h.b16 %v3611
        %v3966 = vunpack.c.l.b16 %v3612
        %v3967 = vunpack.c.h.b16 %v3612
        %v3968 = vunpack.c.l.b16 %v3613
        %v3969 = vunpack.c.h.b16 %v3613
        %v3970 = vunpack.c.l.b16 %v3614
        %v3971 = vunpack.c.h.b16 %v3614
        %v3972 = vunpack.c.l.b16 %v3615
        %v3973 = vunpack.c.h.b16 %v3615
        %v3974 = vunpack.c.l.b16 %v3616
        %v3975 = vunpack.c.h.b16 %v3616
        %v3976 = vunpack.c.l.b16 %v3617
        %v3977 = vunpack.c.h.b16 %v3617
        %v3978 = vunpack.c.l.b16 %v3618
        %v3979 = vunpack.c.h.b16 %v3618
        %v3980 = vunpack.c.l.b16 %v3619
        %v3981 = vunpack.c.h.b16 %v3619
        %v3982 = vunpack.c.l.b16 %v3620
        %v3983 = vunpack.c.h.b16 %v3620
        %v3984 = vunpack.c.l.b16 %v3621
        %v3985 = vunpack.c.h.b16 %v3621
        %v3986 = vunpack.c.l.b16 %v3622
        %v3987 = vunpack.c.h.b16 %v3622
        %v3988 = vunpack.c.l.b16 %v3623
        %v3989 = vunpack.c.h.b16 %v3623
        %v3990 = vunpack.c.l.b16 %v3624
        %v3991 = vunpack.c.h.b16 %v3624
        %v3992 = vunpack.c.l.b16 %v3625
        %v3993 = vunpack.c.h.b16 %v3625
        %v3994 = vunpack.c.l.b16 %v3626
        %v3995 = vunpack.c.h.b16 %v3626
        %v3996 = vunpack.c.l.b16 %v3627
        %v3997 = vunpack.c.h.b16 %v3627
        %v3998 = vunpack.c.l.b16 %v3628
        %v3999 = vunpack.c.h.b16 %v3628
        %v4000 = vunpack.c.l.b16 %v3629
        %v4001 = vunpack.c.h.b16 %v3629
        %v4002 = vunpack.c.l.b16 %v3630
        %v4003 = vunpack.c.h.b16 %v3630
        %v4004 = vunpack.c.l.b16 %v3631
        %v4005 = vunpack.c.h.b16 %v3631
        %v4006 = vpack.c.b16 %v3944, %v3942
        %v4007 = vpack.c.b16 %v3945, %v3943
        %v4008 = vpack.c.b16 %v3948, %v3946
        %v4009 = vpack.c.b16 %v3949, %v3947
        %v4010 = vpack.c.b16 %v3952, %v3950
        %v4011 = vpack.c.b16 %v3953, %v3951
        %v4012 = vpack.c.b16 %v3956, %v3954
        %v4013 = vpack.c.b16 %v3957, %v3955
        %v4014 = vpack.c.b16 %v3960, %v3958
        %v4015 = vpack.c.b16 %v3961, %v3959
        %v4016 = vpack.c.b16 %v3964, %v3962
        %v4017 = vpack.c.b16 %v3965, %v3963
        %v4018 = vpack.c.b16 %v3968, %v3966
        %v4019 = vpack.c.b16 %v3969, %v3967
        %v4020 = vpack.c.b16 %v3972, %v3970
        %v4021 = vpack.c.b16 %v3973, %v3971
        %v4022 = vpack.c.b16 %v3976, %v3974
        %v4023 = vpack.c.b16 %v3977, %v3975
        %v4024 = vpack.c.b16 %v3980, %v3978
        %v4025 = vpack.c.b16 %v3981, %v3979
        %v4026 = vpack.c.b16 %v3984, %v3982
        %v4027 = vpack.c.b16 %v3985, %v3983
        %v4028 = vpack.c.b16 %v3988, %v3986
        %v4029 = vpack.c.b16 %v3989, %v3987
        %v4030 = vpack.c.b16 %v3992, %v3990
        %v4031 = vpack.c.b16 %v3993, %v3991
        %v4032 = vpack.c.b16 %v3996, %v3994
        %v4033 = vpack.c.b16 %v3997, %v3995
        %v4034 = vpack.c.b16 %v4000, %v3998
        %v4035 = vpack.c.b16 %v4001, %v3999
        %v4036 = vpack.c.b16 %v4004, %v4002
        %v4037 = vpack.c.b16 %v4005, %v4003
        %4070 = vmatprep.subr.bf16.mxu0 %v4021
        %4071 = vmatpush1.bf16.msra.mxu0 %v4020
        %4072 = vmatprep.subr.bf16.mxu0 %v4019
        %4073 = vmatpush1.bf16.msra.mxu0 %v4018
        %4074 = vmatprep.subr.bf16.mxu0 %v4017
        %4075 = vmatpush1.bf16.msra.mxu0 %v4016
        %4076 = vmatprep.subr.bf16.mxu0 %v4015
        %4077 = vmatpush1.bf16.msra.mxu0 %v4014
        %4078 = vmatprep.subr.bf16.mxu0 %v4013
        %4079 = vmatpush1.bf16.msra.mxu0 %v4012
        %4080 = vmatprep.subr.bf16.mxu0 %v4011
        %4081 = vmatpush1.bf16.msra.mxu0 %v4010
        %4082 = vmatprep.subr.bf16.mxu0 %v4009
        %4083 = vmatpush1.bf16.msra.mxu0 %v4008
        %4084 = vmatprep.subr.bf16.mxu0 %v4007
        %4085 = vmatpush1.bf16.msra.mxu0 %v4006
        %4086 = vmatprep.subr.bf16.mxu0 %v4037
        %4087 = vmatpush2.bf16.msra.mxu0 %v4036
        %4088 = vmatprep.subr.bf16.mxu0 %v4035
        %4089 = vmatpush2.bf16.msra.mxu0 %v4034
        %4090 = vmatprep.subr.bf16.mxu0 %v4033
        %4091 = vmatpush2.bf16.msra.mxu0 %v4032
        %4092 = vmatprep.subr.bf16.mxu0 %v4031
        %4093 = vmatpush2.bf16.msra.mxu0 %v4030
        %4094 = vmatprep.subr.bf16.mxu0 %v4029
        %4095 = vmatpush2.bf16.msra.mxu0 %v4028
        %4096 = vmatprep.subr.bf16.mxu0 %v4027
        %4097 = vmatpush2.bf16.msra.mxu0 %v4026
        %4098 = vmatprep.subr.bf16.mxu0 %v4025
        %4099 = vmatpush2.bf16.msra.mxu0 %v4024
        %4100 = vmatprep.subr.bf16.mxu0 %v4023
        %4101 = vmatpush2.bf16.msra.mxu0 %v4022
        %4102 = vmatprep.mubr.bf16.mxu0 %v3676
        %4103 = vmatmul.mubr.bf16.gmra.mxu0 %v3675
        %v4104 = vpop.f32.mrf.mxu0
        %v4105 = vadd.f32 %v3900, %v4104
        %v4106 = vpop.f32.mrf.mxu0
        %v4107 = vadd.f32 %v3902, %v4106
        %v4108 = vpop.f32.mrf.mxu0
        %v4109 = vadd.f32 %v3904, %v4108
        %v4110 = vpop.f32.mrf.mxu0
        %v4111 = vadd.f32 %v3906, %v4110
        %4112 = vdwg.mxu0
        %v4113 = vld [vmem:[#allocation2] sm:$0xee]
        %s4114 = scalar_lea.vmem [#allocation11], 512
        %v4115 = vld [vmem:[%s4114] sm:$0xff]
        %v4116 = vld [vmem:[%s4114 + $0x8] sm:$0xff]
        %v4117 = vld [vmem:[%s4114 + $0x10] sm:$0xff]
        %v4118 = vld [vmem:[%s4114 + $0x18] sm:$0xff]
        %v4119 = vld [vmem:[%s4114 + $0x20] sm:$0xff]
        %v4120 = vld [vmem:[%s4114 + $0x28] sm:$0xff]
        %v4121 = vld [vmem:[%s4114 + $0x30] sm:$0xff]
        %v4122 = vld [vmem:[%s4114 + $0x38] sm:$0xff]
        %v4123 = vld [vmem:[%s4114 + $0x40] sm:$0xff]
        %v4124 = vld [vmem:[%s4114 + $0x48] sm:$0xff]
        %v4125 = vld [vmem:[%s4114 + $0x50] sm:$0xff]
        %v4126 = vld [vmem:[%s4114 + $0x58] sm:$0xff]
        %v4127 = vld [vmem:[%s4114 + $0x60] sm:$0xff]
        %v4128 = vld [vmem:[%s4114 + $0x68] sm:$0xff]
        %v4129 = vld [vmem:[%s4114 + $0x70] sm:$0xff]
        %v4130 = vld [vmem:[%s4114 + $0x78] sm:$0xff]
        %v4131 = vld [vmem:[%s4114 + $0x80] sm:$0xff]
        %v4132 = vld [vmem:[%s4114 + $0x88] sm:$0xff]
        %v4133 = vld [vmem:[%s4114 + $0x90] sm:$0xff]
        %v4134 = vld [vmem:[%s4114 + $0x98] sm:$0xff]
        %v4135 = vld [vmem:[%s4114 + $0xa0] sm:$0xff]
        %v4136 = vld [vmem:[%s4114 + $0xa8] sm:$0xff]
        %v4137 = vld [vmem:[%s4114 + $0xb0] sm:$0xff]
        %v4138 = vld [vmem:[%s4114 + $0xb8] sm:$0xff]
        %v4139 = vld [vmem:[%s4114 + $0xc0] sm:$0xff]
        %v4140 = vld [vmem:[%s4114 + $0xc8] sm:$0xff]
        %v4141 = vld [vmem:[%s4114 + $0xd0] sm:$0xff]
        %v4142 = vld [vmem:[%s4114 + $0xd8] sm:$0xff]
        %v4143 = vld [vmem:[%s4114 + $0xe0] sm:$0xff]
        %v4144 = vld [vmem:[%s4114 + $0xe8] sm:$0xff]
        %v4145 = vld [vmem:[%s4114 + $0xf0] sm:$0xff]
        %v4146 = vld [vmem:[%s4114 + $0xf8] sm:$0xff]
        %v4148 = vunpack.c.l.b16 %v4113
        %v4149 = vunpack.c.h.b16 %v4113
        %v4150 = vpack.c.b16 %v3671, %v4148
        %v4151 = vpack.c.b16 %v3672, %v4149
        %v4152 = vrot.slane %v4150, 1
        %v4153 = vrot.slane %v3677, 1
        %v4154 = vsel %vm1162, %v4152, %v4153
        %v4155 = vrot.slane %v4151, 1
        %v4156 = vrot.slane %v3678, 1
        %v4157 = vsel %vm1162, %v4155, %v4156
        %v4192 = vunpack.c.l.b16 %v4115
        %v4193 = vunpack.c.h.b16 %v4115
        %v4194 = vunpack.c.l.b16 %v4116
        %v4195 = vunpack.c.h.b16 %v4116
        %v4196 = vunpack.c.l.b16 %v4117
        %v4197 = vunpack.c.h.b16 %v4117
        %v4198 = vunpack.c.l.b16 %v4118
        %v4199 = vunpack.c.h.b16 %v4118
        %v4200 = vunpack.c.l.b16 %v4119
        %v4201 = vunpack.c.h.b16 %v4119
        %v4202 = vunpack.c.l.b16 %v4120
        %v4203 = vunpack.c.h.b16 %v4120
        %v4204 = vunpack.c.l.b16 %v4121
        %v4205 = vunpack.c.h.b16 %v4121
        %v4206 = vunpack.c.l.b16 %v4122
        %v4207 = vunpack.c.h.b16 %v4122
        %v4208 = vunpack.c.l.b16 %v4123
        %v4209 = vunpack.c.h.b16 %v4123
        %v4210 = vunpack.c.l.b16 %v4124
        %v4211 = vunpack.c.h.b16 %v4124
        %v4212 = vunpack.c.l.b16 %v4125
        %v4213 = vunpack.c.h.b16 %v4125
        %v4214 = vunpack.c.l.b16 %v4126
        %v4215 = vunpack.c.h.b16 %v4126
        %v4216 = vunpack.c.l.b16 %v4127
        %v4217 = vunpack.c.h.b16 %v4127
        %v4218 = vunpack.c.l.b16 %v4128
        %v4219 = vunpack.c.h.b16 %v4128
        %v4220 = vunpack.c.l.b16 %v4129
        %v4221 = vunpack.c.h.b16 %v4129
        %v4222 = vunpack.c.l.b16 %v4130
        %v4223 = vunpack.c.h.b16 %v4130
        %v4224 = vunpack.c.l.b16 %v4131
        %v4225 = vunpack.c.h.b16 %v4131
        %v4226 = vunpack.c.l.b16 %v4132
        %v4227 = vunpack.c.h.b16 %v4132
        %v4228 = vunpack.c.l.b16 %v4133
        %v4229 = vunpack.c.h.b16 %v4133
        %v4230 = vunpack.c.l.b16 %v4134
        %v4231 = vunpack.c.h.b16 %v4134
        %v4232 = vunpack.c.l.b16 %v4135
        %v4233 = vunpack.c.h.b16 %v4135
        %v4234 = vunpack.c.l.b16 %v4136
        %v4235 = vunpack.c.h.b16 %v4136
        %v4236 = vunpack.c.l.b16 %v4137
        %v4237 = vunpack.c.h.b16 %v4137
        %v4238 = vunpack.c.l.b16 %v4138
        %v4239 = vunpack.c.h.b16 %v4138
        %v4240 = vunpack.c.l.b16 %v4139
        %v4241 = vunpack.c.h.b16 %v4139
        %v4242 = vunpack.c.l.b16 %v4140
        %v4243 = vunpack.c.h.b16 %v4140
        %v4244 = vunpack.c.l.b16 %v4141
        %v4245 = vunpack.c.h.b16 %v4141
        %v4246 = vunpack.c.l.b16 %v4142
        %v4247 = vunpack.c.h.b16 %v4142
        %v4248 = vunpack.c.l.b16 %v4143
        %v4249 = vunpack.c.h.b16 %v4143
        %v4250 = vunpack.c.l.b16 %v4144
        %v4251 = vunpack.c.h.b16 %v4144
        %v4252 = vunpack.c.l.b16 %v4145
        %v4253 = vunpack.c.h.b16 %v4145
        %v4254 = vunpack.c.l.b16 %v4146
        %v4255 = vunpack.c.h.b16 %v4146
        %v4256 = vpack.c.b16 %v4194, %v4192
        %v4257 = vpack.c.b16 %v4195, %v4193
        %v4258 = vpack.c.b16 %v4198, %v4196
        %v4259 = vpack.c.b16 %v4199, %v4197
        %v4260 = vpack.c.b16 %v4202, %v4200
        %v4261 = vpack.c.b16 %v4203, %v4201
        %v4262 = vpack.c.b16 %v4206, %v4204
        %v4263 = vpack.c.b16 %v4207, %v4205
        %v4264 = vpack.c.b16 %v4210, %v4208
        %v4265 = vpack.c.b16 %v4211, %v4209
        %v4266 = vpack.c.b16 %v4214, %v4212
        %v4267 = vpack.c.b16 %v4215, %v4213
        %v4268 = vpack.c.b16 %v4218, %v4216
        %v4269 = vpack.c.b16 %v4219, %v4217
        %v4270 = vpack.c.b16 %v4222, %v4220
        %v4271 = vpack.c.b16 %v4223, %v4221
        %v4272 = vpack.c.b16 %v4226, %v4224
        %v4273 = vpack.c.b16 %v4227, %v4225
        %v4274 = vpack.c.b16 %v4230, %v4228
        %v4275 = vpack.c.b16 %v4231, %v4229
        %v4276 = vpack.c.b16 %v4234, %v4232
        %v4277 = vpack.c.b16 %v4235, %v4233
        %v4278 = vpack.c.b16 %v4238, %v4236
        %v4279 = vpack.c.b16 %v4239, %v4237
        %v4280 = vpack.c.b16 %v4242, %v4240
        %v4281 = vpack.c.b16 %v4243, %v4241
        %v4282 = vpack.c.b16 %v4246, %v4244
        %v4283 = vpack.c.b16 %v4247, %v4245
        %v4284 = vpack.c.b16 %v4250, %v4248
        %v4285 = vpack.c.b16 %v4251, %v4249
        %v4286 = vpack.c.b16 %v4254, %v4252
        %v4287 = vpack.c.b16 %v4255, %v4253
        %4320 = vmatprep.subr.bf16.mxu0 %v4271
        %4321 = vmatpush1.bf16.msra.mxu0 %v4270
        %4322 = vmatprep.subr.bf16.mxu0 %v4269
        %4323 = vmatpush1.bf16.msra.mxu0 %v4268
        %4324 = vmatprep.subr.bf16.mxu0 %v4267
        %4325 = vmatpush1.bf16.msra.mxu0 %v4266
        %4326 = vmatprep.subr.bf16.mxu0 %v4265
        %4327 = vmatpush1.bf16.msra.mxu0 %v4264
        %4328 = vmatprep.subr.bf16.mxu0 %v4263
        %4329 = vmatpush1.bf16.msra.mxu0 %v4262
        %4330 = vmatprep.subr.bf16.mxu0 %v4261
        %4331 = vmatpush1.bf16.msra.mxu0 %v4260
        %4332 = vmatprep.subr.bf16.mxu0 %v4259
        %4333 = vmatpush1.bf16.msra.mxu0 %v4258
        %4334 = vmatprep.subr.bf16.mxu0 %v4257
        %4335 = vmatpush1.bf16.msra.mxu0 %v4256
        %4336 = vmatprep.subr.bf16.mxu0 %v4287
        %4337 = vmatpush2.bf16.msra.mxu0 %v4286
        %4338 = vmatprep.subr.bf16.mxu0 %v4285
        %4339 = vmatpush2.bf16.msra.mxu0 %v4284
        %4340 = vmatprep.subr.bf16.mxu0 %v4283
        %4341 = vmatpush2.bf16.msra.mxu0 %v4282
        %4342 = vmatprep.subr.bf16.mxu0 %v4281
        %4343 = vmatpush2.bf16.msra.mxu0 %v4280
        %4344 = vmatprep.subr.bf16.mxu0 %v4279
        %4345 = vmatpush2.bf16.msra.mxu0 %v4278
        %4346 = vmatprep.subr.bf16.mxu0 %v4277
        %4347 = vmatpush2.bf16.msra.mxu0 %v4276
        %4348 = vmatprep.subr.bf16.mxu0 %v4275
        %4349 = vmatpush2.bf16.msra.mxu0 %v4274
        %4350 = vmatprep.subr.bf16.mxu0 %v4273
        %4351 = vmatpush2.bf16.msra.mxu0 %v4272
        %4352 = vmatprep.mubr.bf16.mxu0 %v4157
        %4353 = vmatmul.mubr.bf16.gmra.mxu0 %v4154
        %v4354 = vpop.f32.mrf.mxu0
        %v4355 = vadd.f32 0.0, %v4354
        %v4356 = vpop.f32.mrf.mxu0
        %v4357 = vadd.f32 0.0, %v4356
        %v4358 = vpop.f32.mrf.mxu0
        %v4359 = vadd.f32 0.0, %v4358
        %v4360 = vpop.f32.mrf.mxu0
        %v4361 = vadd.f32 0.0, %v4360
        %4362 = vdwg.mxu0
        %v4363 = vadd.f32 %v4105, %v4355
        %v4364 = vadd.f32 %v4107, %v4357
        %v4365 = vadd.f32 %v4109, %v4359
        %v4366 = vadd.f32 %v4111, %v4361
        %v4367 = vld [vmem:[%s12] sm:$0x3]
        %v4369 = vlaneseq
        %v4370 = vshrl.u32 %v4369, 7
        %v4371 = vsub.s32 0, %v4370
        %v4372 = vrot.slane %v4367, %v4371
        %v4373 = vlaneseq
        %v4374 = vshrl.u32 %v4373, 7
        %v4375 = vsub.s32 1, %v4374
        %v4376 = vrot.slane %v4367, %v4375
        %v4379 = vadd.f32 %v4363, %v4372
        %v4380 = vadd.f32 %v4364, %v4376
        %v4381 = vadd.f32 %v4365, %v4372
        %v4382 = vadd.f32 %v4366, %v4376
        %v4383 = vadd.f32 %v4379, %v3554
        %v4384 = vadd.f32 %v4380, %v3556
        %v4385 = vadd.f32 %v4381, %v3558
        %v4386 = vadd.f32 %v4382, %v3560
        %v4387 = vmax.f32 %v4383, 0.0
        %v4388 = vmax.f32 %v4384, 0.0
        %v4389 = vmax.f32 %v4385, 0.0
        %v4390 = vmax.f32 %v4386, 0.0
        %v4391 = vpack.c.bf16 %v4389, %v4387
        %v4392 = vpack.c.bf16 %v4390, %v4388
        %v4395 = vunpack.c.l.b16 %v4391
        %v4396 = vunpack.c.l.b16 %v4392
        %v4397 = vunpack.c.h.b16 %v4391
        %v4398 = vunpack.c.h.b16 %v4392
        %v4399 = vpack.c.b16 %v4396, %v4395
        %v4400 = vpack.c.b16 %v4398, %v4397
        %v4402 = vshrl.u32 %v4399, 16
        %v4404 = vrot.slane %v4402, 7
        %v4405 = vshll.u32 %v4399, 16
        %v4407 = vor.u32 %v4404, %v4405
        %v4408 = vrot.slane %v4404, 4
        %v4410 = vshrl.u32 %v4400, 16
        %v4412 = vrot.slane %v4410, 7
        %v4413 = vshll.u32 %v4400, 16
        %v4415 = vor.u32 %v4412, %v4413
        %v4416 = vsel %vm939, %v4408, %v4415
        %v4417 = vrot.slane %v4412, 4
        %v4421 = vsel %vm1789, %v4407, %v3598
        %4422 = vst [vmem:[#allocation2] sm:$0xff] %v4421
        %4423 = vst [vmem:[#allocation2 + $0x8] sm:$0xff] %v4416
        %v4424 = vld [vmem:[#allocation2 + $0x10] sm:$0x11]
        %v4425 = vsel %vm918, %v4417, %v4424
        %4426 = vst [vmem:[#allocation2 + $0x10] sm:$0x11] %v4425
        %v4427 = vld [vmem:[#allocation2] sm:$0xff]
        %v4428 = vld [vmem:[#allocation2 + $0x8] sm:$0xff]
        %v4429 = vld [vmem:[#allocation13] sm:$0xff]
        %v4430 = vld [vmem:[#allocation13 + $0x8] sm:$0xff]
        %v4431 = vld [vmem:[#allocation13 + $0x10] sm:$0xff]
        %v4432 = vld [vmem:[#allocation13 + $0x18] sm:$0xff]
        %v4433 = vld [vmem:[#allocation13 + $0x20] sm:$0xff]
        %v4434 = vld [vmem:[#allocation13 + $0x28] sm:$0xff]
        %v4435 = vld [vmem:[#allocation13 + $0x30] sm:$0xff]
        %v4436 = vld [vmem:[#allocation13 + $0x38] sm:$0xff]
        %v4437 = vld [vmem:[#allocation13 + $0x40] sm:$0xff]
        %v4438 = vld [vmem:[#allocation13 + $0x48] sm:$0xff]
        %v4439 = vld [vmem:[#allocation13 + $0x50] sm:$0xff]
        %v4440 = vld [vmem:[#allocation13 + $0x58] sm:$0xff]
        %v4441 = vld [vmem:[#allocation13 + $0x60] sm:$0xff]
        %v4442 = vld [vmem:[#allocation13 + $0x68] sm:$0xff]
        %v4443 = vld [vmem:[#allocation13 + $0x70] sm:$0xff]
        %v4444 = vld [vmem:[#allocation13 + $0x78] sm:$0xff]
        %v4445 = vld [vmem:[#allocation13 + $0x80] sm:$0xff]
        %v4446 = vld [vmem:[#allocation13 + $0x88] sm:$0xff]
        %v4447 = vld [vmem:[#allocation13 + $0x90] sm:$0xff]
        %v4448 = vld [vmem:[#allocation13 + $0x98] sm:$0xff]
        %v4449 = vld [vmem:[#allocation13 + $0xa0] sm:$0xff]
        %v4450 = vld [vmem:[#allocation13 + $0xa8] sm:$0xff]
        %v4451 = vld [vmem:[#allocation13 + $0xb0] sm:$0xff]
        %v4452 = vld [vmem:[#allocation13 + $0xb8] sm:$0xff]
        %v4453 = vld [vmem:[#allocation13 + $0xc0] sm:$0xff]
        %v4454 = vld [vmem:[#allocation13 + $0xc8] sm:$0xff]
        %v4455 = vld [vmem:[#allocation13 + $0xd0] sm:$0xff]
        %v4456 = vld [vmem:[#allocation13 + $0xd8] sm:$0xff]
        %v4457 = vld [vmem:[#allocation13 + $0xe0] sm:$0xff]
        %v4458 = vld [vmem:[#allocation13 + $0xe8] sm:$0xff]
        %v4459 = vld [vmem:[#allocation13 + $0xf0] sm:$0xff]
        %v4460 = vld [vmem:[#allocation13 + $0xf8] sm:$0xff]
        %v4461 = vld [vmem:[#allocation2 + $0x10] sm:$0x11]
        %s4462 = scalar_lea.vmem [#allocation13], 256
        %v4463 = vld [vmem:[%s4462] sm:$0xff]
        %v4464 = vld [vmem:[%s4462 + $0x8] sm:$0xff]
        %v4465 = vld [vmem:[%s4462 + $0x10] sm:$0xff]
        %v4466 = vld [vmem:[%s4462 + $0x18] sm:$0xff]
        %v4467 = vld [vmem:[%s4462 + $0x20] sm:$0xff]
        %v4468 = vld [vmem:[%s4462 + $0x28] sm:$0xff]
        %v4469 = vld [vmem:[%s4462 + $0x30] sm:$0xff]
        %v4470 = vld [vmem:[%s4462 + $0x38] sm:$0xff]
        %v4471 = vld [vmem:[%s4462 + $0x40] sm:$0xff]
        %v4472 = vld [vmem:[%s4462 + $0x48] sm:$0xff]
        %v4473 = vld [vmem:[%s4462 + $0x50] sm:$0xff]
        %v4474 = vld [vmem:[%s4462 + $0x58] sm:$0xff]
        %v4475 = vld [vmem:[%s4462 + $0x60] sm:$0xff]
        %v4476 = vld [vmem:[%s4462 + $0x68] sm:$0xff]
        %v4477 = vld [vmem:[%s4462 + $0x70] sm:$0xff]
        %v4478 = vld [vmem:[%s4462 + $0x78] sm:$0xff]
        %v4479 = vld [vmem:[%s4462 + $0x80] sm:$0xff]
        %v4480 = vld [vmem:[%s4462 + $0x88] sm:$0xff]
        %v4481 = vld [vmem:[%s4462 + $0x90] sm:$0xff]
        %v4482 = vld [vmem:[%s4462 + $0x98] sm:$0xff]
        %v4483 = vld [vmem:[%s4462 + $0xa0] sm:$0xff]
        %v4484 = vld [vmem:[%s4462 + $0xa8] sm:$0xff]
        %v4485 = vld [vmem:[%s4462 + $0xb0] sm:$0xff]
        %v4486 = vld [vmem:[%s4462 + $0xb8] sm:$0xff]
        %v4487 = vld [vmem:[%s4462 + $0xc0] sm:$0xff]
        %v4488 = vld [vmem:[%s4462 + $0xc8] sm:$0xff]
        %v4489 = vld [vmem:[%s4462 + $0xd0] sm:$0xff]
        %v4490 = vld [vmem:[%s4462 + $0xd8] sm:$0xff]
        %v4491 = vld [vmem:[%s4462 + $0xe0] sm:$0xff]
        %v4492 = vld [vmem:[%s4462 + $0xe8] sm:$0xff]
        %v4493 = vld [vmem:[%s4462 + $0xf0] sm:$0xff]
        %v4494 = vld [vmem:[%s4462 + $0xf8] sm:$0xff]
        %v4498 = vunpack.c.l.b16 %v4427
        %v4499 = vunpack.c.h.b16 %v4427
        %v4500 = vunpack.c.l.b16 %v4428
        %v4501 = vunpack.c.h.b16 %v4428
        %v4502 = vunpack.c.l.b16 %v4461
        %v4503 = vunpack.c.h.b16 %v4461
        %v4504 = vpack.c.b16 %v4500, %v4498
        %v4505 = vpack.c.b16 %v4501, %v4499
        %v4506 = vpack.c.b16 %v4502, %v4502
        %v4507 = vpack.c.b16 %v4503, %v4503
        %v4509 = vshrl.u32 %v4504, 16
        %v4511 = vshll.u32 %v4504, 16
        %v4513 = vrot.slane %v4511, 1
        %v4514 = vor.u32 %v4509, %v4513
        %v4516 = vshll.u32 %v4506, 16
        %v4518 = vrot.slane %v4516, 1
        %v4519 = vsel %vm1000, %v4514, %v4518
        %v4521 = vshrl.u32 %v4505, 16
        %v4523 = vshll.u32 %v4505, 16
        %v4525 = vrot.slane %v4523, 1
        %v4526 = vor.u32 %v4521, %v4525
        %v4528 = vshll.u32 %v4507, 16
        %v4530 = vrot.slane %v4528, 1
        %v4531 = vsel %vm1000, %v4526, %v4530
        %v4566 = vunpack.c.l.b16 %v4463
        %v4567 = vunpack.c.h.b16 %v4463
        %v4568 = vunpack.c.l.b16 %v4464
        %v4569 = vunpack.c.h.b16 %v4464
        %v4570 = vunpack.c.l.b16 %v4465
        %v4571 = vunpack.c.h.b16 %v4465
        %v4572 = vunpack.c.l.b16 %v4466
        %v4573 = vunpack.c.h.b16 %v4466
        %v4574 = vunpack.c.l.b16 %v4467
        %v4575 = vunpack.c.h.b16 %v4467
        %v4576 = vunpack.c.l.b16 %v4468
        %v4577 = vunpack.c.h.b16 %v4468
        %v4578 = vunpack.c.l.b16 %v4469
        %v4579 = vunpack.c.h.b16 %v4469
        %v4580 = vunpack.c.l.b16 %v4470
        %v4581 = vunpack.c.h.b16 %v4470
        %v4582 = vunpack.c.l.b16 %v4471
        %v4583 = vunpack.c.h.b16 %v4471
        %v4584 = vunpack.c.l.b16 %v4472
        %v4585 = vunpack.c.h.b16 %v4472
        %v4586 = vunpack.c.l.b16 %v4473
        %v4587 = vunpack.c.h.b16 %v4473
        %v4588 = vunpack.c.l.b16 %v4474
        %v4589 = vunpack.c.h.b16 %v4474
        %v4590 = vunpack.c.l.b16 %v4475
        %v4591 = vunpack.c.h.b16 %v4475
        %v4592 = vunpack.c.l.b16 %v4476
        %v4593 = vunpack.c.h.b16 %v4476
        %v4594 = vunpack.c.l.b16 %v4477
        %v4595 = vunpack.c.h.b16 %v4477
        %v4596 = vunpack.c.l.b16 %v4478
        %v4597 = vunpack.c.h.b16 %v4478
        %v4598 = vunpack.c.l.b16 %v4479
        %v4599 = vunpack.c.h.b16 %v4479
        %v4600 = vunpack.c.l.b16 %v4480
        %v4601 = vunpack.c.h.b16 %v4480
        %v4602 = vunpack.c.l.b16 %v4481
        %v4603 = vunpack.c.h.b16 %v4481
        %v4604 = vunpack.c.l.b16 %v4482
        %v4605 = vunpack.c.h.b16 %v4482
        %v4606 = vunpack.c.l.b16 %v4483
        %v4607 = vunpack.c.h.b16 %v4483
        %v4608 = vunpack.c.l.b16 %v4484
        %v4609 = vunpack.c.h.b16 %v4484
        %v4610 = vunpack.c.l.b16 %v4485
        %v4611 = vunpack.c.h.b16 %v4485
        %v4612 = vunpack.c.l.b16 %v4486
        %v4613 = vunpack.c.h.b16 %v4486
        %v4614 = vunpack.c.l.b16 %v4487
        %v4615 = vunpack.c.h.b16 %v4487
        %v4616 = vunpack.c.l.b16 %v4488
        %v4617 = vunpack.c.h.b16 %v4488
        %v4618 = vunpack.c.l.b16 %v4489
        %v4619 = vunpack.c.h.b16 %v4489
        %v4620 = vunpack.c.l.b16 %v4490
        %v4621 = vunpack.c.h.b16 %v4490
        %v4622 = vunpack.c.l.b16 %v4491
        %v4623 = vunpack.c.h.b16 %v4491
        %v4624 = vunpack.c.l.b16 %v4492
        %v4625 = vunpack.c.h.b16 %v4492
        %v4626 = vunpack.c.l.b16 %v4493
        %v4627 = vunpack.c.h.b16 %v4493
        %v4628 = vunpack.c.l.b16 %v4494
        %v4629 = vunpack.c.h.b16 %v4494
        %v4630 = vpack.c.b16 %v4568, %v4566
        %v4631 = vpack.c.b16 %v4569, %v4567
        %v4632 = vpack.c.b16 %v4572, %v4570
        %v4633 = vpack.c.b16 %v4573, %v4571
        %v4634 = vpack.c.b16 %v4576, %v4574
        %v4635 = vpack.c.b16 %v4577, %v4575
        %v4636 = vpack.c.b16 %v4580, %v4578
        %v4637 = vpack.c.b16 %v4581, %v4579
        %v4638 = vpack.c.b16 %v4584, %v4582
        %v4639 = vpack.c.b16 %v4585, %v4583
        %v4640 = vpack.c.b16 %v4588, %v4586
        %v4641 = vpack.c.b16 %v4589, %v4587
        %v4642 = vpack.c.b16 %v4592, %v4590
        %v4643 = vpack.c.b16 %v4593, %v4591
        %v4644 = vpack.c.b16 %v4596, %v4594
        %v4645 = vpack.c.b16 %v4597, %v4595
        %v4646 = vpack.c.b16 %v4600, %v4598
        %v4647 = vpack.c.b16 %v4601, %v4599
        %v4648 = vpack.c.b16 %v4604, %v4602
        %v4649 = vpack.c.b16 %v4605, %v4603
        %v4650 = vpack.c.b16 %v4608, %v4606
        %v4651 = vpack.c.b16 %v4609, %v4607
        %v4652 = vpack.c.b16 %v4612, %v4610
        %v4653 = vpack.c.b16 %v4613, %v4611
        %v4654 = vpack.c.b16 %v4616, %v4614
        %v4655 = vpack.c.b16 %v4617, %v4615
        %v4656 = vpack.c.b16 %v4620, %v4618
        %v4657 = vpack.c.b16 %v4621, %v4619
        %v4658 = vpack.c.b16 %v4624, %v4622
        %v4659 = vpack.c.b16 %v4625, %v4623
        %v4660 = vpack.c.b16 %v4628, %v4626
        %v4661 = vpack.c.b16 %v4629, %v4627
        %4694 = vmatprep.subr.bf16.mxu0 %v4645
        %4695 = vmatpush1.bf16.msra.mxu0 %v4644
        %4696 = vmatprep.subr.bf16.mxu0 %v4643
        %4697 = vmatpush1.bf16.msra.mxu0 %v4642
        %4698 = vmatprep.subr.bf16.mxu0 %v4641
        %4699 = vmatpush1.bf16.msra.mxu0 %v4640
        %4700 = vmatprep.subr.bf16.mxu0 %v4639
        %4701 = vmatpush1.bf16.msra.mxu0 %v4638
        %4702 = vmatprep.subr.bf16.mxu0 %v4637
        %4703 = vmatpush1.bf16.msra.mxu0 %v4636
        %4704 = vmatprep.subr.bf16.mxu0 %v4635
        %4705 = vmatpush1.bf16.msra.mxu0 %v4634
        %4706 = vmatprep.subr.bf16.mxu0 %v4633
        %4707 = vmatpush1.bf16.msra.mxu0 %v4632
        %4708 = vmatprep.subr.bf16.mxu0 %v4631
        %4709 = vmatpush1.bf16.msra.mxu0 %v4630
        %4710 = vmatprep.subr.bf16.mxu0 %v4661
        %4711 = vmatpush2.bf16.msra.mxu0 %v4660
        %4712 = vmatprep.subr.bf16.mxu0 %v4659
        %4713 = vmatpush2.bf16.msra.mxu0 %v4658
        %4714 = vmatprep.subr.bf16.mxu0 %v4657
        %4715 = vmatpush2.bf16.msra.mxu0 %v4656
        %4716 = vmatprep.subr.bf16.mxu0 %v4655
        %4717 = vmatpush2.bf16.msra.mxu0 %v4654
        %4718 = vmatprep.subr.bf16.mxu0 %v4653
        %4719 = vmatpush2.bf16.msra.mxu0 %v4652
        %4720 = vmatprep.subr.bf16.mxu0 %v4651
        %4721 = vmatpush2.bf16.msra.mxu0 %v4650
        %4722 = vmatprep.subr.bf16.mxu0 %v4649
        %4723 = vmatpush2.bf16.msra.mxu0 %v4648
        %4724 = vmatprep.subr.bf16.mxu0 %v4647
        %4725 = vmatpush2.bf16.msra.mxu0 %v4646
        %4726 = vmatprep.mubr.bf16.mxu0 %v4531
        %4727 = vmatmul.mubr.bf16.gmra.mxu0 %v4519
        %v4728 = vpop.f32.mrf.mxu0
        %v4729 = vadd.f32 0.0, %v4728
        %v4730 = vpop.f32.mrf.mxu0
        %v4731 = vadd.f32 0.0, %v4730
        %v4732 = vpop.f32.mrf.mxu0
        %v4733 = vadd.f32 0.0, %v4732
        %v4734 = vpop.f32.mrf.mxu0
        %v4735 = vadd.f32 0.0, %v4734
        %4736 = vdwg.mxu0
        %v4771 = vunpack.c.l.b16 %v4429
        %v4772 = vunpack.c.h.b16 %v4429
        %v4773 = vunpack.c.l.b16 %v4430
        %v4774 = vunpack.c.h.b16 %v4430
        %v4775 = vunpack.c.l.b16 %v4431
        %v4776 = vunpack.c.h.b16 %v4431
        %v4777 = vunpack.c.l.b16 %v4432
        %v4778 = vunpack.c.h.b16 %v4432
        %v4779 = vunpack.c.l.b16 %v4433
        %v4780 = vunpack.c.h.b16 %v4433
        %v4781 = vunpack.c.l.b16 %v4434
        %v4782 = vunpack.c.h.b16 %v4434
        %v4783 = vunpack.c.l.b16 %v4435
        %v4784 = vunpack.c.h.b16 %v4435
        %v4785 = vunpack.c.l.b16 %v4436
        %v4786 = vunpack.c.h.b16 %v4436
        %v4787 = vunpack.c.l.b16 %v4437
        %v4788 = vunpack.c.h.b16 %v4437
        %v4789 = vunpack.c.l.b16 %v4438
        %v4790 = vunpack.c.h.b16 %v4438
        %v4791 = vunpack.c.l.b16 %v4439
        %v4792 = vunpack.c.h.b16 %v4439
        %v4793 = vunpack.c.l.b16 %v4440
        %v4794 = vunpack.c.h.b16 %v4440
        %v4795 = vunpack.c.l.b16 %v4441
        %v4796 = vunpack.c.h.b16 %v4441
        %v4797 = vunpack.c.l.b16 %v4442
        %v4798 = vunpack.c.h.b16 %v4442
        %v4799 = vunpack.c.l.b16 %v4443
        %v4800 = vunpack.c.h.b16 %v4443
        %v4801 = vunpack.c.l.b16 %v4444
        %v4802 = vunpack.c.h.b16 %v4444
        %v4803 = vunpack.c.l.b16 %v4445
        %v4804 = vunpack.c.h.b16 %v4445
        %v4805 = vunpack.c.l.b16 %v4446
        %v4806 = vunpack.c.h.b16 %v4446
        %v4807 = vunpack.c.l.b16 %v4447
        %v4808 = vunpack.c.h.b16 %v4447
        %v4809 = vunpack.c.l.b16 %v4448
        %v4810 = vunpack.c.h.b16 %v4448
        %v4811 = vunpack.c.l.b16 %v4449
        %v4812 = vunpack.c.h.b16 %v4449
        %v4813 = vunpack.c.l.b16 %v4450
        %v4814 = vunpack.c.h.b16 %v4450
        %v4815 = vunpack.c.l.b16 %v4451
        %v4816 = vunpack.c.h.b16 %v4451
        %v4817 = vunpack.c.l.b16 %v4452
        %v4818 = vunpack.c.h.b16 %v4452
        %v4819 = vunpack.c.l.b16 %v4453
        %v4820 = vunpack.c.h.b16 %v4453
        %v4821 = vunpack.c.l.b16 %v4454
        %v4822 = vunpack.c.h.b16 %v4454
        %v4823 = vunpack.c.l.b16 %v4455
        %v4824 = vunpack.c.h.b16 %v4455
        %v4825 = vunpack.c.l.b16 %v4456
        %v4826 = vunpack.c.h.b16 %v4456
        %v4827 = vunpack.c.l.b16 %v4457
        %v4828 = vunpack.c.h.b16 %v4457
        %v4829 = vunpack.c.l.b16 %v4458
        %v4830 = vunpack.c.h.b16 %v4458
        %v4831 = vunpack.c.l.b16 %v4459
        %v4832 = vunpack.c.h.b16 %v4459
        %v4833 = vunpack.c.l.b16 %v4460
        %v4834 = vunpack.c.h.b16 %v4460
        %v4835 = vpack.c.b16 %v4773, %v4771
        %v4836 = vpack.c.b16 %v4774, %v4772
        %v4837 = vpack.c.b16 %v4777, %v4775
        %v4838 = vpack.c.b16 %v4778, %v4776
        %v4839 = vpack.c.b16 %v4781, %v4779
        %v4840 = vpack.c.b16 %v4782, %v4780
        %v4841 = vpack.c.b16 %v4785, %v4783
        %v4842 = vpack.c.b16 %v4786, %v4784
        %v4843 = vpack.c.b16 %v4789, %v4787
        %v4844 = vpack.c.b16 %v4790, %v4788
        %v4845 = vpack.c.b16 %v4793, %v4791
        %v4846 = vpack.c.b16 %v4794, %v4792
        %v4847 = vpack.c.b16 %v4797, %v4795
        %v4848 = vpack.c.b16 %v4798, %v4796
        %v4849 = vpack.c.b16 %v4801, %v4799
        %v4850 = vpack.c.b16 %v4802, %v4800
        %v4851 = vpack.c.b16 %v4805, %v4803
        %v4852 = vpack.c.b16 %v4806, %v4804
        %v4853 = vpack.c.b16 %v4809, %v4807
        %v4854 = vpack.c.b16 %v4810, %v4808
        %v4855 = vpack.c.b16 %v4813, %v4811
        %v4856 = vpack.c.b16 %v4814, %v4812
        %v4857 = vpack.c.b16 %v4817, %v4815
        %v4858 = vpack.c.b16 %v4818, %v4816
        %v4859 = vpack.c.b16 %v4821, %v4819
        %v4860 = vpack.c.b16 %v4822, %v4820
        %v4861 = vpack.c.b16 %v4825, %v4823
        %v4862 = vpack.c.b16 %v4826, %v4824
        %v4863 = vpack.c.b16 %v4829, %v4827
        %v4864 = vpack.c.b16 %v4830, %v4828
        %v4865 = vpack.c.b16 %v4833, %v4831
        %v4866 = vpack.c.b16 %v4834, %v4832
        %4899 = vmatprep.subr.bf16.mxu0 %v4850
        %4900 = vmatpush1.bf16.msra.mxu0 %v4849
        %4901 = vmatprep.subr.bf16.mxu0 %v4848
        %4902 = vmatpush1.bf16.msra.mxu0 %v4847
        %4903 = vmatprep.subr.bf16.mxu0 %v4846
        %4904 = vmatpush1.bf16.msra.mxu0 %v4845
        %4905 = vmatprep.subr.bf16.mxu0 %v4844
        %4906 = vmatpush1.bf16.msra.mxu0 %v4843
        %4907 = vmatprep.subr.bf16.mxu0 %v4842
        %4908 = vmatpush1.bf16.msra.mxu0 %v4841
        %4909 = vmatprep.subr.bf16.mxu0 %v4840
        %4910 = vmatpush1.bf16.msra.mxu0 %v4839
        %4911 = vmatprep.subr.bf16.mxu0 %v4838
        %4912 = vmatpush1.bf16.msra.mxu0 %v4837
        %4913 = vmatprep.subr.bf16.mxu0 %v4836
        %4914 = vmatpush1.bf16.msra.mxu0 %v4835
        %4915 = vmatprep.subr.bf16.mxu0 %v4866
        %4916 = vmatpush2.bf16.msra.mxu0 %v4865
        %4917 = vmatprep.subr.bf16.mxu0 %v4864
        %4918 = vmatpush2.bf16.msra.mxu0 %v4863
        %4919 = vmatprep.subr.bf16.mxu0 %v4862
        %4920 = vmatpush2.bf16.msra.mxu0 %v4861
        %4921 = vmatprep.subr.bf16.mxu0 %v4860
        %4922 = vmatpush2.bf16.msra.mxu0 %v4859
        %4923 = vmatprep.subr.bf16.mxu0 %v4858
        %4924 = vmatpush2.bf16.msra.mxu0 %v4857
        %4925 = vmatprep.subr.bf16.mxu0 %v4856
        %4926 = vmatpush2.bf16.msra.mxu0 %v4855
        %4927 = vmatprep.subr.bf16.mxu0 %v4854
        %4928 = vmatpush2.bf16.msra.mxu0 %v4853
        %4929 = vmatprep.subr.bf16.mxu0 %v4852
        %4930 = vmatpush2.bf16.msra.mxu0 %v4851
        %4931 = vmatprep.mubr.bf16.mxu0 %v4505
        %4932 = vmatmul.mubr.bf16.gmra.mxu0 %v4504
        %v4933 = vpop.f32.mrf.mxu0
        %v4934 = vadd.f32 %v4729, %v4933
        %v4935 = vpop.f32.mrf.mxu0
        %v4936 = vadd.f32 %v4731, %v4935
        %v4937 = vpop.f32.mrf.mxu0
        %v4938 = vadd.f32 %v4733, %v4937
        %v4939 = vpop.f32.mrf.mxu0
        %v4940 = vadd.f32 %v4735, %v4939
        %4941 = vdwg.mxu0
        %v4942 = vld [vmem:[#allocation2] sm:$0xee]
        %s4943 = scalar_lea.vmem [#allocation13], 512
        %v4944 = vld [vmem:[%s4943] sm:$0xff]
        %v4945 = vld [vmem:[%s4943 + $0x8] sm:$0xff]
        %v4946 = vld [vmem:[%s4943 + $0x10] sm:$0xff]
        %v4947 = vld [vmem:[%s4943 + $0x18] sm:$0xff]
        %v4948 = vld [vmem:[%s4943 + $0x20] sm:$0xff]
        %v4949 = vld [vmem:[%s4943 + $0x28] sm:$0xff]
        %v4950 = vld [vmem:[%s4943 + $0x30] sm:$0xff]
        %v4951 = vld [vmem:[%s4943 + $0x38] sm:$0xff]
        %v4952 = vld [vmem:[%s4943 + $0x40] sm:$0xff]
        %v4953 = vld [vmem:[%s4943 + $0x48] sm:$0xff]
        %v4954 = vld [vmem:[%s4943 + $0x50] sm:$0xff]
        %v4955 = vld [vmem:[%s4943 + $0x58] sm:$0xff]
        %v4956 = vld [vmem:[%s4943 + $0x60] sm:$0xff]
        %v4957 = vld [vmem:[%s4943 + $0x68] sm:$0xff]
        %v4958 = vld [vmem:[%s4943 + $0x70] sm:$0xff]
        %v4959 = vld [vmem:[%s4943 + $0x78] sm:$0xff]
        %v4960 = vld [vmem:[%s4943 + $0x80] sm:$0xff]
        %v4961 = vld [vmem:[%s4943 + $0x88] sm:$0xff]
        %v4962 = vld [vmem:[%s4943 + $0x90] sm:$0xff]
        %v4963 = vld [vmem:[%s4943 + $0x98] sm:$0xff]
        %v4964 = vld [vmem:[%s4943 + $0xa0] sm:$0xff]
        %v4965 = vld [vmem:[%s4943 + $0xa8] sm:$0xff]
        %v4966 = vld [vmem:[%s4943 + $0xb0] sm:$0xff]
        %v4967 = vld [vmem:[%s4943 + $0xb8] sm:$0xff]
        %v4968 = vld [vmem:[%s4943 + $0xc0] sm:$0xff]
        %v4969 = vld [vmem:[%s4943 + $0xc8] sm:$0xff]
        %v4970 = vld [vmem:[%s4943 + $0xd0] sm:$0xff]
        %v4971 = vld [vmem:[%s4943 + $0xd8] sm:$0xff]
        %v4972 = vld [vmem:[%s4943 + $0xe0] sm:$0xff]
        %v4973 = vld [vmem:[%s4943 + $0xe8] sm:$0xff]
        %v4974 = vld [vmem:[%s4943 + $0xf0] sm:$0xff]
        %v4975 = vld [vmem:[%s4943 + $0xf8] sm:$0xff]
        %v4977 = vunpack.c.l.b16 %v4942
        %v4978 = vunpack.c.h.b16 %v4942
        %v4979 = vpack.c.b16 %v4500, %v4977
        %v4980 = vpack.c.b16 %v4501, %v4978
        %v4981 = vrot.slane %v4979, 1
        %v4982 = vrot.slane %v4506, 1
        %v4983 = vsel %vm1162, %v4981, %v4982
        %v4984 = vrot.slane %v4980, 1
        %v4985 = vrot.slane %v4507, 1
        %v4986 = vsel %vm1162, %v4984, %v4985
        %v5021 = vunpack.c.l.b16 %v4944
        %v5022 = vunpack.c.h.b16 %v4944
        %v5023 = vunpack.c.l.b16 %v4945
        %v5024 = vunpack.c.h.b16 %v4945
        %v5025 = vunpack.c.l.b16 %v4946
        %v5026 = vunpack.c.h.b16 %v4946
        %v5027 = vunpack.c.l.b16 %v4947
        %v5028 = vunpack.c.h.b16 %v4947
        %v5029 = vunpack.c.l.b16 %v4948
        %v5030 = vunpack.c.h.b16 %v4948
        %v5031 = vunpack.c.l.b16 %v4949
        %v5032 = vunpack.c.h.b16 %v4949
        %v5033 = vunpack.c.l.b16 %v4950
        %v5034 = vunpack.c.h.b16 %v4950
        %v5035 = vunpack.c.l.b16 %v4951
        %v5036 = vunpack.c.h.b16 %v4951
        %v5037 = vunpack.c.l.b16 %v4952
        %v5038 = vunpack.c.h.b16 %v4952
        %v5039 = vunpack.c.l.b16 %v4953
        %v5040 = vunpack.c.h.b16 %v4953
        %v5041 = vunpack.c.l.b16 %v4954
        %v5042 = vunpack.c.h.b16 %v4954
        %v5043 = vunpack.c.l.b16 %v4955
        %v5044 = vunpack.c.h.b16 %v4955
        %v5045 = vunpack.c.l.b16 %v4956
        %v5046 = vunpack.c.h.b16 %v4956
        %v5047 = vunpack.c.l.b16 %v4957
        %v5048 = vunpack.c.h.b16 %v4957
        %v5049 = vunpack.c.l.b16 %v4958
        %v5050 = vunpack.c.h.b16 %v4958
        %v5051 = vunpack.c.l.b16 %v4959
        %v5052 = vunpack.c.h.b16 %v4959
        %v5053 = vunpack.c.l.b16 %v4960
        %v5054 = vunpack.c.h.b16 %v4960
        %v5055 = vunpack.c.l.b16 %v4961
        %v5056 = vunpack.c.h.b16 %v4961
        %v5057 = vunpack.c.l.b16 %v4962
        %v5058 = vunpack.c.h.b16 %v4962
        %v5059 = vunpack.c.l.b16 %v4963
        %v5060 = vunpack.c.h.b16 %v4963
        %v5061 = vunpack.c.l.b16 %v4964
        %v5062 = vunpack.c.h.b16 %v4964
        %v5063 = vunpack.c.l.b16 %v4965
        %v5064 = vunpack.c.h.b16 %v4965
        %v5065 = vunpack.c.l.b16 %v4966
        %v5066 = vunpack.c.h.b16 %v4966
        %v5067 = vunpack.c.l.b16 %v4967
        %v5068 = vunpack.c.h.b16 %v4967
        %v5069 = vunpack.c.l.b16 %v4968
        %v5070 = vunpack.c.h.b16 %v4968
        %v5071 = vunpack.c.l.b16 %v4969
        %v5072 = vunpack.c.h.b16 %v4969
        %v5073 = vunpack.c.l.b16 %v4970
        %v5074 = vunpack.c.h.b16 %v4970
        %v5075 = vunpack.c.l.b16 %v4971
        %v5076 = vunpack.c.h.b16 %v4971
        %v5077 = vunpack.c.l.b16 %v4972
        %v5078 = vunpack.c.h.b16 %v4972
        %v5079 = vunpack.c.l.b16 %v4973
        %v5080 = vunpack.c.h.b16 %v4973
        %v5081 = vunpack.c.l.b16 %v4974
        %v5082 = vunpack.c.h.b16 %v4974
        %v5083 = vunpack.c.l.b16 %v4975
        %v5084 = vunpack.c.h.b16 %v4975
        %v5085 = vpack.c.b16 %v5023, %v5021
        %v5086 = vpack.c.b16 %v5024, %v5022
        %v5087 = vpack.c.b16 %v5027, %v5025
        %v5088 = vpack.c.b16 %v5028, %v5026
        %v5089 = vpack.c.b16 %v5031, %v5029
        %v5090 = vpack.c.b16 %v5032, %v5030
        %v5091 = vpack.c.b16 %v5035, %v5033
        %v5092 = vpack.c.b16 %v5036, %v5034
        %v5093 = vpack.c.b16 %v5039, %v5037
        %v5094 = vpack.c.b16 %v5040, %v5038
        %v5095 = vpack.c.b16 %v5043, %v5041
        %v5096 = vpack.c.b16 %v5044, %v5042
        %v5097 = vpack.c.b16 %v5047, %v5045
        %v5098 = vpack.c.b16 %v5048, %v5046
        %v5099 = vpack.c.b16 %v5051, %v5049
        %v5100 = vpack.c.b16 %v5052, %v5050
        %v5101 = vpack.c.b16 %v5055, %v5053
        %v5102 = vpack.c.b16 %v5056, %v5054
        %v5103 = vpack.c.b16 %v5059, %v5057
        %v5104 = vpack.c.b16 %v5060, %v5058
        %v5105 = vpack.c.b16 %v5063, %v5061
        %v5106 = vpack.c.b16 %v5064, %v5062
        %v5107 = vpack.c.b16 %v5067, %v5065
        %v5108 = vpack.c.b16 %v5068, %v5066
        %v5109 = vpack.c.b16 %v5071, %v5069
        %v5110 = vpack.c.b16 %v5072, %v5070
        %v5111 = vpack.c.b16 %v5075, %v5073
        %v5112 = vpack.c.b16 %v5076, %v5074
        %v5113 = vpack.c.b16 %v5079, %v5077
        %v5114 = vpack.c.b16 %v5080, %v5078
        %v5115 = vpack.c.b16 %v5083, %v5081
        %v5116 = vpack.c.b16 %v5084, %v5082
        %5149 = vmatprep.subr.bf16.mxu0 %v5100
        %5150 = vmatpush1.bf16.msra.mxu0 %v5099
        %5151 = vmatprep.subr.bf16.mxu0 %v5098
        %5152 = vmatpush1.bf16.msra.mxu0 %v5097
        %5153 = vmatprep.subr.bf16.mxu0 %v5096
        %5154 = vmatpush1.bf16.msra.mxu0 %v5095
        %5155 = vmatprep.subr.bf16.mxu0 %v5094
        %5156 = vmatpush1.bf16.msra.mxu0 %v5093
        %5157 = vmatprep.subr.bf16.mxu0 %v5092
        %5158 = vmatpush1.bf16.msra.mxu0 %v5091
        %5159 = vmatprep.subr.bf16.mxu0 %v5090
        %5160 = vmatpush1.bf16.msra.mxu0 %v5089
        %5161 = vmatprep.subr.bf16.mxu0 %v5088
        %5162 = vmatpush1.bf16.msra.mxu0 %v5087
        %5163 = vmatprep.subr.bf16.mxu0 %v5086
        %5164 = vmatpush1.bf16.msra.mxu0 %v5085
        %5165 = vmatprep.subr.bf16.mxu0 %v5116
        %5166 = vmatpush2.bf16.msra.mxu0 %v5115
        %5167 = vmatprep.subr.bf16.mxu0 %v5114
        %5168 = vmatpush2.bf16.msra.mxu0 %v5113
        %5169 = vmatprep.subr.bf16.mxu0 %v5112
        %5170 = vmatpush2.bf16.msra.mxu0 %v5111
        %5171 = vmatprep.subr.bf16.mxu0 %v5110
        %5172 = vmatpush2.bf16.msra.mxu0 %v5109
        %5173 = vmatprep.subr.bf16.mxu0 %v5108
        %5174 = vmatpush2.bf16.msra.mxu0 %v5107
        %5175 = vmatprep.subr.bf16.mxu0 %v5106
        %5176 = vmatpush2.bf16.msra.mxu0 %v5105
        %5177 = vmatprep.subr.bf16.mxu0 %v5104
        %5178 = vmatpush2.bf16.msra.mxu0 %v5103
        %5179 = vmatprep.subr.bf16.mxu0 %v5102
        %5180 = vmatpush2.bf16.msra.mxu0 %v5101
        %5181 = vmatprep.mubr.bf16.mxu0 %v4986
        %5182 = vmatmul.mubr.bf16.gmra.mxu0 %v4983
        %v5183 = vpop.f32.mrf.mxu0
        %v5184 = vadd.f32 0.0, %v5183
        %v5185 = vpop.f32.mrf.mxu0
        %v5186 = vadd.f32 0.0, %v5185
        %v5187 = vpop.f32.mrf.mxu0
        %v5188 = vadd.f32 0.0, %v5187
        %v5189 = vpop.f32.mrf.mxu0
        %v5190 = vadd.f32 0.0, %v5189
        %5191 = vdwg.mxu0
        %v5192 = vadd.f32 %v4934, %v5184
        %v5193 = vadd.f32 %v4936, %v5186
        %v5194 = vadd.f32 %v4938, %v5188
        %v5195 = vadd.f32 %v4940, %v5190
        %v5196 = vld [vmem:[%s14] sm:$0x3]
        %v5198 = vlaneseq
        %v5199 = vshrl.u32 %v5198, 7
        %v5200 = vsub.s32 0, %v5199
        %v5201 = vrot.slane %v5196, %v5200
        %v5202 = vlaneseq
        %v5203 = vshrl.u32 %v5202, 7
        %v5204 = vsub.s32 1, %v5203
        %v5205 = vrot.slane %v5196, %v5204
        %v5208 = vadd.f32 %v5192, %v5201
        %v5209 = vadd.f32 %v5193, %v5205
        %v5210 = vadd.f32 %v5194, %v5201
        %v5211 = vadd.f32 %v5195, %v5205
        %v5212 = vmax.f32 %v5208, 0.0
        %v5213 = vmax.f32 %v5209, 0.0
        %v5214 = vmax.f32 %v5210, 0.0
        %v5215 = vmax.f32 %v5211, 0.0
        %v5216 = vpack.c.bf16 %v5214, %v5212
        %v5217 = vpack.c.bf16 %v5215, %v5213
        %v5220 = vunpack.c.l.b16 %v5216
        %v5221 = vunpack.c.l.b16 %v5217
        %v5222 = vunpack.c.h.b16 %v5216
        %v5223 = vunpack.c.h.b16 %v5217
        %v5224 = vpack.c.b16 %v5221, %v5220
        %v5225 = vpack.c.b16 %v5223, %v5222
        %v5227 = vshrl.u32 %v5224, 16
        %v5229 = vrot.slane %v5227, 7
        %v5230 = vshll.u32 %v5224, 16
        %v5232 = vor.u32 %v5229, %v5230
        %v5233 = vrot.slane %v5229, 4
        %v5235 = vshrl.u32 %v5225, 16
        %v5237 = vrot.slane %v5235, 7
        %v5238 = vshll.u32 %v5225, 16
        %v5240 = vor.u32 %v5237, %v5238
        %v5241 = vsel %vm939, %v5233, %v5240
        %v5242 = vrot.slane %v5237, 4
        %v5246 = vsel %vm1789, %v5232, %v4427
        %5247 = vst [vmem:[#allocation2] sm:$0xff] %v5246
        %5248 = vst [vmem:[#allocation2 + $0x8] sm:$0xff] %v5241
        %v5249 = vld [vmem:[#allocation2 + $0x10] sm:$0x11]
        %v5250 = vsel %vm918, %v5242, %v5249
        %5251 = vst [vmem:[#allocation2 + $0x10] sm:$0x11] %v5250
        %v5252 = vld [vmem:[#allocation2] sm:$0xff]
        %v5253 = vld [vmem:[#allocation2 + $0x8] sm:$0xff]
        %v5254 = vld [vmem:[#allocation14] sm:$0xff]
        %v5255 = vld [vmem:[#allocation14 + $0x8] sm:$0xff]
        %v5256 = vld [vmem:[#allocation14 + $0x10] sm:$0xff]
        %v5257 = vld [vmem:[#allocation14 + $0x18] sm:$0xff]
        %v5258 = vld [vmem:[#allocation14 + $0x20] sm:$0xff]
        %v5259 = vld [vmem:[#allocation14 + $0x28] sm:$0xff]
        %v5260 = vld [vmem:[#allocation14 + $0x30] sm:$0xff]
        %v5261 = vld [vmem:[#allocation14 + $0x38] sm:$0xff]
        %v5262 = vld [vmem:[#allocation14 + $0x40] sm:$0xff]
        %v5263 = vld [vmem:[#allocation14 + $0x48] sm:$0xff]
        %v5264 = vld [vmem:[#allocation14 + $0x50] sm:$0xff]
        %v5265 = vld [vmem:[#allocation14 + $0x58] sm:$0xff]
        %v5266 = vld [vmem:[#allocation14 + $0x60] sm:$0xff]
        %v5267 = vld [vmem:[#allocation14 + $0x68] sm:$0xff]
        %v5268 = vld [vmem:[#allocation14 + $0x70] sm:$0xff]
        %v5269 = vld [vmem:[#allocation14 + $0x78] sm:$0xff]
        %v5270 = vld [vmem:[#allocation14 + $0x80] sm:$0xff]
        %v5271 = vld [vmem:[#allocation14 + $0x88] sm:$0xff]
        %v5272 = vld [vmem:[#allocation14 + $0x90] sm:$0xff]
        %v5273 = vld [vmem:[#allocation14 + $0x98] sm:$0xff]
        %v5274 = vld [vmem:[#allocation14 + $0xa0] sm:$0xff]
        %v5275 = vld [vmem:[#allocation14 + $0xa8] sm:$0xff]
        %v5276 = vld [vmem:[#allocation14 + $0xb0] sm:$0xff]
        %v5277 = vld [vmem:[#allocation14 + $0xb8] sm:$0xff]
        %v5278 = vld [vmem:[#allocation14 + $0xc0] sm:$0xff]
        %v5279 = vld [vmem:[#allocation14 + $0xc8] sm:$0xff]
        %v5280 = vld [vmem:[#allocation14 + $0xd0] sm:$0xff]
        %v5281 = vld [vmem:[#allocation14 + $0xd8] sm:$0xff]
        %v5282 = vld [vmem:[#allocation14 + $0xe0] sm:$0xff]
        %v5283 = vld [vmem:[#allocation14 + $0xe8] sm:$0xff]
        %v5284 = vld [vmem:[#allocation14 + $0xf0] sm:$0xff]
        %v5285 = vld [vmem:[#allocation14 + $0xf8] sm:$0xff]
        %v5286 = vld [vmem:[#allocation2 + $0x10] sm:$0x11]
        %s5287 = scalar_lea.vmem [#allocation14], 256
        %v5288 = vld [vmem:[%s5287] sm:$0xff]
        %v5289 = vld [vmem:[%s5287 + $0x8] sm:$0xff]
        %v5290 = vld [vmem:[%s5287 + $0x10] sm:$0xff]
        %v5291 = vld [vmem:[%s5287 + $0x18] sm:$0xff]
        %v5292 = vld [vmem:[%s5287 + $0x20] sm:$0xff]
        %v5293 = vld [vmem:[%s5287 + $0x28] sm:$0xff]
        %v5294 = vld [vmem:[%s5287 + $0x30] sm:$0xff]
        %v5295 = vld [vmem:[%s5287 + $0x38] sm:$0xff]
        %v5296 = vld [vmem:[%s5287 + $0x40] sm:$0xff]
        %v5297 = vld [vmem:[%s5287 + $0x48] sm:$0xff]
        %v5298 = vld [vmem:[%s5287 + $0x50] sm:$0xff]
        %v5299 = vld [vmem:[%s5287 + $0x58] sm:$0xff]
        %v5300 = vld [vmem:[%s5287 + $0x60] sm:$0xff]
        %v5301 = vld [vmem:[%s5287 + $0x68] sm:$0xff]
        %v5302 = vld [vmem:[%s5287 + $0x70] sm:$0xff]
        %v5303 = vld [vmem:[%s5287 + $0x78] sm:$0xff]
        %v5304 = vld [vmem:[%s5287 + $0x80] sm:$0xff]
        %v5305 = vld [vmem:[%s5287 + $0x88] sm:$0xff]
        %v5306 = vld [vmem:[%s5287 + $0x90] sm:$0xff]
        %v5307 = vld [vmem:[%s5287 + $0x98] sm:$0xff]
        %v5308 = vld [vmem:[%s5287 + $0xa0] sm:$0xff]
        %v5309 = vld [vmem:[%s5287 + $0xa8] sm:$0xff]
        %v5310 = vld [vmem:[%s5287 + $0xb0] sm:$0xff]
        %v5311 = vld [vmem:[%s5287 + $0xb8] sm:$0xff]
        %v5312 = vld [vmem:[%s5287 + $0xc0] sm:$0xff]
        %v5313 = vld [vmem:[%s5287 + $0xc8] sm:$0xff]
        %v5314 = vld [vmem:[%s5287 + $0xd0] sm:$0xff]
        %v5315 = vld [vmem:[%s5287 + $0xd8] sm:$0xff]
        %v5316 = vld [vmem:[%s5287 + $0xe0] sm:$0xff]
        %v5317 = vld [vmem:[%s5287 + $0xe8] sm:$0xff]
        %v5318 = vld [vmem:[%s5287 + $0xf0] sm:$0xff]
        %v5319 = vld [vmem:[%s5287 + $0xf8] sm:$0xff]
        %v5323 = vunpack.c.l.b16 %v5252
        %v5324 = vunpack.c.h.b16 %v5252
        %v5325 = vunpack.c.l.b16 %v5253
        %v5326 = vunpack.c.h.b16 %v5253
        %v5327 = vunpack.c.l.b16 %v5286
        %v5328 = vunpack.c.h.b16 %v5286
        %v5329 = vpack.c.b16 %v5325, %v5323
        %v5330 = vpack.c.b16 %v5326, %v5324
        %v5331 = vpack.c.b16 %v5327, %v5327
        %v5332 = vpack.c.b16 %v5328, %v5328
        %v5334 = vshrl.u32 %v5329, 16
        %v5336 = vshll.u32 %v5329, 16
        %v5338 = vrot.slane %v5336, 1
        %v5339 = vor.u32 %v5334, %v5338
        %v5341 = vshll.u32 %v5331, 16
        %v5343 = vrot.slane %v5341, 1
        %v5344 = vsel %vm1000, %v5339, %v5343
        %v5346 = vshrl.u32 %v5330, 16
        %v5348 = vshll.u32 %v5330, 16
        %v5350 = vrot.slane %v5348, 1
        %v5351 = vor.u32 %v5346, %v5350
        %v5353 = vshll.u32 %v5332, 16
        %v5355 = vrot.slane %v5353, 1
        %v5356 = vsel %vm1000, %v5351, %v5355
        %v5391 = vunpack.c.l.b16 %v5288
        %v5392 = vunpack.c.h.b16 %v5288
        %v5393 = vunpack.c.l.b16 %v5289
        %v5394 = vunpack.c.h.b16 %v5289
        %v5395 = vunpack.c.l.b16 %v5290
        %v5396 = vunpack.c.h.b16 %v5290
        %v5397 = vunpack.c.l.b16 %v5291
        %v5398 = vunpack.c.h.b16 %v5291
        %v5399 = vunpack.c.l.b16 %v5292
        %v5400 = vunpack.c.h.b16 %v5292
        %v5401 = vunpack.c.l.b16 %v5293
        %v5402 = vunpack.c.h.b16 %v5293
        %v5403 = vunpack.c.l.b16 %v5294
        %v5404 = vunpack.c.h.b16 %v5294
        %v5405 = vunpack.c.l.b16 %v5295
        %v5406 = vunpack.c.h.b16 %v5295
        %v5407 = vunpack.c.l.b16 %v5296
        %v5408 = vunpack.c.h.b16 %v5296
        %v5409 = vunpack.c.l.b16 %v5297
        %v5410 = vunpack.c.h.b16 %v5297
        %v5411 = vunpack.c.l.b16 %v5298
        %v5412 = vunpack.c.h.b16 %v5298
        %v5413 = vunpack.c.l.b16 %v5299
        %v5414 = vunpack.c.h.b16 %v5299
        %v5415 = vunpack.c.l.b16 %v5300
        %v5416 = vunpack.c.h.b16 %v5300
        %v5417 = vunpack.c.l.b16 %v5301
        %v5418 = vunpack.c.h.b16 %v5301
        %v5419 = vunpack.c.l.b16 %v5302
        %v5420 = vunpack.c.h.b16 %v5302
        %v5421 = vunpack.c.l.b16 %v5303
        %v5422 = vunpack.c.h.b16 %v5303
        %v5423 = vunpack.c.l.b16 %v5304
        %v5424 = vunpack.c.h.b16 %v5304
        %v5425 = vunpack.c.l.b16 %v5305
        %v5426 = vunpack.c.h.b16 %v5305
        %v5427 = vunpack.c.l.b16 %v5306
        %v5428 = vunpack.c.h.b16 %v5306
        %v5429 = vunpack.c.l.b16 %v5307
        %v5430 = vunpack.c.h.b16 %v5307
        %v5431 = vunpack.c.l.b16 %v5308
        %v5432 = vunpack.c.h.b16 %v5308
        %v5433 = vunpack.c.l.b16 %v5309
        %v5434 = vunpack.c.h.b16 %v5309
        %v5435 = vunpack.c.l.b16 %v5310
        %v5436 = vunpack.c.h.b16 %v5310
        %v5437 = vunpack.c.l.b16 %v5311
        %v5438 = vunpack.c.h.b16 %v5311
        %v5439 = vunpack.c.l.b16 %v5312
        %v5440 = vunpack.c.h.b16 %v5312
        %v5441 = vunpack.c.l.b16 %v5313
        %v5442 = vunpack.c.h.b16 %v5313
        %v5443 = vunpack.c.l.b16 %v5314
        %v5444 = vunpack.c.h.b16 %v5314
        %v5445 = vunpack.c.l.b16 %v5315
        %v5446 = vunpack.c.h.b16 %v5315
        %v5447 = vunpack.c.l.b16 %v5316
        %v5448 = vunpack.c.h.b16 %v5316
        %v5449 = vunpack.c.l.b16 %v5317
        %v5450 = vunpack.c.h.b16 %v5317
        %v5451 = vunpack.c.l.b16 %v5318
        %v5452 = vunpack.c.h.b16 %v5318
        %v5453 = vunpack.c.l.b16 %v5319
        %v5454 = vunpack.c.h.b16 %v5319
        %v5455 = vpack.c.b16 %v5393, %v5391
        %v5456 = vpack.c.b16 %v5394, %v5392
        %v5457 = vpack.c.b16 %v5397, %v5395
        %v5458 = vpack.c.b16 %v5398, %v5396
        %v5459 = vpack.c.b16 %v5401, %v5399
        %v5460 = vpack.c.b16 %v5402, %v5400
        %v5461 = vpack.c.b16 %v5405, %v5403
        %v5462 = vpack.c.b16 %v5406, %v5404
        %v5463 = vpack.c.b16 %v5409, %v5407
        %v5464 = vpack.c.b16 %v5410, %v5408
        %v5465 = vpack.c.b16 %v5413, %v5411
        %v5466 = vpack.c.b16 %v5414, %v5412
        %v5467 = vpack.c.b16 %v5417, %v5415
        %v5468 = vpack.c.b16 %v5418, %v5416
        %v5469 = vpack.c.b16 %v5421, %v5419
        %v5470 = vpack.c.b16 %v5422, %v5420
        %v5471 = vpack.c.b16 %v5425, %v5423
        %v5472 = vpack.c.b16 %v5426, %v5424
        %v5473 = vpack.c.b16 %v5429, %v5427
        %v5474 = vpack.c.b16 %v5430, %v5428
        %v5475 = vpack.c.b16 %v5433, %v5431
        %v5476 = vpack.c.b16 %v5434, %v5432
        %v5477 = vpack.c.b16 %v5437, %v5435
        %v5478 = vpack.c.b16 %v5438, %v5436
        %v5479 = vpack.c.b16 %v5441, %v5439
        %v5480 = vpack.c.b16 %v5442, %v5440
        %v5481 = vpack.c.b16 %v5445, %v5443
        %v5482 = vpack.c.b16 %v5446, %v5444
        %v5483 = vpack.c.b16 %v5449, %v5447
        %v5484 = vpack.c.b16 %v5450, %v5448
        %v5485 = vpack.c.b16 %v5453, %v5451
        %v5486 = vpack.c.b16 %v5454, %v5452
        %5519 = vmatprep.subr.bf16.mxu0 %v5470
        %5520 = vmatpush1.bf16.msra.mxu0 %v5469
        %5521 = vmatprep.subr.bf16.mxu0 %v5468
        %5522 = vmatpush1.bf16.msra.mxu0 %v5467
        %5523 = vmatprep.subr.bf16.mxu0 %v5466
        %5524 = vmatpush1.bf16.msra.mxu0 %v5465
        %5525 = vmatprep.subr.bf16.mxu0 %v5464
        %5526 = vmatpush1.bf16.msra.mxu0 %v5463
        %5527 = vmatprep.subr.bf16.mxu0 %v5462
        %5528 = vmatpush1.bf16.msra.mxu0 %v5461
        %5529 = vmatprep.subr.bf16.mxu0 %v5460
        %5530 = vmatpush1.bf16.msra.mxu0 %v5459
        %5531 = vmatprep.subr.bf16.mxu0 %v5458
        %5532 = vmatpush1.bf16.msra.mxu0 %v5457
        %5533 = vmatprep.subr.bf16.mxu0 %v5456
        %5534 = vmatpush1.bf16.msra.mxu0 %v5455
        %5535 = vmatprep.subr.bf16.mxu0 %v5486
        %5536 = vmatpush2.bf16.msra.mxu0 %v5485
        %5537 = vmatprep.subr.bf16.mxu0 %v5484
        %5538 = vmatpush2.bf16.msra.mxu0 %v5483
        %5539 = vmatprep.subr.bf16.mxu0 %v5482
        %5540 = vmatpush2.bf16.msra.mxu0 %v5481
        %5541 = vmatprep.subr.bf16.mxu0 %v5480
        %5542 = vmatpush2.bf16.msra.mxu0 %v5479
        %5543 = vmatprep.subr.bf16.mxu0 %v5478
        %5544 = vmatpush2.bf16.msra.mxu0 %v5477
        %5545 = vmatprep.subr.bf16.mxu0 %v5476
        %5546 = vmatpush2.bf16.msra.mxu0 %v5475
        %5547 = vmatprep.subr.bf16.mxu0 %v5474
        %5548 = vmatpush2.bf16.msra.mxu0 %v5473
        %5549 = vmatprep.subr.bf16.mxu0 %v5472
        %5550 = vmatpush2.bf16.msra.mxu0 %v5471
        %5551 = vmatprep.mubr.bf16.mxu0 %v5356
        %5552 = vmatmul.mubr.bf16.gmra.mxu0 %v5344
        %v5553 = vpop.f32.mrf.mxu0
        %v5554 = vadd.f32 0.0, %v5553
        %v5555 = vpop.f32.mrf.mxu0
        %v5556 = vadd.f32 0.0, %v5555
        %v5557 = vpop.f32.mrf.mxu0
        %v5558 = vadd.f32 0.0, %v5557
        %v5559 = vpop.f32.mrf.mxu0
        %v5560 = vadd.f32 0.0, %v5559
        %5561 = vdwg.mxu0
        %v5596 = vunpack.c.l.b16 %v5254
        %v5597 = vunpack.c.h.b16 %v5254
        %v5598 = vunpack.c.l.b16 %v5255
        %v5599 = vunpack.c.h.b16 %v5255
        %v5600 = vunpack.c.l.b16 %v5256
        %v5601 = vunpack.c.h.b16 %v5256
        %v5602 = vunpack.c.l.b16 %v5257
        %v5603 = vunpack.c.h.b16 %v5257
        %v5604 = vunpack.c.l.b16 %v5258
        %v5605 = vunpack.c.h.b16 %v5258
        %v5606 = vunpack.c.l.b16 %v5259
        %v5607 = vunpack.c.h.b16 %v5259
        %v5608 = vunpack.c.l.b16 %v5260
        %v5609 = vunpack.c.h.b16 %v5260
        %v5610 = vunpack.c.l.b16 %v5261
        %v5611 = vunpack.c.h.b16 %v5261
        %v5612 = vunpack.c.l.b16 %v5262
        %v5613 = vunpack.c.h.b16 %v5262
        %v5614 = vunpack.c.l.b16 %v5263
        %v5615 = vunpack.c.h.b16 %v5263
        %v5616 = vunpack.c.l.b16 %v5264
        %v5617 = vunpack.c.h.b16 %v5264
        %v5618 = vunpack.c.l.b16 %v5265
        %v5619 = vunpack.c.h.b16 %v5265
        %v5620 = vunpack.c.l.b16 %v5266
        %v5621 = vunpack.c.h.b16 %v5266
        %v5622 = vunpack.c.l.b16 %v5267
        %v5623 = vunpack.c.h.b16 %v5267
        %v5624 = vunpack.c.l.b16 %v5268
        %v5625 = vunpack.c.h.b16 %v5268
        %v5626 = vunpack.c.l.b16 %v5269
        %v5627 = vunpack.c.h.b16 %v5269
        %v5628 = vunpack.c.l.b16 %v5270
        %v5629 = vunpack.c.h.b16 %v5270
        %v5630 = vunpack.c.l.b16 %v5271
        %v5631 = vunpack.c.h.b16 %v5271
        %v5632 = vunpack.c.l.b16 %v5272
        %v5633 = vunpack.c.h.b16 %v5272
        %v5634 = vunpack.c.l.b16 %v5273
        %v5635 = vunpack.c.h.b16 %v5273
        %v5636 = vunpack.c.l.b16 %v5274
        %v5637 = vunpack.c.h.b16 %v5274
        %v5638 = vunpack.c.l.b16 %v5275
        %v5639 = vunpack.c.h.b16 %v5275
        %v5640 = vunpack.c.l.b16 %v5276
        %v5641 = vunpack.c.h.b16 %v5276
        %v5642 = vunpack.c.l.b16 %v5277
        %v5643 = vunpack.c.h.b16 %v5277
        %v5644 = vunpack.c.l.b16 %v5278
        %v5645 = vunpack.c.h.b16 %v5278
        %v5646 = vunpack.c.l.b16 %v5279
        %v5647 = vunpack.c.h.b16 %v5279
        %v5648 = vunpack.c.l.b16 %v5280
        %v5649 = vunpack.c.h.b16 %v5280
        %v5650 = vunpack.c.l.b16 %v5281
        %v5651 = vunpack.c.h.b16 %v5281
        %v5652 = vunpack.c.l.b16 %v5282
        %v5653 = vunpack.c.h.b16 %v5282
        %v5654 = vunpack.c.l.b16 %v5283
        %v5655 = vunpack.c.h.b16 %v5283
        %v5656 = vunpack.c.l.b16 %v5284
        %v5657 = vunpack.c.h.b16 %v5284
        %v5658 = vunpack.c.l.b16 %v5285
        %v5659 = vunpack.c.h.b16 %v5285
        %v5660 = vpack.c.b16 %v5598, %v5596
        %v5661 = vpack.c.b16 %v5599, %v5597
        %v5662 = vpack.c.b16 %v5602, %v5600
        %v5663 = vpack.c.b16 %v5603, %v5601
        %v5664 = vpack.c.b16 %v5606, %v5604
        %v5665 = vpack.c.b16 %v5607, %v5605
        %v5666 = vpack.c.b16 %v5610, %v5608
        %v5667 = vpack.c.b16 %v5611, %v5609
        %v5668 = vpack.c.b16 %v5614, %v5612
        %v5669 = vpack.c.b16 %v5615, %v5613
        %v5670 = vpack.c.b16 %v5618, %v5616
        %v5671 = vpack.c.b16 %v5619, %v5617
        %v5672 = vpack.c.b16 %v5622, %v5620
        %v5673 = vpack.c.b16 %v5623, %v5621
        %v5674 = vpack.c.b16 %v5626, %v5624
        %v5675 = vpack.c.b16 %v5627, %v5625
        %v5676 = vpack.c.b16 %v5630, %v5628
        %v5677 = vpack.c.b16 %v5631, %v5629
        %v5678 = vpack.c.b16 %v5634, %v5632
        %v5679 = vpack.c.b16 %v5635, %v5633
        %v5680 = vpack.c.b16 %v5638, %v5636
        %v5681 = vpack.c.b16 %v5639, %v5637
        %v5682 = vpack.c.b16 %v5642, %v5640
        %v5683 = vpack.c.b16 %v5643, %v5641
        %v5684 = vpack.c.b16 %v5646, %v5644
        %v5685 = vpack.c.b16 %v5647, %v5645
        %v5686 = vpack.c.b16 %v5650, %v5648
        %v5687 = vpack.c.b16 %v5651, %v5649
        %v5688 = vpack.c.b16 %v5654, %v5652
        %v5689 = vpack.c.b16 %v5655, %v5653
        %v5690 = vpack.c.b16 %v5658, %v5656
        %v5691 = vpack.c.b16 %v5659, %v5657
        %5724 = vmatprep.subr.bf16.mxu0 %v5675
        %5725 = vmatpush1.bf16.msra.mxu0 %v5674
        %5726 = vmatprep.subr.bf16.mxu0 %v5673
        %5727 = vmatpush1.bf16.msra.mxu0 %v5672
        %5728 = vmatprep.subr.bf16.mxu0 %v5671
        %5729 = vmatpush1.bf16.msra.mxu0 %v5670
        %5730 = vmatprep.subr.bf16.mxu0 %v5669
        %5731 = vmatpush1.bf16.msra.mxu0 %v5668
        %5732 = vmatprep.subr.bf16.mxu0 %v5667
        %5733 = vmatpush1.bf16.msra.mxu0 %v5666
        %5734 = vmatprep.subr.bf16.mxu0 %v5665
        %5735 = vmatpush1.bf16.msra.mxu0 %v5664
        %5736 = vmatprep.subr.bf16.mxu0 %v5663
        %5737 = vmatpush1.bf16.msra.mxu0 %v5662
        %5738 = vmatprep.subr.bf16.mxu0 %v5661
        %5739 = vmatpush1.bf16.msra.mxu0 %v5660
        %5740 = vmatprep.subr.bf16.mxu0 %v5691
        %5741 = vmatpush2.bf16.msra.mxu0 %v5690
        %5742 = vmatprep.subr.bf16.mxu0 %v5689
        %5743 = vmatpush2.bf16.msra.mxu0 %v5688
        %5744 = vmatprep.subr.bf16.mxu0 %v5687
        %5745 = vmatpush2.bf16.msra.mxu0 %v5686
        %5746 = vmatprep.subr.bf16.mxu0 %v5685
        %5747 = vmatpush2.bf16.msra.mxu0 %v5684
        %5748 = vmatprep.subr.bf16.mxu0 %v5683
        %5749 = vmatpush2.bf16.msra.mxu0 %v5682
        %5750 = vmatprep.subr.bf16.mxu0 %v5681
        %5751 = vmatpush2.bf16.msra.mxu0 %v5680
        %5752 = vmatprep.subr.bf16.mxu0 %v5679
        %5753 = vmatpush2.bf16.msra.mxu0 %v5678
        %5754 = vmatprep.subr.bf16.mxu0 %v5677
        %5755 = vmatpush2.bf16.msra.mxu0 %v5676
        %5756 = vmatprep.mubr.bf16.mxu0 %v5330
        %5757 = vmatmul.mubr.bf16.gmra.mxu0 %v5329
        %v5758 = vpop.f32.mrf.mxu0
        %v5759 = vadd.f32 %v5554, %v5758
        %v5760 = vpop.f32.mrf.mxu0
        %v5761 = vadd.f32 %v5556, %v5760
        %v5762 = vpop.f32.mrf.mxu0
        %v5763 = vadd.f32 %v5558, %v5762
        %v5764 = vpop.f32.mrf.mxu0
        %v5765 = vadd.f32 %v5560, %v5764
        %5766 = vdwg.mxu0
        %v5767 = vld [vmem:[#allocation2] sm:$0xee]
        %s5768 = scalar_lea.vmem [#allocation14], 512
        %v5769 = vld [vmem:[%s5768] sm:$0xff]
        %v5770 = vld [vmem:[%s5768 + $0x8] sm:$0xff]
        %v5771 = vld [vmem:[%s5768 + $0x10] sm:$0xff]
        %v5772 = vld [vmem:[%s5768 + $0x18] sm:$0xff]
        %v5773 = vld [vmem:[%s5768 + $0x20] sm:$0xff]
        %v5774 = vld [vmem:[%s5768 + $0x28] sm:$0xff]
        %v5775 = vld [vmem:[%s5768 + $0x30] sm:$0xff]
        %v5776 = vld [vmem:[%s5768 + $0x38] sm:$0xff]
        %v5777 = vld [vmem:[%s5768 + $0x40] sm:$0xff]
        %v5778 = vld [vmem:[%s5768 + $0x48] sm:$0xff]
        %v5779 = vld [vmem:[%s5768 + $0x50] sm:$0xff]
        %v5780 = vld [vmem:[%s5768 + $0x58] sm:$0xff]
        %v5781 = vld [vmem:[%s5768 + $0x60] sm:$0xff]
        %v5782 = vld [vmem:[%s5768 + $0x68] sm:$0xff]
        %v5783 = vld [vmem:[%s5768 + $0x70] sm:$0xff]
        %v5784 = vld [vmem:[%s5768 + $0x78] sm:$0xff]
        %v5785 = vld [vmem:[%s5768 + $0x80] sm:$0xff]
        %v5786 = vld [vmem:[%s5768 + $0x88] sm:$0xff]
        %v5787 = vld [vmem:[%s5768 + $0x90] sm:$0xff]
        %v5788 = vld [vmem:[%s5768 + $0x98] sm:$0xff]
        %v5789 = vld [vmem:[%s5768 + $0xa0] sm:$0xff]
        %v5790 = vld [vmem:[%s5768 + $0xa8] sm:$0xff]
        %v5791 = vld [vmem:[%s5768 + $0xb0] sm:$0xff]
        %v5792 = vld [vmem:[%s5768 + $0xb8] sm:$0xff]
        %v5793 = vld [vmem:[%s5768 + $0xc0] sm:$0xff]
        %v5794 = vld [vmem:[%s5768 + $0xc8] sm:$0xff]
        %v5795 = vld [vmem:[%s5768 + $0xd0] sm:$0xff]
        %v5796 = vld [vmem:[%s5768 + $0xd8] sm:$0xff]
        %v5797 = vld [vmem:[%s5768 + $0xe0] sm:$0xff]
        %v5798 = vld [vmem:[%s5768 + $0xe8] sm:$0xff]
        %v5799 = vld [vmem:[%s5768 + $0xf0] sm:$0xff]
        %v5800 = vld [vmem:[%s5768 + $0xf8] sm:$0xff]
        %v5802 = vunpack.c.l.b16 %v5767
        %v5803 = vunpack.c.h.b16 %v5767
        %v5804 = vpack.c.b16 %v5325, %v5802
        %v5805 = vpack.c.b16 %v5326, %v5803
        %v5806 = vrot.slane %v5804, 1
        %v5807 = vrot.slane %v5331, 1
        %v5808 = vsel %vm1162, %v5806, %v5807
        %v5809 = vrot.slane %v5805, 1
        %v5810 = vrot.slane %v5332, 1
        %v5811 = vsel %vm1162, %v5809, %v5810
        %v5846 = vunpack.c.l.b16 %v5769
        %v5847 = vunpack.c.h.b16 %v5769
        %v5848 = vunpack.c.l.b16 %v5770
        %v5849 = vunpack.c.h.b16 %v5770
        %v5850 = vunpack.c.l.b16 %v5771
        %v5851 = vunpack.c.h.b16 %v5771
        %v5852 = vunpack.c.l.b16 %v5772
        %v5853 = vunpack.c.h.b16 %v5772
        %v5854 = vunpack.c.l.b16 %v5773
        %v5855 = vunpack.c.h.b16 %v5773
        %v5856 = vunpack.c.l.b16 %v5774
        %v5857 = vunpack.c.h.b16 %v5774
        %v5858 = vunpack.c.l.b16 %v5775
        %v5859 = vunpack.c.h.b16 %v5775
        %v5860 = vunpack.c.l.b16 %v5776
        %v5861 = vunpack.c.h.b16 %v5776
        %v5862 = vunpack.c.l.b16 %v5777
        %v5863 = vunpack.c.h.b16 %v5777
        %v5864 = vunpack.c.l.b16 %v5778
        %v5865 = vunpack.c.h.b16 %v5778
        %v5866 = vunpack.c.l.b16 %v5779
        %v5867 = vunpack.c.h.b16 %v5779
        %v5868 = vunpack.c.l.b16 %v5780
        %v5869 = vunpack.c.h.b16 %v5780
        %v5870 = vunpack.c.l.b16 %v5781
        %v5871 = vunpack.c.h.b16 %v5781
        %v5872 = vunpack.c.l.b16 %v5782
        %v5873 = vunpack.c.h.b16 %v5782
        %v5874 = vunpack.c.l.b16 %v5783
        %v5875 = vunpack.c.h.b16 %v5783
        %v5876 = vunpack.c.l.b16 %v5784
        %v5877 = vunpack.c.h.b16 %v5784
        %v5878 = vunpack.c.l.b16 %v5785
        %v5879 = vunpack.c.h.b16 %v5785
        %v5880 = vunpack.c.l.b16 %v5786
        %v5881 = vunpack.c.h.b16 %v5786
        %v5882 = vunpack.c.l.b16 %v5787
        %v5883 = vunpack.c.h.b16 %v5787
        %v5884 = vunpack.c.l.b16 %v5788
        %v5885 = vunpack.c.h.b16 %v5788
        %v5886 = vunpack.c.l.b16 %v5789
        %v5887 = vunpack.c.h.b16 %v5789
        %v5888 = vunpack.c.l.b16 %v5790
        %v5889 = vunpack.c.h.b16 %v5790
        %v5890 = vunpack.c.l.b16 %v5791
        %v5891 = vunpack.c.h.b16 %v5791
        %v5892 = vunpack.c.l.b16 %v5792
        %v5893 = vunpack.c.h.b16 %v5792
        %v5894 = vunpack.c.l.b16 %v5793
        %v5895 = vunpack.c.h.b16 %v5793
        %v5896 = vunpack.c.l.b16 %v5794
        %v5897 = vunpack.c.h.b16 %v5794
        %v5898 = vunpack.c.l.b16 %v5795
        %v5899 = vunpack.c.h.b16 %v5795
        %v5900 = vunpack.c.l.b16 %v5796
        %v5901 = vunpack.c.h.b16 %v5796
        %v5902 = vunpack.c.l.b16 %v5797
        %v5903 = vunpack.c.h.b16 %v5797
        %v5904 = vunpack.c.l.b16 %v5798
        %v5905 = vunpack.c.h.b16 %v5798
        %v5906 = vunpack.c.l.b16 %v5799
        %v5907 = vunpack.c.h.b16 %v5799
        %v5908 = vunpack.c.l.b16 %v5800
        %v5909 = vunpack.c.h.b16 %v5800
        %v5910 = vpack.c.b16 %v5848, %v5846
        %v5911 = vpack.c.b16 %v5849, %v5847
        %v5912 = vpack.c.b16 %v5852, %v5850
        %v5913 = vpack.c.b16 %v5853, %v5851
        %v5914 = vpack.c.b16 %v5856, %v5854
        %v5915 = vpack.c.b16 %v5857, %v5855
        %v5916 = vpack.c.b16 %v5860, %v5858
        %v5917 = vpack.c.b16 %v5861, %v5859
        %v5918 = vpack.c.b16 %v5864, %v5862
        %v5919 = vpack.c.b16 %v5865, %v5863
        %v5920 = vpack.c.b16 %v5868, %v5866
        %v5921 = vpack.c.b16 %v5869, %v5867
        %v5922 = vpack.c.b16 %v5872, %v5870
        %v5923 = vpack.c.b16 %v5873, %v5871
        %v5924 = vpack.c.b16 %v5876, %v5874
        %v5925 = vpack.c.b16 %v5877, %v5875
        %v5926 = vpack.c.b16 %v5880, %v5878
        %v5927 = vpack.c.b16 %v5881, %v5879
        %v5928 = vpack.c.b16 %v5884, %v5882
        %v5929 = vpack.c.b16 %v5885, %v5883
        %v5930 = vpack.c.b16 %v5888, %v5886
        %v5931 = vpack.c.b16 %v5889, %v5887
        %v5932 = vpack.c.b16 %v5892, %v5890
        %v5933 = vpack.c.b16 %v5893, %v5891
        %v5934 = vpack.c.b16 %v5896, %v5894
        %v5935 = vpack.c.b16 %v5897, %v5895
        %v5936 = vpack.c.b16 %v5900, %v5898
        %v5937 = vpack.c.b16 %v5901, %v5899
        %v5938 = vpack.c.b16 %v5904, %v5902
        %v5939 = vpack.c.b16 %v5905, %v5903
        %v5940 = vpack.c.b16 %v5908, %v5906
        %v5941 = vpack.c.b16 %v5909, %v5907
        %5974 = vmatprep.subr.bf16.mxu0 %v5925
        %5975 = vmatpush1.bf16.msra.mxu0 %v5924
        %5976 = vmatprep.subr.bf16.mxu0 %v5923
        %5977 = vmatpush1.bf16.msra.mxu0 %v5922
        %5978 = vmatprep.subr.bf16.mxu0 %v5921
        %5979 = vmatpush1.bf16.msra.mxu0 %v5920
        %5980 = vmatprep.subr.bf16.mxu0 %v5919
        %5981 = vmatpush1.bf16.msra.mxu0 %v5918
        %5982 = vmatprep.subr.bf16.mxu0 %v5917
        %5983 = vmatpush1.bf16.msra.mxu0 %v5916
        %5984 = vmatprep.subr.bf16.mxu0 %v5915
        %5985 = vmatpush1.bf16.msra.mxu0 %v5914
        %5986 = vmatprep.subr.bf16.mxu0 %v5913
        %5987 = vmatpush1.bf16.msra.mxu0 %v5912
        %5988 = vmatprep.subr.bf16.mxu0 %v5911
        %5989 = vmatpush1.bf16.msra.mxu0 %v5910
        %5990 = vmatprep.subr.bf16.mxu0 %v5941
        %5991 = vmatpush2.bf16.msra.mxu0 %v5940
        %5992 = vmatprep.subr.bf16.mxu0 %v5939
        %5993 = vmatpush2.bf16.msra.mxu0 %v5938
        %5994 = vmatprep.subr.bf16.mxu0 %v5937
        %5995 = vmatpush2.bf16.msra.mxu0 %v5936
        %5996 = vmatprep.subr.bf16.mxu0 %v5935
        %5997 = vmatpush2.bf16.msra.mxu0 %v5934
        %5998 = vmatprep.subr.bf16.mxu0 %v5933
        %5999 = vmatpush2.bf16.msra.mxu0 %v5932
        %6000 = vmatprep.subr.bf16.mxu0 %v5931
        %6001 = vmatpush2.bf16.msra.mxu0 %v5930
        %6002 = vmatprep.subr.bf16.mxu0 %v5929
        %6003 = vmatpush2.bf16.msra.mxu0 %v5928
        %6004 = vmatprep.subr.bf16.mxu0 %v5927
        %6005 = vmatpush2.bf16.msra.mxu0 %v5926
        %6006 = vmatprep.mubr.bf16.mxu0 %v5811
        %6007 = vmatmul.mubr.bf16.gmra.mxu0 %v5808
        %v6008 = vpop.f32.mrf.mxu0
        %v6009 = vadd.f32 0.0, %v6008
        %v6010 = vpop.f32.mrf.mxu0
        %v6011 = vadd.f32 0.0, %v6010
        %v6012 = vpop.f32.mrf.mxu0
        %v6013 = vadd.f32 0.0, %v6012
        %v6014 = vpop.f32.mrf.mxu0
        %v6015 = vadd.f32 0.0, %v6014
        %6016 = vdwg.mxu0
        %v6017 = vadd.f32 %v5759, %v6009
        %v6018 = vadd.f32 %v5761, %v6011
        %v6019 = vadd.f32 %v5763, %v6013
        %v6020 = vadd.f32 %v5765, %v6015
        %v6021 = vld [vmem:[%s16] sm:$0x3]
        %v6023 = vlaneseq
        %v6024 = vshrl.u32 %v6023, 7
        %v6025 = vsub.s32 0, %v6024
        %v6026 = vrot.slane %v6021, %v6025
        %v6027 = vlaneseq
        %v6028 = vshrl.u32 %v6027, 7
        %v6029 = vsub.s32 1, %v6028
        %v6030 = vrot.slane %v6021, %v6029
        %v6033 = vadd.f32 %v6017, %v6026
        %v6034 = vadd.f32 %v6018, %v6030
        %v6035 = vadd.f32 %v6019, %v6026
        %v6036 = vadd.f32 %v6020, %v6030
        %v6037 = vmax.f32 %v6033, 0.0
        %v6038 = vmax.f32 %v6034, 0.0
        %v6039 = vmax.f32 %v6035, 0.0
        %v6040 = vmax.f32 %v6036, 0.0
        %v6041 = vpack.c.bf16 %v6039, %v6037
        %v6042 = vpack.c.bf16 %v6040, %v6038
        %v6045 = vunpack.c.l.b16 %v6041
        %v6046 = vunpack.c.l.b16 %v6042
        %v6047 = vunpack.c.h.b16 %v6041
        %v6048 = vunpack.c.h.b16 %v6042
        %v6049 = vpack.c.b16 %v6046, %v6045
        %v6050 = vpack.c.b16 %v6048, %v6047
        %v6052 = vshrl.u32 %v6049, 16
        %v6054 = vrot.slane %v6052, 7
        %v6055 = vshll.u32 %v6049, 16
        %v6057 = vor.u32 %v6054, %v6055
        %v6058 = vrot.slane %v6054, 4
        %v6060 = vshrl.u32 %v6050, 16
        %v6062 = vrot.slane %v6060, 7
        %v6063 = vshll.u32 %v6050, 16
        %v6065 = vor.u32 %v6062, %v6063
        %v6066 = vsel %vm939, %v6058, %v6065
        %v6067 = vrot.slane %v6062, 4
        %v6071 = vsel %vm1789, %v6057, %v5252
        %6072 = vst [vmem:[#allocation2] sm:$0xff] %v6071
        %6073 = vst [vmem:[#allocation2 + $0x8] sm:$0xff] %v6066
        %v6074 = vld [vmem:[#allocation2 + $0x10] sm:$0x11]
        %v6075 = vsel %vm918, %v6067, %v6074
        %6076 = vst [vmem:[#allocation2 + $0x10] sm:$0x11] %v6075
        %v6077 = vld [vmem:[#allocation2] sm:$0xff]
        %v6078 = vld [vmem:[#allocation2 + $0x8] sm:$0xff]
        %v6079 = vld [vmem:[#allocation16] sm:$0xff]
        %v6080 = vld [vmem:[#allocation16 + $0x8] sm:$0xff]
        %v6081 = vld [vmem:[#allocation16 + $0x10] sm:$0xff]
        %v6082 = vld [vmem:[#allocation16 + $0x18] sm:$0xff]
        %v6083 = vld [vmem:[#allocation16 + $0x20] sm:$0xff]
        %v6084 = vld [vmem:[#allocation16 + $0x28] sm:$0xff]
        %v6085 = vld [vmem:[#allocation16 + $0x30] sm:$0xff]
        %v6086 = vld [vmem:[#allocation16 + $0x38] sm:$0xff]
        %v6087 = vld [vmem:[#allocation16 + $0x40] sm:$0xff]
        %v6088 = vld [vmem:[#allocation16 + $0x48] sm:$0xff]
        %v6089 = vld [vmem:[#allocation16 + $0x50] sm:$0xff]
        %v6090 = vld [vmem:[#allocation16 + $0x58] sm:$0xff]
        %v6091 = vld [vmem:[#allocation16 + $0x60] sm:$0xff]
        %v6092 = vld [vmem:[#allocation16 + $0x68] sm:$0xff]
        %v6093 = vld [vmem:[#allocation16 + $0x70] sm:$0xff]
        %v6094 = vld [vmem:[#allocation16 + $0x78] sm:$0xff]
        %v6095 = vld [vmem:[#allocation16 + $0x80] sm:$0xff]
        %v6096 = vld [vmem:[#allocation16 + $0x88] sm:$0xff]
        %v6097 = vld [vmem:[#allocation16 + $0x90] sm:$0xff]
        %v6098 = vld [vmem:[#allocation16 + $0x98] sm:$0xff]
        %v6099 = vld [vmem:[#allocation16 + $0xa0] sm:$0xff]
        %v6100 = vld [vmem:[#allocation16 + $0xa8] sm:$0xff]
        %v6101 = vld [vmem:[#allocation16 + $0xb0] sm:$0xff]
        %v6102 = vld [vmem:[#allocation16 + $0xb8] sm:$0xff]
        %v6103 = vld [vmem:[#allocation16 + $0xc0] sm:$0xff]
        %v6104 = vld [vmem:[#allocation16 + $0xc8] sm:$0xff]
        %v6105 = vld [vmem:[#allocation16 + $0xd0] sm:$0xff]
        %v6106 = vld [vmem:[#allocation16 + $0xd8] sm:$0xff]
        %v6107 = vld [vmem:[#allocation16 + $0xe0] sm:$0xff]
        %v6108 = vld [vmem:[#allocation16 + $0xe8] sm:$0xff]
        %v6109 = vld [vmem:[#allocation16 + $0xf0] sm:$0xff]
        %v6110 = vld [vmem:[#allocation16 + $0xf8] sm:$0xff]
        %v6111 = vld [vmem:[#allocation2 + $0x10] sm:$0x11]
        %s6112 = scalar_lea.vmem [#allocation16], 256
        %v6113 = vld [vmem:[%s6112] sm:$0xff]
        %v6114 = vld [vmem:[%s6112 + $0x8] sm:$0xff]
        %v6115 = vld [vmem:[%s6112 + $0x10] sm:$0xff]
        %v6116 = vld [vmem:[%s6112 + $0x18] sm:$0xff]
        %v6117 = vld [vmem:[%s6112 + $0x20] sm:$0xff]
        %v6118 = vld [vmem:[%s6112 + $0x28] sm:$0xff]
        %v6119 = vld [vmem:[%s6112 + $0x30] sm:$0xff]
        %v6120 = vld [vmem:[%s6112 + $0x38] sm:$0xff]
        %v6121 = vld [vmem:[%s6112 + $0x40] sm:$0xff]
        %v6122 = vld [vmem:[%s6112 + $0x48] sm:$0xff]
        %v6123 = vld [vmem:[%s6112 + $0x50] sm:$0xff]
        %v6124 = vld [vmem:[%s6112 + $0x58] sm:$0xff]
        %v6125 = vld [vmem:[%s6112 + $0x60] sm:$0xff]
        %v6126 = vld [vmem:[%s6112 + $0x68] sm:$0xff]
        %v6127 = vld [vmem:[%s6112 + $0x70] sm:$0xff]
        %v6128 = vld [vmem:[%s6112 + $0x78] sm:$0xff]
        %v6129 = vld [vmem:[%s6112 + $0x80] sm:$0xff]
        %v6130 = vld [vmem:[%s6112 + $0x88] sm:$0xff]
        %v6131 = vld [vmem:[%s6112 + $0x90] sm:$0xff]
        %v6132 = vld [vmem:[%s6112 + $0x98] sm:$0xff]
        %v6133 = vld [vmem:[%s6112 + $0xa0] sm:$0xff]
        %v6134 = vld [vmem:[%s6112 + $0xa8] sm:$0xff]
        %v6135 = vld [vmem:[%s6112 + $0xb0] sm:$0xff]
        %v6136 = vld [vmem:[%s6112 + $0xb8] sm:$0xff]
        %v6137 = vld [vmem:[%s6112 + $0xc0] sm:$0xff]
        %v6138 = vld [vmem:[%s6112 + $0xc8] sm:$0xff]
        %v6139 = vld [vmem:[%s6112 + $0xd0] sm:$0xff]
        %v6140 = vld [vmem:[%s6112 + $0xd8] sm:$0xff]
        %v6141 = vld [vmem:[%s6112 + $0xe0] sm:$0xff]
        %v6142 = vld [vmem:[%s6112 + $0xe8] sm:$0xff]
        %v6143 = vld [vmem:[%s6112 + $0xf0] sm:$0xff]
        %v6144 = vld [vmem:[%s6112 + $0xf8] sm:$0xff]
        %v6148 = vunpack.c.l.b16 %v6077
        %v6149 = vunpack.c.h.b16 %v6077
        %v6150 = vunpack.c.l.b16 %v6078
        %v6151 = vunpack.c.h.b16 %v6078
        %v6152 = vunpack.c.l.b16 %v6111
        %v6153 = vunpack.c.h.b16 %v6111
        %v6154 = vpack.c.b16 %v6150, %v6148
        %v6155 = vpack.c.b16 %v6151, %v6149
        %v6156 = vpack.c.b16 %v6152, %v6152
        %v6157 = vpack.c.b16 %v6153, %v6153
        %v6159 = vshrl.u32 %v6154, 16
        %v6161 = vshll.u32 %v6154, 16
        %v6163 = vrot.slane %v6161, 1
        %v6164 = vor.u32 %v6159, %v6163
        %v6166 = vshll.u32 %v6156, 16
        %v6168 = vrot.slane %v6166, 1
        %v6169 = vsel %vm1000, %v6164, %v6168
        %v6171 = vshrl.u32 %v6155, 16
        %v6173 = vshll.u32 %v6155, 16
        %v6175 = vrot.slane %v6173, 1
        %v6176 = vor.u32 %v6171, %v6175
        %v6178 = vshll.u32 %v6157, 16
        %v6180 = vrot.slane %v6178, 1
        %v6181 = vsel %vm1000, %v6176, %v6180
        %v6216 = vunpack.c.l.b16 %v6113
        %v6217 = vunpack.c.h.b16 %v6113
        %v6218 = vunpack.c.l.b16 %v6114
        %v6219 = vunpack.c.h.b16 %v6114
        %v6220 = vunpack.c.l.b16 %v6115
        %v6221 = vunpack.c.h.b16 %v6115
        %v6222 = vunpack.c.l.b16 %v6116
        %v6223 = vunpack.c.h.b16 %v6116
        %v6224 = vunpack.c.l.b16 %v6117
        %v6225 = vunpack.c.h.b16 %v6117
        %v6226 = vunpack.c.l.b16 %v6118
        %v6227 = vunpack.c.h.b16 %v6118
        %v6228 = vunpack.c.l.b16 %v6119
        %v6229 = vunpack.c.h.b16 %v6119
        %v6230 = vunpack.c.l.b16 %v6120
        %v6231 = vunpack.c.h.b16 %v6120
        %v6232 = vunpack.c.l.b16 %v6121
        %v6233 = vunpack.c.h.b16 %v6121
        %v6234 = vunpack.c.l.b16 %v6122
        %v6235 = vunpack.c.h.b16 %v6122
        %v6236 = vunpack.c.l.b16 %v6123
        %v6237 = vunpack.c.h.b16 %v6123
        %v6238 = vunpack.c.l.b16 %v6124
        %v6239 = vunpack.c.h.b16 %v6124
        %v6240 = vunpack.c.l.b16 %v6125
        %v6241 = vunpack.c.h.b16 %v6125
        %v6242 = vunpack.c.l.b16 %v6126
        %v6243 = vunpack.c.h.b16 %v6126
        %v6244 = vunpack.c.l.b16 %v6127
        %v6245 = vunpack.c.h.b16 %v6127
        %v6246 = vunpack.c.l.b16 %v6128
        %v6247 = vunpack.c.h.b16 %v6128
        %v6248 = vunpack.c.l.b16 %v6129
        %v6249 = vunpack.c.h.b16 %v6129
        %v6250 = vunpack.c.l.b16 %v6130
        %v6251 = vunpack.c.h.b16 %v6130
        %v6252 = vunpack.c.l.b16 %v6131
        %v6253 = vunpack.c.h.b16 %v6131
        %v6254 = vunpack.c.l.b16 %v6132
        %v6255 = vunpack.c.h.b16 %v6132
        %v6256 = vunpack.c.l.b16 %v6133
        %v6257 = vunpack.c.h.b16 %v6133
        %v6258 = vunpack.c.l.b16 %v6134
        %v6259 = vunpack.c.h.b16 %v6134
        %v6260 = vunpack.c.l.b16 %v6135
        %v6261 = vunpack.c.h.b16 %v6135
        %v6262 = vunpack.c.l.b16 %v6136
        %v6263 = vunpack.c.h.b16 %v6136
        %v6264 = vunpack.c.l.b16 %v6137
        %v6265 = vunpack.c.h.b16 %v6137
        %v6266 = vunpack.c.l.b16 %v6138
        %v6267 = vunpack.c.h.b16 %v6138
        %v6268 = vunpack.c.l.b16 %v6139
        %v6269 = vunpack.c.h.b16 %v6139
        %v6270 = vunpack.c.l.b16 %v6140
        %v6271 = vunpack.c.h.b16 %v6140
        %v6272 = vunpack.c.l.b16 %v6141
        %v6273 = vunpack.c.h.b16 %v6141
        %v6274 = vunpack.c.l.b16 %v6142
        %v6275 = vunpack.c.h.b16 %v6142
        %v6276 = vunpack.c.l.b16 %v6143
        %v6277 = vunpack.c.h.b16 %v6143
        %v6278 = vunpack.c.l.b16 %v6144
        %v6279 = vunpack.c.h.b16 %v6144
        %v6280 = vpack.c.b16 %v6218, %v6216
        %v6281 = vpack.c.b16 %v6219, %v6217
        %v6282 = vpack.c.b16 %v6222, %v6220
        %v6283 = vpack.c.b16 %v6223, %v6221
        %v6284 = vpack.c.b16 %v6226, %v6224
        %v6285 = vpack.c.b16 %v6227, %v6225
        %v6286 = vpack.c.b16 %v6230, %v6228
        %v6287 = vpack.c.b16 %v6231, %v6229
        %v6288 = vpack.c.b16 %v6234, %v6232
        %v6289 = vpack.c.b16 %v6235, %v6233
        %v6290 = vpack.c.b16 %v6238, %v6236
        %v6291 = vpack.c.b16 %v6239, %v6237
        %v6292 = vpack.c.b16 %v6242, %v6240
        %v6293 = vpack.c.b16 %v6243, %v6241
        %v6294 = vpack.c.b16 %v6246, %v6244
        %v6295 = vpack.c.b16 %v6247, %v6245
        %v6296 = vpack.c.b16 %v6250, %v6248
        %v6297 = vpack.c.b16 %v6251, %v6249
        %v6298 = vpack.c.b16 %v6254, %v6252
        %v6299 = vpack.c.b16 %v6255, %v6253
        %v6300 = vpack.c.b16 %v6258, %v6256
        %v6301 = vpack.c.b16 %v6259, %v6257
        %v6302 = vpack.c.b16 %v6262, %v6260
        %v6303 = vpack.c.b16 %v6263, %v6261
        %v6304 = vpack.c.b16 %v6266, %v6264
        %v6305 = vpack.c.b16 %v6267, %v6265
        %v6306 = vpack.c.b16 %v6270, %v6268
        %v6307 = vpack.c.b16 %v6271, %v6269
        %v6308 = vpack.c.b16 %v6274, %v6272
        %v6309 = vpack.c.b16 %v6275, %v6273
        %v6310 = vpack.c.b16 %v6278, %v6276
        %v6311 = vpack.c.b16 %v6279, %v6277
        %6344 = vmatprep.subr.bf16.mxu0 %v6295
        %6345 = vmatpush1.bf16.msra.mxu0 %v6294
        %6346 = vmatprep.subr.bf16.mxu0 %v6293
        %6347 = vmatpush1.bf16.msra.mxu0 %v6292
        %6348 = vmatprep.subr.bf16.mxu0 %v6291
        %6349 = vmatpush1.bf16.msra.mxu0 %v6290
        %6350 = vmatprep.subr.bf16.mxu0 %v6289
        %6351 = vmatpush1.bf16.msra.mxu0 %v6288
        %6352 = vmatprep.subr.bf16.mxu0 %v6287
        %6353 = vmatpush1.bf16.msra.mxu0 %v6286
        %6354 = vmatprep.subr.bf16.mxu0 %v6285
        %6355 = vmatpush1.bf16.msra.mxu0 %v6284
        %6356 = vmatprep.subr.bf16.mxu0 %v6283
        %6357 = vmatpush1.bf16.msra.mxu0 %v6282
        %6358 = vmatprep.subr.bf16.mxu0 %v6281
        %6359 = vmatpush1.bf16.msra.mxu0 %v6280
        %6360 = vmatprep.subr.bf16.mxu0 %v6311
        %6361 = vmatpush2.bf16.msra.mxu0 %v6310
        %6362 = vmatprep.subr.bf16.mxu0 %v6309
        %6363 = vmatpush2.bf16.msra.mxu0 %v6308
        %6364 = vmatprep.subr.bf16.mxu0 %v6307
        %6365 = vmatpush2.bf16.msra.mxu0 %v6306
        %6366 = vmatprep.subr.bf16.mxu0 %v6305
        %6367 = vmatpush2.bf16.msra.mxu0 %v6304
        %6368 = vmatprep.subr.bf16.mxu0 %v6303
        %6369 = vmatpush2.bf16.msra.mxu0 %v6302
        %6370 = vmatprep.subr.bf16.mxu0 %v6301
        %6371 = vmatpush2.bf16.msra.mxu0 %v6300
        %6372 = vmatprep.subr.bf16.mxu0 %v6299
        %6373 = vmatpush2.bf16.msra.mxu0 %v6298
        %6374 = vmatprep.subr.bf16.mxu0 %v6297
        %6375 = vmatpush2.bf16.msra.mxu0 %v6296
        %6376 = vmatprep.mubr.bf16.mxu0 %v6181
        %6377 = vmatmul.mubr.bf16.gmra.mxu0 %v6169
        %v6378 = vpop.f32.mrf.mxu0
        %v6379 = vadd.f32 0.0, %v6378
        %v6380 = vpop.f32.mrf.mxu0
        %v6381 = vadd.f32 0.0, %v6380
        %v6382 = vpop.f32.mrf.mxu0
        %v6383 = vadd.f32 0.0, %v6382
        %v6384 = vpop.f32.mrf.mxu0
        %v6385 = vadd.f32 0.0, %v6384
        %6386 = vdwg.mxu0
        %v6421 = vunpack.c.l.b16 %v6079
        %v6422 = vunpack.c.h.b16 %v6079
        %v6423 = vunpack.c.l.b16 %v6080
        %v6424 = vunpack.c.h.b16 %v6080
        %v6425 = vunpack.c.l.b16 %v6081
        %v6426 = vunpack.c.h.b16 %v6081
        %v6427 = vunpack.c.l.b16 %v6082
        %v6428 = vunpack.c.h.b16 %v6082
        %v6429 = vunpack.c.l.b16 %v6083
        %v6430 = vunpack.c.h.b16 %v6083
        %v6431 = vunpack.c.l.b16 %v6084
        %v6432 = vunpack.c.h.b16 %v6084
        %v6433 = vunpack.c.l.b16 %v6085
        %v6434 = vunpack.c.h.b16 %v6085
        %v6435 = vunpack.c.l.b16 %v6086
        %v6436 = vunpack.c.h.b16 %v6086
        %v6437 = vunpack.c.l.b16 %v6087
        %v6438 = vunpack.c.h.b16 %v6087
        %v6439 = vunpack.c.l.b16 %v6088
        %v6440 = vunpack.c.h.b16 %v6088
        %v6441 = vunpack.c.l.b16 %v6089
        %v6442 = vunpack.c.h.b16 %v6089
        %v6443 = vunpack.c.l.b16 %v6090
        %v6444 = vunpack.c.h.b16 %v6090
        %v6445 = vunpack.c.l.b16 %v6091
        %v6446 = vunpack.c.h.b16 %v6091
        %v6447 = vunpack.c.l.b16 %v6092
        %v6448 = vunpack.c.h.b16 %v6092
        %v6449 = vunpack.c.l.b16 %v6093
        %v6450 = vunpack.c.h.b16 %v6093
        %v6451 = vunpack.c.l.b16 %v6094
        %v6452 = vunpack.c.h.b16 %v6094
        %v6453 = vunpack.c.l.b16 %v6095
        %v6454 = vunpack.c.h.b16 %v6095
        %v6455 = vunpack.c.l.b16 %v6096
        %v6456 = vunpack.c.h.b16 %v6096
        %v6457 = vunpack.c.l.b16 %v6097
        %v6458 = vunpack.c.h.b16 %v6097
        %v6459 = vunpack.c.l.b16 %v6098
        %v6460 = vunpack.c.h.b16 %v6098
        %v6461 = vunpack.c.l.b16 %v6099
        %v6462 = vunpack.c.h.b16 %v6099
        %v6463 = vunpack.c.l.b16 %v6100
        %v6464 = vunpack.c.h.b16 %v6100
        %v6465 = vunpack.c.l.b16 %v6101
        %v6466 = vunpack.c.h.b16 %v6101
        %v6467 = vunpack.c.l.b16 %v6102
        %v6468 = vunpack.c.h.b16 %v6102
        %v6469 = vunpack.c.l.b16 %v6103
        %v6470 = vunpack.c.h.b16 %v6103
        %v6471 = vunpack.c.l.b16 %v6104
        %v6472 = vunpack.c.h.b16 %v6104
        %v6473 = vunpack.c.l.b16 %v6105
        %v6474 = vunpack.c.h.b16 %v6105
        %v6475 = vunpack.c.l.b16 %v6106
        %v6476 = vunpack.c.h.b16 %v6106
        %v6477 = vunpack.c.l.b16 %v6107
        %v6478 = vunpack.c.h.b16 %v6107
        %v6479 = vunpack.c.l.b16 %v6108
        %v6480 = vunpack.c.h.b16 %v6108
        %v6481 = vunpack.c.l.b16 %v6109
        %v6482 = vunpack.c.h.b16 %v6109
        %v6483 = vunpack.c.l.b16 %v6110
        %v6484 = vunpack.c.h.b16 %v6110
        %v6485 = vpack.c.b16 %v6423, %v6421
        %v6486 = vpack.c.b16 %v6424, %v6422
        %v6487 = vpack.c.b16 %v6427, %v6425
        %v6488 = vpack.c.b16 %v6428, %v6426
        %v6489 = vpack.c.b16 %v6431, %v6429
        %v6490 = vpack.c.b16 %v6432, %v6430
        %v6491 = vpack.c.b16 %v6435, %v6433
        %v6492 = vpack.c.b16 %v6436, %v6434
        %v6493 = vpack.c.b16 %v6439, %v6437
        %v6494 = vpack.c.b16 %v6440, %v6438
        %v6495 = vpack.c.b16 %v6443, %v6441
        %v6496 = vpack.c.b16 %v6444, %v6442
        %v6497 = vpack.c.b16 %v6447, %v6445
        %v6498 = vpack.c.b16 %v6448, %v6446
        %v6499 = vpack.c.b16 %v6451, %v6449
        %v6500 = vpack.c.b16 %v6452, %v6450
        %v6501 = vpack.c.b16 %v6455, %v6453
        %v6502 = vpack.c.b16 %v6456, %v6454
        %v6503 = vpack.c.b16 %v6459, %v6457
        %v6504 = vpack.c.b16 %v6460, %v6458
        %v6505 = vpack.c.b16 %v6463, %v6461
        %v6506 = vpack.c.b16 %v6464, %v6462
        %v6507 = vpack.c.b16 %v6467, %v6465
        %v6508 = vpack.c.b16 %v6468, %v6466
        %v6509 = vpack.c.b16 %v6471, %v6469
        %v6510 = vpack.c.b16 %v6472, %v6470
        %v6511 = vpack.c.b16 %v6475, %v6473
        %v6512 = vpack.c.b16 %v6476, %v6474
        %v6513 = vpack.c.b16 %v6479, %v6477
        %v6514 = vpack.c.b16 %v6480, %v6478
        %v6515 = vpack.c.b16 %v6483, %v6481
        %v6516 = vpack.c.b16 %v6484, %v6482
        %6549 = vmatprep.subr.bf16.mxu0 %v6500
        %6550 = vmatpush1.bf16.msra.mxu0 %v6499
        %6551 = vmatprep.subr.bf16.mxu0 %v6498
        %6552 = vmatpush1.bf16.msra.mxu0 %v6497
        %6553 = vmatprep.subr.bf16.mxu0 %v6496
        %6554 = vmatpush1.bf16.msra.mxu0 %v6495
        %6555 = vmatprep.subr.bf16.mxu0 %v6494
        %6556 = vmatpush1.bf16.msra.mxu0 %v6493
        %6557 = vmatprep.subr.bf16.mxu0 %v6492
        %6558 = vmatpush1.bf16.msra.mxu0 %v6491
        %6559 = vmatprep.subr.bf16.mxu0 %v6490
        %6560 = vmatpush1.bf16.msra.mxu0 %v6489
        %6561 = vmatprep.subr.bf16.mxu0 %v6488
        %6562 = vmatpush1.bf16.msra.mxu0 %v6487
        %6563 = vmatprep.subr.bf16.mxu0 %v6486
        %6564 = vmatpush1.bf16.msra.mxu0 %v6485
        %6565 = vmatprep.subr.bf16.mxu0 %v6516
        %6566 = vmatpush2.bf16.msra.mxu0 %v6515
        %6567 = vmatprep.subr.bf16.mxu0 %v6514
        %6568 = vmatpush2.bf16.msra.mxu0 %v6513
        %6569 = vmatprep.subr.bf16.mxu0 %v6512
        %6570 = vmatpush2.bf16.msra.mxu0 %v6511
        %6571 = vmatprep.subr.bf16.mxu0 %v6510
        %6572 = vmatpush2.bf16.msra.mxu0 %v6509
        %6573 = vmatprep.subr.bf16.mxu0 %v6508
        %6574 = vmatpush2.bf16.msra.mxu0 %v6507
        %6575 = vmatprep.subr.bf16.mxu0 %v6506
        %6576 = vmatpush2.bf16.msra.mxu0 %v6505
        %6577 = vmatprep.subr.bf16.mxu0 %v6504
        %6578 = vmatpush2.bf16.msra.mxu0 %v6503
        %6579 = vmatprep.subr.bf16.mxu0 %v6502
        %6580 = vmatpush2.bf16.msra.mxu0 %v6501
        %6581 = vmatprep.mubr.bf16.mxu0 %v6155
        %6582 = vmatmul.mubr.bf16.gmra.mxu0 %v6154
        %v6583 = vpop.f32.mrf.mxu0
        %v6584 = vadd.f32 %v6379, %v6583
        %v6585 = vpop.f32.mrf.mxu0
        %v6586 = vadd.f32 %v6381, %v6585
        %v6587 = vpop.f32.mrf.mxu0
        %v6588 = vadd.f32 %v6383, %v6587
        %v6589 = vpop.f32.mrf.mxu0
        %v6590 = vadd.f32 %v6385, %v6589
        %6591 = vdwg.mxu0
        %v6592 = vld [vmem:[#allocation2] sm:$0xee]
        %s6593 = scalar_lea.vmem [#allocation16], 512
        %v6594 = vld [vmem:[%s6593] sm:$0xff]
        %v6595 = vld [vmem:[%s6593 + $0x8] sm:$0xff]
        %v6596 = vld [vmem:[%s6593 + $0x10] sm:$0xff]
        %v6597 = vld [vmem:[%s6593 + $0x18] sm:$0xff]
        %v6598 = vld [vmem:[%s6593 + $0x20] sm:$0xff]
        %v6599 = vld [vmem:[%s6593 + $0x28] sm:$0xff]
        %v6600 = vld [vmem:[%s6593 + $0x30] sm:$0xff]
        %v6601 = vld [vmem:[%s6593 + $0x38] sm:$0xff]
        %v6602 = vld [vmem:[%s6593 + $0x40] sm:$0xff]
        %v6603 = vld [vmem:[%s6593 + $0x48] sm:$0xff]
        %v6604 = vld [vmem:[%s6593 + $0x50] sm:$0xff]
        %v6605 = vld [vmem:[%s6593 + $0x58] sm:$0xff]
        %v6606 = vld [vmem:[%s6593 + $0x60] sm:$0xff]
        %v6607 = vld [vmem:[%s6593 + $0x68] sm:$0xff]
        %v6608 = vld [vmem:[%s6593 + $0x70] sm:$0xff]
        %v6609 = vld [vmem:[%s6593 + $0x78] sm:$0xff]
        %v6610 = vld [vmem:[%s6593 + $0x80] sm:$0xff]
        %v6611 = vld [vmem:[%s6593 + $0x88] sm:$0xff]
        %v6612 = vld [vmem:[%s6593 + $0x90] sm:$0xff]
        %v6613 = vld [vmem:[%s6593 + $0x98] sm:$0xff]
        %v6614 = vld [vmem:[%s6593 + $0xa0] sm:$0xff]
        %v6615 = vld [vmem:[%s6593 + $0xa8] sm:$0xff]
        %v6616 = vld [vmem:[%s6593 + $0xb0] sm:$0xff]
        %v6617 = vld [vmem:[%s6593 + $0xb8] sm:$0xff]
        %v6618 = vld [vmem:[%s6593 + $0xc0] sm:$0xff]
        %v6619 = vld [vmem:[%s6593 + $0xc8] sm:$0xff]
        %v6620 = vld [vmem:[%s6593 + $0xd0] sm:$0xff]
        %v6621 = vld [vmem:[%s6593 + $0xd8] sm:$0xff]
        %v6622 = vld [vmem:[%s6593 + $0xe0] sm:$0xff]
        %v6623 = vld [vmem:[%s6593 + $0xe8] sm:$0xff]
        %v6624 = vld [vmem:[%s6593 + $0xf0] sm:$0xff]
        %v6625 = vld [vmem:[%s6593 + $0xf8] sm:$0xff]
        %v6627 = vunpack.c.l.b16 %v6592
        %v6628 = vunpack.c.h.b16 %v6592
        %v6629 = vpack.c.b16 %v6150, %v6627
        %v6630 = vpack.c.b16 %v6151, %v6628
        %v6631 = vrot.slane %v6629, 1
        %v6632 = vrot.slane %v6156, 1
        %v6633 = vsel %vm1162, %v6631, %v6632
        %v6634 = vrot.slane %v6630, 1
        %v6635 = vrot.slane %v6157, 1
        %v6636 = vsel %vm1162, %v6634, %v6635
        %v6671 = vunpack.c.l.b16 %v6594
        %v6672 = vunpack.c.h.b16 %v6594
        %v6673 = vunpack.c.l.b16 %v6595
        %v6674 = vunpack.c.h.b16 %v6595
        %v6675 = vunpack.c.l.b16 %v6596
        %v6676 = vunpack.c.h.b16 %v6596
        %v6677 = vunpack.c.l.b16 %v6597
        %v6678 = vunpack.c.h.b16 %v6597
        %v6679 = vunpack.c.l.b16 %v6598
        %v6680 = vunpack.c.h.b16 %v6598
        %v6681 = vunpack.c.l.b16 %v6599
        %v6682 = vunpack.c.h.b16 %v6599
        %v6683 = vunpack.c.l.b16 %v6600
        %v6684 = vunpack.c.h.b16 %v6600
        %v6685 = vunpack.c.l.b16 %v6601
        %v6686 = vunpack.c.h.b16 %v6601
        %v6687 = vunpack.c.l.b16 %v6602
        %v6688 = vunpack.c.h.b16 %v6602
        %v6689 = vunpack.c.l.b16 %v6603
        %v6690 = vunpack.c.h.b16 %v6603
        %v6691 = vunpack.c.l.b16 %v6604
        %v6692 = vunpack.c.h.b16 %v6604
        %v6693 = vunpack.c.l.b16 %v6605
        %v6694 = vunpack.c.h.b16 %v6605
        %v6695 = vunpack.c.l.b16 %v6606
        %v6696 = vunpack.c.h.b16 %v6606
        %v6697 = vunpack.c.l.b16 %v6607
        %v6698 = vunpack.c.h.b16 %v6607
        %v6699 = vunpack.c.l.b16 %v6608
        %v6700 = vunpack.c.h.b16 %v6608
        %v6701 = vunpack.c.l.b16 %v6609
        %v6702 = vunpack.c.h.b16 %v6609
        %v6703 = vunpack.c.l.b16 %v6610
        %v6704 = vunpack.c.h.b16 %v6610
        %v6705 = vunpack.c.l.b16 %v6611
        %v6706 = vunpack.c.h.b16 %v6611
        %v6707 = vunpack.c.l.b16 %v6612
        %v6708 = vunpack.c.h.b16 %v6612
        %v6709 = vunpack.c.l.b16 %v6613
        %v6710 = vunpack.c.h.b16 %v6613
        %v6711 = vunpack.c.l.b16 %v6614
        %v6712 = vunpack.c.h.b16 %v6614
        %v6713 = vunpack.c.l.b16 %v6615
        %v6714 = vunpack.c.h.b16 %v6615
        %v6715 = vunpack.c.l.b16 %v6616
        %v6716 = vunpack.c.h.b16 %v6616
        %v6717 = vunpack.c.l.b16 %v6617
        %v6718 = vunpack.c.h.b16 %v6617
        %v6719 = vunpack.c.l.b16 %v6618
        %v6720 = vunpack.c.h.b16 %v6618
        %v6721 = vunpack.c.l.b16 %v6619
        %v6722 = vunpack.c.h.b16 %v6619
        %v6723 = vunpack.c.l.b16 %v6620
        %v6724 = vunpack.c.h.b16 %v6620
        %v6725 = vunpack.c.l.b16 %v6621
        %v6726 = vunpack.c.h.b16 %v6621
        %v6727 = vunpack.c.l.b16 %v6622
        %v6728 = vunpack.c.h.b16 %v6622
        %v6729 = vunpack.c.l.b16 %v6623
        %v6730 = vunpack.c.h.b16 %v6623
        %v6731 = vunpack.c.l.b16 %v6624
        %v6732 = vunpack.c.h.b16 %v6624
        %v6733 = vunpack.c.l.b16 %v6625
        %v6734 = vunpack.c.h.b16 %v6625
        %v6735 = vpack.c.b16 %v6673, %v6671
        %v6736 = vpack.c.b16 %v6674, %v6672
        %v6737 = vpack.c.b16 %v6677, %v6675
        %v6738 = vpack.c.b16 %v6678, %v6676
        %v6739 = vpack.c.b16 %v6681, %v6679
        %v6740 = vpack.c.b16 %v6682, %v6680
        %v6741 = vpack.c.b16 %v6685, %v6683
        %v6742 = vpack.c.b16 %v6686, %v6684
        %v6743 = vpack.c.b16 %v6689, %v6687
        %v6744 = vpack.c.b16 %v6690, %v6688
        %v6745 = vpack.c.b16 %v6693, %v6691
        %v6746 = vpack.c.b16 %v6694, %v6692
        %v6747 = vpack.c.b16 %v6697, %v6695
        %v6748 = vpack.c.b16 %v6698, %v6696
        %v6749 = vpack.c.b16 %v6701, %v6699
        %v6750 = vpack.c.b16 %v6702, %v6700
        %v6751 = vpack.c.b16 %v6705, %v6703
        %v6752 = vpack.c.b16 %v6706, %v6704
        %v6753 = vpack.c.b16 %v6709, %v6707
        %v6754 = vpack.c.b16 %v6710, %v6708
        %v6755 = vpack.c.b16 %v6713, %v6711
        %v6756 = vpack.c.b16 %v6714, %v6712
        %v6757 = vpack.c.b16 %v6717, %v6715
        %v6758 = vpack.c.b16 %v6718, %v6716
        %v6759 = vpack.c.b16 %v6721, %v6719
        %v6760 = vpack.c.b16 %v6722, %v6720
        %v6761 = vpack.c.b16 %v6725, %v6723
        %v6762 = vpack.c.b16 %v6726, %v6724
        %v6763 = vpack.c.b16 %v6729, %v6727
        %v6764 = vpack.c.b16 %v6730, %v6728
        %v6765 = vpack.c.b16 %v6733, %v6731
        %v6766 = vpack.c.b16 %v6734, %v6732
        %6799 = vmatprep.subr.bf16.mxu0 %v6750
        %6800 = vmatpush1.bf16.msra.mxu0 %v6749
        %6801 = vmatprep.subr.bf16.mxu0 %v6748
        %6802 = vmatpush1.bf16.msra.mxu0 %v6747
        %6803 = vmatprep.subr.bf16.mxu0 %v6746
        %6804 = vmatpush1.bf16.msra.mxu0 %v6745
        %6805 = vmatprep.subr.bf16.mxu0 %v6744
        %6806 = vmatpush1.bf16.msra.mxu0 %v6743
        %6807 = vmatprep.subr.bf16.mxu0 %v6742
        %6808 = vmatpush1.bf16.msra.mxu0 %v6741
        %6809 = vmatprep.subr.bf16.mxu0 %v6740
        %6810 = vmatpush1.bf16.msra.mxu0 %v6739
        %6811 = vmatprep.subr.bf16.mxu0 %v6738
        %6812 = vmatpush1.bf16.msra.mxu0 %v6737
        %6813 = vmatprep.subr.bf16.mxu0 %v6736
        %6814 = vmatpush1.bf16.msra.mxu0 %v6735
        %6815 = vmatprep.subr.bf16.mxu0 %v6766
        %6816 = vmatpush2.bf16.msra.mxu0 %v6765
        %6817 = vmatprep.subr.bf16.mxu0 %v6764
        %6818 = vmatpush2.bf16.msra.mxu0 %v6763
        %6819 = vmatprep.subr.bf16.mxu0 %v6762
        %6820 = vmatpush2.bf16.msra.mxu0 %v6761
        %6821 = vmatprep.subr.bf16.mxu0 %v6760
        %6822 = vmatpush2.bf16.msra.mxu0 %v6759
        %6823 = vmatprep.subr.bf16.mxu0 %v6758
        %6824 = vmatpush2.bf16.msra.mxu0 %v6757
        %6825 = vmatprep.subr.bf16.mxu0 %v6756
        %6826 = vmatpush2.bf16.msra.mxu0 %v6755
        %6827 = vmatprep.subr.bf16.mxu0 %v6754
        %6828 = vmatpush2.bf16.msra.mxu0 %v6753
        %6829 = vmatprep.subr.bf16.mxu0 %v6752
        %6830 = vmatpush2.bf16.msra.mxu0 %v6751
        %6831 = vmatprep.mubr.bf16.mxu0 %v6636
        %6832 = vmatmul.mubr.bf16.gmra.mxu0 %v6633
        %v6833 = vpop.f32.mrf.mxu0
        %v6834 = vadd.f32 0.0, %v6833
        %v6835 = vpop.f32.mrf.mxu0
        %v6836 = vadd.f32 0.0, %v6835
        %v6837 = vpop.f32.mrf.mxu0
        %v6838 = vadd.f32 0.0, %v6837
        %v6839 = vpop.f32.mrf.mxu0
        %v6840 = vadd.f32 0.0, %v6839
        %6841 = vdwg.mxu0
        %v6842 = vadd.f32 %v6584, %v6834
        %v6843 = vadd.f32 %v6586, %v6836
        %v6844 = vadd.f32 %v6588, %v6838
        %v6845 = vadd.f32 %v6590, %v6840
        %v6846 = vld [vmem:[%s18] sm:$0x3]
        %v6848 = vlaneseq
        %v6849 = vshrl.u32 %v6848, 7
        %v6850 = vsub.s32 0, %v6849
        %v6851 = vrot.slane %v6846, %v6850
        %v6852 = vlaneseq
        %v6853 = vshrl.u32 %v6852, 7
        %v6854 = vsub.s32 1, %v6853
        %v6855 = vrot.slane %v6846, %v6854
        %v6858 = vadd.f32 %v6842, %v6851
        %v6859 = vadd.f32 %v6843, %v6855
        %v6860 = vadd.f32 %v6844, %v6851
        %v6861 = vadd.f32 %v6845, %v6855
        %v6862 = vmax.f32 %v6858, 0.0
        %v6863 = vmax.f32 %v6859, 0.0
        %v6864 = vmax.f32 %v6860, 0.0
        %v6865 = vmax.f32 %v6861, 0.0
        %v6866 = vpack.c.bf16 %v6864, %v6862
        %v6867 = vpack.c.bf16 %v6865, %v6863
        %v6870 = vunpack.c.l.b16 %v6866
        %v6871 = vunpack.c.l.b16 %v6867
        %v6872 = vunpack.c.h.b16 %v6866
        %v6873 = vunpack.c.h.b16 %v6867
        %v6874 = vpack.c.b16 %v6871, %v6870
        %v6875 = vpack.c.b16 %v6873, %v6872
        %v6877 = vshrl.u32 %v6874, 16
        %v6879 = vrot.slane %v6877, 7
        %v6880 = vshll.u32 %v6874, 16
        %v6882 = vor.u32 %v6879, %v6880
        %v6883 = vrot.slane %v6879, 4
        %v6885 = vshrl.u32 %v6875, 16
        %v6887 = vrot.slane %v6885, 7
        %v6888 = vshll.u32 %v6875, 16
        %v6890 = vor.u32 %v6887, %v6888
        %v6891 = vsel %vm939, %v6883, %v6890
        %v6892 = vrot.slane %v6887, 4
        %v6896 = vsel %vm1789, %v6882, %v6077
        %6897 = vst [vmem:[#allocation2] sm:$0xff] %v6896
        %6898 = vst [vmem:[#allocation2 + $0x8] sm:$0xff] %v6891
        %v6899 = vld [vmem:[#allocation2 + $0x10] sm:$0x11]
        %v6900 = vsel %vm918, %v6892, %v6899
        %6901 = vst [vmem:[#allocation2 + $0x10] sm:$0x11] %v6900
        %v6902 = vld [vmem:[#allocation2] sm:$0xff]
        %v6903 = vld [vmem:[#allocation2 + $0x8] sm:$0xff]
        %v6904 = vld [vmem:[%s19] sm:$0xff]
        %v6905 = vld [vmem:[%s19 + $0x8] sm:$0xff]
        %v6906 = vld [vmem:[%s19 + $0x10] sm:$0xff]
        %v6907 = vld [vmem:[%s19 + $0x18] sm:$0xff]
        %v6908 = vld [vmem:[%s19 + $0x20] sm:$0xff]
        %v6909 = vld [vmem:[%s19 + $0x28] sm:$0xff]
        %v6910 = vld [vmem:[%s19 + $0x30] sm:$0xff]
        %v6911 = vld [vmem:[%s19 + $0x38] sm:$0xff]
        %v6912 = vld [vmem:[%s19 + $0x40] sm:$0xff]
        %v6913 = vld [vmem:[%s19 + $0x48] sm:$0xff]
        %v6914 = vld [vmem:[%s19 + $0x50] sm:$0xff]
        %v6915 = vld [vmem:[%s19 + $0x58] sm:$0xff]
        %v6916 = vld [vmem:[%s19 + $0x60] sm:$0xff]
        %v6917 = vld [vmem:[%s19 + $0x68] sm:$0xff]
        %v6918 = vld [vmem:[%s19 + $0x70] sm:$0xff]
        %v6919 = vld [vmem:[%s19 + $0x78] sm:$0xff]
        %v6920 = vld [vmem:[%s19 + $0x80] sm:$0xff]
        %v6921 = vld [vmem:[%s19 + $0x88] sm:$0xff]
        %v6922 = vld [vmem:[%s19 + $0x90] sm:$0xff]
        %v6923 = vld [vmem:[%s19 + $0x98] sm:$0xff]
        %v6924 = vld [vmem:[%s19 + $0xa0] sm:$0xff]
        %v6925 = vld [vmem:[%s19 + $0xa8] sm:$0xff]
        %v6926 = vld [vmem:[%s19 + $0xb0] sm:$0xff]
        %v6927 = vld [vmem:[%s19 + $0xb8] sm:$0xff]
        %v6928 = vld [vmem:[%s19 + $0xc0] sm:$0xff]
        %v6929 = vld [vmem:[%s19 + $0xc8] sm:$0xff]
        %v6930 = vld [vmem:[%s19 + $0xd0] sm:$0xff]
        %v6931 = vld [vmem:[%s19 + $0xd8] sm:$0xff]
        %v6932 = vld [vmem:[%s19 + $0xe0] sm:$0xff]
        %v6933 = vld [vmem:[%s19 + $0xe8] sm:$0xff]
        %v6934 = vld [vmem:[%s19 + $0xf0] sm:$0xff]
        %v6935 = vld [vmem:[%s19 + $0xf8] sm:$0xff]
        %v6936 = vld [vmem:[#allocation2 + $0x10] sm:$0x11]
        %s6937 = scalar_lea.vmem %s19, 256
        %v6938 = vld [vmem:[%s6937] sm:$0xff]
        %v6939 = vld [vmem:[%s6937 + $0x8] sm:$0xff]
        %v6940 = vld [vmem:[%s6937 + $0x10] sm:$0xff]
        %v6941 = vld [vmem:[%s6937 + $0x18] sm:$0xff]
        %v6942 = vld [vmem:[%s6937 + $0x20] sm:$0xff]
        %v6943 = vld [vmem:[%s6937 + $0x28] sm:$0xff]
        %v6944 = vld [vmem:[%s6937 + $0x30] sm:$0xff]
        %v6945 = vld [vmem:[%s6937 + $0x38] sm:$0xff]
        %v6946 = vld [vmem:[%s6937 + $0x40] sm:$0xff]
        %v6947 = vld [vmem:[%s6937 + $0x48] sm:$0xff]
        %v6948 = vld [vmem:[%s6937 + $0x50] sm:$0xff]
        %v6949 = vld [vmem:[%s6937 + $0x58] sm:$0xff]
        %v6950 = vld [vmem:[%s6937 + $0x60] sm:$0xff]
        %v6951 = vld [vmem:[%s6937 + $0x68] sm:$0xff]
        %v6952 = vld [vmem:[%s6937 + $0x70] sm:$0xff]
        %v6953 = vld [vmem:[%s6937 + $0x78] sm:$0xff]
        %v6954 = vld [vmem:[%s6937 + $0x80] sm:$0xff]
        %v6955 = vld [vmem:[%s6937 + $0x88] sm:$0xff]
        %v6956 = vld [vmem:[%s6937 + $0x90] sm:$0xff]
        %v6957 = vld [vmem:[%s6937 + $0x98] sm:$0xff]
        %v6958 = vld [vmem:[%s6937 + $0xa0] sm:$0xff]
        %v6959 = vld [vmem:[%s6937 + $0xa8] sm:$0xff]
        %v6960 = vld [vmem:[%s6937 + $0xb0] sm:$0xff]
        %v6961 = vld [vmem:[%s6937 + $0xb8] sm:$0xff]
        %v6962 = vld [vmem:[%s6937 + $0xc0] sm:$0xff]
        %v6963 = vld [vmem:[%s6937 + $0xc8] sm:$0xff]
        %v6964 = vld [vmem:[%s6937 + $0xd0] sm:$0xff]
        %v6965 = vld [vmem:[%s6937 + $0xd8] sm:$0xff]
        %v6966 = vld [vmem:[%s6937 + $0xe0] sm:$0xff]
        %v6967 = vld [vmem:[%s6937 + $0xe8] sm:$0xff]
        %v6968 = vld [vmem:[%s6937 + $0xf0] sm:$0xff]
        %v6969 = vld [vmem:[%s6937 + $0xf8] sm:$0xff]
        %v6973 = vunpack.c.l.b16 %v6902
        %v6974 = vunpack.c.h.b16 %v6902
        %v6975 = vunpack.c.l.b16 %v6903
        %v6976 = vunpack.c.h.b16 %v6903
        %v6977 = vunpack.c.l.b16 %v6936
        %v6978 = vunpack.c.h.b16 %v6936
        %v6979 = vpack.c.b16 %v6975, %v6973
        %v6980 = vpack.c.b16 %v6976, %v6974
        %v6981 = vpack.c.b16 %v6977, %v6977
        %v6982 = vpack.c.b16 %v6978, %v6978
        %v6984 = vshrl.u32 %v6979, 16
        %v6986 = vshll.u32 %v6979, 16
        %v6988 = vrot.slane %v6986, 1
        %v6989 = vor.u32 %v6984, %v6988
        %v6991 = vshll.u32 %v6981, 16
        %v6993 = vrot.slane %v6991, 1
        %v6994 = vsel %vm1000, %v6989, %v6993
        %v6996 = vshrl.u32 %v6980, 16
        %v6998 = vshll.u32 %v6980, 16
        %v7000 = vrot.slane %v6998, 1
        %v7001 = vor.u32 %v6996, %v7000
        %v7003 = vshll.u32 %v6982, 16
        %v7005 = vrot.slane %v7003, 1
        %v7006 = vsel %vm1000, %v7001, %v7005
        %v7041 = vunpack.c.l.b16 %v6938
        %v7042 = vunpack.c.h.b16 %v6938
        %v7043 = vunpack.c.l.b16 %v6939
        %v7044 = vunpack.c.h.b16 %v6939
        %v7045 = vunpack.c.l.b16 %v6940
        %v7046 = vunpack.c.h.b16 %v6940
        %v7047 = vunpack.c.l.b16 %v6941
        %v7048 = vunpack.c.h.b16 %v6941
        %v7049 = vunpack.c.l.b16 %v6942
        %v7050 = vunpack.c.h.b16 %v6942
        %v7051 = vunpack.c.l.b16 %v6943
        %v7052 = vunpack.c.h.b16 %v6943
        %v7053 = vunpack.c.l.b16 %v6944
        %v7054 = vunpack.c.h.b16 %v6944
        %v7055 = vunpack.c.l.b16 %v6945
        %v7056 = vunpack.c.h.b16 %v6945
        %v7057 = vunpack.c.l.b16 %v6946
        %v7058 = vunpack.c.h.b16 %v6946
        %v7059 = vunpack.c.l.b16 %v6947
        %v7060 = vunpack.c.h.b16 %v6947
        %v7061 = vunpack.c.l.b16 %v6948
        %v7062 = vunpack.c.h.b16 %v6948
        %v7063 = vunpack.c.l.b16 %v6949
        %v7064 = vunpack.c.h.b16 %v6949
        %v7065 = vunpack.c.l.b16 %v6950
        %v7066 = vunpack.c.h.b16 %v6950
        %v7067 = vunpack.c.l.b16 %v6951
        %v7068 = vunpack.c.h.b16 %v6951
        %v7069 = vunpack.c.l.b16 %v6952
        %v7070 = vunpack.c.h.b16 %v6952
        %v7071 = vunpack.c.l.b16 %v6953
        %v7072 = vunpack.c.h.b16 %v6953
        %v7073 = vunpack.c.l.b16 %v6954
        %v7074 = vunpack.c.h.b16 %v6954
        %v7075 = vunpack.c.l.b16 %v6955
        %v7076 = vunpack.c.h.b16 %v6955
        %v7077 = vunpack.c.l.b16 %v6956
        %v7078 = vunpack.c.h.b16 %v6956
        %v7079 = vunpack.c.l.b16 %v6957
        %v7080 = vunpack.c.h.b16 %v6957
        %v7081 = vunpack.c.l.b16 %v6958
        %v7082 = vunpack.c.h.b16 %v6958
        %v7083 = vunpack.c.l.b16 %v6959
        %v7084 = vunpack.c.h.b16 %v6959
        %v7085 = vunpack.c.l.b16 %v6960
        %v7086 = vunpack.c.h.b16 %v6960
        %v7087 = vunpack.c.l.b16 %v6961
        %v7088 = vunpack.c.h.b16 %v6961
        %v7089 = vunpack.c.l.b16 %v6962
        %v7090 = vunpack.c.h.b16 %v6962
        %v7091 = vunpack.c.l.b16 %v6963
        %v7092 = vunpack.c.h.b16 %v6963
        %v7093 = vunpack.c.l.b16 %v6964
        %v7094 = vunpack.c.h.b16 %v6964
        %v7095 = vunpack.c.l.b16 %v6965
        %v7096 = vunpack.c.h.b16 %v6965
        %v7097 = vunpack.c.l.b16 %v6966
        %v7098 = vunpack.c.h.b16 %v6966
        %v7099 = vunpack.c.l.b16 %v6967
        %v7100 = vunpack.c.h.b16 %v6967
        %v7101 = vunpack.c.l.b16 %v6968
        %v7102 = vunpack.c.h.b16 %v6968
        %v7103 = vunpack.c.l.b16 %v6969
        %v7104 = vunpack.c.h.b16 %v6969
        %v7105 = vpack.c.b16 %v7043, %v7041
        %v7106 = vpack.c.b16 %v7044, %v7042
        %v7107 = vpack.c.b16 %v7047, %v7045
        %v7108 = vpack.c.b16 %v7048, %v7046
        %v7109 = vpack.c.b16 %v7051, %v7049
        %v7110 = vpack.c.b16 %v7052, %v7050
        %v7111 = vpack.c.b16 %v7055, %v7053
        %v7112 = vpack.c.b16 %v7056, %v7054
        %v7113 = vpack.c.b16 %v7059, %v7057
        %v7114 = vpack.c.b16 %v7060, %v7058
        %v7115 = vpack.c.b16 %v7063, %v7061
        %v7116 = vpack.c.b16 %v7064, %v7062
        %v7117 = vpack.c.b16 %v7067, %v7065
        %v7118 = vpack.c.b16 %v7068, %v7066
        %v7119 = vpack.c.b16 %v7071, %v7069
        %v7120 = vpack.c.b16 %v7072, %v7070
        %v7121 = vpack.c.b16 %v7075, %v7073
        %v7122 = vpack.c.b16 %v7076, %v7074
        %v7123 = vpack.c.b16 %v7079, %v7077
        %v7124 = vpack.c.b16 %v7080, %v7078
        %v7125 = vpack.c.b16 %v7083, %v7081
        %v7126 = vpack.c.b16 %v7084, %v7082
        %v7127 = vpack.c.b16 %v7087, %v7085
        %v7128 = vpack.c.b16 %v7088, %v7086
        %v7129 = vpack.c.b16 %v7091, %v7089
        %v7130 = vpack.c.b16 %v7092, %v7090
        %v7131 = vpack.c.b16 %v7095, %v7093
        %v7132 = vpack.c.b16 %v7096, %v7094
        %v7133 = vpack.c.b16 %v7099, %v7097
        %v7134 = vpack.c.b16 %v7100, %v7098
        %v7135 = vpack.c.b16 %v7103, %v7101
        %v7136 = vpack.c.b16 %v7104, %v7102
        %7169 = vmatprep.subr.bf16.mxu0 %v7120
        %7170 = vmatpush1.bf16.msra.mxu0 %v7119
        %7171 = vmatprep.subr.bf16.mxu0 %v7118
        %7172 = vmatpush1.bf16.msra.mxu0 %v7117
        %7173 = vmatprep.subr.bf16.mxu0 %v7116
        %7174 = vmatpush1.bf16.msra.mxu0 %v7115
        %7175 = vmatprep.subr.bf16.mxu0 %v7114
        %7176 = vmatpush1.bf16.msra.mxu0 %v7113
        %7177 = vmatprep.subr.bf16.mxu0 %v7112
        %7178 = vmatpush1.bf16.msra.mxu0 %v7111
        %7179 = vmatprep.subr.bf16.mxu0 %v7110
        %7180 = vmatpush1.bf16.msra.mxu0 %v7109
        %7181 = vmatprep.subr.bf16.mxu0 %v7108
        %7182 = vmatpush1.bf16.msra.mxu0 %v7107
        %7183 = vmatprep.subr.bf16.mxu0 %v7106
        %7184 = vmatpush1.bf16.msra.mxu0 %v7105
        %7185 = vmatprep.subr.bf16.mxu0 %v7136
        %7186 = vmatpush2.bf16.msra.mxu0 %v7135
        %7187 = vmatprep.subr.bf16.mxu0 %v7134
        %7188 = vmatpush2.bf16.msra.mxu0 %v7133
        %7189 = vmatprep.subr.bf16.mxu0 %v7132
        %7190 = vmatpush2.bf16.msra.mxu0 %v7131
        %7191 = vmatprep.subr.bf16.mxu0 %v7130
        %7192 = vmatpush2.bf16.msra.mxu0 %v7129
        %7193 = vmatprep.subr.bf16.mxu0 %v7128
        %7194 = vmatpush2.bf16.msra.mxu0 %v7127
        %7195 = vmatprep.subr.bf16.mxu0 %v7126
        %7196 = vmatpush2.bf16.msra.mxu0 %v7125
        %7197 = vmatprep.subr.bf16.mxu0 %v7124
        %7198 = vmatpush2.bf16.msra.mxu0 %v7123
        %7199 = vmatprep.subr.bf16.mxu0 %v7122
        %7200 = vmatpush2.bf16.msra.mxu0 %v7121
        %7201 = vmatprep.mubr.bf16.mxu0 %v7006
        %7202 = vmatmul.mubr.bf16.gmra.mxu0 %v6994
        %v7203 = vpop.f32.mrf.mxu0
        %v7204 = vadd.f32 0.0, %v7203
        %v7205 = vpop.f32.mrf.mxu0
        %v7206 = vadd.f32 0.0, %v7205
        %v7207 = vpop.f32.mrf.mxu0
        %v7208 = vadd.f32 0.0, %v7207
        %v7209 = vpop.f32.mrf.mxu0
        %v7210 = vadd.f32 0.0, %v7209
        %7211 = vdwg.mxu0
        %v7246 = vunpack.c.l.b16 %v6904
        %v7247 = vunpack.c.h.b16 %v6904
        %v7248 = vunpack.c.l.b16 %v6905
        %v7249 = vunpack.c.h.b16 %v6905
        %v7250 = vunpack.c.l.b16 %v6906
        %v7251 = vunpack.c.h.b16 %v6906
        %v7252 = vunpack.c.l.b16 %v6907
        %v7253 = vunpack.c.h.b16 %v6907
        %v7254 = vunpack.c.l.b16 %v6908
        %v7255 = vunpack.c.h.b16 %v6908
        %v7256 = vunpack.c.l.b16 %v6909
        %v7257 = vunpack.c.h.b16 %v6909
        %v7258 = vunpack.c.l.b16 %v6910
        %v7259 = vunpack.c.h.b16 %v6910
        %v7260 = vunpack.c.l.b16 %v6911
        %v7261 = vunpack.c.h.b16 %v6911
        %v7262 = vunpack.c.l.b16 %v6912
        %v7263 = vunpack.c.h.b16 %v6912
        %v7264 = vunpack.c.l.b16 %v6913
        %v7265 = vunpack.c.h.b16 %v6913
        %v7266 = vunpack.c.l.b16 %v6914
        %v7267 = vunpack.c.h.b16 %v6914
        %v7268 = vunpack.c.l.b16 %v6915
        %v7269 = vunpack.c.h.b16 %v6915
        %v7270 = vunpack.c.l.b16 %v6916
        %v7271 = vunpack.c.h.b16 %v6916
        %v7272 = vunpack.c.l.b16 %v6917
        %v7273 = vunpack.c.h.b16 %v6917
        %v7274 = vunpack.c.l.b16 %v6918
        %v7275 = vunpack.c.h.b16 %v6918
        %v7276 = vunpack.c.l.b16 %v6919
        %v7277 = vunpack.c.h.b16 %v6919
        %v7278 = vunpack.c.l.b16 %v6920
        %v7279 = vunpack.c.h.b16 %v6920
        %v7280 = vunpack.c.l.b16 %v6921
        %v7281 = vunpack.c.h.b16 %v6921
        %v7282 = vunpack.c.l.b16 %v6922
        %v7283 = vunpack.c.h.b16 %v6922
        %v7284 = vunpack.c.l.b16 %v6923
        %v7285 = vunpack.c.h.b16 %v6923
        %v7286 = vunpack.c.l.b16 %v6924
        %v7287 = vunpack.c.h.b16 %v6924
        %v7288 = vunpack.c.l.b16 %v6925
        %v7289 = vunpack.c.h.b16 %v6925
        %v7290 = vunpack.c.l.b16 %v6926
        %v7291 = vunpack.c.h.b16 %v6926
        %v7292 = vunpack.c.l.b16 %v6927
        %v7293 = vunpack.c.h.b16 %v6927
        %v7294 = vunpack.c.l.b16 %v6928
        %v7295 = vunpack.c.h.b16 %v6928
        %v7296 = vunpack.c.l.b16 %v6929
        %v7297 = vunpack.c.h.b16 %v6929
        %v7298 = vunpack.c.l.b16 %v6930
        %v7299 = vunpack.c.h.b16 %v6930
        %v7300 = vunpack.c.l.b16 %v6931
        %v7301 = vunpack.c.h.b16 %v6931
        %v7302 = vunpack.c.l.b16 %v6932
        %v7303 = vunpack.c.h.b16 %v6932
        %v7304 = vunpack.c.l.b16 %v6933
        %v7305 = vunpack.c.h.b16 %v6933
        %v7306 = vunpack.c.l.b16 %v6934
        %v7307 = vunpack.c.h.b16 %v6934
        %v7308 = vunpack.c.l.b16 %v6935
        %v7309 = vunpack.c.h.b16 %v6935
        %v7310 = vpack.c.b16 %v7248, %v7246
        %v7311 = vpack.c.b16 %v7249, %v7247
        %v7312 = vpack.c.b16 %v7252, %v7250
        %v7313 = vpack.c.b16 %v7253, %v7251
        %v7314 = vpack.c.b16 %v7256, %v7254
        %v7315 = vpack.c.b16 %v7257, %v7255
        %v7316 = vpack.c.b16 %v7260, %v7258
        %v7317 = vpack.c.b16 %v7261, %v7259
        %v7318 = vpack.c.b16 %v7264, %v7262
        %v7319 = vpack.c.b16 %v7265, %v7263
        %v7320 = vpack.c.b16 %v7268, %v7266
        %v7321 = vpack.c.b16 %v7269, %v7267
        %v7322 = vpack.c.b16 %v7272, %v7270
        %v7323 = vpack.c.b16 %v7273, %v7271
        %v7324 = vpack.c.b16 %v7276, %v7274
        %v7325 = vpack.c.b16 %v7277, %v7275
        %v7326 = vpack.c.b16 %v7280, %v7278
        %v7327 = vpack.c.b16 %v7281, %v7279
        %v7328 = vpack.c.b16 %v7284, %v7282
        %v7329 = vpack.c.b16 %v7285, %v7283
        %v7330 = vpack.c.b16 %v7288, %v7286
        %v7331 = vpack.c.b16 %v7289, %v7287
        %v7332 = vpack.c.b16 %v7292, %v7290
        %v7333 = vpack.c.b16 %v7293, %v7291
        %v7334 = vpack.c.b16 %v7296, %v7294
        %v7335 = vpack.c.b16 %v7297, %v7295
        %v7336 = vpack.c.b16 %v7300, %v7298
        %v7337 = vpack.c.b16 %v7301, %v7299
        %v7338 = vpack.c.b16 %v7304, %v7302
        %v7339 = vpack.c.b16 %v7305, %v7303
        %v7340 = vpack.c.b16 %v7308, %v7306
        %v7341 = vpack.c.b16 %v7309, %v7307
        %7374 = vmatprep.subr.bf16.mxu0 %v7325
        %7375 = vmatpush1.bf16.msra.mxu0 %v7324
        %7376 = vmatprep.subr.bf16.mxu0 %v7323
        %7377 = vmatpush1.bf16.msra.mxu0 %v7322
        %7378 = vmatprep.subr.bf16.mxu0 %v7321
        %7379 = vmatpush1.bf16.msra.mxu0 %v7320
        %7380 = vmatprep.subr.bf16.mxu0 %v7319
        %7381 = vmatpush1.bf16.msra.mxu0 %v7318
        %7382 = vmatprep.subr.bf16.mxu0 %v7317
        %7383 = vmatpush1.bf16.msra.mxu0 %v7316
        %7384 = vmatprep.subr.bf16.mxu0 %v7315
        %7385 = vmatpush1.bf16.msra.mxu0 %v7314
        %7386 = vmatprep.subr.bf16.mxu0 %v7313
        %7387 = vmatpush1.bf16.msra.mxu0 %v7312
        %7388 = vmatprep.subr.bf16.mxu0 %v7311
        %7389 = vmatpush1.bf16.msra.mxu0 %v7310
        %7390 = vmatprep.subr.bf16.mxu0 %v7341
        %7391 = vmatpush2.bf16.msra.mxu0 %v7340
        %7392 = vmatprep.subr.bf16.mxu0 %v7339
        %7393 = vmatpush2.bf16.msra.mxu0 %v7338
        %7394 = vmatprep.subr.bf16.mxu0 %v7337
        %7395 = vmatpush2.bf16.msra.mxu0 %v7336
        %7396 = vmatprep.subr.bf16.mxu0 %v7335
        %7397 = vmatpush2.bf16.msra.mxu0 %v7334
        %7398 = vmatprep.subr.bf16.mxu0 %v7333
        %7399 = vmatpush2.bf16.msra.mxu0 %v7332
        %7400 = vmatprep.subr.bf16.mxu0 %v7331
        %7401 = vmatpush2.bf16.msra.mxu0 %v7330
        %7402 = vmatprep.subr.bf16.mxu0 %v7329
        %7403 = vmatpush2.bf16.msra.mxu0 %v7328
        %7404 = vmatprep.subr.bf16.mxu0 %v7327
        %7405 = vmatpush2.bf16.msra.mxu0 %v7326
        %7406 = vmatprep.mubr.bf16.mxu0 %v6980
        %7407 = vmatmul.mubr.bf16.gmra.mxu0 %v6979
        %v7408 = vpop.f32.mrf.mxu0
        %v7409 = vadd.f32 %v7204, %v7408
        %v7410 = vpop.f32.mrf.mxu0
        %v7411 = vadd.f32 %v7206, %v7410
        %v7412 = vpop.f32.mrf.mxu0
        %v7413 = vadd.f32 %v7208, %v7412
        %v7414 = vpop.f32.mrf.mxu0
        %v7415 = vadd.f32 %v7210, %v7414
        %7416 = vdwg.mxu0
        %v7417 = vld [vmem:[#allocation2] sm:$0xee]
        %s7418 = scalar_lea.vmem %s19, 512
        %v7419 = vld [vmem:[%s7418] sm:$0xff]
        %v7420 = vld [vmem:[%s7418 + $0x8] sm:$0xff]
        %v7421 = vld [vmem:[%s7418 + $0x10] sm:$0xff]
        %v7422 = vld [vmem:[%s7418 + $0x18] sm:$0xff]
        %v7423 = vld [vmem:[%s7418 + $0x20] sm:$0xff]
        %v7424 = vld [vmem:[%s7418 + $0x28] sm:$0xff]
        %v7425 = vld [vmem:[%s7418 + $0x30] sm:$0xff]
        %v7426 = vld [vmem:[%s7418 + $0x38] sm:$0xff]
        %v7427 = vld [vmem:[%s7418 + $0x40] sm:$0xff]
        %v7428 = vld [vmem:[%s7418 + $0x48] sm:$0xff]
        %v7429 = vld [vmem:[%s7418 + $0x50] sm:$0xff]
        %v7430 = vld [vmem:[%s7418 + $0x58] sm:$0xff]
        %v7431 = vld [vmem:[%s7418 + $0x60] sm:$0xff]
        %v7432 = vld [vmem:[%s7418 + $0x68] sm:$0xff]
        %v7433 = vld [vmem:[%s7418 + $0x70] sm:$0xff]
        %v7434 = vld [vmem:[%s7418 + $0x78] sm:$0xff]
        %v7435 = vld [vmem:[%s7418 + $0x80] sm:$0xff]
        %v7436 = vld [vmem:[%s7418 + $0x88] sm:$0xff]
        %v7437 = vld [vmem:[%s7418 + $0x90] sm:$0xff]
        %v7438 = vld [vmem:[%s7418 + $0x98] sm:$0xff]
        %v7439 = vld [vmem:[%s7418 + $0xa0] sm:$0xff]
        %v7440 = vld [vmem:[%s7418 + $0xa8] sm:$0xff]
        %v7441 = vld [vmem:[%s7418 + $0xb0] sm:$0xff]
        %v7442 = vld [vmem:[%s7418 + $0xb8] sm:$0xff]
        %v7443 = vld [vmem:[%s7418 + $0xc0] sm:$0xff]
        %v7444 = vld [vmem:[%s7418 + $0xc8] sm:$0xff]
        %v7445 = vld [vmem:[%s7418 + $0xd0] sm:$0xff]
        %v7446 = vld [vmem:[%s7418 + $0xd8] sm:$0xff]
        %v7447 = vld [vmem:[%s7418 + $0xe0] sm:$0xff]
        %v7448 = vld [vmem:[%s7418 + $0xe8] sm:$0xff]
        %v7449 = vld [vmem:[%s7418 + $0xf0] sm:$0xff]
        %v7450 = vld [vmem:[%s7418 + $0xf8] sm:$0xff]
        %v7452 = vunpack.c.l.b16 %v7417
        %v7453 = vunpack.c.h.b16 %v7417
        %v7454 = vpack.c.b16 %v6975, %v7452
        %v7455 = vpack.c.b16 %v6976, %v7453
        %v7456 = vrot.slane %v7454, 1
        %v7457 = vrot.slane %v6981, 1
        %v7458 = vsel %vm1162, %v7456, %v7457
        %v7459 = vrot.slane %v7455, 1
        %v7460 = vrot.slane %v6982, 1
        %v7461 = vsel %vm1162, %v7459, %v7460
        %v7496 = vunpack.c.l.b16 %v7419
        %v7497 = vunpack.c.h.b16 %v7419
        %v7498 = vunpack.c.l.b16 %v7420
        %v7499 = vunpack.c.h.b16 %v7420
        %v7500 = vunpack.c.l.b16 %v7421
        %v7501 = vunpack.c.h.b16 %v7421
        %v7502 = vunpack.c.l.b16 %v7422
        %v7503 = vunpack.c.h.b16 %v7422
        %v7504 = vunpack.c.l.b16 %v7423
        %v7505 = vunpack.c.h.b16 %v7423
        %v7506 = vunpack.c.l.b16 %v7424
        %v7507 = vunpack.c.h.b16 %v7424
        %v7508 = vunpack.c.l.b16 %v7425
        %v7509 = vunpack.c.h.b16 %v7425
        %v7510 = vunpack.c.l.b16 %v7426
        %v7511 = vunpack.c.h.b16 %v7426
        %v7512 = vunpack.c.l.b16 %v7427
        %v7513 = vunpack.c.h.b16 %v7427
        %v7514 = vunpack.c.l.b16 %v7428
        %v7515 = vunpack.c.h.b16 %v7428
        %v7516 = vunpack.c.l.b16 %v7429
        %v7517 = vunpack.c.h.b16 %v7429
        %v7518 = vunpack.c.l.b16 %v7430
        %v7519 = vunpack.c.h.b16 %v7430
        %v7520 = vunpack.c.l.b16 %v7431
        %v7521 = vunpack.c.h.b16 %v7431
        %v7522 = vunpack.c.l.b16 %v7432
        %v7523 = vunpack.c.h.b16 %v7432
        %v7524 = vunpack.c.l.b16 %v7433
        %v7525 = vunpack.c.h.b16 %v7433
        %v7526 = vunpack.c.l.b16 %v7434
        %v7527 = vunpack.c.h.b16 %v7434
        %v7528 = vunpack.c.l.b16 %v7435
        %v7529 = vunpack.c.h.b16 %v7435
        %v7530 = vunpack.c.l.b16 %v7436
        %v7531 = vunpack.c.h.b16 %v7436
        %v7532 = vunpack.c.l.b16 %v7437
        %v7533 = vunpack.c.h.b16 %v7437
        %v7534 = vunpack.c.l.b16 %v7438
        %v7535 = vunpack.c.h.b16 %v7438
        %v7536 = vunpack.c.l.b16 %v7439
        %v7537 = vunpack.c.h.b16 %v7439
        %v7538 = vunpack.c.l.b16 %v7440
        %v7539 = vunpack.c.h.b16 %v7440
        %v7540 = vunpack.c.l.b16 %v7441
        %v7541 = vunpack.c.h.b16 %v7441
        %v7542 = vunpack.c.l.b16 %v7442
        %v7543 = vunpack.c.h.b16 %v7442
        %v7544 = vunpack.c.l.b16 %v7443
        %v7545 = vunpack.c.h.b16 %v7443
        %v7546 = vunpack.c.l.b16 %v7444
        %v7547 = vunpack.c.h.b16 %v7444
        %v7548 = vunpack.c.l.b16 %v7445
        %v7549 = vunpack.c.h.b16 %v7445
        %v7550 = vunpack.c.l.b16 %v7446
        %v7551 = vunpack.c.h.b16 %v7446
        %v7552 = vunpack.c.l.b16 %v7447
        %v7553 = vunpack.c.h.b16 %v7447
        %v7554 = vunpack.c.l.b16 %v7448
        %v7555 = vunpack.c.h.b16 %v7448
        %v7556 = vunpack.c.l.b16 %v7449
        %v7557 = vunpack.c.h.b16 %v7449
        %v7558 = vunpack.c.l.b16 %v7450
        %v7559 = vunpack.c.h.b16 %v7450
        %v7560 = vpack.c.b16 %v7498, %v7496
        %v7561 = vpack.c.b16 %v7499, %v7497
        %v7562 = vpack.c.b16 %v7502, %v7500
        %v7563 = vpack.c.b16 %v7503, %v7501
        %v7564 = vpack.c.b16 %v7506, %v7504
        %v7565 = vpack.c.b16 %v7507, %v7505
        %v7566 = vpack.c.b16 %v7510, %v7508
        %v7567 = vpack.c.b16 %v7511, %v7509
        %v7568 = vpack.c.b16 %v7514, %v7512
        %v7569 = vpack.c.b16 %v7515, %v7513
        %v7570 = vpack.c.b16 %v7518, %v7516
        %v7571 = vpack.c.b16 %v7519, %v7517
        %v7572 = vpack.c.b16 %v7522, %v7520
        %v7573 = vpack.c.b16 %v7523, %v7521
        %v7574 = vpack.c.b16 %v7526, %v7524
        %v7575 = vpack.c.b16 %v7527, %v7525
        %v7576 = vpack.c.b16 %v7530, %v7528
        %v7577 = vpack.c.b16 %v7531, %v7529
        %v7578 = vpack.c.b16 %v7534, %v7532
        %v7579 = vpack.c.b16 %v7535, %v7533
        %v7580 = vpack.c.b16 %v7538, %v7536
        %v7581 = vpack.c.b16 %v7539, %v7537
        %v7582 = vpack.c.b16 %v7542, %v7540
        %v7583 = vpack.c.b16 %v7543, %v7541
        %v7584 = vpack.c.b16 %v7546, %v7544
        %v7585 = vpack.c.b16 %v7547, %v7545
        %v7586 = vpack.c.b16 %v7550, %v7548
        %v7587 = vpack.c.b16 %v7551, %v7549
        %v7588 = vpack.c.b16 %v7554, %v7552
        %v7589 = vpack.c.b16 %v7555, %v7553
        %v7590 = vpack.c.b16 %v7558, %v7556
        %v7591 = vpack.c.b16 %v7559, %v7557
        %7624 = vmatprep.subr.bf16.mxu0 %v7575
        %7625 = vmatpush1.bf16.msra.mxu0 %v7574
        %7626 = vmatprep.subr.bf16.mxu0 %v7573
        %7627 = vmatpush1.bf16.msra.mxu0 %v7572
        %7628 = vmatprep.subr.bf16.mxu0 %v7571
        %7629 = vmatpush1.bf16.msra.mxu0 %v7570
        %7630 = vmatprep.subr.bf16.mxu0 %v7569
        %7631 = vmatpush1.bf16.msra.mxu0 %v7568
        %7632 = vmatprep.subr.bf16.mxu0 %v7567
        %7633 = vmatpush1.bf16.msra.mxu0 %v7566
        %7634 = vmatprep.subr.bf16.mxu0 %v7565
        %7635 = vmatpush1.bf16.msra.mxu0 %v7564
        %7636 = vmatprep.subr.bf16.mxu0 %v7563
        %7637 = vmatpush1.bf16.msra.mxu0 %v7562
        %7638 = vmatprep.subr.bf16.mxu0 %v7561
        %7639 = vmatpush1.bf16.msra.mxu0 %v7560
        %7640 = vmatprep.subr.bf16.mxu0 %v7591
        %7641 = vmatpush2.bf16.msra.mxu0 %v7590
        %7642 = vmatprep.subr.bf16.mxu0 %v7589
        %7643 = vmatpush2.bf16.msra.mxu0 %v7588
        %7644 = vmatprep.subr.bf16.mxu0 %v7587
        %7645 = vmatpush2.bf16.msra.mxu0 %v7586
        %7646 = vmatprep.subr.bf16.mxu0 %v7585
        %7647 = vmatpush2.bf16.msra.mxu0 %v7584
        %7648 = vmatprep.subr.bf16.mxu0 %v7583
        %7649 = vmatpush2.bf16.msra.mxu0 %v7582
        %7650 = vmatprep.subr.bf16.mxu0 %v7581
        %7651 = vmatpush2.bf16.msra.mxu0 %v7580
        %7652 = vmatprep.subr.bf16.mxu0 %v7579
        %7653 = vmatpush2.bf16.msra.mxu0 %v7578
        %7654 = vmatprep.subr.bf16.mxu0 %v7577
        %7655 = vmatpush2.bf16.msra.mxu0 %v7576
        %7656 = vmatprep.mubr.bf16.mxu0 %v7461
        %7657 = vmatmul.mubr.bf16.gmra.mxu0 %v7458
        %v7658 = vpop.f32.mrf.mxu0
        %v7659 = vadd.f32 0.0, %v7658
        %v7660 = vpop.f32.mrf.mxu0
        %v7661 = vadd.f32 0.0, %v7660
        %v7662 = vpop.f32.mrf.mxu0
        %v7663 = vadd.f32 0.0, %v7662
        %v7664 = vpop.f32.mrf.mxu0
        %v7665 = vadd.f32 0.0, %v7664
        %7666 = vdwg.mxu0
        %v7667 = vadd.f32 %v7409, %v7659
        %v7668 = vadd.f32 %v7411, %v7661
        %v7669 = vadd.f32 %v7413, %v7663
        %v7670 = vadd.f32 %v7415, %v7665
        %v7671 = vld [vmem:[%s20] sm:$0x3]
        %v7673 = vlaneseq
        %v7674 = vshrl.u32 %v7673, 7
        %v7675 = vsub.s32 0, %v7674
        %v7676 = vrot.slane %v7671, %v7675
        %v7677 = vlaneseq
        %v7678 = vshrl.u32 %v7677, 7
        %v7679 = vsub.s32 1, %v7678
        %v7680 = vrot.slane %v7671, %v7679
        %v7683 = vadd.f32 %v7667, %v7676
        %v7684 = vadd.f32 %v7668, %v7680
        %v7685 = vadd.f32 %v7669, %v7676
        %v7686 = vadd.f32 %v7670, %v7680
        %v7687 = vadd.f32 %v7683, %v4387
        %v7688 = vadd.f32 %v7684, %v4388
        %v7689 = vadd.f32 %v7685, %v4389
        %v7690 = vadd.f32 %v7686, %v4390
        %v7691 = vmax.f32 %v7687, 0.0
        %v7692 = vmax.f32 %v7688, 0.0
        %v7693 = vmax.f32 %v7689, 0.0
        %v7694 = vmax.f32 %v7690, 0.0
        %v7695 = vpack.c.bf16 %v7693, %v7691
        %v7696 = vpack.c.bf16 %v7694, %v7692
        %v7699 = vunpack.c.l.b16 %v7695
        %v7700 = vunpack.c.l.b16 %v7696
        %v7701 = vunpack.c.h.b16 %v7695
        %v7702 = vunpack.c.h.b16 %v7696
        %v7703 = vpack.c.b16 %v7700, %v7699
        %v7704 = vpack.c.b16 %v7702, %v7701
        %v7706 = vshrl.u32 %v7703, 16
        %v7708 = vrot.slane %v7706, 7
        %v7709 = vshll.u32 %v7703, 16
        %v7711 = vor.u32 %v7708, %v7709
        %v7712 = vrot.slane %v7708, 4
        %v7714 = vshrl.u32 %v7704, 16
        %v7716 = vrot.slane %v7714, 7
        %v7717 = vshll.u32 %v7704, 16
        %v7719 = vor.u32 %v7716, %v7717
        %v7720 = vsel %vm939, %v7712, %v7719
        %v7721 = vrot.slane %v7716, 4
        %v7725 = vsel %vm1789, %v7711, %v6902
        %7726 = vst [vmem:[#allocation2] sm:$0xff] %v7725
        %7727 = vst [vmem:[#allocation2 + $0x8] sm:$0xff] %v7720
        %v7728 = vld [vmem:[#allocation2 + $0x10] sm:$0x11]
        %v7729 = vsel %vm918, %v7721, %v7728
        %7730 = vst [vmem:[#allocation2 + $0x10] sm:$0x11] %v7729
        %v7731 = vld [vmem:[#allocation2] sm:$0xff]
        %v7732 = vld [vmem:[#allocation2 + $0x8] sm:$0xff]
        %v7733 = vld [vmem:[#allocation17] sm:$0xf]
        %v7734 = vld [vmem:[#allocation17 + $0x4] sm:$0xf]
        %v7735 = vld [vmem:[#allocation17 + $0x8] sm:$0xf]
        %v7736 = vld [vmem:[#allocation17 + $0xc] sm:$0xf]
        %v7737 = vld [vmem:[#allocation17 + $0x10] sm:$0xf]
        %v7738 = vld [vmem:[#allocation17 + $0x14] sm:$0xf]
        %v7739 = vld [vmem:[#allocation17 + $0x18] sm:$0xf]
        %v7740 = vld [vmem:[#allocation17 + $0x1c] sm:$0xf]
        %v7741 = vld [vmem:[#allocation17 + $0x20] sm:$0xf]
        %v7742 = vld [vmem:[#allocation17 + $0x24] sm:$0xf]
        %v7743 = vld [vmem:[#allocation17 + $0x28] sm:$0xf]
        %v7744 = vld [vmem:[#allocation17 + $0x2c] sm:$0xf]
        %v7745 = vld [vmem:[#allocation17 + $0x30] sm:$0xf]
        %v7746 = vld [vmem:[#allocation17 + $0x34] sm:$0xf]
        %v7747 = vld [vmem:[#allocation17 + $0x38] sm:$0xf]
        %v7748 = vld [vmem:[#allocation17 + $0x3c] sm:$0xf]
        %v7749 = vld [vmem:[#allocation17 + $0x40] sm:$0xf]
        %v7750 = vld [vmem:[#allocation17 + $0x44] sm:$0xf]
        %v7751 = vld [vmem:[#allocation17 + $0x48] sm:$0xf]
        %v7752 = vld [vmem:[#allocation17 + $0x4c] sm:$0xf]
        %v7753 = vld [vmem:[#allocation17 + $0x50] sm:$0xf]
        %v7754 = vld [vmem:[#allocation17 + $0x54] sm:$0xf]
        %v7755 = vld [vmem:[#allocation17 + $0x58] sm:$0xf]
        %v7756 = vld [vmem:[#allocation17 + $0x5c] sm:$0xf]
        %v7757 = vld [vmem:[#allocation17 + $0x60] sm:$0xf]
        %v7758 = vld [vmem:[#allocation17 + $0x64] sm:$0xf]
        %v7759 = vld [vmem:[#allocation17 + $0x68] sm:$0xf]
        %v7760 = vld [vmem:[#allocation17 + $0x6c] sm:$0xf]
        %v7761 = vld [vmem:[#allocation17 + $0x70] sm:$0xf]
        %v7762 = vld [vmem:[#allocation17 + $0x74] sm:$0xf]
        %v7763 = vld [vmem:[#allocation17 + $0x78] sm:$0xf]
        %v7764 = vld [vmem:[#allocation17 + $0x7c] sm:$0xf]
        %v7765 = vld [vmem:[#allocation2 + $0x10] sm:$0x11]
        %s7766 = scalar_lea.vmem [#allocation17], 128
        %v7767 = vld [vmem:[%s7766] sm:$0xf]
        %v7768 = vld [vmem:[%s7766 + $0x4] sm:$0xf]
        %v7769 = vld [vmem:[%s7766 + $0x8] sm:$0xf]
        %v7770 = vld [vmem:[%s7766 + $0xc] sm:$0xf]
        %v7771 = vld [vmem:[%s7766 + $0x10] sm:$0xf]
        %v7772 = vld [vmem:[%s7766 + $0x14] sm:$0xf]
        %v7773 = vld [vmem:[%s7766 + $0x18] sm:$0xf]
        %v7774 = vld [vmem:[%s7766 + $0x1c] sm:$0xf]
        %v7775 = vld [vmem:[%s7766 + $0x20] sm:$0xf]
        %v7776 = vld [vmem:[%s7766 + $0x24] sm:$0xf]
        %v7777 = vld [vmem:[%s7766 + $0x28] sm:$0xf]
        %v7778 = vld [vmem:[%s7766 + $0x2c] sm:$0xf]
        %v7779 = vld [vmem:[%s7766 + $0x30] sm:$0xf]
        %v7780 = vld [vmem:[%s7766 + $0x34] sm:$0xf]
        %v7781 = vld [vmem:[%s7766 + $0x38] sm:$0xf]
        %v7782 = vld [vmem:[%s7766 + $0x3c] sm:$0xf]
        %v7783 = vld [vmem:[%s7766 + $0x40] sm:$0xf]
        %v7784 = vld [vmem:[%s7766 + $0x44] sm:$0xf]
        %v7785 = vld [vmem:[%s7766 + $0x48] sm:$0xf]
        %v7786 = vld [vmem:[%s7766 + $0x4c] sm:$0xf]
        %v7787 = vld [vmem:[%s7766 + $0x50] sm:$0xf]
        %v7788 = vld [vmem:[%s7766 + $0x54] sm:$0xf]
        %v7789 = vld [vmem:[%s7766 + $0x58] sm:$0xf]
        %v7790 = vld [vmem:[%s7766 + $0x5c] sm:$0xf]
        %v7791 = vld [vmem:[%s7766 + $0x60] sm:$0xf]
        %v7792 = vld [vmem:[%s7766 + $0x64] sm:$0xf]
        %v7793 = vld [vmem:[%s7766 + $0x68] sm:$0xf]
        %v7794 = vld [vmem:[%s7766 + $0x6c] sm:$0xf]
        %v7795 = vld [vmem:[%s7766 + $0x70] sm:$0xf]
        %v7796 = vld [vmem:[%s7766 + $0x74] sm:$0xf]
        %v7797 = vld [vmem:[%s7766 + $0x78] sm:$0xf]
        %v7798 = vld [vmem:[%s7766 + $0x7c] sm:$0xf]
        %v7802 = vunpack.c.l.b16 %v7731
        %v7803 = vunpack.c.h.b16 %v7731
        %v7804 = vunpack.c.l.b16 %v7732
        %v7805 = vunpack.c.h.b16 %v7732
        %v7806 = vunpack.c.l.b16 %v7765
        %v7807 = vunpack.c.h.b16 %v7765
        %v7808 = vpack.c.b16 %v7804, %v7802
        %v7809 = vpack.c.b16 %v7805, %v7803
        %v7810 = vpack.c.b16 %v7806, %v7806
        %v7811 = vpack.c.b16 %v7807, %v7807
        %v7813 = vshrl.u32 %v7808, 16
        %v7815 = vshll.u32 %v7808, 16
        %v7817 = vrot.slane %v7815, 1
        %v7818 = vor.u32 %v7813, %v7817
        %v7820 = vshll.u32 %v7810, 16
        %v7822 = vrot.slane %v7820, 1
        %v7823 = vsel %vm1000, %v7818, %v7822
        %v7825 = vshrl.u32 %v7809, 16
        %v7827 = vshll.u32 %v7809, 16
        %v7829 = vrot.slane %v7827, 1
        %v7830 = vor.u32 %v7825, %v7829
        %v7832 = vshll.u32 %v7811, 16
        %v7834 = vrot.slane %v7832, 1
        %v7835 = vsel %vm1000, %v7830, %v7834
        %v7870 = vunpack.c.l.b16 %v7767
        %v7871 = vunpack.c.l.b16 %v7768
        %v7872 = vunpack.c.l.b16 %v7769
        %v7873 = vunpack.c.l.b16 %v7770
        %v7874 = vunpack.c.l.b16 %v7771
        %v7875 = vunpack.c.l.b16 %v7772
        %v7876 = vunpack.c.l.b16 %v7773
        %v7877 = vunpack.c.l.b16 %v7774
        %v7878 = vunpack.c.l.b16 %v7775
        %v7879 = vunpack.c.l.b16 %v7776
        %v7880 = vunpack.c.l.b16 %v7777
        %v7881 = vunpack.c.l.b16 %v7778
        %v7882 = vunpack.c.l.b16 %v7779
        %v7883 = vunpack.c.l.b16 %v7780
        %v7884 = vunpack.c.l.b16 %v7781
        %v7885 = vunpack.c.l.b16 %v7782
        %v7886 = vunpack.c.l.b16 %v7783
        %v7887 = vunpack.c.l.b16 %v7784
        %v7888 = vunpack.c.l.b16 %v7785
        %v7889 = vunpack.c.l.b16 %v7786
        %v7890 = vunpack.c.l.b16 %v7787
        %v7891 = vunpack.c.l.b16 %v7788
        %v7892 = vunpack.c.l.b16 %v7789
        %v7893 = vunpack.c.l.b16 %v7790
        %v7894 = vunpack.c.l.b16 %v7791
        %v7895 = vunpack.c.l.b16 %v7792
        %v7896 = vunpack.c.l.b16 %v7793
        %v7897 = vunpack.c.l.b16 %v7794
        %v7898 = vunpack.c.l.b16 %v7795
        %v7899 = vunpack.c.l.b16 %v7796
        %v7900 = vunpack.c.l.b16 %v7797
        %v7901 = vunpack.c.l.b16 %v7798
        %v7902 = vpack.c.b16 %v7871, %v7870
        %v7903 = vpack.c.b16 %v7873, %v7872
        %v7904 = vpack.c.b16 %v7875, %v7874
        %v7905 = vpack.c.b16 %v7877, %v7876
        %v7906 = vpack.c.b16 %v7879, %v7878
        %v7907 = vpack.c.b16 %v7881, %v7880
        %v7908 = vpack.c.b16 %v7883, %v7882
        %v7909 = vpack.c.b16 %v7885, %v7884
        %v7910 = vpack.c.b16 %v7887, %v7886
        %v7911 = vpack.c.b16 %v7889, %v7888
        %v7912 = vpack.c.b16 %v7891, %v7890
        %v7913 = vpack.c.b16 %v7893, %v7892
        %v7914 = vpack.c.b16 %v7895, %v7894
        %v7915 = vpack.c.b16 %v7897, %v7896
        %v7916 = vpack.c.b16 %v7899, %v7898
        %v7917 = vpack.c.b16 %v7901, %v7900
        %7934 = vmatprep.subr.bf16.mxu0 0
        %7935 = vmatpush1.bf16.msra.mxu0 %v7909
        %7936 = vmatprep.subr.bf16.mxu0 0
        %7937 = vmatpush1.bf16.msra.mxu0 %v7908
        %7938 = vmatprep.subr.bf16.mxu0 0
        %7939 = vmatpush1.bf16.msra.mxu0 %v7907
        %7940 = vmatprep.subr.bf16.mxu0 0
        %7941 = vmatpush1.bf16.msra.mxu0 %v7906
        %7942 = vmatprep.subr.bf16.mxu0 0
        %7943 = vmatpush1.bf16.msra.mxu0 %v7905
        %7944 = vmatprep.subr.bf16.mxu0 0
        %7945 = vmatpush1.bf16.msra.mxu0 %v7904
        %7946 = vmatprep.subr.bf16.mxu0 0
        %7947 = vmatpush1.bf16.msra.mxu0 %v7903
        %7948 = vmatprep.subr.bf16.mxu0 0
        %7949 = vmatpush1.bf16.msra.mxu0 %v7902
        %7950 = vmatprep.subr.bf16.mxu0 0
        %7951 = vmatpush2.bf16.msra.mxu0 %v7917
        %7952 = vmatprep.subr.bf16.mxu0 0
        %7953 = vmatpush2.bf16.msra.mxu0 %v7916
        %7954 = vmatprep.subr.bf16.mxu0 0
        %7955 = vmatpush2.bf16.msra.mxu0 %v7915
        %7956 = vmatprep.subr.bf16.mxu0 0
        %7957 = vmatpush2.bf16.msra.mxu0 %v7914
        %7958 = vmatprep.subr.bf16.mxu0 0
        %7959 = vmatpush2.bf16.msra.mxu0 %v7913
        %7960 = vmatprep.subr.bf16.mxu0 0
        %7961 = vmatpush2.bf16.msra.mxu0 %v7912
        %7962 = vmatprep.subr.bf16.mxu0 0
        %7963 = vmatpush2.bf16.msra.mxu0 %v7911
        %7964 = vmatprep.subr.bf16.mxu0 0
        %7965 = vmatpush2.bf16.msra.mxu0 %v7910
        %7966 = vmatprep.mubr.bf16.mxu0 %v7835
        %7967 = vmatmul.mubr.bf16.gmra.mxu0 %v7823
        %v7968 = vpop.f32.mrf.mxu0
        %v7969 = vadd.f32 0.0, %v7968
        %v7970 = vpop.f32.mrf.mxu0
        %v7971 = vpop.f32.mrf.mxu0
        %v7972 = vadd.f32 0.0, %v7971
        %v7973 = vpop.f32.mrf.mxu0
        %7974 = vdwg.mxu0
        %v8009 = vunpack.c.l.b16 %v7733
        %v8010 = vunpack.c.l.b16 %v7734
        %v8011 = vunpack.c.l.b16 %v7735
        %v8012 = vunpack.c.l.b16 %v7736
        %v8013 = vunpack.c.l.b16 %v7737
        %v8014 = vunpack.c.l.b16 %v7738
        %v8015 = vunpack.c.l.b16 %v7739
        %v8016 = vunpack.c.l.b16 %v7740
        %v8017 = vunpack.c.l.b16 %v7741
        %v8018 = vunpack.c.l.b16 %v7742
        %v8019 = vunpack.c.l.b16 %v7743
        %v8020 = vunpack.c.l.b16 %v7744
        %v8021 = vunpack.c.l.b16 %v7745
        %v8022 = vunpack.c.l.b16 %v7746
        %v8023 = vunpack.c.l.b16 %v7747
        %v8024 = vunpack.c.l.b16 %v7748
        %v8025 = vunpack.c.l.b16 %v7749
        %v8026 = vunpack.c.l.b16 %v7750
        %v8027 = vunpack.c.l.b16 %v7751
        %v8028 = vunpack.c.l.b16 %v7752
        %v8029 = vunpack.c.l.b16 %v7753
        %v8030 = vunpack.c.l.b16 %v7754
        %v8031 = vunpack.c.l.b16 %v7755
        %v8032 = vunpack.c.l.b16 %v7756
        %v8033 = vunpack.c.l.b16 %v7757
        %v8034 = vunpack.c.l.b16 %v7758
        %v8035 = vunpack.c.l.b16 %v7759
        %v8036 = vunpack.c.l.b16 %v7760
        %v8037 = vunpack.c.l.b16 %v7761
        %v8038 = vunpack.c.l.b16 %v7762
        %v8039 = vunpack.c.l.b16 %v7763
        %v8040 = vunpack.c.l.b16 %v7764
        %v8041 = vpack.c.b16 %v8010, %v8009
        %v8042 = vpack.c.b16 %v8012, %v8011
        %v8043 = vpack.c.b16 %v8014, %v8013
        %v8044 = vpack.c.b16 %v8016, %v8015
        %v8045 = vpack.c.b16 %v8018, %v8017
        %v8046 = vpack.c.b16 %v8020, %v8019
        %v8047 = vpack.c.b16 %v8022, %v8021
        %v8048 = vpack.c.b16 %v8024, %v8023
        %v8049 = vpack.c.b16 %v8026, %v8025
        %v8050 = vpack.c.b16 %v8028, %v8027
        %v8051 = vpack.c.b16 %v8030, %v8029
        %v8052 = vpack.c.b16 %v8032, %v8031
        %v8053 = vpack.c.b16 %v8034, %v8033
        %v8054 = vpack.c.b16 %v8036, %v8035
        %v8055 = vpack.c.b16 %v8038, %v8037
        %v8056 = vpack.c.b16 %v8040, %v8039
        %8073 = vmatprep.subr.bf16.mxu0 0
        %8074 = vmatpush1.bf16.msra.mxu0 %v8048
        %8075 = vmatprep.subr.bf16.mxu0 0
        %8076 = vmatpush1.bf16.msra.mxu0 %v8047
        %8077 = vmatprep.subr.bf16.mxu0 0
        %8078 = vmatpush1.bf16.msra.mxu0 %v8046
        %8079 = vmatprep.subr.bf16.mxu0 0
        %8080 = vmatpush1.bf16.msra.mxu0 %v8045
        %8081 = vmatprep.subr.bf16.mxu0 0
        %8082 = vmatpush1.bf16.msra.mxu0 %v8044
        %8083 = vmatprep.subr.bf16.mxu0 0
        %8084 = vmatpush1.bf16.msra.mxu0 %v8043
        %8085 = vmatprep.subr.bf16.mxu0 0
        %8086 = vmatpush1.bf16.msra.mxu0 %v8042
        %8087 = vmatprep.subr.bf16.mxu0 0
        %8088 = vmatpush1.bf16.msra.mxu0 %v8041
        %8089 = vmatprep.subr.bf16.mxu0 0
        %8090 = vmatpush2.bf16.msra.mxu0 %v8056
        %8091 = vmatprep.subr.bf16.mxu0 0
        %8092 = vmatpush2.bf16.msra.mxu0 %v8055
        %8093 = vmatprep.subr.bf16.mxu0 0
        %8094 = vmatpush2.bf16.msra.mxu0 %v8054
        %8095 = vmatprep.subr.bf16.mxu0 0
        %8096 = vmatpush2.bf16.msra.mxu0 %v8053
        %8097 = vmatprep.subr.bf16.mxu0 0
        %8098 = vmatpush2.bf16.msra.mxu0 %v8052
        %8099 = vmatprep.subr.bf16.mxu0 0
        %8100 = vmatpush2.bf16.msra.mxu0 %v8051
        %8101 = vmatprep.subr.bf16.mxu0 0
        %8102 = vmatpush2.bf16.msra.mxu0 %v8050
        %8103 = vmatprep.subr.bf16.mxu0 0
        %8104 = vmatpush2.bf16.msra.mxu0 %v8049
        %8105 = vmatprep.mubr.bf16.mxu0 %v7809
        %8106 = vmatmul.mubr.bf16.gmra.mxu0 %v7808
        %v8107 = vpop.f32.mrf.mxu0
        %v8108 = vadd.f32 %v7969, %v8107
        %v8109 = vpop.f32.mrf.mxu0
        %v8110 = vpop.f32.mrf.mxu0
        %v8111 = vadd.f32 %v7972, %v8110
        %v8112 = vpop.f32.mrf.mxu0
        %8113 = vdwg.mxu0
        %v8114 = vld [vmem:[#allocation2] sm:$0xee]
        %s8115 = scalar_lea.vmem [#allocation17], 256
        %v8116 = vld [vmem:[%s8115] sm:$0xf]
        %v8117 = vld [vmem:[%s8115 + $0x4] sm:$0xf]
        %v8118 = vld [vmem:[%s8115 + $0x8] sm:$0xf]
        %v8119 = vld [vmem:[%s8115 + $0xc] sm:$0xf]
        %v8120 = vld [vmem:[%s8115 + $0x10] sm:$0xf]
        %v8121 = vld [vmem:[%s8115 + $0x14] sm:$0xf]
        %v8122 = vld [vmem:[%s8115 + $0x18] sm:$0xf]
        %v8123 = vld [vmem:[%s8115 + $0x1c] sm:$0xf]
        %v8124 = vld [vmem:[%s8115 + $0x20] sm:$0xf]
        %v8125 = vld [vmem:[%s8115 + $0x24] sm:$0xf]
        %v8126 = vld [vmem:[%s8115 + $0x28] sm:$0xf]
        %v8127 = vld [vmem:[%s8115 + $0x2c] sm:$0xf]
        %v8128 = vld [vmem:[%s8115 + $0x30] sm:$0xf]
        %v8129 = vld [vmem:[%s8115 + $0x34] sm:$0xf]
        %v8130 = vld [vmem:[%s8115 + $0x38] sm:$0xf]
        %v8131 = vld [vmem:[%s8115 + $0x3c] sm:$0xf]
        %v8132 = vld [vmem:[%s8115 + $0x40] sm:$0xf]
        %v8133 = vld [vmem:[%s8115 + $0x44] sm:$0xf]
        %v8134 = vld [vmem:[%s8115 + $0x48] sm:$0xf]
        %v8135 = vld [vmem:[%s8115 + $0x4c] sm:$0xf]
        %v8136 = vld [vmem:[%s8115 + $0x50] sm:$0xf]
        %v8137 = vld [vmem:[%s8115 + $0x54] sm:$0xf]
        %v8138 = vld [vmem:[%s8115 + $0x58] sm:$0xf]
        %v8139 = vld [vmem:[%s8115 + $0x5c] sm:$0xf]
        %v8140 = vld [vmem:[%s8115 + $0x60] sm:$0xf]
        %v8141 = vld [vmem:[%s8115 + $0x64] sm:$0xf]
        %v8142 = vld [vmem:[%s8115 + $0x68] sm:$0xf]
        %v8143 = vld [vmem:[%s8115 + $0x6c] sm:$0xf]
        %v8144 = vld [vmem:[%s8115 + $0x70] sm:$0xf]
        %v8145 = vld [vmem:[%s8115 + $0x74] sm:$0xf]
        %v8146 = vld [vmem:[%s8115 + $0x78] sm:$0xf]
        %v8147 = vld [vmem:[%s8115 + $0x7c] sm:$0xf]
        %v8149 = vunpack.c.l.b16 %v8114
        %v8150 = vunpack.c.h.b16 %v8114
        %v8151 = vpack.c.b16 %v7804, %v8149
        %v8152 = vpack.c.b16 %v7805, %v8150
        %v8153 = vrot.slane %v8151, 1
        %v8154 = vrot.slane %v7810, 1
        %v8155 = vsel %vm1162, %v8153, %v8154
        %v8156 = vrot.slane %v8152, 1
        %v8157 = vrot.slane %v7811, 1
        %v8158 = vsel %vm1162, %v8156, %v8157
        %v8193 = vunpack.c.l.b16 %v8116
        %v8194 = vunpack.c.l.b16 %v8117
        %v8195 = vunpack.c.l.b16 %v8118
        %v8196 = vunpack.c.l.b16 %v8119
        %v8197 = vunpack.c.l.b16 %v8120
        %v8198 = vunpack.c.l.b16 %v8121
        %v8199 = vunpack.c.l.b16 %v8122
        %v8200 = vunpack.c.l.b16 %v8123
        %v8201 = vunpack.c.l.b16 %v8124
        %v8202 = vunpack.c.l.b16 %v8125
        %v8203 = vunpack.c.l.b16 %v8126
        %v8204 = vunpack.c.l.b16 %v8127
        %v8205 = vunpack.c.l.b16 %v8128
        %v8206 = vunpack.c.l.b16 %v8129
        %v8207 = vunpack.c.l.b16 %v8130
        %v8208 = vunpack.c.l.b16 %v8131
        %v8209 = vunpack.c.l.b16 %v8132
        %v8210 = vunpack.c.l.b16 %v8133
        %v8211 = vunpack.c.l.b16 %v8134
        %v8212 = vunpack.c.l.b16 %v8135
        %v8213 = vunpack.c.l.b16 %v8136
        %v8214 = vunpack.c.l.b16 %v8137
        %v8215 = vunpack.c.l.b16 %v8138
        %v8216 = vunpack.c.l.b16 %v8139
        %v8217 = vunpack.c.l.b16 %v8140
        %v8218 = vunpack.c.l.b16 %v8141
        %v8219 = vunpack.c.l.b16 %v8142
        %v8220 = vunpack.c.l.b16 %v8143
        %v8221 = vunpack.c.l.b16 %v8144
        %v8222 = vunpack.c.l.b16 %v8145
        %v8223 = vunpack.c.l.b16 %v8146
        %v8224 = vunpack.c.l.b16 %v8147
        %v8225 = vpack.c.b16 %v8194, %v8193
        %v8226 = vpack.c.b16 %v8196, %v8195
        %v8227 = vpack.c.b16 %v8198, %v8197
        %v8228 = vpack.c.b16 %v8200, %v8199
        %v8229 = vpack.c.b16 %v8202, %v8201
        %v8230 = vpack.c.b16 %v8204, %v8203
        %v8231 = vpack.c.b16 %v8206, %v8205
        %v8232 = vpack.c.b16 %v8208, %v8207
        %v8233 = vpack.c.b16 %v8210, %v8209
        %v8234 = vpack.c.b16 %v8212, %v8211
        %v8235 = vpack.c.b16 %v8214, %v8213
        %v8236 = vpack.c.b16 %v8216, %v8215
        %v8237 = vpack.c.b16 %v8218, %v8217
        %v8238 = vpack.c.b16 %v8220, %v8219
        %v8239 = vpack.c.b16 %v8222, %v8221
        %v8240 = vpack.c.b16 %v8224, %v8223
        %8257 = vmatprep.subr.bf16.mxu0 0
        %8258 = vmatpush1.bf16.msra.mxu0 %v8232
        %8259 = vmatprep.subr.bf16.mxu0 0
        %8260 = vmatpush1.bf16.msra.mxu0 %v8231
        %8261 = vmatprep.subr.bf16.mxu0 0
        %8262 = vmatpush1.bf16.msra.mxu0 %v8230
        %8263 = vmatprep.subr.bf16.mxu0 0
        %8264 = vmatpush1.bf16.msra.mxu0 %v8229
        %8265 = vmatprep.subr.bf16.mxu0 0
        %8266 = vmatpush1.bf16.msra.mxu0 %v8228
        %8267 = vmatprep.subr.bf16.mxu0 0
        %8268 = vmatpush1.bf16.msra.mxu0 %v8227
        %8269 = vmatprep.subr.bf16.mxu0 0
        %8270 = vmatpush1.bf16.msra.mxu0 %v8226
        %8271 = vmatprep.subr.bf16.mxu0 0
        %8272 = vmatpush1.bf16.msra.mxu0 %v8225
        %8273 = vmatprep.subr.bf16.mxu0 0
        %8274 = vmatpush2.bf16.msra.mxu0 %v8240
        %8275 = vmatprep.subr.bf16.mxu0 0
        %8276 = vmatpush2.bf16.msra.mxu0 %v8239
        %8277 = vmatprep.subr.bf16.mxu0 0
        %8278 = vmatpush2.bf16.msra.mxu0 %v8238
        %8279 = vmatprep.subr.bf16.mxu0 0
        %8280 = vmatpush2.bf16.msra.mxu0 %v8237
        %8281 = vmatprep.subr.bf16.mxu0 0
        %8282 = vmatpush2.bf16.msra.mxu0 %v8236
        %8283 = vmatprep.subr.bf16.mxu0 0
        %8284 = vmatpush2.bf16.msra.mxu0 %v8235
        %8285 = vmatprep.subr.bf16.mxu0 0
        %8286 = vmatpush2.bf16.msra.mxu0 %v8234
        %8287 = vmatprep.subr.bf16.mxu0 0
        %8288 = vmatpush2.bf16.msra.mxu0 %v8233
        %8289 = vmatprep.mubr.bf16.mxu0 %v8158
        %8290 = vmatmul.mubr.bf16.gmra.mxu0 %v8155
        %v8291 = vpop.f32.mrf.mxu0
        %v8292 = vadd.f32 0.0, %v8291
        %v8293 = vpop.f32.mrf.mxu0
        %v8294 = vpop.f32.mrf.mxu0
        %v8295 = vadd.f32 0.0, %v8294
        %v8296 = vpop.f32.mrf.mxu0
        %8297 = vdwg.mxu0
        %v8298 = vadd.f32 %v8108, %v8292
        %v8299 = vadd.f32 %v8111, %v8295
        %v8300 = vld [vmem:[%s22] sm:$0x1]
        %v8302 = vlaneseq
        %v8303 = vshrl.u32 %v8302, 7
        %v8304 = vsub.s32 0, %v8303
        %v8305 = vrot.slane %v8300, %v8304
        %v8307 = vadd.f32 %v8298, %v8305
        %v8308 = vadd.f32 %v8299, %v8305
        %v8309 = vmax.f32 %v8307, 0.0
        %v8310 = vmax.f32 %v8308, 0.0
        %v8311 = vpack.c.bf16 %v8310, %v8309
        %v8312 = vld [vmem:[%s23] sm:$0xf]
        %v8313 = vld [vmem:[%s23 + $0x4] sm:$0xf]
        %v8314 = vld [vmem:[%s23 + $0x8] sm:$0xf]
        %v8315 = vld [vmem:[%s23 + $0xc] sm:$0xf]
        %v8316 = vld [vmem:[%s23 + $0x10] sm:$0xf]
        %v8317 = vld [vmem:[%s23 + $0x14] sm:$0xf]
        %v8318 = vld [vmem:[%s23 + $0x18] sm:$0xf]
        %v8319 = vld [vmem:[%s23 + $0x1c] sm:$0xf]
        %v8320 = vld [vmem:[%s23 + $0x20] sm:$0xf]
        %v8321 = vld [vmem:[%s23 + $0x24] sm:$0xf]
        %v8322 = vld [vmem:[%s23 + $0x28] sm:$0xf]
        %v8323 = vld [vmem:[%s23 + $0x2c] sm:$0xf]
        %v8324 = vld [vmem:[%s23 + $0x30] sm:$0xf]
        %v8325 = vld [vmem:[%s23 + $0x34] sm:$0xf]
        %v8326 = vld [vmem:[%s23 + $0x38] sm:$0xf]
        %v8327 = vld [vmem:[%s23 + $0x3c] sm:$0xf]
        %v8328 = vld [vmem:[%s24] sm:$0x1]
        %v8330 = vlaneseq
        %v8331 = vshrl.u32 %v8330, 7
        %v8332 = vsub.s32 0, %v8331
        %v8333 = vrot.slane %v8328, %v8332
        %v8351 = vunpack.c.l.b16 %v8312
        %v8352 = vunpack.c.l.b16 %v8313
        %v8353 = vunpack.c.l.b16 %v8314
        %v8354 = vunpack.c.l.b16 %v8315
        %v8355 = vunpack.c.l.b16 %v8316
        %v8356 = vunpack.c.l.b16 %v8317
        %v8357 = vunpack.c.l.b16 %v8318
        %v8358 = vunpack.c.l.b16 %v8319
        %v8359 = vunpack.c.l.b16 %v8320
        %v8360 = vunpack.c.l.b16 %v8321
        %v8361 = vunpack.c.l.b16 %v8322
        %v8362 = vunpack.c.l.b16 %v8323
        %v8363 = vunpack.c.l.b16 %v8324
        %v8364 = vunpack.c.l.b16 %v8325
        %v8365 = vunpack.c.l.b16 %v8326
        %v8366 = vunpack.c.l.b16 %v8327
        %v8367 = vpack.c.b16 %v8352, %v8351
        %v8368 = vpack.c.b16 %v8354, %v8353
        %v8369 = vpack.c.b16 %v8356, %v8355
        %v8370 = vpack.c.b16 %v8358, %v8357
        %v8371 = vpack.c.b16 %v8360, %v8359
        %v8372 = vpack.c.b16 %v8362, %v8361
        %v8373 = vpack.c.b16 %v8364, %v8363
        %v8374 = vpack.c.b16 %v8366, %v8365
        %8383 = vmatprep.subr.bf16.mxu0 0
        %8384 = vmatpush1.bf16.msra.mxu0 %v8374
        %8385 = vmatprep.subr.bf16.mxu0 0
        %8386 = vmatpush1.bf16.msra.mxu0 %v8373
        %8387 = vmatprep.subr.bf16.mxu0 0
        %8388 = vmatpush1.bf16.msra.mxu0 %v8372
        %8389 = vmatprep.subr.bf16.mxu0 0
        %8390 = vmatpush1.bf16.msra.mxu0 %v8371
        %8391 = vmatprep.subr.bf16.mxu0 0
        %8392 = vmatpush1.bf16.msra.mxu0 %v8370
        %8393 = vmatprep.subr.bf16.mxu0 0
        %8394 = vmatpush1.bf16.msra.mxu0 %v8369
        %8395 = vmatprep.subr.bf16.mxu0 0
        %8396 = vmatpush1.bf16.msra.mxu0 %v8368
        %8397 = vmatprep.subr.bf16.mxu0 0
        %8398 = vmatpush1.bf16.msra.mxu0 %v8367
        %8399 = vmatprep.subr.bf16.mxu0 0
        %8400 = vmatpush2.bf16.msra.mxu0 0
        %8401 = vmatprep.subr.bf16.mxu0 0
        %8402 = vmatpush2.bf16.msra.mxu0 0
        %8403 = vmatprep.subr.bf16.mxu0 0
        %8404 = vmatpush2.bf16.msra.mxu0 0
        %8405 = vmatprep.subr.bf16.mxu0 0
        %8406 = vmatpush2.bf16.msra.mxu0 0
        %8407 = vmatprep.subr.bf16.mxu0 0
        %8408 = vmatpush2.bf16.msra.mxu0 0
        %8409 = vmatprep.subr.bf16.mxu0 0
        %8410 = vmatpush2.bf16.msra.mxu0 0
        %8411 = vmatprep.subr.bf16.mxu0 0
        %8412 = vmatpush2.bf16.msra.mxu0 0
        %8413 = vmatprep.subr.bf16.mxu0 0
        %8414 = vmatpush2.bf16.msra.mxu0 0
        %8415 = vmatprep.mubr.bf16.mxu0 0
        %8416 = vmatmul.mubr.bf16.gmra.mxu0 %v8311
        %v8417 = vpop.f32.mrf.mxu0
        %v8418 = vadd.f32 %v8333, %v8417
        %v8419 = vpop.f32.mrf.mxu0
        %v8420 = vpop.f32.mrf.mxu0
        %v8421 = vadd.f32 %v8333, %v8420
        %v8422 = vpop.f32.mrf.mxu0
        %8423 = vdwg.mxu0
        %8424 = vst [vmem:[%s910] sm:$0xff] %v8418
        %8425 = vst [vmem:[%s910 + $0x8] sm:$0xff] %v8421
        %p8426 = scmp.lt.s32.totalorder %s42, 1
        %s8427 = scalar_select %p8426, %s42, 1
        %s8428 = smul.addr %s8427, 2
        %s8429 = smul.addr %s8428, 8
        %s8430 = scalar_lea.vmem %s25, %s8429
        // Predicated region
        $region161: #{_lambda_.1} parent=119 // pred_check
          %p8431 = pneg %p590
        $region162: #{_lambda_.1} parent=119 // pred_check_branch
          %8433 = sbr.rel (%p8431) target = $region164
        $region163: #{_lambda_.1} parent=119 // pred_region
          _
        $region164: #{_lambda_.1} parent=119 // pred_fallthru
          _
      $region120: #{_lambda_.1} parent=5 // pred_fallthru
        _
      %p8434 = scmp.le.s32.totalorder 2, %s37
      // Predicated region
      $region165: #{_lambda_.1} parent=5 // pred_check
        %p8435 = pneg %p8434
      $region166: #{_lambda_.1} parent=5 // pred_check_branch
        %8437 = sbr.rel (%p8435) target = $region168
      $region167: #{_lambda_.1} parent=5 // pred_region
        %s8438 = ssub.s32 %s37, 2
        // Predicated region
        $region169: #{_lambda_.1} parent=167 // pred_check
          %p8439 = pneg %p596
        $region170: #{_lambda_.1} parent=167 // pred_check_branch
          %8441 = sbr.rel (%p8439) target = $region172
        $region171: #{_lambda_.1} parent=167 // pred_region
          %p8442 = scmp.lt.s32.totalorder %s43, 1
          %s8443 = scalar_select %p8442, %s43, 1
          %s8444 = smul.addr %s8443, 2
          %s8445 = smul.addr %s8444, 8
          %s8446 = scalar_lea.vmem %s25, %s8445
        $region172: #{_lambda_.1} parent=167 // pred_fallthru
          _
      $region168: #{_lambda_.1} parent=5 // pred_fallthru
        _
    $region6: #{_lambda_.1} parent=1 // loop_footer
      %s41 = sadd.s32 1, %s37
    $region7: #{_lambda_.1} parent=1 // loop_footer_branch
      %36 = sbr.rel target = $region3
    $region8: #{_lambda_.1} parent=1 // loop_exit
      _
    %8447 = vsyncpa [#allocation4], 1
    %s8448 = scalar_lea.sflag [#allocation4], 1
    %8449 = vsyncpa %s8448, 1
    %8450 = vsyncpa [#allocation6], 1
    %8451 = vsyncpa [#allocation9], 1
    %8452 = vsyncpa [#allocation12], 1
    %8453 = vsyncpa [#allocation15], 1
    %8454 = vsyncpa [#allocation18], 1

</llo_original>
